<compile_context>
chip_gen: v7x
topology: tpu7x:2x2x1
jax: 0.10.0
libtpu: 0.0.40
codegen_flags: <defaults>
</compile_context>

<pallas_src>
import jax
import jax.numpy as jnp
from jax.experimental import pallas as pl
from jax.experimental.pallas import tpu as pltpu

EPS = 1e-5
LANE = 128


def _round_up(x, m):
    return (x + m - 1) // m * m


# --------------------- kernel A: conv1 (tap-packed K) + stats -----------------
def _make_conv1_kernel(m_blk, m_work, wp, w_out, cin_p, cout_p):
    def kernel(x_ref, w_ref, y_ref, s_ref, q_ref, lhs_ref, acc_ref):
        acc_ref[...] = jnp.zeros_like(acc_ref)
        # 3x3 conv as 3 MXU matmuls: the three horizontal taps (kx) are packed
        # into the K dimension (3*cin_p) via lane-aligned column-block copies.
        for ky in range(3):
            for kx in range(3):
                lhs_ref[:, pl.ds(kx * cin_p, cin_p)] = x_ref[
                    pl.ds(ky * wp + kx, m_blk), :]
            acc_ref[...] += jnp.dot(
                lhs_ref[...], w_ref[pl.ds(ky * 3 * cin_p, 3 * cin_p), :],
                preferred_element_type=jnp.float32)
        acc = acc_ref[...]
        # mask junk working-grid columns (c >= W) and padded rows for the stats
        ridx = jax.lax.broadcasted_iota(jnp.int32, (m_blk, 1), 0)
        valid = (ridx < m_work) & ((ridx % wp) < w_out)
        accm = jnp.where(valid, acc, 0.0)
        csum = jnp.sum(accm, axis=0, keepdims=True)
        cssq = jnp.sum(accm * accm, axis=0, keepdims=True)
        row8 = jax.lax.broadcasted_iota(jnp.int32, (8, cout_p), 0)
        s_ref[...] = jnp.where(row8 == 0, csum, 0.0)
        q_ref[...] = jnp.where(row8 == 0, cssq, 0.0)
        y_ref[...] = acc.astype(y_ref.dtype)
    return kernel


# ----------- kernel B: BN1 + ReLU1 fused with conv2 (tap-packed K) + stats ----
def _make_mid_kernel(m_blk, m_work, wp, w_out, cout_p, zoff, lpad_b):
    def kernel(y1_ref, sc_ref, sh_ref, w2_ref, y2_ref, s2_ref, q2_ref,
               zbuf, lhs_ref, acc_ref):
        # BN1 (precomputed scale/shift) + ReLU; junk columns/rows are zeroed so
        # they double as conv2 zero padding.
        y1 = y1_ref[...].astype(jnp.float32)
        act = jnp.maximum(y1 * sc_ref[...] + sh_ref[...], 0.0)
        ridx = jax.lax.broadcasted_iota(jnp.int32, (m_blk, 1), 0)
        valid = (ridx < m_work) & ((ridx % wp) < w_out)
        act = jnp.where(valid, act, 0.0)

        # bf16 staging buffer for conv2: zero ONLY the halo rows (head/tail),
        # store the activation block once.  All stores are 16-row aligned.
        tail = zoff + m_blk
        zbuf[pl.ds(0, zoff), :] = jnp.zeros((zoff, cout_p), jnp.bfloat16)
        zbuf[pl.ds(tail, lpad_b - tail), :] = jnp.zeros(
            (lpad_b - tail, cout_p), jnp.bfloat16)
        zbuf[pl.ds(zoff, m_blk), :] = act.astype(jnp.bfloat16)

        delta = zoff - (wp + 1)   # buffer-row offset of padded flat index 0
        acc_ref[...] = jnp.zeros_like(acc_ref)
        for ky in range(3):
            for kx in range(3):
                lhs_ref[:, pl.ds(kx * cout_p, cout_p)] = zbuf[
                    pl.ds(delta + ky * wp + kx, m_blk), :]
            acc_ref[...] += jnp.dot(
                lhs_ref[...], w2_ref[pl.ds(ky * 3 * cout_p, 3 * cout_p), :],
                preferred_element_type=jnp.float32)
        acc = acc_ref[...]
        accm = jnp.where(valid, acc, 0.0)
        csum = jnp.sum(accm, axis=0, keepdims=True)
        cssq = jnp.sum(accm * accm, axis=0, keepdims=True)
        row8 = jax.lax.broadcasted_iota(jnp.int32, (8, cout_p), 0)
        s2_ref[...] = jnp.where(row8 == 0, csum, 0.0)
        q2_ref[...] = jnp.where(row8 == 0, cssq, 0.0)
        y2_ref[...] = acc.astype(y2_ref.dtype)
    return kernel


# --------------------------- kernel C: BN2 + ReLU2 ----------------------------
def _final_kernel(y2_ref, sc_ref, sh_ref, o_ref):
    o_ref[...] = jnp.maximum(
        y2_ref[...].astype(jnp.float32) * sc_ref[...] + sh_ref[...], 0.0)


# --------------------------------- wrapper ------------------------------------
def double_conv(x_nchw, p):
    n, c_in, h, w = x_nchw.shape
    c_out = p["w1"].shape[0]
    cin_p = _round_up(c_in, LANE)
    cout_p = _round_up(c_out, LANE)
    hp, wp = h + 2, w + 2
    m_work = h * wp                       # flattened "working grid" rows / sample
    m_blk = _round_up(m_work, 16)         # 16-aligned for clean bf16 packing
    # pass-A flattened/zero-padded image length (+ guard so every tap slice is
    # in-bounds), 16-row aligned.
    lpad = _round_up(max(hp * wp, 2 * wp + 2 + m_blk) + 8, 16)
    # pass-B staging buffer: activation block placed at a 16-aligned offset so
    # all zbuf stores are sublane-aligned; loads may be offset (cheap relayout).
    zoff = _round_up(wp + 1, 16)
    lpad_b = _round_up(zoff + wp + 1 + m_blk, 16)
    m_total = float(n * h * w)

    # ---- layout prep (cheap data movement in plain JAX) ----
    # bf16 activations: the MXU consumes bf16 anyway; halves HBM + VMEM traffic.
    x_nhwc = jnp.transpose(x_nchw, (0, 2, 3, 1)).astype(jnp.bfloat16)
    x_p = jnp.pad(x_nhwc, ((0, 0), (1, 1), (1, 1), (0, cin_p - c_in)))
    x_flat = x_p.reshape(n, hp * wp, cin_p)
    x_flat = jnp.pad(x_flat, ((0, 0), (0, lpad - hp * wp), (0, 0)))
    x_flat = x_flat.reshape(n * lpad, cin_p)

    def prep_w(wt, ci_p):
        co, ci = wt.shape[0], wt.shape[1]
        wk = jnp.transpose(wt, (2, 3, 1, 0)).reshape(9, ci, co)   # k = ky*3+kx major
        wk = jnp.pad(wk, ((0, 0), (0, ci_p - ci), (0, cout_p - co)))
        return wk.reshape(9 * ci_p, cout_p).astype(jnp.bfloat16)

    def prep_vec(v):
        return jnp.pad(v.astype(jnp.float32), (0, cout_p - c_out)).reshape(1, cout_p)

    w1 = prep_w(p["w1"], cin_p)
    w2 = prep_w(p["w2"], cout_p)
    g1, be1 = prep_vec(p["g1"]), prep_vec(p["be1"])
    g2, be2 = prep_vec(p["g2"]), prep_vec(p["be2"])
    # conv biases b1/b2 intentionally unused: batch-stat BN cancels them exactly.

    # Modest scoped-VMEM request derived from actual block sizes: headroom on
    # v7x (64 MiB physical per TensorCore), plenty on v5e/v6e (128 MiB).
    blk_bytes = (
        2 * lpad * cin_p * 2                                    # x block (bf16, 2x buf)
        + 9 * cin_p * cout_p * 2 + 9 * cout_p * cout_p * 2      # resident weights
        + 4 * m_blk * cout_p * 2                                # y1/y2 bf16 blocks (2x buf)
        + 2 * m_blk * cout_p * 4                                # f32 output block (2x buf)
        + (lpad_b + m_blk + 3 * max(cin_p, cout_p)) * cout_p * 4  # scratch (generous)
        + 64 * 1024                                             # stats / BN vectors / slack
    )
    vmem_limit = int(min(48 * 1024 * 1024, max(8 * 1024 * 1024, 2 * blk_bytes)))
    cparams = pltpu.CompilerParams(
        dimension_semantics=("parallel",),
        vmem_limit_bytes=vmem_limit,
    )

    def row_blk(rows):
        return pl.BlockSpec((rows, cout_p), lambda i: (i, 0))

    def full(arr):
        return pl.BlockSpec(arr.shape, lambda i: (0, 0))

    # ---- pass A: conv1 (tap-packed K) + per-sample partial BN1 stats ----
    y1_pre, s1, q1 = pl.pallas_call(
        _make_conv1_kernel(m_blk, m_work, wp, w, cin_p, cout_p),
        grid=(n,),
        in_specs=[pl.BlockSpec((lpad, cin_p), lambda i: (i, 0)), full(w1)],
        out_specs=(row_blk(m_blk), row_blk(8), row_blk(8)),
        out_shape=(jax.ShapeDtypeStruct((n * m_blk, cout_p), jnp.bfloat16),
                   jax.ShapeDtypeStruct((n * 8, cout_p), jnp.float32),
                   jax.ShapeDtypeStruct((n * 8, cout_p), jnp.float32)),
        scratch_shapes=[pltpu.VMEM((m_blk, 3 * cin_p), jnp.bfloat16),
                        pltpu.VMEM((m_blk, cout_p), jnp.float32)],
        compiler_params=cparams,
    )(x_flat, w1)

    # Pre-reduce the per-sample partials to per-channel scale/shift once (tiny
    # XLA reduce between passes) instead of redoing it on every grid step.
    def bn_affine(s, q, g, be):
        mean = jnp.sum(s, axis=0, keepdims=True) / m_total
        var = jnp.maximum(jnp.sum(q, axis=0, keepdims=True) / m_total - mean * mean, 0.0)
        scale = jax.lax.rsqrt(var + EPS) * g
        return scale, be - mean * scale

    sc1, sh1 = bn_affine(s1, q1, g1, be1)

    # ---- pass B: BN1 + ReLU1 fused with conv2 + partial BN2 stats ----
    y2_pre, s2, q2 = pl.pallas_call(
        _make_mid_kernel(m_blk, m_work, wp, w, cout_p, zoff, lpad_b),
        grid=(n,),
        in_specs=[row_blk(m_blk), full(sc1), full(sh1), full(w2)],
        out_specs=(row_blk(m_blk), row_blk(8), row_blk(8)),
        out_shape=(jax.ShapeDtypeStruct((n * m_blk, cout_p), jnp.bfloat16),
                   jax.ShapeDtypeStruct((n * 8, cout_p), jnp.float32),
                   jax.ShapeDtypeStruct((n * 8, cout_p), jnp.float32)),
        scratch_shapes=[pltpu.VMEM((lpad_b, cout_p), jnp.bfloat16),
                        pltpu.VMEM((m_blk, 3 * cout_p), jnp.bfloat16),
                        pltpu.VMEM((m_blk, cout_p), jnp.float32)],
        compiler_params=cparams,
    )(y1_pre, sc1, sh1, w2)

    sc2, sh2 = bn_affine(s2, q2, g2, be2)

    # ---- pass C: BN2 + ReLU2 (lane-dense f32 output = module output dtype) ----
    y2 = pl.pallas_call(
        _final_kernel,
        grid=(n,),
        in_specs=[row_blk(m_blk), full(sc2), full(sh2)],
        out_specs=row_blk(m_blk),
        out_shape=jax.ShapeDtypeStruct((n * m_blk, cout_p), jnp.float32),
        compiler_params=cparams,
    )(y2_pre, sc2, sh2)

    out = y2.reshape(n, m_blk, cout_p)[:, :m_work, :]
    out = out.reshape(n, h, wp, cout_p)[:, :, :w, :c_out]
    return jnp.transpose(out, (0, 3, 1, 2))                   # NHWC -> NCHW


# ------------------------------ params & reference ----------------------------
def init_double_conv_params(key, in_channels, out_channels):
    ks = jax.random.split(key, 8)
    return dict(
        w1=0.1 * jax.random.normal(ks[0], (out_channels, in_channels, 3, 3), jnp.float32),
        b1=0.1 * jax.random.normal(ks[1], (out_channels,), jnp.float32),
        w2=0.1 * jax.random.normal(ks[2], (out_channels, out_channels, 3, 3), jnp.float32),
        b2=0.1 * jax.random.normal(ks[3], (out_channels,), jnp.float32),
        g1=1.0 + 0.1 * jax.random.normal(ks[4], (out_channels,), jnp.float32),
        be1=0.1 * jax.random.normal(ks[5], (out_channels,), jnp.float32),
        g2=1.0 + 0.1 * jax.random.normal(ks[6], (out_channels,), jnp.float32),
        be2=0.1 * jax.random.normal(ks[7], (out_channels,), jnp.float32),
    )


def _ref_block(x_nhwc, wt, b, g, be):
    w_hwio = jnp.transpose(wt, (2, 3, 1, 0))
    y = jax.lax.conv_general_dilated(
        x_nhwc, w_hwio, window_strides=(1, 1), padding="SAME",
        dimension_numbers=("NHWC", "HWIO", "NHWC")) + b
    mean = jnp.mean(y, axis=(0, 1, 2), keepdims=True)
    var = jnp.mean((y - mean) ** 2, axis=(0, 1, 2), keepdims=True)
    return jnp.maximum((y - mean) * jax.lax.rsqrt(var + EPS) * g + be, 0.0)


def ref_double_conv(x_nchw, p):
    x = jnp.transpose(x_nchw, (0, 2, 3, 1)).astype(jnp.float32)
    y = _ref_block(x, p["w1"], p["b1"], p["g1"], p["be1"])
    y = _ref_block(y, p["w2"], p["b2"], p["g2"], p["be2"])
    return jnp.transpose(y, (0, 3, 1, 2))


# ----------------------------------- main --------------------------------------
if __name__ == "__main__":
    key = jax.random.PRNGKey(0)
    k_x, k_p = jax.random.split(key)

    N, C_IN, C_OUT, H, W = 2, 4, 8, 16, 16
    x = jax.random.normal(k_x, (N, C_IN, H, W), jnp.float32)
    params = init_double_conv_params(k_p, C_IN, C_OUT)

    out = jax.jit(double_conv)(x, params)
    out = jax.block_until_ready(out)

    ref = ref_double_conv(x, params)
    assert out.shape == (N, C_OUT, H, W)
    max_err = float(jnp.max(jnp.abs(out - ref)))
    # bf16 MXU operands + bf16 pre-BN intermediates -> tolerance widened vs f32 ref.
    assert jnp.allclose(out, ref, atol=5e-2, rtol=5e-2), f"mismatch vs reference (max abs err {max_err})"

    print("KERNEL_OK")
</pallas_src>

<mosaic_0001>
module attributes {stable_mosaic.version = 11 : i64} {
  func.func @kernel(%arg0: i32, %arg1: memref<336x128xbf16, #tpu.memory_space<vmem>>, %arg2: memref<1152x128xbf16, #tpu.memory_space<vmem>>, %arg3: memref<288x128xbf16, #tpu.memory_space<vmem>>, %arg4: memref<8x128xf32, #tpu.memory_space<vmem>>, %arg5: memref<8x128xf32, #tpu.memory_space<vmem>>, %arg6: memref<288x384xbf16, #tpu.memory_space<vmem>>, %arg7: memref<288x128xf32, #tpu.memory_space<vmem>>) attributes {dimension_semantics = [#tpu.dimension_semantics<parallel>], iteration_bounds = array<i64: 2>, scalar_prefetch = 0 : i64, scratch_operands = 2 : i64, tpu.core_type = #tpu.core_type<tc>, window_params = [{transform_indices = @transform_0, window_bounds = array<i64: 336, 128>}, {pipeline_mode = #tpu.pipeline_mode<synchronous>, transform_indices = @transform_1, window_bounds = array<i64: 1152, 128>}, {transform_indices = @transform_2, window_bounds = array<i64: 288, 128>}, {transform_indices = @transform_3, window_bounds = array<i64: 8, 128>}, {transform_indices = @transform_4, window_bounds = array<i64: 8, 128>}]} {
    %cst = arith.constant 0.000000e+00 : f32
    %0 = vector.broadcast %cst : f32 to vector<288x128xf32>
    %c0 = arith.constant 0 : index
    %c0_0 = arith.constant 0 : index
    %1 = vector.load %arg7[%c0, %c0_0] : memref<288x128xf32, #tpu.memory_space<vmem>>, vector<288x128xf32>
    tpu.vector_store %arg7[%c0, %c0_0], %0 {strides = array<i32>} : memref<288x128xf32, #tpu.memory_space<vmem>>, vector<288x128xf32>,
    %c0_1 = arith.constant 0 : index
    %c0_2 = arith.constant 0 : index
    %2 = vector.load %arg1[%c0_1, %c0_2] : memref<336x128xbf16, #tpu.memory_space<vmem>>, vector<288x128xbf16>
    %c0_3 = arith.constant 0 : index
    %c0_4 = arith.constant 0 : index
    %3 = vector.load %arg6[%c0_3, %c0_4] : memref<288x384xbf16, #tpu.memory_space<vmem>>, vector<288x128xbf16>
    tpu.vector_store %arg6[%c0_3, %c0_4], %2 {strides = array<i32>} : memref<288x384xbf16, #tpu.memory_space<vmem>>, vector<288x128xbf16>,
    %c1 = arith.constant 1 : index
    %c0_5 = arith.constant 0 : index
    %4 = vector.load %arg1[%c1, %c0_5] : memref<336x128xbf16, #tpu.memory_space<vmem>>, vector<288x128xbf16>
    %c0_6 = arith.constant 0 : index
    %c128 = arith.constant 128 : index
    %5 = vector.load %arg6[%c0_6, %c128] : memref<288x384xbf16, #tpu.memory_space<vmem>>, vector<288x128xbf16>
    tpu.vector_store %arg6[%c0_6, %c128], %4 {strides = array<i32>} : memref<288x384xbf16, #tpu.memory_space<vmem>>, vector<288x128xbf16>,
    %c2 = arith.constant 2 : index
    %c0_7 = arith.constant 0 : index
    %6 = vector.load %arg1[%c2, %c0_7] : memref<336x128xbf16, #tpu.memory_space<vmem>>, vector<288x128xbf16>
    %c0_8 = arith.constant 0 : index
    %c256 = arith.constant 256 : index
    %7 = vector.load %arg6[%c0_8, %c256] : memref<288x384xbf16, #tpu.memory_space<vmem>>, vector<288x128xbf16>
    tpu.vector_store %arg6[%c0_8, %c256], %6 {strides = array<i32>} : memref<288x384xbf16, #tpu.memory_space<vmem>>, vector<288x128xbf16>,
    %c0_9 = arith.constant 0 : index
    %c0_10 = arith.constant 0 : index
    %8 = vector.load %arg7[%c0_9, %c0_10] : memref<288x128xf32, #tpu.memory_space<vmem>>, vector<288x128xf32>
    %c0_11 = arith.constant 0 : index
    %c0_12 = arith.constant 0 : index
    %9 = vector.load %arg6[%c0_11, %c0_12] : memref<288x384xbf16, #tpu.memory_space<vmem>>, vector<288x384xbf16>
    %c0_13 = arith.constant 0 : index
    %c0_14 = arith.constant 0 : index
    %10 = vector.load %arg2[%c0_13, %c0_14] : memref<1152x128xbf16, #tpu.memory_space<vmem>>, vector<384x128xbf16>
    %cst_15 = arith.constant dense<0.000000e+00> : vector<288x128xf32>
    %11 = tpu.matmul %9, %10, %cst_15 {dimension_numbers = #tpu.dot_dimension_numbers<[1], [0], [0], [1], [0, 0, 1, 1], [], []>} : vector<288x384xbf16>, vector<384x128xbf16>, vector<288x128xf32> -> vector<288x128xf32>
    %12 = arith.addf %8, %11 : vector<288x128xf32>
    %c0_16 = arith.constant 0 : index
    %c0_17 = arith.constant 0 : index
    %13 = vector.load %arg7[%c0_16, %c0_17] : memref<288x128xf32, #tpu.memory_space<vmem>>, vector<288x128xf32>
    tpu.vector_store %arg7[%c0_16, %c0_17], %12 {strides = array<i32>} : memref<288x128xf32, #tpu.memory_space<vmem>>, vector<288x128xf32>,
    %c18 = arith.constant 18 : index
    %c0_18 = arith.constant 0 : index
    %14 = vector.load %arg1[%c18, %c0_18] : memref<336x128xbf16, #tpu.memory_space<vmem>>, vector<288x128xbf16>
    %c0_19 = arith.constant 0 : index
    %c0_20 = arith.constant 0 : index
    %15 = vector.load %arg6[%c0_19, %c0_20] : memref<288x384xbf16, #tpu.memory_space<vmem>>, vector<288x128xbf16>
    tpu.vector_store %arg6[%c0_19, %c0_20], %14 {strides = array<i32>} : memref<288x384xbf16, #tpu.memory_space<vmem>>, vector<288x128xbf16>,
    %c19 = arith.constant 19 : index
    %c0_21 = arith.constant 0 : index
    %16 = vector.load %arg1[%c19, %c0_21] : memref<336x128xbf16, #tpu.memory_space<vmem>>, vector<288x128xbf16>
    %c0_22 = arith.constant 0 : index
    %c128_23 = arith.constant 128 : index
    %17 = vector.load %arg6[%c0_22, %c128_23] : memref<288x384xbf16, #tpu.memory_space<vmem>>, vector<288x128xbf16>
    tpu.vector_store %arg6[%c0_22, %c128_23], %16 {strides = array<i32>} : memref<288x384xbf16, #tpu.memory_space<vmem>>, vector<288x128xbf16>,
    %c20 = arith.constant 20 : index
    %c0_24 = arith.constant 0 : index
    %18 = vector.load %arg1[%c20, %c0_24] : memref<336x128xbf16, #tpu.memory_space<vmem>>, vector<288x128xbf16>
    %c0_25 = arith.constant 0 : index
    %c256_26 = arith.constant 256 : index
    %19 = vector.load %arg6[%c0_25, %c256_26] : memref<288x384xbf16, #tpu.memory_space<vmem>>, vector<288x128xbf16>
    tpu.vector_store %arg6[%c0_25, %c256_26], %18 {strides = array<i32>} : memref<288x384xbf16, #tpu.memory_space<vmem>>, vector<288x128xbf16>,
    %c0_27 = arith.constant 0 : index
    %c0_28 = arith.constant 0 : index
    %20 = vector.load %arg7[%c0_27, %c0_28] : memref<288x128xf32, #tpu.memory_space<vmem>>, vector<288x128xf32>
    %c0_29 = arith.constant 0 : index
    %c0_30 = arith.constant 0 : index
    %21 = vector.load %arg6[%c0_29, %c0_30] : memref<288x384xbf16, #tpu.memory_space<vmem>>, vector<288x384xbf16>
    %c384 = arith.constant 384 : index
    %c0_31 = arith.constant 0 : index
    %22 = vector.load %arg2[%c384, %c0_31] : memref<1152x128xbf16, #tpu.memory_space<vmem>>, vector<384x128xbf16>
    %cst_32 = arith.constant dense<0.000000e+00> : vector<288x128xf32>
    %23 = tpu.matmul %21, %22, %cst_32 {dimension_numbers = #tpu.dot_dimension_numbers<[1], [0], [0], [1], [0, 0, 1, 1], [], []>} : vector<288x384xbf16>, vector<384x128xbf16>, vector<288x128xf32> -> vector<288x128xf32>
    %24 = arith.addf %20, %23 : vector<288x128xf32>
    %c0_33 = arith.constant 0 : index
    %c0_34 = arith.constant 0 : index
    %25 = vector.load %arg7[%c0_33, %c0_34] : memref<288x128xf32, #tpu.memory_space<vmem>>, vector<288x128xf32>
    tpu.vector_store %arg7[%c0_33, %c0_34], %24 {strides = array<i32>} : memref<288x128xf32, #tpu.memory_space<vmem>>, vector<288x128xf32>,
    %c36 = arith.constant 36 : index
    %c0_35 = arith.constant 0 : index
    %26 = vector.load %arg1[%c36, %c0_35] : memref<336x128xbf16, #tpu.memory_space<vmem>>, vector<288x128xbf16>
    %c0_36 = arith.constant 0 : index
    %c0_37 = arith.constant 0 : index
    %27 = vector.load %arg6[%c0_36, %c0_37] : memref<288x384xbf16, #tpu.memory_space<vmem>>, vector<288x128xbf16>
    tpu.vector_store %arg6[%c0_36, %c0_37], %26 {strides = array<i32>} : memref<288x384xbf16, #tpu.memory_space<vmem>>, vector<288x128xbf16>,
    %c37 = arith.constant 37 : index
    %c0_38 = arith.constant 0 : index
    %28 = vector.load %arg1[%c37, %c0_38] : memref<336x128xbf16, #tpu.memory_space<vmem>>, vector<288x128xbf16>
    %c0_39 = arith.constant 0 : index
    %c128_40 = arith.constant 128 : index
    %29 = vector.load %arg6[%c0_39, %c128_40] : memref<288x384xbf16, #tpu.memory_space<vmem>>, vector<288x128xbf16>
    tpu.vector_store %arg6[%c0_39, %c128_40], %28 {strides = array<i32>} : memref<288x384xbf16, #tpu.memory_space<vmem>>, vector<288x128xbf16>,
    %c38 = arith.constant 38 : index
    %c0_41 = arith.constant 0 : index
    %30 = vector.load %arg1[%c38, %c0_41] : memref<336x128xbf16, #tpu.memory_space<vmem>>, vector<288x128xbf16>
    %c0_42 = arith.constant 0 : index
    %c256_43 = arith.constant 256 : index
    %31 = vector.load %arg6[%c0_42, %c256_43] : memref<288x384xbf16, #tpu.memory_space<vmem>>, vector<288x128xbf16>
    tpu.vector_store %arg6[%c0_42, %c256_43], %30 {strides = array<i32>} : memref<288x384xbf16, #tpu.memory_space<vmem>>, vector<288x128xbf16>,
    %c0_44 = arith.constant 0 : index
    %c0_45 = arith.constant 0 : index
    %32 = vector.load %arg7[%c0_44, %c0_45] : memref<288x128xf32, #tpu.memory_space<vmem>>, vector<288x128xf32>
    %c0_46 = arith.constant 0 : index
    %c0_47 = arith.constant 0 : index
    %33 = vector.load %arg6[%c0_46, %c0_47] : memref<288x384xbf16, #tpu.memory_space<vmem>>, vector<288x384xbf16>
    %c768 = arith.constant 768 : index
    %c0_48 = arith.constant 0 : index
    %34 = vector.load %arg2[%c768, %c0_48] : memref<1152x128xbf16, #tpu.memory_space<vmem>>, vector<384x128xbf16>
    %cst_49 = arith.constant dense<0.000000e+00> : vector<288x128xf32>
    %35 = tpu.matmul %33, %34, %cst_49 {dimension_numbers = #tpu.dot_dimension_numbers<[1], [0], [0], [1], [0, 0, 1, 1], [], []>} : vector<288x384xbf16>, vector<384x128xbf16>, vector<288x128xf32> -> vector<288x128xf32>
    %36 = arith.addf %32, %35 : vector<288x128xf32>
    %c0_50 = arith.constant 0 : index
    %c0_51 = arith.constant 0 : index
    %37 = vector.load %arg7[%c0_50, %c0_51] : memref<288x128xf32, #tpu.memory_space<vmem>>, vector<288x128xf32>
    tpu.vector_store %arg7[%c0_50, %c0_51], %36 {strides = array<i32>} : memref<288x128xf32, #tpu.memory_space<vmem>>, vector<288x128xf32>,
    %c0_52 = arith.constant 0 : index
    %c0_53 = arith.constant 0 : index
    %38 = vector.load %arg7[%c0_52, %c0_53] : memref<288x128xf32, #tpu.memory_space<vmem>>, vector<288x128xf32>
    %39 = tpu.iota {dimensions = array<i32: 0>} : vector<288x1xi32>
    %c288_i32 = arith.constant 288 : i32
    %40 = vector.broadcast %c288_i32 : i32 to vector<288x1xi32>
    %41 = arith.cmpi slt, %39, %40 : vector<288x1xi32>
    %c18_i32 = arith.constant 18 : i32
    %c0_i32 = arith.constant 0 : i32
    %42 = arith.cmpi eq, %c18_i32, %c0_i32 : i32
    %c1_i32 = arith.constant 1 : i32
    %43 = arith.select %42, %c1_i32, %c18_i32 : i32
    %44 = vector.broadcast %43 : i32 to vector<288x1xi32>
    %45 = arith.remsi %39, %44 : vector<288x1xi32>
    %c0_i32_54 = arith.constant 0 : i32
    %46 = vector.broadcast %c0_i32_54 : i32 to vector<288x1xi32>
    %47 = arith.cmpi ne, %45, %46 : vector<288x1xi32>
    %c0_i32_55 = arith.constant 0 : i32
    %48 = vector.broadcast %c0_i32_55 : i32 to vector<288x1xi32>
    %49 = arith.cmpi slt, %45, %48 : vector<288x1xi32>
    %c0_i32_56 = arith.constant 0 : i32
    %50 = arith.cmpi slt, %43, %c0_i32_56 : i32
    %51 = vector.broadcast %50 : i1 to vector<288x1xi1>
    %52 = vector.broadcast %51 : vector<288x1xi1> to vector<288x1xi1>
    %53 = arith.xori %49, %52 : vector<288x1xi1>
    %54 = arith.andi %53, %47 : vector<288x1xi1>
    %55 = vector.broadcast %43 : i32 to vector<288x1xi32>
    %56 = arith.addi %45, %55 : vector<288x1xi32>
    %57 = arith.select %54, %56, %45 : vector<288x1xi1>, vector<288x1xi32>
    %c16_i32 = arith.constant 16 : i32
    %58 = vector.broadcast %c16_i32 : i32 to vector<288x1xi32>
    %59 = arith.cmpi slt, %57, %58 : vector<288x1xi32>
    %60 = arith.andi %41, %59 : vector<288x1xi1>
    %cst_57 = arith.constant 0.000000e+00 : f32
    %61 = vector.shape_cast %60 : vector<288x1xi1> to vector<288x1xi1>
    %62 = vector.broadcast %61 : vector<288x1xi1> to vector<288x128xi1>
    %63 = vector.broadcast %cst_57 : f32 to vector<288x128xf32>
    %64 = arith.select %62, %38, %63 : vector<288x128xi1>, vector<288x128xf32>
    %cst_58 = arith.constant dense<0.000000e+00> : vector<128xf32>
    %65 = vector.multi_reduction <add>, %64, %cst_58 [0] : vector<288x128xf32> to vector<128xf32>
    %66 = vector.shape_cast %65 : vector<128xf32> to vector<1x128xf32>
    %67 = arith.mulf %64, %64 : vector<288x128xf32>
    %cst_59 = arith.constant dense<0.000000e+00> : vector<128xf32>
    %68 = vector.multi_reduction <add>, %67, %cst_59 [0] : vector<288x128xf32> to vector<128xf32>
    %69 = vector.shape_cast %68 : vector<128xf32> to vector<1x128xf32>
    %70 = tpu.iota {dimensions = array<i32: 0>} : vector<8x128xi32>
    %c0_i32_60 = arith.constant 0 : i32
    %71 = vector.broadcast %c0_i32_60 : i32 to vector<8x128xi32>
    %72 = arith.cmpi eq, %70, %71 : vector<8x128xi32>
    %cst_61 = arith.constant 0.000000e+00 : f32
    %73 = vector.shape_cast %66 : vector<1x128xf32> to vector<1x128xf32>
    %74 = vector.broadcast %73 : vector<1x128xf32> to vector<8x128xf32>
    %75 = vector.broadcast %cst_61 : f32 to vector<8x128xf32>
    %76 = arith.select %72, %74, %75 : vector<8x128xi1>, vector<8x128xf32>
    %c0_62 = arith.constant 0 : index
    %c0_63 = arith.constant 0 : index
    %77 = vector.load %arg4[%c0_62, %c0_63] : memref<8x128xf32, #tpu.memory_space<vmem>>, vector<8x128xf32>
    tpu.vector_store %arg4[%c0_62, %c0_63], %76 {strides = array<i32>} : memref<8x128xf32, #tpu.memory_space<vmem>>, vector<8x128xf32>,
    %c0_i32_64 = arith.constant 0 : i32
    %78 = vector.broadcast %c0_i32_64 : i32 to vector<8x128xi32>
    %79 = arith.cmpi eq, %70, %78 : vector<8x128xi32>
    %cst_65 = arith.constant 0.000000e+00 : f32
    %80 = vector.shape_cast %69 : vector<1x128xf32> to vector<1x128xf32>
    %81 = vector.broadcast %80 : vector<1x128xf32> to vector<8x128xf32>
    %82 = vector.broadcast %cst_65 : f32 to vector<8x128xf32>
    %83 = arith.select %79, %81, %82 : vector<8x128xi1>, vector<8x128xf32>
    %c0_66 = arith.constant 0 : index
    %c0_67 = arith.constant 0 : index
    %84 = vector.load %arg5[%c0_66, %c0_67] : memref<8x128xf32, #tpu.memory_space<vmem>>, vector<8x128xf32>
    tpu.vector_store %arg5[%c0_66, %c0_67], %83 {strides = array<i32>} : memref<8x128xf32, #tpu.memory_space<vmem>>, vector<8x128xf32>,
    %85 = arith.truncf %38 : vector<288x128xf32> to vector<288x128xbf16>
    %c0_68 = arith.constant 0 : index
    %c0_69 = arith.constant 0 : index
    %86 = vector.load %arg3[%c0_68, %c0_69] : memref<288x128xbf16, #tpu.memory_space<vmem>>, vector<288x128xbf16>
    tpu.vector_store %arg3[%c0_68, %c0_69], %85 {strides = array<i32>} : memref<288x128xbf16, #tpu.memory_space<vmem>>, vector<288x128xbf16>,
    return
  }
  func.func @transform_0(%arg0: i32) -> (i32, i32) {
    %c0_i32 = arith.constant 0 : i32
    %c0_i32_0 = arith.constant 0 : i32
    return %arg0, %c0_i32 : i32, i32
  }
  func.func @transform_1(%arg0: i32) -> (i32, i32) {
    %c0_i32 = arith.constant 0 : i32
    %c0_i32_0 = arith.constant 0 : i32
    %c0_i32_1 = arith.constant 0 : i32
    return %c0_i32, %c0_i32_0 : i32, i32
  }
  func.func @transform_2(%arg0: i32) -> (i32, i32) {
    %c0_i32 = arith.constant 0 : i32
    %c0_i32_0 = arith.constant 0 : i32
    return %arg0, %c0_i32 : i32, i32
  }
  func.func @transform_3(%arg0: i32) -> (i32, i32) {
    %c0_i32 = arith.constant 0 : i32
    %c0_i32_0 = arith.constant 0 : i32
    return %arg0, %c0_i32 : i32, i32
  }
  func.func @transform_4(%arg0: i32) -> (i32, i32) {
    %c0_i32 = arith.constant 0 : i32
    %c0_i32_0 = arith.constant 0 : i32
    return %arg0, %c0_i32 : i32, i32
  }
}

module attributes {stable_mosaic.version = 11 : i64} {
  func.func @kernel(%arg0: i32, %arg1: memref<288x128xbf16, #tpu.memory_space<vmem>>, %arg2: memref<1x128xf32, #tpu.memory_space<vmem>>, %arg3: memref<1x128xf32, #tpu.memory_space<vmem>>, %arg4: memref<1152x128xbf16, #tpu.memory_space<vmem>>, %arg5: memref<288x128xbf16, #tpu.memory_space<vmem>>, %arg6: memref<8x128xf32, #tpu.memory_space<vmem>>, %arg7: memref<8x128xf32, #tpu.memory_space<vmem>>, %arg8: memref<352x128xbf16, #tpu.memory_space<vmem>>, %arg9: memref<288x384xbf16, #tpu.memory_space<vmem>>, %arg10: memref<288x128xf32, #tpu.memory_space<vmem>>) attributes {dimension_semantics = [#tpu.dimension_semantics<parallel>], iteration_bounds = array<i64: 2>, scalar_prefetch = 0 : i64, scratch_operands = 3 : i64, tpu.core_type = #tpu.core_type<tc>, window_params = [{transform_indices = @transform_0, window_bounds = array<i64: 288, 128>}, {pipeline_mode = #tpu.pipeline_mode<synchronous>, transform_indices = @transform_1, window_bounds = array<i64: 1, 128>}, {pipeline_mode = #tpu.pipeline_mode<synchronous>, transform_indices = @transform_2, window_bounds = array<i64: 1, 128>}, {pipeline_mode = #tpu.pipeline_mode<synchronous>, transform_indices = @transform_3, window_bounds = array<i64: 1152, 128>}, {transform_indices = @transform_4, window_bounds = array<i64: 288, 128>}, {transform_indices = @transform_5, window_bounds = array<i64: 8, 128>}, {transform_indices = @transform_6, window_bounds = array<i64: 8, 128>}]} {
    %c0 = arith.constant 0 : index
    %c0_0 = arith.constant 0 : index
    %0 = vector.load %arg1[%c0, %c0_0] : memref<288x128xbf16, #tpu.memory_space<vmem>>, vector<288x128xbf16>
    %1 = arith.extf %0 : vector<288x128xbf16> to vector<288x128xf32>
    %c0_1 = arith.constant 0 : index
    %c0_2 = arith.constant 0 : index
    %2 = vector.load %arg2[%c0_1, %c0_2] : memref<1x128xf32, #tpu.memory_space<vmem>>, vector<1x128xf32>
    %3 = vector.broadcast %2 : vector<1x128xf32> to vector<288x128xf32>
    %4 = arith.mulf %1, %3 : vector<288x128xf32>
    %c0_3 = arith.constant 0 : index
    %c0_4 = arith.constant 0 : index
    %5 = vector.load %arg3[%c0_3, %c0_4] : memref<1x128xf32, #tpu.memory_space<vmem>>, vector<1x128xf32>
    %6 = vector.broadcast %5 : vector<1x128xf32> to vector<288x128xf32>
    %7 = arith.addf %4, %6 : vector<288x128xf32>
    %cst = arith.constant 0.000000e+00 : f32
    %8 = vector.broadcast %cst : f32 to vector<288x128xf32>
    %9 = arith.maximumf %7, %8 : vector<288x128xf32>
    %10 = tpu.iota {dimensions = array<i32: 0>} : vector<288x1xi32>
    %c288_i32 = arith.constant 288 : i32
    %11 = vector.broadcast %c288_i32 : i32 to vector<288x1xi32>
    %12 = arith.cmpi slt, %10, %11 : vector<288x1xi32>
    %c18_i32 = arith.constant 18 : i32
    %c0_i32 = arith.constant 0 : i32
    %13 = arith.cmpi eq, %c18_i32, %c0_i32 : i32
    %c1_i32 = arith.constant 1 : i32
    %14 = arith.select %13, %c1_i32, %c18_i32 : i32
    %15 = vector.broadcast %14 : i32 to vector<288x1xi32>
    %16 = arith.remsi %10, %15 : vector<288x1xi32>
    %c0_i32_5 = arith.constant 0 : i32
    %17 = vector.broadcast %c0_i32_5 : i32 to vector<288x1xi32>
    %18 = arith.cmpi ne, %16, %17 : vector<288x1xi32>
    %c0_i32_6 = arith.constant 0 : i32
    %19 = vector.broadcast %c0_i32_6 : i32 to vector<288x1xi32>
    %20 = arith.cmpi slt, %16, %19 : vector<288x1xi32>
    %c0_i32_7 = arith.constant 0 : i32
    %21 = arith.cmpi slt, %14, %c0_i32_7 : i32
    %22 = vector.broadcast %21 : i1 to vector<288x1xi1>
    %23 = vector.broadcast %22 : vector<288x1xi1> to vector<288x1xi1>
    %24 = arith.xori %20, %23 : vector<288x1xi1>
    %25 = arith.andi %24, %18 : vector<288x1xi1>
    %26 = vector.broadcast %14 : i32 to vector<288x1xi32>
    %27 = arith.addi %16, %26 : vector<288x1xi32>
    %28 = arith.select %25, %27, %16 : vector<288x1xi1>, vector<288x1xi32>
    %c16_i32 = arith.constant 16 : i32
    %29 = vector.broadcast %c16_i32 : i32 to vector<288x1xi32>
    %30 = arith.cmpi slt, %28, %29 : vector<288x1xi32>
    %31 = arith.andi %12, %30 : vector<288x1xi1>
    %cst_8 = arith.constant 0.000000e+00 : f32
    %32 = vector.shape_cast %31 : vector<288x1xi1> to vector<288x1xi1>
    %33 = vector.broadcast %32 : vector<288x1xi1> to vector<288x128xi1>
    %34 = vector.broadcast %cst_8 : f32 to vector<288x128xf32>
    %35 = arith.select %33, %9, %34 : vector<288x128xi1>, vector<288x128xf32>
    %cst_9 = arith.constant 0.000000e+00 : bf16
    %36 = vector.broadcast %cst_9 : bf16 to vector<32x128xbf16>
    %c0_10 = arith.constant 0 : index
    %c0_11 = arith.constant 0 : index
    %37 = vector.load %arg8[%c0_10, %c0_11] : memref<352x128xbf16, #tpu.memory_space<vmem>>, vector<32x128xbf16>
    tpu.vector_store %arg8[%c0_10, %c0_11], %36 {strides = array<i32>} : memref<352x128xbf16, #tpu.memory_space<vmem>>, vector<32x128xbf16>,
    %cst_12 = arith.constant 0.000000e+00 : bf16
    %38 = vector.broadcast %cst_12 : bf16 to vector<32x128xbf16>
    %c320 = arith.constant 320 : index
    %c0_13 = arith.constant 0 : index
    %39 = vector.load %arg8[%c320, %c0_13] : memref<352x128xbf16, #tpu.memory_space<vmem>>, vector<32x128xbf16>
    tpu.vector_store %arg8[%c320, %c0_13], %38 {strides = array<i32>} : memref<352x128xbf16, #tpu.memory_space<vmem>>, vector<32x128xbf16>,
    %40 = arith.truncf %35 : vector<288x128xf32> to vector<288x128xbf16>
    %c32 = arith.constant 32 : index
    %c0_14 = arith.constant 0 : index
    %41 = vector.load %arg8[%c32, %c0_14] : memref<352x128xbf16, #tpu.memory_space<vmem>>, vector<288x128xbf16>
    tpu.vector_store %arg8[%c32, %c0_14], %40 {strides = array<i32>} : memref<352x128xbf16, #tpu.memory_space<vmem>>, vector<288x128xbf16>,
    %cst_15 = arith.constant 0.000000e+00 : f32
    %42 = vector.broadcast %cst_15 : f32 to vector<288x128xf32>
    %c0_16 = arith.constant 0 : index
    %c0_17 = arith.constant 0 : index
    %43 = vector.load %arg10[%c0_16, %c0_17] : memref<288x128xf32, #tpu.memory_space<vmem>>, vector<288x128xf32>
    tpu.vector_store %arg10[%c0_16, %c0_17], %42 {strides = array<i32>} : memref<288x128xf32, #tpu.memory_space<vmem>>, vector<288x128xf32>,
    %c13 = arith.constant 13 : index
    %c0_18 = arith.constant 0 : index
    %44 = vector.load %arg8[%c13, %c0_18] : memref<352x128xbf16, #tpu.memory_space<vmem>>, vector<288x128xbf16>
    %c0_19 = arith.constant 0 : index
    %c0_20 = arith.constant 0 : index
    %45 = vector.load %arg9[%c0_19, %c0_20] : memref<288x384xbf16, #tpu.memory_space<vmem>>, vector<288x128xbf16>
    tpu.vector_store %arg9[%c0_19, %c0_20], %44 {strides = array<i32>} : memref<288x384xbf16, #tpu.memory_space<vmem>>, vector<288x128xbf16>,
    %c14 = arith.constant 14 : index
    %c0_21 = arith.constant 0 : index
    %46 = vector.load %arg8[%c14, %c0_21] : memref<352x128xbf16, #tpu.memory_space<vmem>>, vector<288x128xbf16>
    %c0_22 = arith.constant 0 : index
    %c128 = arith.constant 128 : index
    %47 = vector.load %arg9[%c0_22, %c128] : memref<288x384xbf16, #tpu.memory_space<vmem>>, vector<288x128xbf16>
    tpu.vector_store %arg9[%c0_22, %c128], %46 {strides = array<i32>} : memref<288x384xbf16, #tpu.memory_space<vmem>>, vector<288x128xbf16>,
    %c15 = arith.constant 15 : index
    %c0_23 = arith.constant 0 : index
    %48 = vector.load %arg8[%c15, %c0_23] : memref<352x128xbf16, #tpu.memory_space<vmem>>, vector<288x128xbf16>
    %c0_24 = arith.constant 0 : index
    %c256 = arith.constant 256 : index
    %49 = vector.load %arg9[%c0_24, %c256] : memref<288x384xbf16, #tpu.memory_space<vmem>>, vector<288x128xbf16>
    tpu.vector_store %arg9[%c0_24, %c256], %48 {strides = array<i32>} : memref<288x384xbf16, #tpu.memory_space<vmem>>, vector<288x128xbf16>,
    %c0_25 = arith.constant 0 : index
    %c0_26 = arith.constant 0 : index
    %50 = vector.load %arg10[%c0_25, %c0_26] : memref<288x128xf32, #tpu.memory_space<vmem>>, vector<288x128xf32>
    %c0_27 = arith.constant 0 : index
    %c0_28 = arith.constant 0 : index
    %51 = vector.load %arg9[%c0_27, %c0_28] : memref<288x384xbf16, #tpu.memory_space<vmem>>, vector<288x384xbf16>
    %c0_29 = arith.constant 0 : index
    %c0_30 = arith.constant 0 : index
    %52 = vector.load %arg4[%c0_29, %c0_30] : memref<1152x128xbf16, #tpu.memory_space<vmem>>, vector<384x128xbf16>
    %cst_31 = arith.constant dense<0.000000e+00> : vector<288x128xf32>
    %53 = tpu.matmul %51, %52, %cst_31 {dimension_numbers = #tpu.dot_dimension_numbers<[1], [0], [0], [1], [0, 0, 1, 1], [], []>} : vector<288x384xbf16>, vector<384x128xbf16>, vector<288x128xf32> -> vector<288x128xf32>
    %54 = arith.addf %50, %53 : vector<288x128xf32>
    %c0_32 = arith.constant 0 : index
    %c0_33 = arith.constant 0 : index
    %55 = vector.load %arg10[%c0_32, %c0_33] : memref<288x128xf32, #tpu.memory_space<vmem>>, vector<288x128xf32>
    tpu.vector_store %arg10[%c0_32, %c0_33], %54 {strides = array<i32>} : memref<288x128xf32, #tpu.memory_space<vmem>>, vector<288x128xf32>,
    %c31 = arith.constant 31 : index
    %c0_34 = arith.constant 0 : index
    %56 = vector.load %arg8[%c31, %c0_34] : memref<352x128xbf16, #tpu.memory_space<vmem>>, vector<288x128xbf16>
    %c0_35 = arith.constant 0 : index
    %c0_36 = arith.constant 0 : index
    %57 = vector.load %arg9[%c0_35, %c0_36] : memref<288x384xbf16, #tpu.memory_space<vmem>>, vector<288x128xbf16>
    tpu.vector_store %arg9[%c0_35, %c0_36], %56 {strides = array<i32>} : memref<288x384xbf16, #tpu.memory_space<vmem>>, vector<288x128xbf16>,
    %c32_37 = arith.constant 32 : index
    %c0_38 = arith.constant 0 : index
    %58 = vector.load %arg8[%c32_37, %c0_38] : memref<352x128xbf16, #tpu.memory_space<vmem>>, vector<288x128xbf16>
    %c0_39 = arith.constant 0 : index
    %c128_40 = arith.constant 128 : index
    %59 = vector.load %arg9[%c0_39, %c128_40] : memref<288x384xbf16, #tpu.memory_space<vmem>>, vector<288x128xbf16>
    tpu.vector_store %arg9[%c0_39, %c128_40], %58 {strides = array<i32>} : memref<288x384xbf16, #tpu.memory_space<vmem>>, vector<288x128xbf16>,
    %c33 = arith.constant 33 : index
    %c0_41 = arith.constant 0 : index
    %60 = vector.load %arg8[%c33, %c0_41] : memref<352x128xbf16, #tpu.memory_space<vmem>>, vector<288x128xbf16>
    %c0_42 = arith.constant 0 : index
    %c256_43 = arith.constant 256 : index
    %61 = vector.load %arg9[%c0_42, %c256_43] : memref<288x384xbf16, #tpu.memory_space<vmem>>, vector<288x128xbf16>
    tpu.vector_store %arg9[%c0_42, %c256_43], %60 {strides = array<i32>} : memref<288x384xbf16, #tpu.memory_space<vmem>>, vector<288x128xbf16>,
    %c0_44 = arith.constant 0 : index
    %c0_45 = arith.constant 0 : index
    %62 = vector.load %arg10[%c0_44, %c0_45] : memref<288x128xf32, #tpu.memory_space<vmem>>, vector<288x128xf32>
    %c0_46 = arith.constant 0 : index
    %c0_47 = arith.constant 0 : index
    %63 = vector.load %arg9[%c0_46, %c0_47] : memref<288x384xbf16, #tpu.memory_space<vmem>>, vector<288x384xbf16>
    %c384 = arith.constant 384 : index
    %c0_48 = arith.constant 0 : index
    %64 = vector.load %arg4[%c384, %c0_48] : memref<1152x128xbf16, #tpu.memory_space<vmem>>, vector<384x128xbf16>
    %cst_49 = arith.constant dense<0.000000e+00> : vector<288x128xf32>
    %65 = tpu.matmul %63, %64, %cst_49 {dimension_numbers = #tpu.dot_dimension_numbers<[1], [0], [0], [1], [0, 0, 1, 1], [], []>} : vector<288x384xbf16>, vector<384x128xbf16>, vector<288x128xf32> -> vector<288x128xf32>
    %66 = arith.addf %62, %65 : vector<288x128xf32>
    %c0_50 = arith.constant 0 : index
    %c0_51 = arith.constant 0 : index
    %67 = vector.load %arg10[%c0_50, %c0_51] : memref<288x128xf32, #tpu.memory_space<vmem>>, vector<288x128xf32>
    tpu.vector_store %arg10[%c0_50, %c0_51], %66 {strides = array<i32>} : memref<288x128xf32, #tpu.memory_space<vmem>>, vector<288x128xf32>,
    %c49 = arith.constant 49 : index
    %c0_52 = arith.constant 0 : index
    %68 = vector.load %arg8[%c49, %c0_52] : memref<352x128xbf16, #tpu.memory_space<vmem>>, vector<288x128xbf16>
    %c0_53 = arith.constant 0 : index
    %c0_54 = arith.constant 0 : index
    %69 = vector.load %arg9[%c0_53, %c0_54] : memref<288x384xbf16, #tpu.memory_space<vmem>>, vector<288x128xbf16>
    tpu.vector_store %arg9[%c0_53, %c0_54], %68 {strides = array<i32>} : memref<288x384xbf16, #tpu.memory_space<vmem>>, vector<288x128xbf16>,
    %c50 = arith.constant 50 : index
    %c0_55 = arith.constant 0 : index
    %70 = vector.load %arg8[%c50, %c0_55] : memref<352x128xbf16, #tpu.memory_space<vmem>>, vector<288x128xbf16>
    %c0_56 = arith.constant 0 : index
    %c128_57 = arith.constant 128 : index
    %71 = vector.load %arg9[%c0_56, %c128_57] : memref<288x384xbf16, #tpu.memory_space<vmem>>, vector<288x128xbf16>
    tpu.vector_store %arg9[%c0_56, %c128_57], %70 {strides = array<i32>} : memref<288x384xbf16, #tpu.memory_space<vmem>>, vector<288x128xbf16>,
    %c51 = arith.constant 51 : index
    %c0_58 = arith.constant 0 : index
    %72 = vector.load %arg8[%c51, %c0_58] : memref<352x128xbf16, #tpu.memory_space<vmem>>, vector<288x128xbf16>
    %c0_59 = arith.constant 0 : index
    %c256_60 = arith.constant 256 : index
    %73 = vector.load %arg9[%c0_59, %c256_60] : memref<288x384xbf16, #tpu.memory_space<vmem>>, vector<288x128xbf16>
    tpu.vector_store %arg9[%c0_59, %c256_60], %72 {strides = array<i32>} : memref<288x384xbf16, #tpu.memory_space<vmem>>, vector<288x128xbf16>,
    %c0_61 = arith.constant 0 : index
    %c0_62 = arith.constant 0 : index
    %74 = vector.load %arg10[%c0_61, %c0_62] : memref<288x128xf32, #tpu.memory_space<vmem>>, vector<288x128xf32>
    %c0_63 = arith.constant 0 : index
    %c0_64 = arith.constant 0 : index
    %75 = vector.load %arg9[%c0_63, %c0_64] : memref<288x384xbf16, #tpu.memory_space<vmem>>, vector<288x384xbf16>
    %c768 = arith.constant 768 : index
    %c0_65 = arith.constant 0 : index
    %76 = vector.load %arg4[%c768, %c0_65] : memref<1152x128xbf16, #tpu.memory_space<vmem>>, vector<384x128xbf16>
    %cst_66 = arith.constant dense<0.000000e+00> : vector<288x128xf32>
    %77 = tpu.matmul %75, %76, %cst_66 {dimension_numbers = #tpu.dot_dimension_numbers<[1], [0], [0], [1], [0, 0, 1, 1], [], []>} : vector<288x384xbf16>, vector<384x128xbf16>, vector<288x128xf32> -> vector<288x128xf32>
    %78 = arith.addf %74, %77 : vector<288x128xf32>
    %c0_67 = arith.constant 0 : index
    %c0_68 = arith.constant 0 : index
    %79 = vector.load %arg10[%c0_67, %c0_68] : memref<288x128xf32, #tpu.memory_space<vmem>>, vector<288x128xf32>
    tpu.vector_store %arg10[%c0_67, %c0_68], %78 {strides = array<i32>} : memref<288x128xf32, #tpu.memory_space<vmem>>, vector<288x128xf32>,
    %c0_69 = arith.constant 0 : index
    %c0_70 = arith.constant 0 : index
    %80 = vector.load %arg10[%c0_69, %c0_70] : memref<288x128xf32, #tpu.memory_space<vmem>>, vector<288x128xf32>
    %cst_71 = arith.constant 0.000000e+00 : f32
    %81 = vector.shape_cast %31 : vector<288x1xi1> to vector<288x1xi1>
    %82 = vector.broadcast %81 : vector<288x1xi1> to vector<288x128xi1>
    %83 = vector.broadcast %cst_71 : f32 to vector<288x128xf32>
    %84 = arith.select %82, %80, %83 : vector<288x128xi1>, vector<288x128xf32>
    %cst_72 = arith.constant dense<0.000000e+00> : vector<128xf32>
    %85 = vector.multi_reduction <add>, %84, %cst_72 [0] : vector<288x128xf32> to vector<128xf32>
    %86 = vector.shape_cast %85 : vector<128xf32> to vector<1x128xf32>
    %87 = arith.mulf %84, %84 : vector<288x128xf32>
    %cst_73 = arith.constant dense<0.000000e+00> : vector<128xf32>
    %88 = vector.multi_reduction <add>, %87, %cst_73 [0] : vector<288x128xf32> to vector<128xf32>
    %89 = vector.shape_cast %88 : vector<128xf32> to vector<1x128xf32>
    %90 = tpu.iota {dimensions = array<i32: 0>} : vector<8x128xi32>
    %c0_i32_74 = arith.constant 0 : i32
    %91 = vector.broadcast %c0_i32_74 : i32 to vector<8x128xi32>
    %92 = arith.cmpi eq, %90, %91 : vector<8x128xi32>
    %cst_75 = arith.constant 0.000000e+00 : f32
    %93 = vector.shape_cast %86 : vector<1x128xf32> to vector<1x128xf32>
    %94 = vector.broadcast %93 : vector<1x128xf32> to vector<8x128xf32>
    %95 = vector.broadcast %cst_75 : f32 to vector<8x128xf32>
    %96 = arith.select %92, %94, %95 : vector<8x128xi1>, vector<8x128xf32>
    %c0_76 = arith.constant 0 : index
    %c0_77 = arith.constant 0 : index
    %97 = vector.load %arg6[%c0_76, %c0_77] : memref<8x128xf32, #tpu.memory_space<vmem>>, vector<8x128xf32>
    tpu.vector_store %arg6[%c0_76, %c0_77], %96 {strides = array<i32>} : memref<8x128xf32, #tpu.memory_space<vmem>>, vector<8x128xf32>,
    %c0_i32_78 = arith.constant 0 : i32
    %98 = vector.broadcast %c0_i32_78 : i32 to vector<8x128xi32>
    %99 = arith.cmpi eq, %90, %98 : vector<8x128xi32>
    %cst_79 = arith.constant 0.000000e+00 : f32
    %100 = vector.shape_cast %89 : vector<1x128xf32> to vector<1x128xf32>
    %101 = vector.broadcast %100 : vector<1x128xf32> to vector<8x128xf32>
    %102 = vector.broadcast %cst_79 : f32 to vector<8x128xf32>
    %103 = arith.select %99, %101, %102 : vector<8x128xi1>, vector<8x128xf32>
    %c0_80 = arith.constant 0 : index
    %c0_81 = arith.constant 0 : index
    %104 = vector.load %arg7[%c0_80, %c0_81] : memref<8x128xf32, #tpu.memory_space<vmem>>, vector<8x128xf32>
    tpu.vector_store %arg7[%c0_80, %c0_81], %103 {strides = array<i32>} : memref<8x128xf32, #tpu.memory_space<vmem>>, vector<8x128xf32>,
    %105 = arith.truncf %80 : vector<288x128xf32> to vector<288x128xbf16>
    %c0_82 = arith.constant 0 : index
    %c0_83 = arith.constant 0 : index
    %106 = vector.load %arg5[%c0_82, %c0_83] : memref<288x128xbf16, #tpu.memory_space<vmem>>, vector<288x128xbf16>
    tpu.vector_store %arg5[%c0_82, %c0_83], %105 {strides = array<i32>} : memref<288x128xbf16, #tpu.memory_space<vmem>>, vector<288x128xbf16>,
    return
  }
  func.func @transform_0(%arg0: i32) -> (i32, i32) {
    %c0_i32 = arith.constant 0 : i32
    %c0_i32_0 = arith.constant 0 : i32
    return %arg0, %c0_i32 : i32, i32
  }
  func.func @transform_1(%arg0: i32) -> (i32, i32) {
    %c0_i32 = arith.constant 0 : i32
    %c0_i32_0 = arith.constant 0 : i32
    %c0_i32_1 = arith.constant 0 : i32
    return %c0_i32, %c0_i32_0 : i32, i32
  }
  func.func @transform_2(%arg0: i32) -> (i32, i32) {
    %c0_i32 = arith.constant 0 : i32
    %c0_i32_0 = arith.constant 0 : i32
    %c0_i32_1 = arith.constant 0 : i32
    return %c0_i32, %c0_i32_0 : i32, i32
  }
  func.func @transform_3(%arg0: i32) -> (i32, i32) {
    %c0_i32 = arith.constant 0 : i32
    %c0_i32_0 = arith.constant 0 : i32
    %c0_i32_1 = arith.constant 0 : i32
    return %c0_i32, %c0_i32_0 : i32, i32
  }
  func.func @transform_4(%arg0: i32) -> (i32, i32) {
    %c0_i32 = arith.constant 0 : i32
    %c0_i32_0 = arith.constant 0 : i32
    return %arg0, %c0_i32 : i32, i32
  }
  func.func @transform_5(%arg0: i32) -> (i32, i32) {
    %c0_i32 = arith.constant 0 : i32
    %c0_i32_0 = arith.constant 0 : i32
    return %arg0, %c0_i32 : i32, i32
  }
  func.func @transform_6(%arg0: i32) -> (i32, i32) {
    %c0_i32 = arith.constant 0 : i32
    %c0_i32_0 = arith.constant 0 : i32
    return %arg0, %c0_i32 : i32, i32
  }
}

module attributes {stable_mosaic.version = 11 : i64} {
  func.func @_final_kernel(%arg0: i32, %arg1: memref<288x128xbf16, #tpu.memory_space<vmem>>, %arg2: memref<1x128xf32, #tpu.memory_space<vmem>>, %arg3: memref<1x128xf32, #tpu.memory_space<vmem>>, %arg4: memref<288x128xf32, #tpu.memory_space<vmem>>) attributes {dimension_semantics = [#tpu.dimension_semantics<parallel>], iteration_bounds = array<i64: 2>, scalar_prefetch = 0 : i64, scratch_operands = 0 : i64, tpu.core_type = #tpu.core_type<tc>, window_params = [{transform_indices = @transform_0, window_bounds = array<i64: 288, 128>}, {pipeline_mode = #tpu.pipeline_mode<synchronous>, transform_indices = @transform_1, window_bounds = array<i64: 1, 128>}, {pipeline_mode = #tpu.pipeline_mode<synchronous>, transform_indices = @transform_2, window_bounds = array<i64: 1, 128>}, {transform_indices = @transform_3, window_bounds = array<i64: 288, 128>}]} {
    %c0 = arith.constant 0 : index
    %c0_0 = arith.constant 0 : index
    %0 = vector.load %arg1[%c0, %c0_0] : memref<288x128xbf16, #tpu.memory_space<vmem>>, vector<288x128xbf16>
    %1 = arith.extf %0 : vector<288x128xbf16> to vector<288x128xf32>
    %c0_1 = arith.constant 0 : index
    %c0_2 = arith.constant 0 : index
    %2 = vector.load %arg2[%c0_1, %c0_2] : memref<1x128xf32, #tpu.memory_space<vmem>>, vector<1x128xf32>
    %3 = vector.broadcast %2 : vector<1x128xf32> to vector<288x128xf32>
    %4 = arith.mulf %1, %3 : vector<288x128xf32>
    %c0_3 = arith.constant 0 : index
    %c0_4 = arith.constant 0 : index
    %5 = vector.load %arg3[%c0_3, %c0_4] : memref<1x128xf32, #tpu.memory_space<vmem>>, vector<1x128xf32>
    %6 = vector.broadcast %5 : vector<1x128xf32> to vector<288x128xf32>
    %7 = arith.addf %4, %6 : vector<288x128xf32>
    %cst = arith.constant 0.000000e+00 : f32
    %8 = vector.broadcast %cst : f32 to vector<288x128xf32>
    %9 = arith.maximumf %7, %8 : vector<288x128xf32>
    %c0_5 = arith.constant 0 : index
    %c0_6 = arith.constant 0 : index
    %10 = vector.load %arg4[%c0_5, %c0_6] : memref<288x128xf32, #tpu.memory_space<vmem>>, vector<288x128xf32>
    tpu.vector_store %arg4[%c0_5, %c0_6], %9 {strides = array<i32>} : memref<288x128xf32, #tpu.memory_space<vmem>>, vector<288x128xf32>,
    return
  }
  func.func @transform_0(%arg0: i32) -> (i32, i32) {
    %c0_i32 = arith.constant 0 : i32
    %c0_i32_0 = arith.constant 0 : i32
    return %arg0, %c0_i32 : i32, i32
  }
  func.func @transform_1(%arg0: i32) -> (i32, i32) {
    %c0_i32 = arith.constant 0 : i32
    %c0_i32_0 = arith.constant 0 : i32
    %c0_i32_1 = arith.constant 0 : i32
    return %c0_i32, %c0_i32_0 : i32, i32
  }
  func.func @transform_2(%arg0: i32) -> (i32, i32) {
    %c0_i32 = arith.constant 0 : i32
    %c0_i32_0 = arith.constant 0 : i32
    %c0_i32_1 = arith.constant 0 : i32
    return %c0_i32, %c0_i32_0 : i32, i32
  }
  func.func @transform_3(%arg0: i32) -> (i32, i32) {
    %c0_i32 = arith.constant 0 : i32
    %c0_i32_0 = arith.constant 0 : i32
    return %arg0, %c0_i32 : i32, i32
  }
}

</mosaic_0001>

<llo_original>
// kernel: double_conv.5
$region0: #{double_conv.5}
  #allocation0 [shape = 'u32[]', space=smem, size = 0x4, offset = 0x4, fixed_abs, tag = 'smem constant byte address 0x4 - core index']
  #allocation1 [shape = 'u32[144,128]{1,0:T(1,128)}', space=vmem, size = 0x12000, scoped, tag = 'internal scratch']
  %s0 = inlined_call_operand.vmem [shape: bf16[576,128], index: 0, kind: input, shape index: {}]
  %s1 = inlined_call_operand.vmem [shape: f32[1,128], index: 1, kind: input, shape index: {}]
  %s2 = inlined_call_operand.vmem [shape: f32[1,128], index: 2, kind: input, shape index: {}]
  %s3 = inlined_call_operand.vmem [shape: f32[576,128], index: 3, kind: output, shape index: {}]
  %s4 = sld [smem:[#allocation0]]
  $region45: #{double_conv.5} parent=0
    _
  %s6 = ssub.s32 1, %s4
  %s7 = scalar_select 0, %s6, %s4
  loop: start=0, step=1, limit=4
  $region2: #{double_conv.5} parent=0 // loop_pre_header
    _
  $region3: #{double_conv.5} parent=0 // loop_header
    %s9 = sphi 0, %s13
    %p10 = scmp.ge.s32.totalorder %s9, 4
    %s19 = sphi 0, %s21
    %s22 = sphi 0, %s19
    %s23 = sphi 0, %s22
    %s39 = sphi 0, %s23
    %s43 = sphi 0, %s43
    %s45 = sphi 0, %s43
    %s46 = sphi 0, %s45
    %s60 = sphi 0, %s46
    %s64 = sphi 0, %s64
    %s66 = sphi 0, %s64
    %s67 = sphi 0, %s66
    %s81 = sphi 0, %s67
    %s87 = sphi 0, %s89
    %s90 = sphi 0, %s87
    %s91 = sphi 0, %s90
    %s107 = sphi 0, %s91
  $region4: #{double_conv.5} parent=0 // loop_header_branch
    %12 = sbr.rel (%p10) target = $region8
  $region5: #{double_conv.5} parent=0 // loop_body
    %s14 = ssub.s32 %s9, 1
    %s15 = ssub.s32 %s9, 2
    %s16 = sadd.s32 %s9, 1
    %s17 = ssub.s32 %s9, %s16
    %p18 = scmp.eq.s32.totalorder %s17, 0
    %s20 = sadd.s32 %s19, 1
    %s21 = scalar_select %p18, %s19, %s20
    %p24 = pneg %p18
    %p25 = scmp.eq.s32.totalorder %s9, 1
    %p26 = por %p24, %p25
    %p27 = scmp.ne.s32.totalorder %s19, %s22
    %p28 = scmp.eq.s32.totalorder %s9, 0
    %p29 = por %p27, %p28
    %p30 = scmp.ne.s32.totalorder %s19, %s22
    %p31 = scmp.eq.s32.totalorder %s14, 1
    %p32 = por %p30, %p31
    %p33 = scmp.ne.s32.totalorder %s22, %s23
    %p34 = scmp.eq.s32.totalorder %s14, 0
    %p35 = por %p33, %p34
    %p36 = scmp.ne.s32.totalorder %s22, %s23
    %p37 = scmp.eq.s32.totalorder %s15, 1
    %p38 = por %p36, %p37
    %p40 = scmp.ne.s32.totalorder %s23, %s39
    %p41 = scmp.eq.s32.totalorder %s15, 0
    %p42 = por %p40, %p41
    %s44 = sadd.s32 %s43, 1
    %p47 = scmp.eq.s32.totalorder %s9, 1
    %p48 = scmp.ne.s32.totalorder %s43, %s45
    %p49 = scmp.eq.s32.totalorder %s9, 0
    %p50 = por %p48, %p49
    %p51 = scmp.ne.s32.totalorder %s43, %s45
    %p52 = scmp.eq.s32.totalorder %s14, 1
    %p53 = por %p51, %p52
    %p54 = scmp.ne.s32.totalorder %s45, %s46
    %p55 = scmp.eq.s32.totalorder %s14, 0
    %p56 = por %p54, %p55
    %p57 = scmp.ne.s32.totalorder %s45, %s46
    %p58 = scmp.eq.s32.totalorder %s15, 1
    %p59 = por %p57, %p58
    %p61 = scmp.ne.s32.totalorder %s46, %s60
    %p62 = scmp.eq.s32.totalorder %s15, 0
    %p63 = por %p61, %p62
    %s65 = sadd.s32 %s64, 1
    %p68 = scmp.eq.s32.totalorder %s9, 1
    %p69 = scmp.ne.s32.totalorder %s64, %s66
    %p70 = scmp.eq.s32.totalorder %s9, 0
    %p71 = por %p69, %p70
    %p72 = scmp.ne.s32.totalorder %s64, %s66
    %p73 = scmp.eq.s32.totalorder %s14, 1
    %p74 = por %p72, %p73
    %p75 = scmp.ne.s32.totalorder %s66, %s67
    %p76 = scmp.eq.s32.totalorder %s14, 0
    %p77 = por %p75, %p76
    %p78 = scmp.ne.s32.totalorder %s66, %s67
    %p79 = scmp.eq.s32.totalorder %s15, 1
    %p80 = por %p78, %p79
    %p82 = scmp.ne.s32.totalorder %s67, %s81
    %p83 = scmp.eq.s32.totalorder %s15, 0
    %p84 = por %p82, %p83
    %s85 = ssub.s32 %s9, %s16
    %p86 = scmp.eq.s32.totalorder %s85, 0
    %s88 = sadd.s32 %s87, 1
    %s89 = scalar_select %p86, %s87, %s88
    %p92 = pneg %p86
    %p93 = scmp.eq.s32.totalorder %s9, 1
    %p94 = por %p92, %p93
    %p95 = scmp.ne.s32.totalorder %s87, %s90
    %p96 = scmp.eq.s32.totalorder %s9, 0
    %p97 = por %p95, %p96
    %p98 = scmp.ne.s32.totalorder %s87, %s90
    %p99 = scmp.eq.s32.totalorder %s14, 1
    %p100 = por %p98, %p99
    %p101 = scmp.ne.s32.totalorder %s90, %s91
    %p102 = scmp.eq.s32.totalorder %s14, 0
    %p103 = por %p101, %p102
    %p104 = scmp.ne.s32.totalorder %s90, %s91
    %p105 = scmp.eq.s32.totalorder %s15, 1
    %p106 = por %p104, %p105
    %p108 = scmp.ne.s32.totalorder %s91, %s107
    %p109 = scmp.eq.s32.totalorder %s15, 0
    %p110 = por %p108, %p109
    %p111 = scmp.le.s32.totalorder 1, %s9
    %p112 = scmp.lt.s32.totalorder %s9, 3
    %p113 = pnand %p111, %p112
    %p114 = pneg %p113
    // Predicated region
    $region9: #{double_conv.5} parent=5 // pred_check
      _
    $region10: #{double_conv.5} parent=5 // pred_check_branch
      %116 = sbr.rel (%p113) target = $region12
    $region11: #{double_conv.5} parent=5 // pred_region
      %s117 = ssub.s32 %s9, 1
      // Predicated region
      $region13: #{double_conv.5} parent=11 // pred_check
        %p118 = pneg %p56
      $region14: #{double_conv.5} parent=11 // pred_check_branch
        %120 = sbr.rel (%p118) target = $region16
      $region15: #{double_conv.5} parent=11 // pred_region
        _
      $region16: #{double_conv.5} parent=11 // pred_fallthru
        _
      // Predicated region
      $region17: #{double_conv.5} parent=11 // pred_check
        %p121 = pneg %p77
      $region18: #{double_conv.5} parent=11 // pred_check_branch
        %123 = sbr.rel (%p121) target = $region20
      $region19: #{double_conv.5} parent=11 // pred_region
        _
      $region20: #{double_conv.5} parent=11 // pred_fallthru
        _
    $region12: #{double_conv.5} parent=5 // pred_fallthru
      _
    %p124 = scmp.lt.s32.totalorder %s9, 2
    // Predicated region
    $region21: #{double_conv.5} parent=5 // pred_check
      %p125 = pneg %p124
    $region22: #{double_conv.5} parent=5 // pred_check_branch
      %127 = sbr.rel (%p125) target = $region24
    $region23: #{double_conv.5} parent=5 // pred_region
      // Predicated region
      $region25: #{double_conv.5} parent=23 // pred_check
        %p128 = pneg %p29
      $region26: #{double_conv.5} parent=23 // pred_check_branch
        %130 = sbr.rel (%p128) target = $region28
      $region27: #{double_conv.5} parent=23 // pred_region
        %s131 = smul.u32 36, %s9
        %p132 = scmp.lt.s32.totalorder %s131, 71
        %s133 = scalar_select %p132, %s131, 71
        %s134 = smul.addr %s133, 4
        %s135 = scalar_lea.vmem %s0, %s134
        %s136 = smul.u32 36, %s9
      $region28: #{double_conv.5} parent=23 // pred_fallthru
        _
    $region24: #{double_conv.5} parent=5 // pred_fallthru
      _
    %p137 = scmp.le.s32.totalorder 1, %s9
    %p138 = scmp.lt.s32.totalorder %s9, 3
    %p139 = pnand %p137, %p138
    %p140 = pneg %p139
    // Predicated region
    $region29: #{double_conv.5} parent=5 // pred_check
      _
    $region30: #{double_conv.5} parent=5 // pred_check_branch
      %142 = sbr.rel (%p139) target = $region32
    $region31: #{double_conv.5} parent=5 // pred_region
      %s143 = ssub.s32 %s9, 1
      %s144 = smul.u32 36, %s14
      %p145 = scmp.lt.s32.totalorder %s144, 71
      %s146 = scalar_select %p145, %s144, 71
      %s147 = smul.addr %s146, 4
      %s148 = scalar_lea.vmem %s0, %s147
      %p149 = pneg %p35
      %p150 = pneg %p32
      %p151 = pneg %p56
      %p152 = pneg %p53
      %p153 = pneg %p77
      %p154 = pneg %p74
      %p155 = pneg %p103
      %p156 = pneg %p100
      %s157 = smul.u32 36, %s14
      %p158 = scmp.lt.s32.totalorder %s157, 71
      %s159 = scalar_select %p158, %s157, 71
      %s160 = smul.addr %s159, 8
      %s161 = scalar_lea.vmem %s3, %s160
      %s162 = smul.u32 36, %s14
      %p163 = scmp.lt.s32.totalorder %s162, 71
      %s164 = scalar_select %p163, %s162, 71
      %s165 = smul.addr %s164, 4
      %s166 = scalar_lea.vmem %s0, %s165
      %s167 = smul.u32 36, %s14
      %s168 = smul.u32 36, %s14
      %p169 = scmp.lt.s32.totalorder %s168, 71
      %s170 = scalar_select %p169, %s168, 71
      %s171 = smul.addr %s170, 8
      %s172 = scalar_lea.vmem %s3, %s171
      %s173 = smul.u32 36, %s14
      %v174 = vld [vmem:[%s166] sm:$0xf]
      %v175 = vld [vmem:[%s166 + $0x4] sm:$0xf]
      %v176 = vld [vmem:[%s166 + $0x8] sm:$0xf]
      %v177 = vld [vmem:[%s166 + $0xc] sm:$0xf]
      %v178 = vld [vmem:[%s166 + $0x10] sm:$0xf]
      %v179 = vld [vmem:[%s166 + $0x14] sm:$0xf]
      %v180 = vld [vmem:[%s166 + $0x18] sm:$0xf]
      %v181 = vld [vmem:[%s166 + $0x1c] sm:$0xf]
      %v182 = vld [vmem:[%s166 + $0x20] sm:$0xf]
      %v183 = vld [vmem:[%s166 + $0x24] sm:$0xf]
      %v184 = vld [vmem:[%s166 + $0x28] sm:$0xf]
      %v185 = vld [vmem:[%s166 + $0x2c] sm:$0xf]
      %v186 = vld [vmem:[%s166 + $0x30] sm:$0xf]
      %v187 = vld [vmem:[%s166 + $0x34] sm:$0xf]
      %v188 = vld [vmem:[%s166 + $0x38] sm:$0xf]
      %v189 = vld [vmem:[%s166 + $0x3c] sm:$0xf]
      %v190 = vld [vmem:[%s166 + $0x40] sm:$0xf]
      %v191 = vld [vmem:[%s166 + $0x44] sm:$0xf]
      %v192 = vld [vmem:[%s166 + $0x48] sm:$0xf]
      %v193 = vld [vmem:[%s166 + $0x4c] sm:$0xf]
      %v194 = vld [vmem:[%s166 + $0x50] sm:$0xf]
      %v195 = vld [vmem:[%s166 + $0x54] sm:$0xf]
      %v196 = vld [vmem:[%s166 + $0x58] sm:$0xf]
      %v197 = vld [vmem:[%s166 + $0x5c] sm:$0xf]
      %v198 = vld [vmem:[%s166 + $0x60] sm:$0xf]
      %v199 = vld [vmem:[%s166 + $0x64] sm:$0xf]
      %v200 = vld [vmem:[%s166 + $0x68] sm:$0xf]
      %v201 = vld [vmem:[%s166 + $0x6c] sm:$0xf]
      %v202 = vld [vmem:[%s166 + $0x70] sm:$0xf]
      %v203 = vld [vmem:[%s166 + $0x74] sm:$0xf]
      %v204 = vld [vmem:[%s166 + $0x78] sm:$0xf]
      %v205 = vld [vmem:[%s166 + $0x7c] sm:$0xf]
      %v206 = vld [vmem:[%s166 + $0x80] sm:$0xf]
      %v207 = vld [vmem:[%s166 + $0x84] sm:$0xf]
      %v208 = vld [vmem:[%s166 + $0x88] sm:$0xf]
      %v209 = vld [vmem:[%s166 + $0x8c] sm:$0xf]
      %v210 = vunpack.c.l.bf16 %v174
      %v211 = vunpack.c.l.bf16 %v175
      %v212 = vunpack.c.l.bf16 %v176
      %v213 = vunpack.c.l.bf16 %v177
      %v214 = vunpack.c.l.bf16 %v178
      %v215 = vunpack.c.l.bf16 %v179
      %v216 = vunpack.c.l.bf16 %v180
      %v217 = vunpack.c.l.bf16 %v181
      %v218 = vunpack.c.l.bf16 %v182
      %v219 = vunpack.c.l.bf16 %v183
      %v220 = vunpack.c.l.bf16 %v184
      %v221 = vunpack.c.l.bf16 %v185
      %v222 = vunpack.c.l.bf16 %v186
      %v223 = vunpack.c.l.bf16 %v187
      %v224 = vunpack.c.l.bf16 %v188
      %v225 = vunpack.c.l.bf16 %v189
      %v226 = vunpack.c.l.bf16 %v190
      %v227 = vunpack.c.l.bf16 %v191
      %v228 = vunpack.c.l.bf16 %v192
      %v229 = vunpack.c.l.bf16 %v193
      %v230 = vunpack.c.l.bf16 %v194
      %v231 = vunpack.c.l.bf16 %v195
      %v232 = vunpack.c.l.bf16 %v196
      %v233 = vunpack.c.l.bf16 %v197
      %v234 = vunpack.c.l.bf16 %v198
      %v235 = vunpack.c.l.bf16 %v199
      %v236 = vunpack.c.l.bf16 %v200
      %v237 = vunpack.c.l.bf16 %v201
      %v238 = vunpack.c.l.bf16 %v202
      %v239 = vunpack.c.l.bf16 %v203
      %v240 = vunpack.c.l.bf16 %v204
      %v241 = vunpack.c.l.bf16 %v205
      %v242 = vunpack.c.l.bf16 %v206
      %v243 = vunpack.c.l.bf16 %v207
      %v244 = vunpack.c.l.bf16 %v208
      %v245 = vunpack.c.l.bf16 %v209
      %v246 = vld [vmem:[%s1] sm:$0x1]
      %v248 = vlaneseq
      %v249 = vshrl.u32 %v248, 7
      %v250 = vsub.s32 0, %v249
      %v251 = vrot.slane %v246, %v250
      %v253 = vmul.f32 %v210, %v251
      %v254 = vmul.f32 %v211, %v251
      %v255 = vmul.f32 %v212, %v251
      %v256 = vmul.f32 %v213, %v251
      %v257 = vmul.f32 %v214, %v251
      %v258 = vmul.f32 %v215, %v251
      %v259 = vmul.f32 %v216, %v251
      %v260 = vmul.f32 %v217, %v251
      %v261 = vmul.f32 %v218, %v251
      %v262 = vmul.f32 %v219, %v251
      %v263 = vmul.f32 %v220, %v251
      %v264 = vmul.f32 %v221, %v251
      %v265 = vmul.f32 %v222, %v251
      %v266 = vmul.f32 %v223, %v251
      %v267 = vmul.f32 %v224, %v251
      %v268 = vmul.f32 %v225, %v251
      %v269 = vmul.f32 %v226, %v251
      %v270 = vmul.f32 %v227, %v251
      %v271 = vmul.f32 %v228, %v251
      %v272 = vmul.f32 %v229, %v251
      %v273 = vmul.f32 %v230, %v251
      %v274 = vmul.f32 %v231, %v251
      %v275 = vmul.f32 %v232, %v251
      %v276 = vmul.f32 %v233, %v251
      %v277 = vmul.f32 %v234, %v251
      %v278 = vmul.f32 %v235, %v251
      %v279 = vmul.f32 %v236, %v251
      %v280 = vmul.f32 %v237, %v251
      %v281 = vmul.f32 %v238, %v251
      %v282 = vmul.f32 %v239, %v251
      %v283 = vmul.f32 %v240, %v251
      %v284 = vmul.f32 %v241, %v251
      %v285 = vmul.f32 %v242, %v251
      %v286 = vmul.f32 %v243, %v251
      %v287 = vmul.f32 %v244, %v251
      %v288 = vmul.f32 %v245, %v251
      %v289 = vld [vmem:[%s2] sm:$0x1]
      %v291 = vlaneseq
      %v292 = vshrl.u32 %v291, 7
      %v293 = vsub.s32 0, %v292
      %v294 = vrot.slane %v289, %v293
      %v296 = vadd.f32 %v253, %v294
      %v297 = vadd.f32 %v254, %v294
      %v298 = vadd.f32 %v255, %v294
      %v299 = vadd.f32 %v256, %v294
      %v300 = vadd.f32 %v257, %v294
      %v301 = vadd.f32 %v258, %v294
      %v302 = vadd.f32 %v259, %v294
      %v303 = vadd.f32 %v260, %v294
      %v304 = vadd.f32 %v261, %v294
      %v305 = vadd.f32 %v262, %v294
      %v306 = vadd.f32 %v263, %v294
      %v307 = vadd.f32 %v264, %v294
      %v308 = vadd.f32 %v265, %v294
      %v309 = vadd.f32 %v266, %v294
      %v310 = vadd.f32 %v267, %v294
      %v311 = vadd.f32 %v268, %v294
      %v312 = vadd.f32 %v269, %v294
      %v313 = vadd.f32 %v270, %v294
      %v314 = vadd.f32 %v271, %v294
      %v315 = vadd.f32 %v272, %v294
      %v316 = vadd.f32 %v273, %v294
      %v317 = vadd.f32 %v274, %v294
      %v318 = vadd.f32 %v275, %v294
      %v319 = vadd.f32 %v276, %v294
      %v320 = vadd.f32 %v277, %v294
      %v321 = vadd.f32 %v278, %v294
      %v322 = vadd.f32 %v279, %v294
      %v323 = vadd.f32 %v280, %v294
      %v324 = vadd.f32 %v281, %v294
      %v325 = vadd.f32 %v282, %v294
      %v326 = vadd.f32 %v283, %v294
      %v327 = vadd.f32 %v284, %v294
      %v328 = vadd.f32 %v285, %v294
      %v329 = vadd.f32 %v286, %v294
      %v330 = vadd.f32 %v287, %v294
      %v331 = vadd.f32 %v288, %v294
      %v332 = vmax.f32 %v296, 0.0
      %v333 = vmax.f32 %v297, 0.0
      %v334 = vmax.f32 %v298, 0.0
      %v335 = vmax.f32 %v299, 0.0
      %v336 = vmax.f32 %v300, 0.0
      %v337 = vmax.f32 %v301, 0.0
      %v338 = vmax.f32 %v302, 0.0
      %v339 = vmax.f32 %v303, 0.0
      %v340 = vmax.f32 %v304, 0.0
      %v341 = vmax.f32 %v305, 0.0
      %v342 = vmax.f32 %v306, 0.0
      %v343 = vmax.f32 %v307, 0.0
      %v344 = vmax.f32 %v308, 0.0
      %v345 = vmax.f32 %v309, 0.0
      %v346 = vmax.f32 %v310, 0.0
      %v347 = vmax.f32 %v311, 0.0
      %v348 = vmax.f32 %v312, 0.0
      %v349 = vmax.f32 %v313, 0.0
      %v350 = vmax.f32 %v314, 0.0
      %v351 = vmax.f32 %v315, 0.0
      %v352 = vmax.f32 %v316, 0.0
      %v353 = vmax.f32 %v317, 0.0
      %v354 = vmax.f32 %v318, 0.0
      %v355 = vmax.f32 %v319, 0.0
      %v356 = vmax.f32 %v320, 0.0
      %v357 = vmax.f32 %v321, 0.0
      %v358 = vmax.f32 %v322, 0.0
      %v359 = vmax.f32 %v323, 0.0
      %v360 = vmax.f32 %v324, 0.0
      %v361 = vmax.f32 %v325, 0.0
      %v362 = vmax.f32 %v326, 0.0
      %v363 = vmax.f32 %v327, 0.0
      %v364 = vmax.f32 %v328, 0.0
      %v365 = vmax.f32 %v329, 0.0
      %v366 = vmax.f32 %v330, 0.0
      %v367 = vmax.f32 %v331, 0.0
      %368 = vst [vmem:[%s172] sm:$0xff] %v332
      %369 = vst [vmem:[%s172 + $0x8] sm:$0xff] %v333
      %370 = vst [vmem:[%s172 + $0x10] sm:$0xff] %v334
      %371 = vst [vmem:[%s172 + $0x18] sm:$0xff] %v335
      %372 = vst [vmem:[%s172 + $0x20] sm:$0xff] %v336
      %373 = vst [vmem:[%s172 + $0x28] sm:$0xff] %v337
      %374 = vst [vmem:[%s172 + $0x30] sm:$0xff] %v338
      %375 = vst [vmem:[%s172 + $0x38] sm:$0xff] %v339
      %376 = vst [vmem:[%s172 + $0x40] sm:$0xff] %v340
      %377 = vst [vmem:[%s172 + $0x48] sm:$0xff] %v341
      %378 = vst [vmem:[%s172 + $0x50] sm:$0xff] %v342
      %379 = vst [vmem:[%s172 + $0x58] sm:$0xff] %v343
      %380 = vst [vmem:[%s172 + $0x60] sm:$0xff] %v344
      %381 = vst [vmem:[%s172 + $0x68] sm:$0xff] %v345
      %382 = vst [vmem:[%s172 + $0x70] sm:$0xff] %v346
      %383 = vst [vmem:[%s172 + $0x78] sm:$0xff] %v347
      %384 = vst [vmem:[%s172 + $0x80] sm:$0xff] %v348
      %385 = vst [vmem:[%s172 + $0x88] sm:$0xff] %v349
      %386 = vst [vmem:[%s172 + $0x90] sm:$0xff] %v350
      %387 = vst [vmem:[%s172 + $0x98] sm:$0xff] %v351
      %388 = vst [vmem:[%s172 + $0xa0] sm:$0xff] %v352
      %389 = vst [vmem:[%s172 + $0xa8] sm:$0xff] %v353
      %390 = vst [vmem:[%s172 + $0xb0] sm:$0xff] %v354
      %391 = vst [vmem:[%s172 + $0xb8] sm:$0xff] %v355
      %392 = vst [vmem:[%s172 + $0xc0] sm:$0xff] %v356
      %393 = vst [vmem:[%s172 + $0xc8] sm:$0xff] %v357
      %394 = vst [vmem:[%s172 + $0xd0] sm:$0xff] %v358
      %395 = vst [vmem:[%s172 + $0xd8] sm:$0xff] %v359
      %396 = vst [vmem:[%s172 + $0xe0] sm:$0xff] %v360
      %397 = vst [vmem:[%s172 + $0xe8] sm:$0xff] %v361
      %398 = vst [vmem:[%s172 + $0xf0] sm:$0xff] %v362
      %399 = vst [vmem:[%s172 + $0xf8] sm:$0xff] %v363
      %400 = vst [vmem:[%s172 + $0x100] sm:$0xff] %v364
      %401 = vst [vmem:[%s172 + $0x108] sm:$0xff] %v365
      %402 = vst [vmem:[%s172 + $0x110] sm:$0xff] %v366
      %403 = vst [vmem:[%s172 + $0x118] sm:$0xff] %v367
      %s404 = smul.u32 36, %s14
      %p405 = scmp.lt.s32.totalorder %s404, 71
      %s406 = scalar_select %p405, %s404, 71
      %s407 = smul.addr %s406, 8
      %s408 = scalar_lea.vmem %s3, %s407
      // Predicated region
      $region33: #{double_conv.5} parent=31 // pred_check
        %p409 = pneg %p100
      $region34: #{double_conv.5} parent=31 // pred_check_branch
        %411 = sbr.rel (%p409) target = $region36
      $region35: #{double_conv.5} parent=31 // pred_region
        %s412 = smul.u32 36, %s14
      $region36: #{double_conv.5} parent=31 // pred_fallthru
        _
    $region32: #{double_conv.5} parent=5 // pred_fallthru
      _
    %p413 = scmp.le.s32.totalorder 2, %s9
    // Predicated region
    $region37: #{double_conv.5} parent=5 // pred_check
      %p414 = pneg %p413
    $region38: #{double_conv.5} parent=5 // pred_check_branch
      %416 = sbr.rel (%p414) target = $region40
    $region39: #{double_conv.5} parent=5 // pred_region
      %s417 = ssub.s32 %s9, 2
      // Predicated region
      $region41: #{double_conv.5} parent=39 // pred_check
        %p418 = pneg %p106
      $region42: #{double_conv.5} parent=39 // pred_check_branch
        %420 = sbr.rel (%p418) target = $region44
      $region43: #{double_conv.5} parent=39 // pred_region
        %s421 = smul.u32 36, %s15
        %p422 = scmp.lt.s32.totalorder %s421, 71
        %s423 = scalar_select %p422, %s421, 71
        %s424 = smul.addr %s423, 8
        %s425 = scalar_lea.vmem %s3, %s424
      $region44: #{double_conv.5} parent=39 // pred_fallthru
        _
    $region40: #{double_conv.5} parent=5 // pred_fallthru
      _
  $region6: #{double_conv.5} parent=0 // loop_footer
    %s13 = sadd.s32 1, %s9
  $region7: #{double_conv.5} parent=0 // loop_footer_branch
    %8 = sbr.rel target = $region3
  $region8: #{double_conv.5} parent=0 // loop_exit
    _

// kernel: double_conv.4
$region0: #{double_conv.4}
  #allocation0 [shape = 'u32[]', space=smem, size = 0x4, offset = 0x4, fixed_abs, tag = 'smem constant byte address 0x4 - core index']
  #allocation1 [shape = 'u32[144,128]{1,0:T(1,128)}', space=vmem, size = 0x12000, scoped, tag = 'internal scratch']
  #allocation2 [shape = 'bf16[352,128]{1,0:T(16,128)(2,1)}', space=vmem, size = 0x16000, scoped, tag = 'scratch operand']
  #allocation3 [shape = 'bf16[288,384]{1,0:T(16,128)(2,1)}', space=vmem, size = 0x36000, scoped, tag = 'scratch operand']
  #allocation4 [shape = 'f32[288,128]{1,0:T(8,128)}', space=vmem, size = 0x24000, scoped, tag = 'scratch operand']
  %s0 = inlined_call_operand.vmem [shape: bf16[576,128], index: 0, kind: input, shape index: {}]
  %s1 = inlined_call_operand.vmem [shape: f32[1,128], index: 1, kind: input, shape index: {}]
  %s2 = inlined_call_operand.vmem [shape: f32[1,128], index: 2, kind: input, shape index: {}]
  %s3 = inlined_call_operand.vmem [shape: bf16[1152,128], index: 3, kind: input, shape index: {}]
  %s4 = inlined_call_operand.vmem [shape: bf16[576,128], index: 4, kind: output, shape index: {0}]
  %s5 = inlined_call_operand.vmem [shape: f32[16,128], index: 5, kind: output, shape index: {1}]
  %s6 = inlined_call_operand.vmem [shape: f32[16,128], index: 6, kind: output, shape index: {2}]
  %7 = xla_tuple %s4, %s5, %s6
  %s8 = sld [smem:[#allocation0]]
  $region65: #{double_conv.4} parent=0
    _
  %s10 = ssub.s32 1, %s8
  %s11 = scalar_select 0, %s10, %s8
  loop: start=0, step=1, limit=4
  $region2: #{double_conv.4} parent=0 // loop_pre_header
    _
  $region3: #{double_conv.4} parent=0 // loop_header
    %s13 = sphi 0, %s17
    %p14 = scmp.ge.s32.totalorder %s13, 4
    %s23 = sphi 0, %s25
    %s26 = sphi 0, %s23
    %s27 = sphi 0, %s26
    %s43 = sphi 0, %s27
    %s47 = sphi 0, %s47
    %s49 = sphi 0, %s47
    %s50 = sphi 0, %s49
    %s64 = sphi 0, %s50
    %s68 = sphi 0, %s68
    %s70 = sphi 0, %s68
    %s71 = sphi 0, %s70
    %s85 = sphi 0, %s71
    %s89 = sphi 0, %s89
    %s91 = sphi 0, %s89
    %s92 = sphi 0, %s91
    %s106 = sphi 0, %s92
    %s112 = sphi 0, %s114
    %s115 = sphi 0, %s112
    %s116 = sphi 0, %s115
    %s132 = sphi 0, %s116
    %s138 = sphi 0, %s140
    %s141 = sphi 0, %s138
    %s142 = sphi 0, %s141
    %s158 = sphi 0, %s142
    %s164 = sphi 0, %s166
    %s167 = sphi 0, %s164
    %s168 = sphi 0, %s167
    %s184 = sphi 0, %s168
  $region4: #{double_conv.4} parent=0 // loop_header_branch
    %16 = sbr.rel (%p14) target = $region8
  $region5: #{double_conv.4} parent=0 // loop_body
    %s18 = ssub.s32 %s13, 1
    %s19 = ssub.s32 %s13, 2
    %s20 = sadd.s32 %s13, 1
    %s21 = ssub.s32 %s13, %s20
    %p22 = scmp.eq.s32.totalorder %s21, 0
    %s24 = sadd.s32 %s23, 1
    %s25 = scalar_select %p22, %s23, %s24
    %p28 = pneg %p22
    %p29 = scmp.eq.s32.totalorder %s13, 1
    %p30 = por %p28, %p29
    %p31 = scmp.ne.s32.totalorder %s23, %s26
    %p32 = scmp.eq.s32.totalorder %s13, 0
    %p33 = por %p31, %p32
    %p34 = scmp.ne.s32.totalorder %s23, %s26
    %p35 = scmp.eq.s32.totalorder %s18, 1
    %p36 = por %p34, %p35
    %p37 = scmp.ne.s32.totalorder %s26, %s27
    %p38 = scmp.eq.s32.totalorder %s18, 0
    %p39 = por %p37, %p38
    %p40 = scmp.ne.s32.totalorder %s26, %s27
    %p41 = scmp.eq.s32.totalorder %s19, 1
    %p42 = por %p40, %p41
    %p44 = scmp.ne.s32.totalorder %s27, %s43
    %p45 = scmp.eq.s32.totalorder %s19, 0
    %p46 = por %p44, %p45
    %s48 = sadd.s32 %s47, 1
    %p51 = scmp.eq.s32.totalorder %s13, 1
    %p52 = scmp.ne.s32.totalorder %s47, %s49
    %p53 = scmp.eq.s32.totalorder %s13, 0
    %p54 = por %p52, %p53
    %p55 = scmp.ne.s32.totalorder %s47, %s49
    %p56 = scmp.eq.s32.totalorder %s18, 1
    %p57 = por %p55, %p56
    %p58 = scmp.ne.s32.totalorder %s49, %s50
    %p59 = scmp.eq.s32.totalorder %s18, 0
    %p60 = por %p58, %p59
    %p61 = scmp.ne.s32.totalorder %s49, %s50
    %p62 = scmp.eq.s32.totalorder %s19, 1
    %p63 = por %p61, %p62
    %p65 = scmp.ne.s32.totalorder %s50, %s64
    %p66 = scmp.eq.s32.totalorder %s19, 0
    %p67 = por %p65, %p66
    %s69 = sadd.s32 %s68, 1
    %p72 = scmp.eq.s32.totalorder %s13, 1
    %p73 = scmp.ne.s32.totalorder %s68, %s70
    %p74 = scmp.eq.s32.totalorder %s13, 0
    %p75 = por %p73, %p74
    %p76 = scmp.ne.s32.totalorder %s68, %s70
    %p77 = scmp.eq.s32.totalorder %s18, 1
    %p78 = por %p76, %p77
    %p79 = scmp.ne.s32.totalorder %s70, %s71
    %p80 = scmp.eq.s32.totalorder %s18, 0
    %p81 = por %p79, %p80
    %p82 = scmp.ne.s32.totalorder %s70, %s71
    %p83 = scmp.eq.s32.totalorder %s19, 1
    %p84 = por %p82, %p83
    %p86 = scmp.ne.s32.totalorder %s71, %s85
    %p87 = scmp.eq.s32.totalorder %s19, 0
    %p88 = por %p86, %p87
    %s90 = sadd.s32 %s89, 1
    %p93 = scmp.eq.s32.totalorder %s13, 1
    %p94 = scmp.ne.s32.totalorder %s89, %s91
    %p95 = scmp.eq.s32.totalorder %s13, 0
    %p96 = por %p94, %p95
    %p97 = scmp.ne.s32.totalorder %s89, %s91
    %p98 = scmp.eq.s32.totalorder %s18, 1
    %p99 = por %p97, %p98
    %p100 = scmp.ne.s32.totalorder %s91, %s92
    %p101 = scmp.eq.s32.totalorder %s18, 0
    %p102 = por %p100, %p101
    %p103 = scmp.ne.s32.totalorder %s91, %s92
    %p104 = scmp.eq.s32.totalorder %s19, 1
    %p105 = por %p103, %p104
    %p107 = scmp.ne.s32.totalorder %s92, %s106
    %p108 = scmp.eq.s32.totalorder %s19, 0
    %p109 = por %p107, %p108
    %s110 = ssub.s32 %s13, %s20
    %p111 = scmp.eq.s32.totalorder %s110, 0
    %s113 = sadd.s32 %s112, 1
    %s114 = scalar_select %p111, %s112, %s113
    %p117 = pneg %p111
    %p118 = scmp.eq.s32.totalorder %s13, 1
    %p119 = por %p117, %p118
    %p120 = scmp.ne.s32.totalorder %s112, %s115
    %p121 = scmp.eq.s32.totalorder %s13, 0
    %p122 = por %p120, %p121
    %p123 = scmp.ne.s32.totalorder %s112, %s115
    %p124 = scmp.eq.s32.totalorder %s18, 1
    %p125 = por %p123, %p124
    %p126 = scmp.ne.s32.totalorder %s115, %s116
    %p127 = scmp.eq.s32.totalorder %s18, 0
    %p128 = por %p126, %p127
    %p129 = scmp.ne.s32.totalorder %s115, %s116
    %p130 = scmp.eq.s32.totalorder %s19, 1
    %p131 = por %p129, %p130
    %p133 = scmp.ne.s32.totalorder %s116, %s132
    %p134 = scmp.eq.s32.totalorder %s19, 0
    %p135 = por %p133, %p134
    %s136 = ssub.s32 %s13, %s20
    %p137 = scmp.eq.s32.totalorder %s136, 0
    %s139 = sadd.s32 %s138, 1
    %s140 = scalar_select %p137, %s138, %s139
    %p143 = pneg %p137
    %p144 = scmp.eq.s32.totalorder %s13, 1
    %p145 = por %p143, %p144
    %p146 = scmp.ne.s32.totalorder %s138, %s141
    %p147 = scmp.eq.s32.totalorder %s13, 0
    %p148 = por %p146, %p147
    %p149 = scmp.ne.s32.totalorder %s138, %s141
    %p150 = scmp.eq.s32.totalorder %s18, 1
    %p151 = por %p149, %p150
    %p152 = scmp.ne.s32.totalorder %s141, %s142
    %p153 = scmp.eq.s32.totalorder %s18, 0
    %p154 = por %p152, %p153
    %p155 = scmp.ne.s32.totalorder %s141, %s142
    %p156 = scmp.eq.s32.totalorder %s19, 1
    %p157 = por %p155, %p156
    %p159 = scmp.ne.s32.totalorder %s142, %s158
    %p160 = scmp.eq.s32.totalorder %s19, 0
    %p161 = por %p159, %p160
    %s162 = ssub.s32 %s13, %s20
    %p163 = scmp.eq.s32.totalorder %s162, 0
    %s165 = sadd.s32 %s164, 1
    %s166 = scalar_select %p163, %s164, %s165
    %p169 = pneg %p163
    %p170 = scmp.eq.s32.totalorder %s13, 1
    %p171 = por %p169, %p170
    %p172 = scmp.ne.s32.totalorder %s164, %s167
    %p173 = scmp.eq.s32.totalorder %s13, 0
    %p174 = por %p172, %p173
    %p175 = scmp.ne.s32.totalorder %s164, %s167
    %p176 = scmp.eq.s32.totalorder %s18, 1
    %p177 = por %p175, %p176
    %p178 = scmp.ne.s32.totalorder %s167, %s168
    %p179 = scmp.eq.s32.totalorder %s18, 0
    %p180 = por %p178, %p179
    %p181 = scmp.ne.s32.totalorder %s167, %s168
    %p182 = scmp.eq.s32.totalorder %s19, 1
    %p183 = por %p181, %p182
    %p185 = scmp.ne.s32.totalorder %s168, %s184
    %p186 = scmp.eq.s32.totalorder %s19, 0
    %p187 = por %p185, %p186
    %p188 = scmp.le.s32.totalorder 1, %s13
    %p189 = scmp.lt.s32.totalorder %s13, 3
    %p190 = pnand %p188, %p189
    %p191 = pneg %p190
    // Predicated region
    $region9: #{double_conv.4} parent=5 // pred_check
      _
    $region10: #{double_conv.4} parent=5 // pred_check_branch
      %193 = sbr.rel (%p190) target = $region12
    $region11: #{double_conv.4} parent=5 // pred_region
      %s194 = ssub.s32 %s13, 1
      // Predicated region
      $region13: #{double_conv.4} parent=11 // pred_check
        %p195 = pneg %p60
      $region14: #{double_conv.4} parent=11 // pred_check_branch
        %197 = sbr.rel (%p195) target = $region16
      $region15: #{double_conv.4} parent=11 // pred_region
        _
      $region16: #{double_conv.4} parent=11 // pred_fallthru
        _
      // Predicated region
      $region17: #{double_conv.4} parent=11 // pred_check
        %p198 = pneg %p81
      $region18: #{double_conv.4} parent=11 // pred_check_branch
        %200 = sbr.rel (%p198) target = $region20
      $region19: #{double_conv.4} parent=11 // pred_region
        _
      $region20: #{double_conv.4} parent=11 // pred_fallthru
        _
      // Predicated region
      $region21: #{double_conv.4} parent=11 // pred_check
        %p201 = pneg %p102
      $region22: #{double_conv.4} parent=11 // pred_check_branch
        %203 = sbr.rel (%p201) target = $region24
      $region23: #{double_conv.4} parent=11 // pred_region
        _
      $region24: #{double_conv.4} parent=11 // pred_fallthru
        _
    $region12: #{double_conv.4} parent=5 // pred_fallthru
      _
    %p204 = scmp.lt.s32.totalorder %s13, 2
    // Predicated region
    $region25: #{double_conv.4} parent=5 // pred_check
      %p205 = pneg %p204
    $region26: #{double_conv.4} parent=5 // pred_check_branch
      %207 = sbr.rel (%p205) target = $region28
    $region27: #{double_conv.4} parent=5 // pred_region
      // Predicated region
      $region29: #{double_conv.4} parent=27 // pred_check
        %p208 = pneg %p33
      $region30: #{double_conv.4} parent=27 // pred_check_branch
        %210 = sbr.rel (%p208) target = $region32
      $region31: #{double_conv.4} parent=27 // pred_region
        %s211 = smul.u32 36, %s13
        %p212 = scmp.lt.s32.totalorder %s211, 71
        %s213 = scalar_select %p212, %s211, 71
        %s214 = smul.addr %s213, 4
        %s215 = scalar_lea.vmem %s0, %s214
        %s216 = smul.u32 36, %s13
      $region32: #{double_conv.4} parent=27 // pred_fallthru
        _
    $region28: #{double_conv.4} parent=5 // pred_fallthru
      _
    %p217 = scmp.le.s32.totalorder 1, %s13
    %p218 = scmp.lt.s32.totalorder %s13, 3
    %p219 = pnand %p217, %p218
    %p220 = pneg %p219
    // Predicated region
    $region33: #{double_conv.4} parent=5 // pred_check
      _
    $region34: #{double_conv.4} parent=5 // pred_check_branch
      %222 = sbr.rel (%p219) target = $region36
    $region35: #{double_conv.4} parent=5 // pred_region
      %s223 = ssub.s32 %s13, 1
      %s224 = smul.u32 36, %s18
      %p225 = scmp.lt.s32.totalorder %s224, 71
      %s226 = scalar_select %p225, %s224, 71
      %s227 = smul.addr %s226, 4
      %s228 = scalar_lea.vmem %s0, %s227
      %p229 = pneg %p39
      %p230 = pneg %p36
      %p231 = pneg %p60
      %p232 = pneg %p57
      %p233 = pneg %p81
      %p234 = pneg %p78
      %p235 = pneg %p102
      %p236 = pneg %p99
      %p237 = pneg %p128
      %p238 = pneg %p125
      %s239 = smul.u32 36, %s18
      %p240 = scmp.lt.s32.totalorder %s239, 71
      %s241 = scalar_select %p240, %s239, 71
      %s242 = smul.addr %s241, 4
      %s243 = scalar_lea.vmem %s4, %s242
      %p244 = pneg %p154
      %p245 = pneg %p151
      %p246 = scmp.lt.s32.totalorder %s18, 1
      %s247 = scalar_select %p246, %s18, 1
      %s248 = smul.addr %s247, 8
      %s249 = scalar_lea.vmem %s5, %s248
      %p250 = pneg %p180
      %p251 = pneg %p177
      %p252 = scmp.lt.s32.totalorder %s18, 1
      %s253 = scalar_select %p252, %s18, 1
      %s254 = smul.addr %s253, 8
      %s255 = scalar_lea.vmem %s6, %s254
      %s256 = smul.u32 36, %s18
      %p257 = scmp.lt.s32.totalorder %s256, 71
      %s258 = scalar_select %p257, %s256, 71
      %s259 = smul.addr %s258, 4
      %s260 = scalar_lea.vmem %s0, %s259
      %s261 = smul.u32 36, %s18
      %s262 = smul.u32 36, %s18
      %p263 = scmp.lt.s32.totalorder %s262, 71
      %s264 = scalar_select %p263, %s262, 71
      %s265 = smul.addr %s264, 4
      %s266 = scalar_lea.vmem %s4, %s265
      %s267 = smul.u32 36, %s18
      %p268 = scmp.lt.s32.totalorder %s18, 1
      %s269 = scalar_select %p268, %s18, 1
      %s270 = smul.addr %s269, 8
      %s271 = scalar_lea.vmem %s5, %s270
      %p272 = scmp.lt.s32.totalorder %s18, 1
      %s273 = scalar_select %p272, %s18, 1
      %s274 = smul.addr %s273, 8
      %s275 = scalar_lea.vmem %s6, %s274
      %v277 = vld [vmem:[%s260] sm:$0xf]
      %v278 = vld [vmem:[%s260 + $0x4] sm:$0xf]
      %v279 = vld [vmem:[%s260 + $0x8] sm:$0xf]
      %v280 = vld [vmem:[%s260 + $0xc] sm:$0xf]
      %v281 = vld [vmem:[%s260 + $0x10] sm:$0xf]
      %v282 = vld [vmem:[%s260 + $0x14] sm:$0xf]
      %v283 = vld [vmem:[%s260 + $0x18] sm:$0xf]
      %v284 = vld [vmem:[%s260 + $0x1c] sm:$0xf]
      %v285 = vld [vmem:[%s260 + $0x20] sm:$0xf]
      %v286 = vld [vmem:[%s260 + $0x24] sm:$0xf]
      %v287 = vld [vmem:[%s260 + $0x28] sm:$0xf]
      %v288 = vld [vmem:[%s260 + $0x2c] sm:$0xf]
      %v289 = vld [vmem:[%s260 + $0x30] sm:$0xf]
      %v290 = vld [vmem:[%s260 + $0x34] sm:$0xf]
      %v291 = vld [vmem:[%s260 + $0x38] sm:$0xf]
      %v292 = vld [vmem:[%s260 + $0x3c] sm:$0xf]
      %v293 = vld [vmem:[%s260 + $0x40] sm:$0xf]
      %v294 = vld [vmem:[%s260 + $0x44] sm:$0xf]
      %v295 = vld [vmem:[%s260 + $0x48] sm:$0xf]
      %v296 = vld [vmem:[%s260 + $0x4c] sm:$0xf]
      %v297 = vld [vmem:[%s260 + $0x50] sm:$0xf]
      %v298 = vld [vmem:[%s260 + $0x54] sm:$0xf]
      %v299 = vld [vmem:[%s260 + $0x58] sm:$0xf]
      %v300 = vld [vmem:[%s260 + $0x5c] sm:$0xf]
      %v301 = vld [vmem:[%s260 + $0x60] sm:$0xf]
      %v302 = vld [vmem:[%s260 + $0x64] sm:$0xf]
      %v303 = vld [vmem:[%s260 + $0x68] sm:$0xf]
      %v304 = vld [vmem:[%s260 + $0x6c] sm:$0xf]
      %v305 = vld [vmem:[%s260 + $0x70] sm:$0xf]
      %v306 = vld [vmem:[%s260 + $0x74] sm:$0xf]
      %v307 = vld [vmem:[%s260 + $0x78] sm:$0xf]
      %v308 = vld [vmem:[%s260 + $0x7c] sm:$0xf]
      %v309 = vld [vmem:[%s260 + $0x80] sm:$0xf]
      %v310 = vld [vmem:[%s260 + $0x84] sm:$0xf]
      %v311 = vld [vmem:[%s260 + $0x88] sm:$0xf]
      %v312 = vld [vmem:[%s260 + $0x8c] sm:$0xf]
      %v313 = vunpack.c.l.bf16 %v277
      %v314 = vunpack.c.l.bf16 %v278
      %v315 = vunpack.c.l.bf16 %v279
      %v316 = vunpack.c.l.bf16 %v280
      %v317 = vunpack.c.l.bf16 %v281
      %v318 = vunpack.c.l.bf16 %v282
      %v319 = vunpack.c.l.bf16 %v283
      %v320 = vunpack.c.l.bf16 %v284
      %v321 = vunpack.c.l.bf16 %v285
      %v322 = vunpack.c.l.bf16 %v286
      %v323 = vunpack.c.l.bf16 %v287
      %v324 = vunpack.c.l.bf16 %v288
      %v325 = vunpack.c.l.bf16 %v289
      %v326 = vunpack.c.l.bf16 %v290
      %v327 = vunpack.c.l.bf16 %v291
      %v328 = vunpack.c.l.bf16 %v292
      %v329 = vunpack.c.l.bf16 %v293
      %v330 = vunpack.c.l.bf16 %v294
      %v331 = vunpack.c.l.bf16 %v295
      %v332 = vunpack.c.l.bf16 %v296
      %v333 = vunpack.c.l.bf16 %v297
      %v334 = vunpack.c.l.bf16 %v298
      %v335 = vunpack.c.l.bf16 %v299
      %v336 = vunpack.c.l.bf16 %v300
      %v337 = vunpack.c.l.bf16 %v301
      %v338 = vunpack.c.l.bf16 %v302
      %v339 = vunpack.c.l.bf16 %v303
      %v340 = vunpack.c.l.bf16 %v304
      %v341 = vunpack.c.l.bf16 %v305
      %v342 = vunpack.c.l.bf16 %v306
      %v343 = vunpack.c.l.bf16 %v307
      %v344 = vunpack.c.l.bf16 %v308
      %v345 = vunpack.c.l.bf16 %v309
      %v346 = vunpack.c.l.bf16 %v310
      %v347 = vunpack.c.l.bf16 %v311
      %v348 = vunpack.c.l.bf16 %v312
      %v349 = vld [vmem:[%s1] sm:$0x1]
      %v351 = vlaneseq
      %v352 = vshrl.u32 %v351, 7
      %v353 = vsub.s32 0, %v352
      %v354 = vrot.slane %v349, %v353
      %v356 = vmul.f32 %v313, %v354
      %v357 = vmul.f32 %v314, %v354
      %v358 = vmul.f32 %v315, %v354
      %v359 = vmul.f32 %v316, %v354
      %v360 = vmul.f32 %v317, %v354
      %v361 = vmul.f32 %v318, %v354
      %v362 = vmul.f32 %v319, %v354
      %v363 = vmul.f32 %v320, %v354
      %v364 = vmul.f32 %v321, %v354
      %v365 = vmul.f32 %v322, %v354
      %v366 = vmul.f32 %v323, %v354
      %v367 = vmul.f32 %v324, %v354
      %v368 = vmul.f32 %v325, %v354
      %v369 = vmul.f32 %v326, %v354
      %v370 = vmul.f32 %v327, %v354
      %v371 = vmul.f32 %v328, %v354
      %v372 = vmul.f32 %v329, %v354
      %v373 = vmul.f32 %v330, %v354
      %v374 = vmul.f32 %v331, %v354
      %v375 = vmul.f32 %v332, %v354
      %v376 = vmul.f32 %v333, %v354
      %v377 = vmul.f32 %v334, %v354
      %v378 = vmul.f32 %v335, %v354
      %v379 = vmul.f32 %v336, %v354
      %v380 = vmul.f32 %v337, %v354
      %v381 = vmul.f32 %v338, %v354
      %v382 = vmul.f32 %v339, %v354
      %v383 = vmul.f32 %v340, %v354
      %v384 = vmul.f32 %v341, %v354
      %v385 = vmul.f32 %v342, %v354
      %v386 = vmul.f32 %v343, %v354
      %v387 = vmul.f32 %v344, %v354
      %v388 = vmul.f32 %v345, %v354
      %v389 = vmul.f32 %v346, %v354
      %v390 = vmul.f32 %v347, %v354
      %v391 = vmul.f32 %v348, %v354
      %v392 = vld [vmem:[%s2] sm:$0x1]
      %v394 = vlaneseq
      %v395 = vshrl.u32 %v394, 7
      %v396 = vsub.s32 0, %v395
      %v397 = vrot.slane %v392, %v396
      %v399 = vadd.f32 %v356, %v397
      %v400 = vadd.f32 %v357, %v397
      %v401 = vadd.f32 %v358, %v397
      %v402 = vadd.f32 %v359, %v397
      %v403 = vadd.f32 %v360, %v397
      %v404 = vadd.f32 %v361, %v397
      %v405 = vadd.f32 %v362, %v397
      %v406 = vadd.f32 %v363, %v397
      %v407 = vadd.f32 %v364, %v397
      %v408 = vadd.f32 %v365, %v397
      %v409 = vadd.f32 %v366, %v397
      %v410 = vadd.f32 %v367, %v397
      %v411 = vadd.f32 %v368, %v397
      %v412 = vadd.f32 %v369, %v397
      %v413 = vadd.f32 %v370, %v397
      %v414 = vadd.f32 %v371, %v397
      %v415 = vadd.f32 %v372, %v397
      %v416 = vadd.f32 %v373, %v397
      %v417 = vadd.f32 %v374, %v397
      %v418 = vadd.f32 %v375, %v397
      %v419 = vadd.f32 %v376, %v397
      %v420 = vadd.f32 %v377, %v397
      %v421 = vadd.f32 %v378, %v397
      %v422 = vadd.f32 %v379, %v397
      %v423 = vadd.f32 %v380, %v397
      %v424 = vadd.f32 %v381, %v397
      %v425 = vadd.f32 %v382, %v397
      %v426 = vadd.f32 %v383, %v397
      %v427 = vadd.f32 %v384, %v397
      %v428 = vadd.f32 %v385, %v397
      %v429 = vadd.f32 %v386, %v397
      %v430 = vadd.f32 %v387, %v397
      %v431 = vadd.f32 %v388, %v397
      %v432 = vadd.f32 %v389, %v397
      %v433 = vadd.f32 %v390, %v397
      %v434 = vadd.f32 %v391, %v397
      %v435 = vmax.f32 %v399, 0.0
      %v436 = vmax.f32 %v400, 0.0
      %v437 = vmax.f32 %v401, 0.0
      %v438 = vmax.f32 %v402, 0.0
      %v439 = vmax.f32 %v403, 0.0
      %v440 = vmax.f32 %v404, 0.0
      %v441 = vmax.f32 %v405, 0.0
      %v442 = vmax.f32 %v406, 0.0
      %v443 = vmax.f32 %v407, 0.0
      %v444 = vmax.f32 %v408, 0.0
      %v445 = vmax.f32 %v409, 0.0
      %v446 = vmax.f32 %v410, 0.0
      %v447 = vmax.f32 %v411, 0.0
      %v448 = vmax.f32 %v412, 0.0
      %v449 = vmax.f32 %v413, 0.0
      %v450 = vmax.f32 %v414, 0.0
      %v451 = vmax.f32 %v415, 0.0
      %v452 = vmax.f32 %v416, 0.0
      %v453 = vmax.f32 %v417, 0.0
      %v454 = vmax.f32 %v418, 0.0
      %v455 = vmax.f32 %v419, 0.0
      %v456 = vmax.f32 %v420, 0.0
      %v457 = vmax.f32 %v421, 0.0
      %v458 = vmax.f32 %v422, 0.0
      %v459 = vmax.f32 %v423, 0.0
      %v460 = vmax.f32 %v424, 0.0
      %v461 = vmax.f32 %v425, 0.0
      %v462 = vmax.f32 %v426, 0.0
      %v463 = vmax.f32 %v427, 0.0
      %v464 = vmax.f32 %v428, 0.0
      %v465 = vmax.f32 %v429, 0.0
      %v466 = vmax.f32 %v430, 0.0
      %v467 = vmax.f32 %v431, 0.0
      %v468 = vmax.f32 %v432, 0.0
      %v469 = vmax.f32 %v433, 0.0
      %v470 = vmax.f32 %v434, 0.0
      %v471 = vlaneseq
      %v472 = vshrl.u32 %v471, 7
      %v473 = vadd.s32 %v472, 8
      %v474 = vadd.s32 %v472, 16
      %v475 = vadd.s32 %v472, 24
      %v476 = vadd.s32 %v472, 32
      %v477 = vadd.s32 %v472, 40
      %v478 = vadd.s32 %v472, 48
      %v479 = vadd.s32 %v472, 56
      %v480 = vadd.s32 %v472, 64
      %v481 = vadd.s32 %v472, 72
      %v482 = vadd.s32 %v472, 80
      %v483 = vadd.s32 %v472, 88
      %v484 = vadd.s32 %v472, 96
      %v485 = vadd.s32 %v472, 104
      %v486 = vadd.s32 %v472, 112
      %v487 = vadd.s32 %v472, 120
      %v488 = vadd.s32 %v472, 128
      %v489 = vadd.s32 %v472, 136
      %v490 = vadd.s32 %v472, 144
      %v491 = vadd.s32 %v472, 152
      %v492 = vadd.s32 %v472, 160
      %v493 = vadd.s32 %v472, 168
      %v494 = vadd.s32 %v472, 176
      %v495 = vadd.s32 %v472, 184
      %v496 = vadd.s32 %v472, 192
      %v497 = vadd.s32 %v472, 200
      %v498 = vadd.s32 %v472, 208
      %v499 = vadd.s32 %v472, 216
      %v500 = vadd.s32 %v472, 224
      %v501 = vadd.s32 %v472, 232
      %v502 = vadd.s32 %v472, 240
      %v503 = vadd.s32 %v472, 248
      %v504 = vadd.s32 %v472, 256
      %v505 = vadd.s32 %v472, 264
      %v506 = vadd.s32 %v472, 272
      %v507 = vadd.s32 %v472, 280
      %vm508 = vcmp.lt.s32.totalorder %v472, 288
      %vm509 = vcmp.lt.s32.totalorder %v473, 288
      %vm510 = vcmp.lt.s32.totalorder %v474, 288
      %vm511 = vcmp.lt.s32.totalorder %v475, 288
      %vm512 = vcmp.lt.s32.totalorder %v476, 288
      %vm513 = vcmp.lt.s32.totalorder %v477, 288
      %vm514 = vcmp.lt.s32.totalorder %v478, 288
      %vm515 = vcmp.lt.s32.totalorder %v479, 288
      %vm516 = vcmp.lt.s32.totalorder %v480, 288
      %vm517 = vcmp.lt.s32.totalorder %v481, 288
      %vm518 = vcmp.lt.s32.totalorder %v482, 288
      %vm519 = vcmp.lt.s32.totalorder %v483, 288
      %vm520 = vcmp.lt.s32.totalorder %v484, 288
      %vm521 = vcmp.lt.s32.totalorder %v485, 288
      %vm522 = vcmp.lt.s32.totalorder %v486, 288
      %vm523 = vcmp.lt.s32.totalorder %v487, 288
      %vm524 = vcmp.lt.s32.totalorder %v488, 288
      %vm525 = vcmp.lt.s32.totalorder %v489, 288
      %vm526 = vcmp.lt.s32.totalorder %v490, 288
      %vm527 = vcmp.lt.s32.totalorder %v491, 288
      %vm528 = vcmp.lt.s32.totalorder %v492, 288
      %vm529 = vcmp.lt.s32.totalorder %v493, 288
      %vm530 = vcmp.lt.s32.totalorder %v494, 288
      %vm531 = vcmp.lt.s32.totalorder %v495, 288
      %vm532 = vcmp.lt.s32.totalorder %v496, 288
      %vm533 = vcmp.lt.s32.totalorder %v497, 288
      %vm534 = vcmp.lt.s32.totalorder %v498, 288
      %vm535 = vcmp.lt.s32.totalorder %v499, 288
      %vm536 = vcmp.lt.s32.totalorder %v500, 288
      %vm537 = vcmp.lt.s32.totalorder %v501, 288
      %vm538 = vcmp.lt.s32.totalorder %v502, 288
      %vm539 = vcmp.lt.s32.totalorder %v503, 288
      %vm540 = vcmp.lt.s32.totalorder %v504, 288
      %vm541 = vcmp.lt.s32.totalorder %v505, 288
      %vm542 = vcmp.lt.s32.totalorder %v506, 288
      %vm543 = vcmp.lt.s32.totalorder %v507, 288
      %vm544 = vcmp.lt.s32.totalorder %v472, 0
      %v545 = vsub.s32 0, %v472
      %v546 = vsel %vm544, %v545, %v472
      %v547 = vmul.u32.u64.compose %v546, 3817748708
      %v548 = vextract.low.u32 %v547
      %v549 = vextract.high.u32 %v547
      %v550 = vshrl.u32 %v549, 4
      %v551 = vmul.u32 %v550, 18
      %v552 = vsub.s32 %v546, %v551
      %v553 = vsub.s32 0, %v552
      %v554 = vsel %vm544, %v553, %v552
      %vm555 = vcmp.lt.s32.totalorder %v473, 0
      %v556 = vsub.s32 0, %v473
      %v557 = vsel %vm555, %v556, %v473
      %v558 = vmul.u32.u64.compose %v557, 3817748708
      %v559 = vextract.low.u32 %v558
      %v560 = vextract.high.u32 %v558
      %v561 = vshrl.u32 %v560, 4
      %v562 = vmul.u32 %v561, 18
      %v563 = vsub.s32 %v557, %v562
      %v564 = vsub.s32 0, %v563
      %v565 = vsel %vm555, %v564, %v563
      %vm566 = vcmp.lt.s32.totalorder %v474, 0
      %v567 = vsub.s32 0, %v474
      %v568 = vsel %vm566, %v567, %v474
      %v569 = vmul.u32.u64.compose %v568, 3817748708
      %v570 = vextract.low.u32 %v569
      %v571 = vextract.high.u32 %v569
      %v572 = vshrl.u32 %v571, 4
      %v573 = vmul.u32 %v572, 18
      %v574 = vsub.s32 %v568, %v573
      %v575 = vsub.s32 0, %v574
      %v576 = vsel %vm566, %v575, %v574
      %vm577 = vcmp.lt.s32.totalorder %v475, 0
      %v578 = vsub.s32 0, %v475
      %v579 = vsel %vm577, %v578, %v475
      %v580 = vmul.u32.u64.compose %v579, 3817748708
      %v581 = vextract.low.u32 %v580
      %v582 = vextract.high.u32 %v580
      %v583 = vshrl.u32 %v582, 4
      %v584 = vmul.u32 %v583, 18
      %v585 = vsub.s32 %v579, %v584
      %v586 = vsub.s32 0, %v585
      %v587 = vsel %vm577, %v586, %v585
      %vm588 = vcmp.lt.s32.totalorder %v476, 0
      %v589 = vsub.s32 0, %v476
      %v590 = vsel %vm588, %v589, %v476
      %v591 = vmul.u32.u64.compose %v590, 3817748708
      %v592 = vextract.low.u32 %v591
      %v593 = vextract.high.u32 %v591
      %v594 = vshrl.u32 %v593, 4
      %v595 = vmul.u32 %v594, 18
      %v596 = vsub.s32 %v590, %v595
      %v597 = vsub.s32 0, %v596
      %v598 = vsel %vm588, %v597, %v596
      %vm599 = vcmp.lt.s32.totalorder %v477, 0
      %v600 = vsub.s32 0, %v477
      %v601 = vsel %vm599, %v600, %v477
      %v602 = vmul.u32.u64.compose %v601, 3817748708
      %v603 = vextract.low.u32 %v602
      %v604 = vextract.high.u32 %v602
      %v605 = vshrl.u32 %v604, 4
      %v606 = vmul.u32 %v605, 18
      %v607 = vsub.s32 %v601, %v606
      %v608 = vsub.s32 0, %v607
      %v609 = vsel %vm599, %v608, %v607
      %vm610 = vcmp.lt.s32.totalorder %v478, 0
      %v611 = vsub.s32 0, %v478
      %v612 = vsel %vm610, %v611, %v478
      %v613 = vmul.u32.u64.compose %v612, 3817748708
      %v614 = vextract.low.u32 %v613
      %v615 = vextract.high.u32 %v613
      %v616 = vshrl.u32 %v615, 4
      %v617 = vmul.u32 %v616, 18
      %v618 = vsub.s32 %v612, %v617
      %v619 = vsub.s32 0, %v618
      %v620 = vsel %vm610, %v619, %v618
      %vm621 = vcmp.lt.s32.totalorder %v479, 0
      %v622 = vsub.s32 0, %v479
      %v623 = vsel %vm621, %v622, %v479
      %v624 = vmul.u32.u64.compose %v623, 3817748708
      %v625 = vextract.low.u32 %v624
      %v626 = vextract.high.u32 %v624
      %v627 = vshrl.u32 %v626, 4
      %v628 = vmul.u32 %v627, 18
      %v629 = vsub.s32 %v623, %v628
      %v630 = vsub.s32 0, %v629
      %v631 = vsel %vm621, %v630, %v629
      %vm632 = vcmp.lt.s32.totalorder %v480, 0
      %v633 = vsub.s32 0, %v480
      %v634 = vsel %vm632, %v633, %v480
      %v635 = vmul.u32.u64.compose %v634, 3817748708
      %v636 = vextract.low.u32 %v635
      %v637 = vextract.high.u32 %v635
      %v638 = vshrl.u32 %v637, 4
      %v639 = vmul.u32 %v638, 18
      %v640 = vsub.s32 %v634, %v639
      %v641 = vsub.s32 0, %v640
      %v642 = vsel %vm632, %v641, %v640
      %vm643 = vcmp.lt.s32.totalorder %v481, 0
      %v644 = vsub.s32 0, %v481
      %v645 = vsel %vm643, %v644, %v481
      %v646 = vmul.u32.u64.compose %v645, 3817748708
      %v647 = vextract.low.u32 %v646
      %v648 = vextract.high.u32 %v646
      %v649 = vshrl.u32 %v648, 4
      %v650 = vmul.u32 %v649, 18
      %v651 = vsub.s32 %v645, %v650
      %v652 = vsub.s32 0, %v651
      %v653 = vsel %vm643, %v652, %v651
      %vm654 = vcmp.lt.s32.totalorder %v482, 0
      %v655 = vsub.s32 0, %v482
      %v656 = vsel %vm654, %v655, %v482
      %v657 = vmul.u32.u64.compose %v656, 3817748708
      %v658 = vextract.low.u32 %v657
      %v659 = vextract.high.u32 %v657
      %v660 = vshrl.u32 %v659, 4
      %v661 = vmul.u32 %v660, 18
      %v662 = vsub.s32 %v656, %v661
      %v663 = vsub.s32 0, %v662
      %v664 = vsel %vm654, %v663, %v662
      %vm665 = vcmp.lt.s32.totalorder %v483, 0
      %v666 = vsub.s32 0, %v483
      %v667 = vsel %vm665, %v666, %v483
      %v668 = vmul.u32.u64.compose %v667, 3817748708
      %v669 = vextract.low.u32 %v668
      %v670 = vextract.high.u32 %v668
      %v671 = vshrl.u32 %v670, 4
      %v672 = vmul.u32 %v671, 18
      %v673 = vsub.s32 %v667, %v672
      %v674 = vsub.s32 0, %v673
      %v675 = vsel %vm665, %v674, %v673
      %vm676 = vcmp.lt.s32.totalorder %v484, 0
      %v677 = vsub.s32 0, %v484
      %v678 = vsel %vm676, %v677, %v484
      %v679 = vmul.u32.u64.compose %v678, 3817748708
      %v680 = vextract.low.u32 %v679
      %v681 = vextract.high.u32 %v679
      %v682 = vshrl.u32 %v681, 4
      %v683 = vmul.u32 %v682, 18
      %v684 = vsub.s32 %v678, %v683
      %v685 = vsub.s32 0, %v684
      %v686 = vsel %vm676, %v685, %v684
      %vm687 = vcmp.lt.s32.totalorder %v485, 0
      %v688 = vsub.s32 0, %v485
      %v689 = vsel %vm687, %v688, %v485
      %v690 = vmul.u32.u64.compose %v689, 3817748708
      %v691 = vextract.low.u32 %v690
      %v692 = vextract.high.u32 %v690
      %v693 = vshrl.u32 %v692, 4
      %v694 = vmul.u32 %v693, 18
      %v695 = vsub.s32 %v689, %v694
      %v696 = vsub.s32 0, %v695
      %v697 = vsel %vm687, %v696, %v695
      %vm698 = vcmp.lt.s32.totalorder %v486, 0
      %v699 = vsub.s32 0, %v486
      %v700 = vsel %vm698, %v699, %v486
      %v701 = vmul.u32.u64.compose %v700, 3817748708
      %v702 = vextract.low.u32 %v701
      %v703 = vextract.high.u32 %v701
      %v704 = vshrl.u32 %v703, 4
      %v705 = vmul.u32 %v704, 18
      %v706 = vsub.s32 %v700, %v705
      %v707 = vsub.s32 0, %v706
      %v708 = vsel %vm698, %v707, %v706
      %vm709 = vcmp.lt.s32.totalorder %v487, 0
      %v710 = vsub.s32 0, %v487
      %v711 = vsel %vm709, %v710, %v487
      %v712 = vmul.u32.u64.compose %v711, 3817748708
      %v713 = vextract.low.u32 %v712
      %v714 = vextract.high.u32 %v712
      %v715 = vshrl.u32 %v714, 4
      %v716 = vmul.u32 %v715, 18
      %v717 = vsub.s32 %v711, %v716
      %v718 = vsub.s32 0, %v717
      %v719 = vsel %vm709, %v718, %v717
      %vm720 = vcmp.lt.s32.totalorder %v488, 0
      %v721 = vsub.s32 0, %v488
      %v722 = vsel %vm720, %v721, %v488
      %v723 = vmul.u32.u64.compose %v722, 3817748708
      %v724 = vextract.low.u32 %v723
      %v725 = vextract.high.u32 %v723
      %v726 = vshrl.u32 %v725, 4
      %v727 = vmul.u32 %v726, 18
      %v728 = vsub.s32 %v722, %v727
      %v729 = vsub.s32 0, %v728
      %v730 = vsel %vm720, %v729, %v728
      %vm731 = vcmp.lt.s32.totalorder %v489, 0
      %v732 = vsub.s32 0, %v489
      %v733 = vsel %vm731, %v732, %v489
      %v734 = vmul.u32.u64.compose %v733, 3817748708
      %v735 = vextract.low.u32 %v734
      %v736 = vextract.high.u32 %v734
      %v737 = vshrl.u32 %v736, 4
      %v738 = vmul.u32 %v737, 18
      %v739 = vsub.s32 %v733, %v738
      %v740 = vsub.s32 0, %v739
      %v741 = vsel %vm731, %v740, %v739
      %vm742 = vcmp.lt.s32.totalorder %v490, 0
      %v743 = vsub.s32 0, %v490
      %v744 = vsel %vm742, %v743, %v490
      %v745 = vmul.u32.u64.compose %v744, 3817748708
      %v746 = vextract.low.u32 %v745
      %v747 = vextract.high.u32 %v745
      %v748 = vshrl.u32 %v747, 4
      %v749 = vmul.u32 %v748, 18
      %v750 = vsub.s32 %v744, %v749
      %v751 = vsub.s32 0, %v750
      %v752 = vsel %vm742, %v751, %v750
      %vm753 = vcmp.lt.s32.totalorder %v491, 0
      %v754 = vsub.s32 0, %v491
      %v755 = vsel %vm753, %v754, %v491
      %v756 = vmul.u32.u64.compose %v755, 3817748708
      %v757 = vextract.low.u32 %v756
      %v758 = vextract.high.u32 %v756
      %v759 = vshrl.u32 %v758, 4
      %v760 = vmul.u32 %v759, 18
      %v761 = vsub.s32 %v755, %v760
      %v762 = vsub.s32 0, %v761
      %v763 = vsel %vm753, %v762, %v761
      %vm764 = vcmp.lt.s32.totalorder %v492, 0
      %v765 = vsub.s32 0, %v492
      %v766 = vsel %vm764, %v765, %v492
      %v767 = vmul.u32.u64.compose %v766, 3817748708
      %v768 = vextract.low.u32 %v767
      %v769 = vextract.high.u32 %v767
      %v770 = vshrl.u32 %v769, 4
      %v771 = vmul.u32 %v770, 18
      %v772 = vsub.s32 %v766, %v771
      %v773 = vsub.s32 0, %v772
      %v774 = vsel %vm764, %v773, %v772
      %vm775 = vcmp.lt.s32.totalorder %v493, 0
      %v776 = vsub.s32 0, %v493
      %v777 = vsel %vm775, %v776, %v493
      %v778 = vmul.u32.u64.compose %v777, 3817748708
      %v779 = vextract.low.u32 %v778
      %v780 = vextract.high.u32 %v778
      %v781 = vshrl.u32 %v780, 4
      %v782 = vmul.u32 %v781, 18
      %v783 = vsub.s32 %v777, %v782
      %v784 = vsub.s32 0, %v783
      %v785 = vsel %vm775, %v784, %v783
      %vm786 = vcmp.lt.s32.totalorder %v494, 0
      %v787 = vsub.s32 0, %v494
      %v788 = vsel %vm786, %v787, %v494
      %v789 = vmul.u32.u64.compose %v788, 3817748708
      %v790 = vextract.low.u32 %v789
      %v791 = vextract.high.u32 %v789
      %v792 = vshrl.u32 %v791, 4
      %v793 = vmul.u32 %v792, 18
      %v794 = vsub.s32 %v788, %v793
      %v795 = vsub.s32 0, %v794
      %v796 = vsel %vm786, %v795, %v794
      %vm797 = vcmp.lt.s32.totalorder %v495, 0
      %v798 = vsub.s32 0, %v495
      %v799 = vsel %vm797, %v798, %v495
      %v800 = vmul.u32.u64.compose %v799, 3817748708
      %v801 = vextract.low.u32 %v800
      %v802 = vextract.high.u32 %v800
      %v803 = vshrl.u32 %v802, 4
      %v804 = vmul.u32 %v803, 18
      %v805 = vsub.s32 %v799, %v804
      %v806 = vsub.s32 0, %v805
      %v807 = vsel %vm797, %v806, %v805
      %vm808 = vcmp.lt.s32.totalorder %v496, 0
      %v809 = vsub.s32 0, %v496
      %v810 = vsel %vm808, %v809, %v496
      %v811 = vmul.u32.u64.compose %v810, 3817748708
      %v812 = vextract.low.u32 %v811
      %v813 = vextract.high.u32 %v811
      %v814 = vshrl.u32 %v813, 4
      %v815 = vmul.u32 %v814, 18
      %v816 = vsub.s32 %v810, %v815
      %v817 = vsub.s32 0, %v816
      %v818 = vsel %vm808, %v817, %v816
      %vm819 = vcmp.lt.s32.totalorder %v497, 0
      %v820 = vsub.s32 0, %v497
      %v821 = vsel %vm819, %v820, %v497
      %v822 = vmul.u32.u64.compose %v821, 3817748708
      %v823 = vextract.low.u32 %v822
      %v824 = vextract.high.u32 %v822
      %v825 = vshrl.u32 %v824, 4
      %v826 = vmul.u32 %v825, 18
      %v827 = vsub.s32 %v821, %v826
      %v828 = vsub.s32 0, %v827
      %v829 = vsel %vm819, %v828, %v827
      %vm830 = vcmp.lt.s32.totalorder %v498, 0
      %v831 = vsub.s32 0, %v498
      %v832 = vsel %vm830, %v831, %v498
      %v833 = vmul.u32.u64.compose %v832, 3817748708
      %v834 = vextract.low.u32 %v833
      %v835 = vextract.high.u32 %v833
      %v836 = vshrl.u32 %v835, 4
      %v837 = vmul.u32 %v836, 18
      %v838 = vsub.s32 %v832, %v837
      %v839 = vsub.s32 0, %v838
      %v840 = vsel %vm830, %v839, %v838
      %vm841 = vcmp.lt.s32.totalorder %v499, 0
      %v842 = vsub.s32 0, %v499
      %v843 = vsel %vm841, %v842, %v499
      %v844 = vmul.u32.u64.compose %v843, 3817748708
      %v845 = vextract.low.u32 %v844
      %v846 = vextract.high.u32 %v844
      %v847 = vshrl.u32 %v846, 4
      %v848 = vmul.u32 %v847, 18
      %v849 = vsub.s32 %v843, %v848
      %v850 = vsub.s32 0, %v849
      %v851 = vsel %vm841, %v850, %v849
      %vm852 = vcmp.lt.s32.totalorder %v500, 0
      %v853 = vsub.s32 0, %v500
      %v854 = vsel %vm852, %v853, %v500
      %v855 = vmul.u32.u64.compose %v854, 3817748708
      %v856 = vextract.low.u32 %v855
      %v857 = vextract.high.u32 %v855
      %v858 = vshrl.u32 %v857, 4
      %v859 = vmul.u32 %v858, 18
      %v860 = vsub.s32 %v854, %v859
      %v861 = vsub.s32 0, %v860
      %v862 = vsel %vm852, %v861, %v860
      %vm863 = vcmp.lt.s32.totalorder %v501, 0
      %v864 = vsub.s32 0, %v501
      %v865 = vsel %vm863, %v864, %v501
      %v866 = vmul.u32.u64.compose %v865, 3817748708
      %v867 = vextract.low.u32 %v866
      %v868 = vextract.high.u32 %v866
      %v869 = vshrl.u32 %v868, 4
      %v870 = vmul.u32 %v869, 18
      %v871 = vsub.s32 %v865, %v870
      %v872 = vsub.s32 0, %v871
      %v873 = vsel %vm863, %v872, %v871
      %vm874 = vcmp.lt.s32.totalorder %v502, 0
      %v875 = vsub.s32 0, %v502
      %v876 = vsel %vm874, %v875, %v502
      %v877 = vmul.u32.u64.compose %v876, 3817748708
      %v878 = vextract.low.u32 %v877
      %v879 = vextract.high.u32 %v877
      %v880 = vshrl.u32 %v879, 4
      %v881 = vmul.u32 %v880, 18
      %v882 = vsub.s32 %v876, %v881
      %v883 = vsub.s32 0, %v882
      %v884 = vsel %vm874, %v883, %v882
      %vm885 = vcmp.lt.s32.totalorder %v503, 0
      %v886 = vsub.s32 0, %v503
      %v887 = vsel %vm885, %v886, %v503
      %v888 = vmul.u32.u64.compose %v887, 3817748708
      %v889 = vextract.low.u32 %v888
      %v890 = vextract.high.u32 %v888
      %v891 = vshrl.u32 %v890, 4
      %v892 = vmul.u32 %v891, 18
      %v893 = vsub.s32 %v887, %v892
      %v894 = vsub.s32 0, %v893
      %v895 = vsel %vm885, %v894, %v893
      %vm896 = vcmp.lt.s32.totalorder %v504, 0
      %v897 = vsub.s32 0, %v504
      %v898 = vsel %vm896, %v897, %v504
      %v899 = vmul.u32.u64.compose %v898, 3817748708
      %v900 = vextract.low.u32 %v899
      %v901 = vextract.high.u32 %v899
      %v902 = vshrl.u32 %v901, 4
      %v903 = vmul.u32 %v902, 18
      %v904 = vsub.s32 %v898, %v903
      %v905 = vsub.s32 0, %v904
      %v906 = vsel %vm896, %v905, %v904
      %vm907 = vcmp.lt.s32.totalorder %v505, 0
      %v908 = vsub.s32 0, %v505
      %v909 = vsel %vm907, %v908, %v505
      %v910 = vmul.u32.u64.compose %v909, 3817748708
      %v911 = vextract.low.u32 %v910
      %v912 = vextract.high.u32 %v910
      %v913 = vshrl.u32 %v912, 4
      %v914 = vmul.u32 %v913, 18
      %v915 = vsub.s32 %v909, %v914
      %v916 = vsub.s32 0, %v915
      %v917 = vsel %vm907, %v916, %v915
      %vm918 = vcmp.lt.s32.totalorder %v506, 0
      %v919 = vsub.s32 0, %v506
      %v920 = vsel %vm918, %v919, %v506
      %v921 = vmul.u32.u64.compose %v920, 3817748708
      %v922 = vextract.low.u32 %v921
      %v923 = vextract.high.u32 %v921
      %v924 = vshrl.u32 %v923, 4
      %v925 = vmul.u32 %v924, 18
      %v926 = vsub.s32 %v920, %v925
      %v927 = vsub.s32 0, %v926
      %v928 = vsel %vm918, %v927, %v926
      %vm929 = vcmp.lt.s32.totalorder %v507, 0
      %v930 = vsub.s32 0, %v507
      %v931 = vsel %vm929, %v930, %v507
      %v932 = vmul.u32.u64.compose %v931, 3817748708
      %v933 = vextract.low.u32 %v932
      %v934 = vextract.high.u32 %v932
      %v935 = vshrl.u32 %v934, 4
      %v936 = vmul.u32 %v935, 18
      %v937 = vsub.s32 %v931, %v936
      %v938 = vsub.s32 0, %v937
      %v939 = vsel %vm929, %v938, %v937
      %vm940 = vcmp.ne.s32.totalorder %v554, 0
      %vm941 = vcmp.ne.s32.totalorder %v565, 0
      %vm942 = vcmp.ne.s32.totalorder %v576, 0
      %vm943 = vcmp.ne.s32.totalorder %v587, 0
      %vm944 = vcmp.ne.s32.totalorder %v598, 0
      %vm945 = vcmp.ne.s32.totalorder %v609, 0
      %vm946 = vcmp.ne.s32.totalorder %v620, 0
      %vm947 = vcmp.ne.s32.totalorder %v631, 0
      %vm948 = vcmp.ne.s32.totalorder %v642, 0
      %vm949 = vcmp.ne.s32.totalorder %v653, 0
      %vm950 = vcmp.ne.s32.totalorder %v664, 0
      %vm951 = vcmp.ne.s32.totalorder %v675, 0
      %vm952 = vcmp.ne.s32.totalorder %v686, 0
      %vm953 = vcmp.ne.s32.totalorder %v697, 0
      %vm954 = vcmp.ne.s32.totalorder %v708, 0
      %vm955 = vcmp.ne.s32.totalorder %v719, 0
      %vm956 = vcmp.ne.s32.totalorder %v730, 0
      %vm957 = vcmp.ne.s32.totalorder %v741, 0
      %vm958 = vcmp.ne.s32.totalorder %v752, 0
      %vm959 = vcmp.ne.s32.totalorder %v763, 0
      %vm960 = vcmp.ne.s32.totalorder %v774, 0
      %vm961 = vcmp.ne.s32.totalorder %v785, 0
      %vm962 = vcmp.ne.s32.totalorder %v796, 0
      %vm963 = vcmp.ne.s32.totalorder %v807, 0
      %vm964 = vcmp.ne.s32.totalorder %v818, 0
      %vm965 = vcmp.ne.s32.totalorder %v829, 0
      %vm966 = vcmp.ne.s32.totalorder %v840, 0
      %vm967 = vcmp.ne.s32.totalorder %v851, 0
      %vm968 = vcmp.ne.s32.totalorder %v862, 0
      %vm969 = vcmp.ne.s32.totalorder %v873, 0
      %vm970 = vcmp.ne.s32.totalorder %v884, 0
      %vm971 = vcmp.ne.s32.totalorder %v895, 0
      %vm972 = vcmp.ne.s32.totalorder %v906, 0
      %vm973 = vcmp.ne.s32.totalorder %v917, 0
      %vm974 = vcmp.ne.s32.totalorder %v928, 0
      %vm975 = vcmp.ne.s32.totalorder %v939, 0
      %vm976 = vcmp.lt.s32.totalorder %v554, 0
      %vm977 = vcmp.lt.s32.totalorder %v565, 0
      %vm978 = vcmp.lt.s32.totalorder %v576, 0
      %vm979 = vcmp.lt.s32.totalorder %v587, 0
      %vm980 = vcmp.lt.s32.totalorder %v598, 0
      %vm981 = vcmp.lt.s32.totalorder %v609, 0
      %vm982 = vcmp.lt.s32.totalorder %v620, 0
      %vm983 = vcmp.lt.s32.totalorder %v631, 0
      %vm984 = vcmp.lt.s32.totalorder %v642, 0
      %vm985 = vcmp.lt.s32.totalorder %v653, 0
      %vm986 = vcmp.lt.s32.totalorder %v664, 0
      %vm987 = vcmp.lt.s32.totalorder %v675, 0
      %vm988 = vcmp.lt.s32.totalorder %v686, 0
      %vm989 = vcmp.lt.s32.totalorder %v697, 0
      %vm990 = vcmp.lt.s32.totalorder %v708, 0
      %vm991 = vcmp.lt.s32.totalorder %v719, 0
      %vm992 = vcmp.lt.s32.totalorder %v730, 0
      %vm993 = vcmp.lt.s32.totalorder %v741, 0
      %vm994 = vcmp.lt.s32.totalorder %v752, 0
      %vm995 = vcmp.lt.s32.totalorder %v763, 0
      %vm996 = vcmp.lt.s32.totalorder %v774, 0
      %vm997 = vcmp.lt.s32.totalorder %v785, 0
      %vm998 = vcmp.lt.s32.totalorder %v796, 0
      %vm999 = vcmp.lt.s32.totalorder %v807, 0
      %vm1000 = vcmp.lt.s32.totalorder %v818, 0
      %vm1001 = vcmp.lt.s32.totalorder %v829, 0
      %vm1002 = vcmp.lt.s32.totalorder %v840, 0
      %vm1003 = vcmp.lt.s32.totalorder %v851, 0
      %vm1004 = vcmp.lt.s32.totalorder %v862, 0
      %vm1005 = vcmp.lt.s32.totalorder %v873, 0
      %vm1006 = vcmp.lt.s32.totalorder %v884, 0
      %vm1007 = vcmp.lt.s32.totalorder %v895, 0
      %vm1008 = vcmp.lt.s32.totalorder %v906, 0
      %vm1009 = vcmp.lt.s32.totalorder %v917, 0
      %vm1010 = vcmp.lt.s32.totalorder %v928, 0
      %vm1011 = vcmp.lt.s32.totalorder %v939, 0
      %vm1012 = vmand %vm976, %vm940
      %vm1013 = vmand %vm977, %vm941
      %vm1014 = vmand %vm978, %vm942
      %vm1015 = vmand %vm979, %vm943
      %vm1016 = vmand %vm980, %vm944
      %vm1017 = vmand %vm981, %vm945
      %vm1018 = vmand %vm982, %vm946
      %vm1019 = vmand %vm983, %vm947
      %vm1020 = vmand %vm984, %vm948
      %vm1021 = vmand %vm985, %vm949
      %vm1022 = vmand %vm986, %vm950
      %vm1023 = vmand %vm987, %vm951
      %vm1024 = vmand %vm988, %vm952
      %vm1025 = vmand %vm989, %vm953
      %vm1026 = vmand %vm990, %vm954
      %vm1027 = vmand %vm991, %vm955
      %vm1028 = vmand %vm992, %vm956
      %vm1029 = vmand %vm993, %vm957
      %vm1030 = vmand %vm994, %vm958
      %vm1031 = vmand %vm995, %vm959
      %vm1032 = vmand %vm996, %vm960
      %vm1033 = vmand %vm997, %vm961
      %vm1034 = vmand %vm998, %vm962
      %vm1035 = vmand %vm999, %vm963
      %vm1036 = vmand %vm1000, %vm964
      %vm1037 = vmand %vm1001, %vm965
      %vm1038 = vmand %vm1002, %vm966
      %vm1039 = vmand %vm1003, %vm967
      %vm1040 = vmand %vm1004, %vm968
      %vm1041 = vmand %vm1005, %vm969
      %vm1042 = vmand %vm1006, %vm970
      %vm1043 = vmand %vm1007, %vm971
      %vm1044 = vmand %vm1008, %vm972
      %vm1045 = vmand %vm1009, %vm973
      %vm1046 = vmand %vm1010, %vm974
      %vm1047 = vmand %vm1011, %vm975
      %v1048 = vadd.s32 %v554, 18
      %v1049 = vadd.s32 %v565, 18
      %v1050 = vadd.s32 %v576, 18
      %v1051 = vadd.s32 %v587, 18
      %v1052 = vadd.s32 %v598, 18
      %v1053 = vadd.s32 %v609, 18
      %v1054 = vadd.s32 %v620, 18
      %v1055 = vadd.s32 %v631, 18
      %v1056 = vadd.s32 %v642, 18
      %v1057 = vadd.s32 %v653, 18
      %v1058 = vadd.s32 %v664, 18
      %v1059 = vadd.s32 %v675, 18
      %v1060 = vadd.s32 %v686, 18
      %v1061 = vadd.s32 %v697, 18
      %v1062 = vadd.s32 %v708, 18
      %v1063 = vadd.s32 %v719, 18
      %v1064 = vadd.s32 %v730, 18
      %v1065 = vadd.s32 %v741, 18
      %v1066 = vadd.s32 %v752, 18
      %v1067 = vadd.s32 %v763, 18
      %v1068 = vadd.s32 %v774, 18
      %v1069 = vadd.s32 %v785, 18
      %v1070 = vadd.s32 %v796, 18
      %v1071 = vadd.s32 %v807, 18
      %v1072 = vadd.s32 %v818, 18
      %v1073 = vadd.s32 %v829, 18
      %v1074 = vadd.s32 %v840, 18
      %v1075 = vadd.s32 %v851, 18
      %v1076 = vadd.s32 %v862, 18
      %v1077 = vadd.s32 %v873, 18
      %v1078 = vadd.s32 %v884, 18
      %v1079 = vadd.s32 %v895, 18
      %v1080 = vadd.s32 %v906, 18
      %v1081 = vadd.s32 %v917, 18
      %v1082 = vadd.s32 %v928, 18
      %v1083 = vadd.s32 %v939, 18
      %v1084 = vsel %vm1012, %v1048, %v554
      %v1085 = vsel %vm1013, %v1049, %v565
      %v1086 = vsel %vm1014, %v1050, %v576
      %v1087 = vsel %vm1015, %v1051, %v587
      %v1088 = vsel %vm1016, %v1052, %v598
      %v1089 = vsel %vm1017, %v1053, %v609
      %v1090 = vsel %vm1018, %v1054, %v620
      %v1091 = vsel %vm1019, %v1055, %v631
      %v1092 = vsel %vm1020, %v1056, %v642
      %v1093 = vsel %vm1021, %v1057, %v653
      %v1094 = vsel %vm1022, %v1058, %v664
      %v1095 = vsel %vm1023, %v1059, %v675
      %v1096 = vsel %vm1024, %v1060, %v686
      %v1097 = vsel %vm1025, %v1061, %v697
      %v1098 = vsel %vm1026, %v1062, %v708
      %v1099 = vsel %vm1027, %v1063, %v719
      %v1100 = vsel %vm1028, %v1064, %v730
      %v1101 = vsel %vm1029, %v1065, %v741
      %v1102 = vsel %vm1030, %v1066, %v752
      %v1103 = vsel %vm1031, %v1067, %v763
      %v1104 = vsel %vm1032, %v1068, %v774
      %v1105 = vsel %vm1033, %v1069, %v785
      %v1106 = vsel %vm1034, %v1070, %v796
      %v1107 = vsel %vm1035, %v1071, %v807
      %v1108 = vsel %vm1036, %v1072, %v818
      %v1109 = vsel %vm1037, %v1073, %v829
      %v1110 = vsel %vm1038, %v1074, %v840
      %v1111 = vsel %vm1039, %v1075, %v851
      %v1112 = vsel %vm1040, %v1076, %v862
      %v1113 = vsel %vm1041, %v1077, %v873
      %v1114 = vsel %vm1042, %v1078, %v884
      %v1115 = vsel %vm1043, %v1079, %v895
      %v1116 = vsel %vm1044, %v1080, %v906
      %v1117 = vsel %vm1045, %v1081, %v917
      %v1118 = vsel %vm1046, %v1082, %v928
      %v1119 = vsel %vm1047, %v1083, %v939
      %vm1120 = vcmp.lt.s32.totalorder %v1084, 16
      %vm1121 = vcmp.lt.s32.totalorder %v1085, 16
      %vm1122 = vcmp.lt.s32.totalorder %v1086, 16
      %vm1123 = vcmp.lt.s32.totalorder %v1087, 16
      %vm1124 = vcmp.lt.s32.totalorder %v1088, 16
      %vm1125 = vcmp.lt.s32.totalorder %v1089, 16
      %vm1126 = vcmp.lt.s32.totalorder %v1090, 16
      %vm1127 = vcmp.lt.s32.totalorder %v1091, 16
      %vm1128 = vcmp.lt.s32.totalorder %v1092, 16
      %vm1129 = vcmp.lt.s32.totalorder %v1093, 16
      %vm1130 = vcmp.lt.s32.totalorder %v1094, 16
      %vm1131 = vcmp.lt.s32.totalorder %v1095, 16
      %vm1132 = vcmp.lt.s32.totalorder %v1096, 16
      %vm1133 = vcmp.lt.s32.totalorder %v1097, 16
      %vm1134 = vcmp.lt.s32.totalorder %v1098, 16
      %vm1135 = vcmp.lt.s32.totalorder %v1099, 16
      %vm1136 = vcmp.lt.s32.totalorder %v1100, 16
      %vm1137 = vcmp.lt.s32.totalorder %v1101, 16
      %vm1138 = vcmp.lt.s32.totalorder %v1102, 16
      %vm1139 = vcmp.lt.s32.totalorder %v1103, 16
      %vm1140 = vcmp.lt.s32.totalorder %v1104, 16
      %vm1141 = vcmp.lt.s32.totalorder %v1105, 16
      %vm1142 = vcmp.lt.s32.totalorder %v1106, 16
      %vm1143 = vcmp.lt.s32.totalorder %v1107, 16
      %vm1144 = vcmp.lt.s32.totalorder %v1108, 16
      %vm1145 = vcmp.lt.s32.totalorder %v1109, 16
      %vm1146 = vcmp.lt.s32.totalorder %v1110, 16
      %vm1147 = vcmp.lt.s32.totalorder %v1111, 16
      %vm1148 = vcmp.lt.s32.totalorder %v1112, 16
      %vm1149 = vcmp.lt.s32.totalorder %v1113, 16
      %vm1150 = vcmp.lt.s32.totalorder %v1114, 16
      %vm1151 = vcmp.lt.s32.totalorder %v1115, 16
      %vm1152 = vcmp.lt.s32.totalorder %v1116, 16
      %vm1153 = vcmp.lt.s32.totalorder %v1117, 16
      %vm1154 = vcmp.lt.s32.totalorder %v1118, 16
      %vm1155 = vcmp.lt.s32.totalorder %v1119, 16
      %vm1156 = vmand %vm508, %vm1120
      %vm1157 = vmand %vm509, %vm1121
      %vm1158 = vmand %vm510, %vm1122
      %vm1159 = vmand %vm511, %vm1123
      %vm1160 = vmand %vm512, %vm1124
      %vm1161 = vmand %vm513, %vm1125
      %vm1162 = vmand %vm514, %vm1126
      %vm1163 = vmand %vm515, %vm1127
      %vm1164 = vmand %vm516, %vm1128
      %vm1165 = vmand %vm517, %vm1129
      %vm1166 = vmand %vm518, %vm1130
      %vm1167 = vmand %vm519, %vm1131
      %vm1168 = vmand %vm520, %vm1132
      %vm1169 = vmand %vm521, %vm1133
      %vm1170 = vmand %vm522, %vm1134
      %vm1171 = vmand %vm523, %vm1135
      %vm1172 = vmand %vm524, %vm1136
      %vm1173 = vmand %vm525, %vm1137
      %vm1174 = vmand %vm526, %vm1138
      %vm1175 = vmand %vm527, %vm1139
      %vm1176 = vmand %vm528, %vm1140
      %vm1177 = vmand %vm529, %vm1141
      %vm1178 = vmand %vm530, %vm1142
      %vm1179 = vmand %vm531, %vm1143
      %vm1180 = vmand %vm532, %vm1144
      %vm1181 = vmand %vm533, %vm1145
      %vm1182 = vmand %vm534, %vm1146
      %vm1183 = vmand %vm535, %vm1147
      %vm1184 = vmand %vm536, %vm1148
      %vm1185 = vmand %vm537, %vm1149
      %vm1186 = vmand %vm538, %vm1150
      %vm1187 = vmand %vm539, %vm1151
      %vm1188 = vmand %vm540, %vm1152
      %vm1189 = vmand %vm541, %vm1153
      %vm1190 = vmand %vm542, %vm1154
      %vm1191 = vmand %vm543, %vm1155
      %v1192 = vsel %vm1156, 1, 0
      %v1193 = vsel %vm1157, 1, 0
      %v1194 = vsel %vm1158, 1, 0
      %v1195 = vsel %vm1159, 1, 0
      %v1196 = vsel %vm1160, 1, 0
      %v1197 = vsel %vm1161, 1, 0
      %v1198 = vsel %vm1162, 1, 0
      %v1199 = vsel %vm1163, 1, 0
      %v1200 = vsel %vm1164, 1, 0
      %v1201 = vsel %vm1165, 1, 0
      %v1202 = vsel %vm1166, 1, 0
      %v1203 = vsel %vm1167, 1, 0
      %v1204 = vsel %vm1168, 1, 0
      %v1205 = vsel %vm1169, 1, 0
      %v1206 = vsel %vm1170, 1, 0
      %v1207 = vsel %vm1171, 1, 0
      %v1208 = vsel %vm1172, 1, 0
      %v1209 = vsel %vm1173, 1, 0
      %v1210 = vsel %vm1174, 1, 0
      %v1211 = vsel %vm1175, 1, 0
      %v1212 = vsel %vm1176, 1, 0
      %v1213 = vsel %vm1177, 1, 0
      %v1214 = vsel %vm1178, 1, 0
      %v1215 = vsel %vm1179, 1, 0
      %v1216 = vsel %vm1180, 1, 0
      %v1217 = vsel %vm1181, 1, 0
      %v1218 = vsel %vm1182, 1, 0
      %v1219 = vsel %vm1183, 1, 0
      %v1220 = vsel %vm1184, 1, 0
      %v1221 = vsel %vm1185, 1, 0
      %v1222 = vsel %vm1186, 1, 0
      %v1223 = vsel %vm1187, 1, 0
      %v1224 = vsel %vm1188, 1, 0
      %v1225 = vsel %vm1189, 1, 0
      %v1226 = vsel %vm1190, 1, 0
      %v1227 = vsel %vm1191, 1, 0
      %vm1228 = vcmp.eq.s32.totalorder %v1192, 1
      %vm1229 = vcmp.eq.s32.totalorder %v1193, 1
      %vm1230 = vcmp.eq.s32.totalorder %v1194, 1
      %vm1231 = vcmp.eq.s32.totalorder %v1195, 1
      %vm1232 = vcmp.eq.s32.totalorder %v1196, 1
      %vm1233 = vcmp.eq.s32.totalorder %v1197, 1
      %vm1234 = vcmp.eq.s32.totalorder %v1198, 1
      %vm1235 = vcmp.eq.s32.totalorder %v1199, 1
      %vm1236 = vcmp.eq.s32.totalorder %v1200, 1
      %vm1237 = vcmp.eq.s32.totalorder %v1201, 1
      %vm1238 = vcmp.eq.s32.totalorder %v1202, 1
      %vm1239 = vcmp.eq.s32.totalorder %v1203, 1
      %vm1240 = vcmp.eq.s32.totalorder %v1204, 1
      %vm1241 = vcmp.eq.s32.totalorder %v1205, 1
      %vm1242 = vcmp.eq.s32.totalorder %v1206, 1
      %vm1243 = vcmp.eq.s32.totalorder %v1207, 1
      %vm1244 = vcmp.eq.s32.totalorder %v1208, 1
      %vm1245 = vcmp.eq.s32.totalorder %v1209, 1
      %vm1246 = vcmp.eq.s32.totalorder %v1210, 1
      %vm1247 = vcmp.eq.s32.totalorder %v1211, 1
      %vm1248 = vcmp.eq.s32.totalorder %v1212, 1
      %vm1249 = vcmp.eq.s32.totalorder %v1213, 1
      %vm1250 = vcmp.eq.s32.totalorder %v1214, 1
      %vm1251 = vcmp.eq.s32.totalorder %v1215, 1
      %vm1252 = vcmp.eq.s32.totalorder %v1216, 1
      %vm1253 = vcmp.eq.s32.totalorder %v1217, 1
      %vm1254 = vcmp.eq.s32.totalorder %v1218, 1
      %vm1255 = vcmp.eq.s32.totalorder %v1219, 1
      %vm1256 = vcmp.eq.s32.totalorder %v1220, 1
      %vm1257 = vcmp.eq.s32.totalorder %v1221, 1
      %vm1258 = vcmp.eq.s32.totalorder %v1222, 1
      %vm1259 = vcmp.eq.s32.totalorder %v1223, 1
      %vm1260 = vcmp.eq.s32.totalorder %v1224, 1
      %vm1261 = vcmp.eq.s32.totalorder %v1225, 1
      %vm1262 = vcmp.eq.s32.totalorder %v1226, 1
      %vm1263 = vcmp.eq.s32.totalorder %v1227, 1
      %v1264 = vsel %vm1228, %v435, 0.0
      %v1265 = vsel %vm1229, %v436, 0.0
      %v1266 = vsel %vm1230, %v437, 0.0
      %v1267 = vsel %vm1231, %v438, 0.0
      %v1268 = vsel %vm1232, %v439, 0.0
      %v1269 = vsel %vm1233, %v440, 0.0
      %v1270 = vsel %vm1234, %v441, 0.0
      %v1271 = vsel %vm1235, %v442, 0.0
      %v1272 = vsel %vm1236, %v443, 0.0
      %v1273 = vsel %vm1237, %v444, 0.0
      %v1274 = vsel %vm1238, %v445, 0.0
      %v1275 = vsel %vm1239, %v446, 0.0
      %v1276 = vsel %vm1240, %v447, 0.0
      %v1277 = vsel %vm1241, %v448, 0.0
      %v1278 = vsel %vm1242, %v449, 0.0
      %v1279 = vsel %vm1243, %v450, 0.0
      %v1280 = vsel %vm1244, %v451, 0.0
      %v1281 = vsel %vm1245, %v452, 0.0
      %v1282 = vsel %vm1246, %v453, 0.0
      %v1283 = vsel %vm1247, %v454, 0.0
      %v1284 = vsel %vm1248, %v455, 0.0
      %v1285 = vsel %vm1249, %v456, 0.0
      %v1286 = vsel %vm1250, %v457, 0.0
      %v1287 = vsel %vm1251, %v458, 0.0
      %v1288 = vsel %vm1252, %v459, 0.0
      %v1289 = vsel %vm1253, %v460, 0.0
      %v1290 = vsel %vm1254, %v461, 0.0
      %v1291 = vsel %vm1255, %v462, 0.0
      %v1292 = vsel %vm1256, %v463, 0.0
      %v1293 = vsel %vm1257, %v464, 0.0
      %v1294 = vsel %vm1258, %v465, 0.0
      %v1295 = vsel %vm1259, %v466, 0.0
      %v1296 = vsel %vm1260, %v467, 0.0
      %v1297 = vsel %vm1261, %v468, 0.0
      %v1298 = vsel %vm1262, %v469, 0.0
      %v1299 = vsel %vm1263, %v470, 0.0
      %1300 = vst [vmem:[#allocation2] sm:$0xff] 0
      %1301 = vst [vmem:[#allocation2 + $0x8] sm:$0xff] 0
      %1302 = vst [vmem:[#allocation2 + $0xa0] sm:$0xff] 0
      %1303 = vst [vmem:[#allocation2 + $0xa8] sm:$0xff] 0
      %v1304 = vpack.c.bf16 %v1265, %v1264
      %v1305 = vpack.c.bf16 %v1267, %v1266
      %v1306 = vpack.c.bf16 %v1269, %v1268
      %v1307 = vpack.c.bf16 %v1271, %v1270
      %v1308 = vpack.c.bf16 %v1273, %v1272
      %v1309 = vpack.c.bf16 %v1275, %v1274
      %v1310 = vpack.c.bf16 %v1277, %v1276
      %v1311 = vpack.c.bf16 %v1279, %v1278
      %v1312 = vpack.c.bf16 %v1281, %v1280
      %v1313 = vpack.c.bf16 %v1283, %v1282
      %v1314 = vpack.c.bf16 %v1285, %v1284
      %v1315 = vpack.c.bf16 %v1287, %v1286
      %v1316 = vpack.c.bf16 %v1289, %v1288
      %v1317 = vpack.c.bf16 %v1291, %v1290
      %v1318 = vpack.c.bf16 %v1293, %v1292
      %v1319 = vpack.c.bf16 %v1295, %v1294
      %v1320 = vpack.c.bf16 %v1297, %v1296
      %v1321 = vpack.c.bf16 %v1299, %v1298
      %1322 = vst [vmem:[#allocation2 + $0x10] sm:$0xff] %v1304
      %1323 = vst [vmem:[#allocation2 + $0x18] sm:$0xff] %v1305
      %1324 = vst [vmem:[#allocation2 + $0x20] sm:$0xff] %v1306
      %1325 = vst [vmem:[#allocation2 + $0x28] sm:$0xff] %v1307
      %1326 = vst [vmem:[#allocation2 + $0x30] sm:$0xff] %v1308
      %1327 = vst [vmem:[#allocation2 + $0x38] sm:$0xff] %v1309
      %1328 = vst [vmem:[#allocation2 + $0x40] sm:$0xff] %v1310
      %1329 = vst [vmem:[#allocation2 + $0x48] sm:$0xff] %v1311
      %1330 = vst [vmem:[#allocation2 + $0x50] sm:$0xff] %v1312
      %1331 = vst [vmem:[#allocation2 + $0x58] sm:$0xff] %v1313
      %1332 = vst [vmem:[#allocation2 + $0x60] sm:$0xff] %v1314
      %1333 = vst [vmem:[#allocation2 + $0x68] sm:$0xff] %v1315
      %1334 = vst [vmem:[#allocation2 + $0x70] sm:$0xff] %v1316
      %1335 = vst [vmem:[#allocation2 + $0x78] sm:$0xff] %v1317
      %1336 = vst [vmem:[#allocation2 + $0x80] sm:$0xff] %v1318
      %1337 = vst [vmem:[#allocation2 + $0x88] sm:$0xff] %v1319
      %1338 = vst [vmem:[#allocation2 + $0x90] sm:$0xff] %v1320
      %1339 = vst [vmem:[#allocation2 + $0x98] sm:$0xff] %v1321
      %1340 = vst [vmem:[#allocation4] sm:$0xff] 0.0
      %1341 = vst [vmem:[#allocation4 + $0x8] sm:$0xff] 0.0
      %1342 = vst [vmem:[#allocation4 + $0x10] sm:$0xff] 0.0
      %1343 = vst [vmem:[#allocation4 + $0x18] sm:$0xff] 0.0
      %1344 = vst [vmem:[#allocation4 + $0x20] sm:$0xff] 0.0
      %1345 = vst [vmem:[#allocation4 + $0x28] sm:$0xff] 0.0
      %1346 = vst [vmem:[#allocation4 + $0x30] sm:$0xff] 0.0
      %1347 = vst [vmem:[#allocation4 + $0x38] sm:$0xff] 0.0
      %1348 = vst [vmem:[#allocation4 + $0x40] sm:$0xff] 0.0
      %1349 = vst [vmem:[#allocation4 + $0x48] sm:$0xff] 0.0
      %1350 = vst [vmem:[#allocation4 + $0x50] sm:$0xff] 0.0
      %1351 = vst [vmem:[#allocation4 + $0x58] sm:$0xff] 0.0
      %1352 = vst [vmem:[#allocation4 + $0x60] sm:$0xff] 0.0
      %1353 = vst [vmem:[#allocation4 + $0x68] sm:$0xff] 0.0
      %1354 = vst [vmem:[#allocation4 + $0x70] sm:$0xff] 0.0
      %1355 = vst [vmem:[#allocation4 + $0x78] sm:$0xff] 0.0
      %1356 = vst [vmem:[#allocation4 + $0x80] sm:$0xff] 0.0
      %1357 = vst [vmem:[#allocation4 + $0x88] sm:$0xff] 0.0
      %1358 = vst [vmem:[#allocation4 + $0x90] sm:$0xff] 0.0
      %1359 = vst [vmem:[#allocation4 + $0x98] sm:$0xff] 0.0
      %1360 = vst [vmem:[#allocation4 + $0xa0] sm:$0xff] 0.0
      %1361 = vst [vmem:[#allocation4 + $0xa8] sm:$0xff] 0.0
      %1362 = vst [vmem:[#allocation4 + $0xb0] sm:$0xff] 0.0
      %1363 = vst [vmem:[#allocation4 + $0xb8] sm:$0xff] 0.0
      %1364 = vst [vmem:[#allocation4 + $0xc0] sm:$0xff] 0.0
      %1365 = vst [vmem:[#allocation4 + $0xc8] sm:$0xff] 0.0
      %1366 = vst [vmem:[#allocation4 + $0xd0] sm:$0xff] 0.0
      %1367 = vst [vmem:[#allocation4 + $0xd8] sm:$0xff] 0.0
      %1368 = vst [vmem:[#allocation4 + $0xe0] sm:$0xff] 0.0
      %1369 = vst [vmem:[#allocation4 + $0xe8] sm:$0xff] 0.0
      %1370 = vst [vmem:[#allocation4 + $0xf0] sm:$0xff] 0.0
      %1371 = vst [vmem:[#allocation4 + $0xf8] sm:$0xff] 0.0
      %1372 = vst [vmem:[#allocation4 + $0x100] sm:$0xff] 0.0
      %1373 = vst [vmem:[#allocation4 + $0x108] sm:$0xff] 0.0
      %1374 = vst [vmem:[#allocation4 + $0x110] sm:$0xff] 0.0
      %1375 = vst [vmem:[#allocation4 + $0x118] sm:$0xff] 0.0
      %v1376 = vld [vmem:[#allocation2] sm:$0xc0]
      %v1377 = vld [vmem:[#allocation2 + $0x8] sm:$0xff]
      %v1378 = vld [vmem:[#allocation2 + $0x10] sm:$0xff]
      %v1379 = vld [vmem:[#allocation2 + $0x18] sm:$0xff]
      %v1380 = vld [vmem:[#allocation2 + $0x20] sm:$0xff]
      %v1381 = vld [vmem:[#allocation2 + $0x28] sm:$0xff]
      %v1382 = vld [vmem:[#allocation2 + $0x30] sm:$0xff]
      %v1383 = vld [vmem:[#allocation2 + $0x38] sm:$0xff]
      %v1384 = vld [vmem:[#allocation2 + $0x40] sm:$0xff]
      %v1385 = vld [vmem:[#allocation2 + $0x48] sm:$0xff]
      %v1386 = vld [vmem:[#allocation2 + $0x50] sm:$0xff]
      %v1387 = vld [vmem:[#allocation2 + $0x58] sm:$0xff]
      %v1388 = vld [vmem:[#allocation2 + $0x60] sm:$0xff]
      %v1389 = vld [vmem:[#allocation2 + $0x68] sm:$0xff]
      %v1390 = vld [vmem:[#allocation2 + $0x70] sm:$0xff]
      %v1391 = vld [vmem:[#allocation2 + $0x78] sm:$0xff]
      %v1392 = vld [vmem:[#allocation2 + $0x80] sm:$0xff]
      %v1393 = vld [vmem:[#allocation2 + $0x88] sm:$0xff]
      %v1394 = vld [vmem:[#allocation2 + $0x90] sm:$0x7f]
      %vm1395 = vsmask.f32 1280
      %v1397 = vshrl.u32 %v1376, 16
      %v1399 = vrot.slane %v1397, 6
      %v1400 = vshll.u32 %v1376, 16
      %v1402 = vrot.slane %v1400, 7
      %v1403 = vor.u32 %v1399, %v1402
      %v1405 = vshrl.u32 %v1377, 16
      %v1407 = vrot.slane %v1405, 6
      %v1408 = vshll.u32 %v1377, 16
      %v1410 = vrot.slane %v1408, 7
      %v1411 = vor.u32 %v1407, %v1410
      %v1412 = vsel %vm1395, %v1403, %v1411
      %v1414 = vshrl.u32 %v1378, 16
      %v1416 = vrot.slane %v1414, 6
      %v1417 = vshll.u32 %v1378, 16
      %v1419 = vrot.slane %v1417, 7
      %v1420 = vor.u32 %v1416, %v1419
      %v1421 = vsel %vm1395, %v1411, %v1420
      %v1423 = vshrl.u32 %v1379, 16
      %v1425 = vrot.slane %v1423, 6
      %v1426 = vshll.u32 %v1379, 16
      %v1428 = vrot.slane %v1426, 7
      %v1429 = vor.u32 %v1425, %v1428
      %v1430 = vsel %vm1395, %v1420, %v1429
      %v1432 = vshrl.u32 %v1380, 16
      %v1434 = vrot.slane %v1432, 6
      %v1435 = vshll.u32 %v1380, 16
      %v1437 = vrot.slane %v1435, 7
      %v1438 = vor.u32 %v1434, %v1437
      %v1439 = vsel %vm1395, %v1429, %v1438
      %v1441 = vshrl.u32 %v1381, 16
      %v1443 = vrot.slane %v1441, 6
      %v1444 = vshll.u32 %v1381, 16
      %v1446 = vrot.slane %v1444, 7
      %v1447 = vor.u32 %v1443, %v1446
      %v1448 = vsel %vm1395, %v1438, %v1447
      %v1450 = vshrl.u32 %v1382, 16
      %v1452 = vrot.slane %v1450, 6
      %v1453 = vshll.u32 %v1382, 16
      %v1455 = vrot.slane %v1453, 7
      %v1456 = vor.u32 %v1452, %v1455
      %v1457 = vsel %vm1395, %v1447, %v1456
      %v1459 = vshrl.u32 %v1383, 16
      %v1461 = vrot.slane %v1459, 6
      %v1462 = vshll.u32 %v1383, 16
      %v1464 = vrot.slane %v1462, 7
      %v1465 = vor.u32 %v1461, %v1464
      %v1466 = vsel %vm1395, %v1456, %v1465
      %v1468 = vshrl.u32 %v1384, 16
      %v1470 = vrot.slane %v1468, 6
      %v1471 = vshll.u32 %v1384, 16
      %v1473 = vrot.slane %v1471, 7
      %v1474 = vor.u32 %v1470, %v1473
      %v1475 = vsel %vm1395, %v1465, %v1474
      %v1477 = vshrl.u32 %v1385, 16
      %v1479 = vrot.slane %v1477, 6
      %v1480 = vshll.u32 %v1385, 16
      %v1482 = vrot.slane %v1480, 7
      %v1483 = vor.u32 %v1479, %v1482
      %v1484 = vsel %vm1395, %v1474, %v1483
      %v1486 = vshrl.u32 %v1386, 16
      %v1488 = vrot.slane %v1486, 6
      %v1489 = vshll.u32 %v1386, 16
      %v1491 = vrot.slane %v1489, 7
      %v1492 = vor.u32 %v1488, %v1491
      %v1493 = vsel %vm1395, %v1483, %v1492
      %v1495 = vshrl.u32 %v1387, 16
      %v1497 = vrot.slane %v1495, 6
      %v1498 = vshll.u32 %v1387, 16
      %v1500 = vrot.slane %v1498, 7
      %v1501 = vor.u32 %v1497, %v1500
      %v1502 = vsel %vm1395, %v1492, %v1501
      %v1504 = vshrl.u32 %v1388, 16
      %v1506 = vrot.slane %v1504, 6
      %v1507 = vshll.u32 %v1388, 16
      %v1509 = vrot.slane %v1507, 7
      %v1510 = vor.u32 %v1506, %v1509
      %v1511 = vsel %vm1395, %v1501, %v1510
      %v1513 = vshrl.u32 %v1389, 16
      %v1515 = vrot.slane %v1513, 6
      %v1516 = vshll.u32 %v1389, 16
      %v1518 = vrot.slane %v1516, 7
      %v1519 = vor.u32 %v1515, %v1518
      %v1520 = vsel %vm1395, %v1510, %v1519
      %v1522 = vshrl.u32 %v1390, 16
      %v1524 = vrot.slane %v1522, 6
      %v1525 = vshll.u32 %v1390, 16
      %v1527 = vrot.slane %v1525, 7
      %v1528 = vor.u32 %v1524, %v1527
      %v1529 = vsel %vm1395, %v1519, %v1528
      %v1531 = vshrl.u32 %v1391, 16
      %v1533 = vrot.slane %v1531, 6
      %v1534 = vshll.u32 %v1391, 16
      %v1536 = vrot.slane %v1534, 7
      %v1537 = vor.u32 %v1533, %v1536
      %v1538 = vsel %vm1395, %v1528, %v1537
      %v1540 = vshrl.u32 %v1392, 16
      %v1542 = vrot.slane %v1540, 6
      %v1543 = vshll.u32 %v1392, 16
      %v1545 = vrot.slane %v1543, 7
      %v1546 = vor.u32 %v1542, %v1545
      %v1547 = vsel %vm1395, %v1537, %v1546
      %v1549 = vshrl.u32 %v1393, 16
      %v1551 = vrot.slane %v1549, 6
      %v1552 = vshll.u32 %v1393, 16
      %v1554 = vrot.slane %v1552, 7
      %v1555 = vor.u32 %v1551, %v1554
      %v1556 = vsel %vm1395, %v1546, %v1555
      %v1558 = vshrl.u32 %v1394, 16
      %v1560 = vrot.slane %v1558, 6
      %v1561 = vshll.u32 %v1394, 16
      %v1563 = vrot.slane %v1561, 7
      %v1564 = vor.u32 %v1560, %v1563
      %v1565 = vsel %vm1395, %v1555, %v1564
      %1584 = vst [vmem:[#allocation3] sm:$0xff] %v1412
      %1585 = vst [vmem:[#allocation3 + $0x18] sm:$0xff] %v1421
      %1586 = vst [vmem:[#allocation3 + $0x30] sm:$0xff] %v1430
      %1587 = vst [vmem:[#allocation3 + $0x48] sm:$0xff] %v1439
      %1588 = vst [vmem:[#allocation3 + $0x60] sm:$0xff] %v1448
      %1589 = vst [vmem:[#allocation3 + $0x78] sm:$0xff] %v1457
      %1590 = vst [vmem:[#allocation3 + $0x90] sm:$0xff] %v1466
      %1591 = vst [vmem:[#allocation3 + $0xa8] sm:$0xff] %v1475
      %1592 = vst [vmem:[#allocation3 + $0xc0] sm:$0xff] %v1484
      %1593 = vst [vmem:[#allocation3 + $0xd8] sm:$0xff] %v1493
      %1594 = vst [vmem:[#allocation3 + $0xf0] sm:$0xff] %v1502
      %1595 = vst [vmem:[#allocation3 + $0x108] sm:$0xff] %v1511
      %1596 = vst [vmem:[#allocation3 + $0x120] sm:$0xff] %v1520
      %1597 = vst [vmem:[#allocation3 + $0x138] sm:$0xff] %v1529
      %1598 = vst [vmem:[#allocation3 + $0x150] sm:$0xff] %v1538
      %1599 = vst [vmem:[#allocation3 + $0x168] sm:$0xff] %v1547
      %1600 = vst [vmem:[#allocation3 + $0x180] sm:$0xff] %v1556
      %1601 = vst [vmem:[#allocation3 + $0x198] sm:$0xff] %v1565
      %v1602 = vld [vmem:[#allocation2] sm:$0x80]
      %v1603 = vld [vmem:[#allocation2 + $0x8] sm:$0xff]
      %v1604 = vld [vmem:[#allocation2 + $0x10] sm:$0xff]
      %v1605 = vld [vmem:[#allocation2 + $0x18] sm:$0xff]
      %v1606 = vld [vmem:[#allocation2 + $0x20] sm:$0xff]
      %v1607 = vld [vmem:[#allocation2 + $0x28] sm:$0xff]
      %v1608 = vld [vmem:[#allocation2 + $0x30] sm:$0xff]
      %v1609 = vld [vmem:[#allocation2 + $0x38] sm:$0xff]
      %v1610 = vld [vmem:[#allocation2 + $0x40] sm:$0xff]
      %v1611 = vld [vmem:[#allocation2 + $0x48] sm:$0xff]
      %v1612 = vld [vmem:[#allocation2 + $0x50] sm:$0xff]
      %v1613 = vld [vmem:[#allocation2 + $0x58] sm:$0xff]
      %v1614 = vld [vmem:[#allocation2 + $0x60] sm:$0xff]
      %v1615 = vld [vmem:[#allocation2 + $0x68] sm:$0xff]
      %v1616 = vld [vmem:[#allocation2 + $0x70] sm:$0xff]
      %v1617 = vld [vmem:[#allocation2 + $0x78] sm:$0xff]
      %v1618 = vld [vmem:[#allocation2 + $0x80] sm:$0xff]
      %v1619 = vld [vmem:[#allocation2 + $0x88] sm:$0xff]
      %v1620 = vld [vmem:[#allocation2 + $0x90] sm:$0x7f]
      %vm1640 = vcmask 1040384
      %v1641 = vrot.slane %v1602, 7
      %v1642 = vrot.slane %v1603, 7
      %v1643 = vsel %vm1640, %v1641, %v1642
      %v1644 = vrot.slane %v1604, 7
      %v1645 = vsel %vm1640, %v1642, %v1644
      %v1646 = vrot.slane %v1605, 7
      %v1647 = vsel %vm1640, %v1644, %v1646
      %v1648 = vrot.slane %v1606, 7
      %v1649 = vsel %vm1640, %v1646, %v1648
      %v1650 = vrot.slane %v1607, 7
      %v1651 = vsel %vm1640, %v1648, %v1650
      %v1652 = vrot.slane %v1608, 7
      %v1653 = vsel %vm1640, %v1650, %v1652
      %v1654 = vrot.slane %v1609, 7
      %v1655 = vsel %vm1640, %v1652, %v1654
      %v1656 = vrot.slane %v1610, 7
      %v1657 = vsel %vm1640, %v1654, %v1656
      %v1658 = vrot.slane %v1611, 7
      %v1659 = vsel %vm1640, %v1656, %v1658
      %v1660 = vrot.slane %v1612, 7
      %v1661 = vsel %vm1640, %v1658, %v1660
      %v1662 = vrot.slane %v1613, 7
      %v1663 = vsel %vm1640, %v1660, %v1662
      %v1664 = vrot.slane %v1614, 7
      %v1665 = vsel %vm1640, %v1662, %v1664
      %v1666 = vrot.slane %v1615, 7
      %v1667 = vsel %vm1640, %v1664, %v1666
      %v1668 = vrot.slane %v1616, 7
      %v1669 = vsel %vm1640, %v1666, %v1668
      %v1670 = vrot.slane %v1617, 7
      %v1671 = vsel %vm1640, %v1668, %v1670
      %v1672 = vrot.slane %v1618, 7
      %v1673 = vsel %vm1640, %v1670, %v1672
      %v1674 = vrot.slane %v1619, 7
      %v1675 = vsel %vm1640, %v1672, %v1674
      %v1676 = vrot.slane %v1620, 7
      %v1677 = vsel %vm1640, %v1674, %v1676
      %1696 = vst [vmem:[#allocation3 + $0x8] sm:$0xff] %v1643
      %1697 = vst [vmem:[#allocation3 + $0x20] sm:$0xff] %v1645
      %1698 = vst [vmem:[#allocation3 + $0x38] sm:$0xff] %v1647
      %1699 = vst [vmem:[#allocation3 + $0x50] sm:$0xff] %v1649
      %1700 = vst [vmem:[#allocation3 + $0x68] sm:$0xff] %v1651
      %1701 = vst [vmem:[#allocation3 + $0x80] sm:$0xff] %v1653
      %1702 = vst [vmem:[#allocation3 + $0x98] sm:$0xff] %v1655
      %1703 = vst [vmem:[#allocation3 + $0xb0] sm:$0xff] %v1657
      %1704 = vst [vmem:[#allocation3 + $0xc8] sm:$0xff] %v1659
      %1705 = vst [vmem:[#allocation3 + $0xe0] sm:$0xff] %v1661
      %1706 = vst [vmem:[#allocation3 + $0xf8] sm:$0xff] %v1663
      %1707 = vst [vmem:[#allocation3 + $0x110] sm:$0xff] %v1665
      %1708 = vst [vmem:[#allocation3 + $0x128] sm:$0xff] %v1667
      %1709 = vst [vmem:[#allocation3 + $0x140] sm:$0xff] %v1669
      %1710 = vst [vmem:[#allocation3 + $0x158] sm:$0xff] %v1671
      %1711 = vst [vmem:[#allocation3 + $0x170] sm:$0xff] %v1673
      %1712 = vst [vmem:[#allocation3 + $0x188] sm:$0xff] %v1675
      %1713 = vst [vmem:[#allocation3 + $0x1a0] sm:$0xff] %v1677
      %v1714 = vld [vmem:[#allocation2] sm:$0x80]
      %v1715 = vld [vmem:[#allocation2 + $0x8] sm:$0xff]
      %v1716 = vld [vmem:[#allocation2 + $0x10] sm:$0xff]
      %v1717 = vld [vmem:[#allocation2 + $0x18] sm:$0xff]
      %v1718 = vld [vmem:[#allocation2 + $0x20] sm:$0xff]
      %v1719 = vld [vmem:[#allocation2 + $0x28] sm:$0xff]
      %v1720 = vld [vmem:[#allocation2 + $0x30] sm:$0xff]
      %v1721 = vld [vmem:[#allocation2 + $0x38] sm:$0xff]
      %v1722 = vld [vmem:[#allocation2 + $0x40] sm:$0xff]
      %v1723 = vld [vmem:[#allocation2 + $0x48] sm:$0xff]
      %v1724 = vld [vmem:[#allocation2 + $0x50] sm:$0xff]
      %v1725 = vld [vmem:[#allocation2 + $0x58] sm:$0xff]
      %v1726 = vld [vmem:[#allocation2 + $0x60] sm:$0xff]
      %v1727 = vld [vmem:[#allocation2 + $0x68] sm:$0xff]
      %v1728 = vld [vmem:[#allocation2 + $0x70] sm:$0xff]
      %v1729 = vld [vmem:[#allocation2 + $0x78] sm:$0xff]
      %v1730 = vld [vmem:[#allocation2 + $0x80] sm:$0xff]
      %v1731 = vld [vmem:[#allocation2 + $0x88] sm:$0xff]
      %v1732 = vld [vmem:[#allocation2 + $0x90] sm:$0xff]
      %vm1733 = vsmask.f32 256
      %v1735 = vshrl.u32 %v1714, 16
      %v1737 = vrot.slane %v1735, 7
      %v1739 = vshrl.u32 %v1715, 16
      %v1741 = vrot.slane %v1739, 7
      %v1742 = vshll.u32 %v1715, 16
      %v1744 = vor.u32 %v1741, %v1742
      %v1745 = vsel %vm1733, %v1737, %v1744
      %v1747 = vshrl.u32 %v1716, 16
      %v1749 = vrot.slane %v1747, 7
      %v1750 = vshll.u32 %v1716, 16
      %v1752 = vor.u32 %v1749, %v1750
      %v1753 = vsel %vm1733, %v1741, %v1752
      %v1755 = vshrl.u32 %v1717, 16
      %v1757 = vrot.slane %v1755, 7
      %v1758 = vshll.u32 %v1717, 16
      %v1760 = vor.u32 %v1757, %v1758
      %v1761 = vsel %vm1733, %v1749, %v1760
      %v1763 = vshrl.u32 %v1718, 16
      %v1765 = vrot.slane %v1763, 7
      %v1766 = vshll.u32 %v1718, 16
      %v1768 = vor.u32 %v1765, %v1766
      %v1769 = vsel %vm1733, %v1757, %v1768
      %v1771 = vshrl.u32 %v1719, 16
      %v1773 = vrot.slane %v1771, 7
      %v1774 = vshll.u32 %v1719, 16
      %v1776 = vor.u32 %v1773, %v1774
      %v1777 = vsel %vm1733, %v1765, %v1776
      %v1779 = vshrl.u32 %v1720, 16
      %v1781 = vrot.slane %v1779, 7
      %v1782 = vshll.u32 %v1720, 16
      %v1784 = vor.u32 %v1781, %v1782
      %v1785 = vsel %vm1733, %v1773, %v1784
      %v1787 = vshrl.u32 %v1721, 16
      %v1789 = vrot.slane %v1787, 7
      %v1790 = vshll.u32 %v1721, 16
      %v1792 = vor.u32 %v1789, %v1790
      %v1793 = vsel %vm1733, %v1781, %v1792
      %v1795 = vshrl.u32 %v1722, 16
      %v1797 = vrot.slane %v1795, 7
      %v1798 = vshll.u32 %v1722, 16
      %v1800 = vor.u32 %v1797, %v1798
      %v1801 = vsel %vm1733, %v1789, %v1800
      %v1803 = vshrl.u32 %v1723, 16
      %v1805 = vrot.slane %v1803, 7
      %v1806 = vshll.u32 %v1723, 16
      %v1808 = vor.u32 %v1805, %v1806
      %v1809 = vsel %vm1733, %v1797, %v1808
      %v1811 = vshrl.u32 %v1724, 16
      %v1813 = vrot.slane %v1811, 7
      %v1814 = vshll.u32 %v1724, 16
      %v1816 = vor.u32 %v1813, %v1814
      %v1817 = vsel %vm1733, %v1805, %v1816
      %v1819 = vshrl.u32 %v1725, 16
      %v1821 = vrot.slane %v1819, 7
      %v1822 = vshll.u32 %v1725, 16
      %v1824 = vor.u32 %v1821, %v1822
      %v1825 = vsel %vm1733, %v1813, %v1824
      %v1827 = vshrl.u32 %v1726, 16
      %v1829 = vrot.slane %v1827, 7
      %v1830 = vshll.u32 %v1726, 16
      %v1832 = vor.u32 %v1829, %v1830
      %v1833 = vsel %vm1733, %v1821, %v1832
      %v1835 = vshrl.u32 %v1727, 16
      %v1837 = vrot.slane %v1835, 7
      %v1838 = vshll.u32 %v1727, 16
      %v1840 = vor.u32 %v1837, %v1838
      %v1841 = vsel %vm1733, %v1829, %v1840
      %v1843 = vshrl.u32 %v1728, 16
      %v1845 = vrot.slane %v1843, 7
      %v1846 = vshll.u32 %v1728, 16
      %v1848 = vor.u32 %v1845, %v1846
      %v1849 = vsel %vm1733, %v1837, %v1848
      %v1851 = vshrl.u32 %v1729, 16
      %v1853 = vrot.slane %v1851, 7
      %v1854 = vshll.u32 %v1729, 16
      %v1856 = vor.u32 %v1853, %v1854
      %v1857 = vsel %vm1733, %v1845, %v1856
      %v1859 = vshrl.u32 %v1730, 16
      %v1861 = vrot.slane %v1859, 7
      %v1862 = vshll.u32 %v1730, 16
      %v1864 = vor.u32 %v1861, %v1862
      %v1865 = vsel %vm1733, %v1853, %v1864
      %v1867 = vshrl.u32 %v1731, 16
      %v1869 = vrot.slane %v1867, 7
      %v1870 = vshll.u32 %v1731, 16
      %v1872 = vor.u32 %v1869, %v1870
      %v1873 = vsel %vm1733, %v1861, %v1872
      %v1875 = vshrl.u32 %v1732, 16
      %v1877 = vrot.slane %v1875, 7
      %v1878 = vshll.u32 %v1732, 16
      %v1880 = vor.u32 %v1877, %v1878
      %v1881 = vsel %vm1733, %v1869, %v1880
      %1900 = vst [vmem:[#allocation3 + $0x10] sm:$0xff] %v1745
      %1901 = vst [vmem:[#allocation3 + $0x28] sm:$0xff] %v1753
      %1902 = vst [vmem:[#allocation3 + $0x40] sm:$0xff] %v1761
      %1903 = vst [vmem:[#allocation3 + $0x58] sm:$0xff] %v1769
      %1904 = vst [vmem:[#allocation3 + $0x70] sm:$0xff] %v1777
      %1905 = vst [vmem:[#allocation3 + $0x88] sm:$0xff] %v1785
      %1906 = vst [vmem:[#allocation3 + $0xa0] sm:$0xff] %v1793
      %1907 = vst [vmem:[#allocation3 + $0xb8] sm:$0xff] %v1801
      %1908 = vst [vmem:[#allocation3 + $0xd0] sm:$0xff] %v1809
      %1909 = vst [vmem:[#allocation3 + $0xe8] sm:$0xff] %v1817
      %1910 = vst [vmem:[#allocation3 + $0x100] sm:$0xff] %v1825
      %1911 = vst [vmem:[#allocation3 + $0x118] sm:$0xff] %v1833
      %1912 = vst [vmem:[#allocation3 + $0x130] sm:$0xff] %v1841
      %1913 = vst [vmem:[#allocation3 + $0x148] sm:$0xff] %v1849
      %1914 = vst [vmem:[#allocation3 + $0x160] sm:$0xff] %v1857
      %1915 = vst [vmem:[#allocation3 + $0x178] sm:$0xff] %v1865
      %1916 = vst [vmem:[#allocation3 + $0x190] sm:$0xff] %v1873
      %1917 = vst [vmem:[#allocation3 + $0x1a8] sm:$0xff] %v1881
      %v1918 = vld [vmem:[#allocation4] sm:$0xff]
      %v1919 = vld [vmem:[#allocation4 + $0x8] sm:$0xff]
      %v1920 = vld [vmem:[#allocation4 + $0x10] sm:$0xff]
      %v1921 = vld [vmem:[#allocation4 + $0x18] sm:$0xff]
      %v1922 = vld [vmem:[#allocation4 + $0x20] sm:$0xff]
      %v1923 = vld [vmem:[#allocation4 + $0x28] sm:$0xff]
      %v1924 = vld [vmem:[#allocation4 + $0x30] sm:$0xff]
      %v1925 = vld [vmem:[#allocation4 + $0x38] sm:$0xff]
      %v1926 = vld [vmem:[#allocation4 + $0x40] sm:$0xff]
      %v1927 = vld [vmem:[#allocation4 + $0x48] sm:$0xff]
      %v1928 = vld [vmem:[#allocation4 + $0x50] sm:$0xff]
      %v1929 = vld [vmem:[#allocation4 + $0x58] sm:$0xff]
      %v1930 = vld [vmem:[#allocation4 + $0x60] sm:$0xff]
      %v1931 = vld [vmem:[#allocation4 + $0x68] sm:$0xff]
      %v1932 = vld [vmem:[#allocation4 + $0x70] sm:$0xff]
      %v1933 = vld [vmem:[#allocation4 + $0x78] sm:$0xff]
      %v1934 = vld [vmem:[#allocation4 + $0x80] sm:$0xff]
      %v1935 = vld [vmem:[#allocation4 + $0x88] sm:$0xff]
      %v1936 = vld [vmem:[#allocation4 + $0x90] sm:$0xff]
      %v1937 = vld [vmem:[#allocation4 + $0x98] sm:$0xff]
      %v1938 = vld [vmem:[#allocation4 + $0xa0] sm:$0xff]
      %v1939 = vld [vmem:[#allocation4 + $0xa8] sm:$0xff]
      %v1940 = vld [vmem:[#allocation4 + $0xb0] sm:$0xff]
      %v1941 = vld [vmem:[#allocation4 + $0xb8] sm:$0xff]
      %v1942 = vld [vmem:[#allocation4 + $0xc0] sm:$0xff]
      %v1943 = vld [vmem:[#allocation4 + $0xc8] sm:$0xff]
      %v1944 = vld [vmem:[#allocation4 + $0xd0] sm:$0xff]
      %v1945 = vld [vmem:[#allocation4 + $0xd8] sm:$0xff]
      %v1946 = vld [vmem:[#allocation4 + $0xe0] sm:$0xff]
      %v1947 = vld [vmem:[#allocation4 + $0xe8] sm:$0xff]
      %v1948 = vld [vmem:[#allocation4 + $0xf0] sm:$0xff]
      %v1949 = vld [vmem:[#allocation4 + $0xf8] sm:$0xff]
      %v1950 = vld [vmem:[#allocation4 + $0x100] sm:$0xff]
      %v1951 = vld [vmem:[#allocation4 + $0x108] sm:$0xff]
      %v1952 = vld [vmem:[#allocation4 + $0x110] sm:$0xff]
      %v1953 = vld [vmem:[#allocation4 + $0x118] sm:$0xff]
      %v1954 = vld [vmem:[#allocation3] sm:$0xff]
      %v1955 = vld [vmem:[#allocation3 + $0x8] sm:$0xff]
      %v1956 = vld [vmem:[#allocation3 + $0x10] sm:$0xff]
      %v1957 = vld [vmem:[#allocation3 + $0x18] sm:$0xff]
      %v1958 = vld [vmem:[#allocation3 + $0x20] sm:$0xff]
      %v1959 = vld [vmem:[#allocation3 + $0x28] sm:$0xff]
      %v1960 = vld [vmem:[#allocation3 + $0x30] sm:$0xff]
      %v1961 = vld [vmem:[#allocation3 + $0x38] sm:$0xff]
      %v1962 = vld [vmem:[#allocation3 + $0x40] sm:$0xff]
      %v1963 = vld [vmem:[#allocation3 + $0x48] sm:$0xff]
      %v1964 = vld [vmem:[#allocation3 + $0x50] sm:$0xff]
      %v1965 = vld [vmem:[#allocation3 + $0x58] sm:$0xff]
      %v1966 = vld [vmem:[#allocation3 + $0x60] sm:$0xff]
      %v1967 = vld [vmem:[#allocation3 + $0x68] sm:$0xff]
      %v1968 = vld [vmem:[#allocation3 + $0x70] sm:$0xff]
      %v1969 = vld [vmem:[#allocation3 + $0x78] sm:$0xff]
      %v1970 = vld [vmem:[#allocation3 + $0x80] sm:$0xff]
      %v1971 = vld [vmem:[#allocation3 + $0x88] sm:$0xff]
      %v1972 = vld [vmem:[#allocation3 + $0x90] sm:$0xff]
      %v1973 = vld [vmem:[#allocation3 + $0x98] sm:$0xff]
      %v1974 = vld [vmem:[#allocation3 + $0xa0] sm:$0xff]
      %v1975 = vld [vmem:[#allocation3 + $0xa8] sm:$0xff]
      %v1976 = vld [vmem:[#allocation3 + $0xb0] sm:$0xff]
      %v1977 = vld [vmem:[#allocation3 + $0xb8] sm:$0xff]
      %v1978 = vld [vmem:[#allocation3 + $0xc0] sm:$0xff]
      %v1979 = vld [vmem:[#allocation3 + $0xc8] sm:$0xff]
      %v1980 = vld [vmem:[#allocation3 + $0xd0] sm:$0xff]
      %v1981 = vld [vmem:[#allocation3 + $0xd8] sm:$0xff]
      %v1982 = vld [vmem:[#allocation3 + $0xe0] sm:$0xff]
      %v1983 = vld [vmem:[#allocation3 + $0xe8] sm:$0xff]
      %v1984 = vld [vmem:[#allocation3 + $0xf0] sm:$0xff]
      %v1985 = vld [vmem:[#allocation3 + $0xf8] sm:$0xff]
      %v1986 = vld [vmem:[#allocation3 + $0x100] sm:$0xff]
      %v1987 = vld [vmem:[#allocation3 + $0x108] sm:$0xff]
      %v1988 = vld [vmem:[#allocation3 + $0x110] sm:$0xff]
      %v1989 = vld [vmem:[#allocation3 + $0x118] sm:$0xff]
      %v1990 = vld [vmem:[#allocation3 + $0x120] sm:$0xff]
      %v1991 = vld [vmem:[#allocation3 + $0x128] sm:$0xff]
      %v1992 = vld [vmem:[#allocation3 + $0x130] sm:$0xff]
      %v1993 = vld [vmem:[#allocation3 + $0x138] sm:$0xff]
      %v1994 = vld [vmem:[#allocation3 + $0x140] sm:$0xff]
      %v1995 = vld [vmem:[#allocation3 + $0x148] sm:$0xff]
      %v1996 = vld [vmem:[#allocation3 + $0x150] sm:$0xff]
      %v1997 = vld [vmem:[#allocation3 + $0x158] sm:$0xff]
      %v1998 = vld [vmem:[#allocation3 + $0x160] sm:$0xff]
      %v1999 = vld [vmem:[#allocation3 + $0x168] sm:$0xff]
      %v2000 = vld [vmem:[#allocation3 + $0x170] sm:$0xff]
      %v2001 = vld [vmem:[#allocation3 + $0x178] sm:$0xff]
      %v2002 = vld [vmem:[#allocation3 + $0x180] sm:$0xff]
      %v2003 = vld [vmem:[#allocation3 + $0x188] sm:$0xff]
      %v2004 = vld [vmem:[#allocation3 + $0x190] sm:$0xff]
      %v2005 = vld [vmem:[#allocation3 + $0x198] sm:$0xff]
      %v2006 = vld [vmem:[#allocation3 + $0x1a0] sm:$0xff]
      %v2007 = vld [vmem:[#allocation3 + $0x1a8] sm:$0xff]
      %v2008 = vld [vmem:[%s3] sm:$0xf]
      %v2009 = vld [vmem:[%s3 + $0x4] sm:$0xf]
      %v2010 = vld [vmem:[%s3 + $0x8] sm:$0xf]
      %v2011 = vld [vmem:[%s3 + $0xc] sm:$0xf]
      %v2012 = vld [vmem:[%s3 + $0x10] sm:$0xf]
      %v2013 = vld [vmem:[%s3 + $0x14] sm:$0xf]
      %v2014 = vld [vmem:[%s3 + $0x18] sm:$0xf]
      %v2015 = vld [vmem:[%s3 + $0x1c] sm:$0xf]
      %v2016 = vld [vmem:[%s3 + $0x20] sm:$0xf]
      %v2017 = vld [vmem:[%s3 + $0x24] sm:$0xf]
      %v2018 = vld [vmem:[%s3 + $0x28] sm:$0xf]
      %v2019 = vld [vmem:[%s3 + $0x2c] sm:$0xf]
      %v2020 = vld [vmem:[%s3 + $0x30] sm:$0xf]
      %v2021 = vld [vmem:[%s3 + $0x34] sm:$0xf]
      %v2022 = vld [vmem:[%s3 + $0x38] sm:$0xf]
      %v2023 = vld [vmem:[%s3 + $0x3c] sm:$0xf]
      %v2024 = vld [vmem:[%s3 + $0x40] sm:$0xf]
      %v2025 = vld [vmem:[%s3 + $0x44] sm:$0xf]
      %v2026 = vld [vmem:[%s3 + $0x48] sm:$0xf]
      %v2027 = vld [vmem:[%s3 + $0x4c] sm:$0xf]
      %v2028 = vld [vmem:[%s3 + $0x50] sm:$0xf]
      %v2029 = vld [vmem:[%s3 + $0x54] sm:$0xf]
      %v2030 = vld [vmem:[%s3 + $0x58] sm:$0xf]
      %v2031 = vld [vmem:[%s3 + $0x5c] sm:$0xf]
      %v2032 = vld [vmem:[%s3 + $0x60] sm:$0xf]
      %v2033 = vld [vmem:[%s3 + $0x64] sm:$0xf]
      %v2034 = vld [vmem:[%s3 + $0x68] sm:$0xf]
      %v2035 = vld [vmem:[%s3 + $0x6c] sm:$0xf]
      %v2036 = vld [vmem:[%s3 + $0x70] sm:$0xf]
      %v2037 = vld [vmem:[%s3 + $0x74] sm:$0xf]
      %v2038 = vld [vmem:[%s3 + $0x78] sm:$0xf]
      %v2039 = vld [vmem:[%s3 + $0x7c] sm:$0xf]
      %v2040 = vld [vmem:[%s3 + $0x80] sm:$0xf]
      %v2041 = vld [vmem:[%s3 + $0x84] sm:$0xf]
      %v2042 = vld [vmem:[%s3 + $0x88] sm:$0xf]
      %v2043 = vld [vmem:[%s3 + $0x8c] sm:$0xf]
      %v2044 = vld [vmem:[%s3 + $0x90] sm:$0xf]
      %v2045 = vld [vmem:[%s3 + $0x94] sm:$0xf]
      %v2046 = vld [vmem:[%s3 + $0x98] sm:$0xf]
      %v2047 = vld [vmem:[%s3 + $0x9c] sm:$0xf]
      %v2048 = vld [vmem:[%s3 + $0xa0] sm:$0xf]
      %v2049 = vld [vmem:[%s3 + $0xa4] sm:$0xf]
      %v2050 = vld [vmem:[%s3 + $0xa8] sm:$0xf]
      %v2051 = vld [vmem:[%s3 + $0xac] sm:$0xf]
      %v2052 = vld [vmem:[%s3 + $0xb0] sm:$0xf]
      %v2053 = vld [vmem:[%s3 + $0xb4] sm:$0xf]
      %v2054 = vld [vmem:[%s3 + $0xb8] sm:$0xf]
      %v2055 = vld [vmem:[%s3 + $0xbc] sm:$0xf]
      %v2104 = vunpack.c.l.b16 %v2008
      %v2105 = vunpack.c.l.b16 %v2009
      %v2106 = vunpack.c.l.b16 %v2010
      %v2107 = vunpack.c.l.b16 %v2011
      %v2108 = vunpack.c.l.b16 %v2012
      %v2109 = vunpack.c.l.b16 %v2013
      %v2110 = vunpack.c.l.b16 %v2014
      %v2111 = vunpack.c.l.b16 %v2015
      %v2112 = vunpack.c.l.b16 %v2016
      %v2113 = vunpack.c.l.b16 %v2017
      %v2114 = vunpack.c.l.b16 %v2018
      %v2115 = vunpack.c.l.b16 %v2019
      %v2116 = vunpack.c.l.b16 %v2020
      %v2117 = vunpack.c.l.b16 %v2021
      %v2118 = vunpack.c.l.b16 %v2022
      %v2119 = vunpack.c.l.b16 %v2023
      %v2120 = vunpack.c.l.b16 %v2024
      %v2121 = vunpack.c.l.b16 %v2025
      %v2122 = vunpack.c.l.b16 %v2026
      %v2123 = vunpack.c.l.b16 %v2027
      %v2124 = vunpack.c.l.b16 %v2028
      %v2125 = vunpack.c.l.b16 %v2029
      %v2126 = vunpack.c.l.b16 %v2030
      %v2127 = vunpack.c.l.b16 %v2031
      %v2128 = vunpack.c.l.b16 %v2032
      %v2129 = vunpack.c.l.b16 %v2033
      %v2130 = vunpack.c.l.b16 %v2034
      %v2131 = vunpack.c.l.b16 %v2035
      %v2132 = vunpack.c.l.b16 %v2036
      %v2133 = vunpack.c.l.b16 %v2037
      %v2134 = vunpack.c.l.b16 %v2038
      %v2135 = vunpack.c.l.b16 %v2039
      %v2136 = vunpack.c.l.b16 %v2040
      %v2137 = vunpack.c.l.b16 %v2041
      %v2138 = vunpack.c.l.b16 %v2042
      %v2139 = vunpack.c.l.b16 %v2043
      %v2140 = vunpack.c.l.b16 %v2044
      %v2141 = vunpack.c.l.b16 %v2045
      %v2142 = vunpack.c.l.b16 %v2046
      %v2143 = vunpack.c.l.b16 %v2047
      %v2144 = vunpack.c.l.b16 %v2048
      %v2145 = vunpack.c.l.b16 %v2049
      %v2146 = vunpack.c.l.b16 %v2050
      %v2147 = vunpack.c.l.b16 %v2051
      %v2148 = vunpack.c.l.b16 %v2052
      %v2149 = vunpack.c.l.b16 %v2053
      %v2150 = vunpack.c.l.b16 %v2054
      %v2151 = vunpack.c.l.b16 %v2055
      %v2152 = vpack.c.b16 %v2105, %v2104
      %v2153 = vpack.c.b16 %v2107, %v2106
      %v2154 = vpack.c.b16 %v2109, %v2108
      %v2155 = vpack.c.b16 %v2111, %v2110
      %v2156 = vpack.c.b16 %v2113, %v2112
      %v2157 = vpack.c.b16 %v2115, %v2114
      %v2158 = vpack.c.b16 %v2117, %v2116
      %v2159 = vpack.c.b16 %v2119, %v2118
      %v2160 = vpack.c.b16 %v2121, %v2120
      %v2161 = vpack.c.b16 %v2123, %v2122
      %v2162 = vpack.c.b16 %v2125, %v2124
      %v2163 = vpack.c.b16 %v2127, %v2126
      %v2164 = vpack.c.b16 %v2129, %v2128
      %v2165 = vpack.c.b16 %v2131, %v2130
      %v2166 = vpack.c.b16 %v2133, %v2132
      %v2167 = vpack.c.b16 %v2135, %v2134
      %v2168 = vpack.c.b16 %v2137, %v2136
      %v2169 = vpack.c.b16 %v2139, %v2138
      %v2170 = vpack.c.b16 %v2141, %v2140
      %v2171 = vpack.c.b16 %v2143, %v2142
      %v2172 = vpack.c.b16 %v2145, %v2144
      %v2173 = vpack.c.b16 %v2147, %v2146
      %v2174 = vpack.c.b16 %v2149, %v2148
      %v2175 = vpack.c.b16 %v2151, %v2150
      %2200 = vmatprep.subr.bf16.mxu0 0
      %2201 = vmatpush1.bf16.msra.mxu0 %v2152
      %2202 = vmatprep.subr.bf16.mxu0 0
      %2203 = vmatpush1.bf16.msra.mxu0 %v2153
      %2204 = vmatprep.subr.bf16.mxu0 0
      %2205 = vmatpush1.bf16.msra.mxu0 %v2154
      %2206 = vmatprep.subr.bf16.mxu0 0
      %2207 = vmatpush1.bf16.msra.mxu0 %v2155
      %2208 = vmatprep.subr.bf16.mxu0 0
      %2209 = vmatpush1.bf16.msra.mxu0 %v2156
      %2210 = vmatprep.subr.bf16.mxu0 0
      %2211 = vmatpush1.bf16.msra.mxu0 %v2157
      %2212 = vmatprep.subr.bf16.mxu0 0
      %2213 = vmatpush1.bf16.msra.mxu0 %v2158
      %2214 = vmatprep.subr.bf16.mxu0 0
      %2215 = vmatpush1.bf16.msra.mxu0 %v2159
      %2216 = vmatprep.subr.bf16.mxu0 0
      %2217 = vmatpush1.bf16.msra.mxu0 %v2160
      %2218 = vmatprep.subr.bf16.mxu0 0
      %2219 = vmatpush1.bf16.msra.mxu0 %v2161
      %2220 = vmatprep.subr.bf16.mxu0 0
      %2221 = vmatpush1.bf16.msra.mxu0 %v2162
      %2222 = vmatprep.subr.bf16.mxu0 0
      %2223 = vmatpush1.bf16.msra.mxu0 %v2163
      %2224 = vmatprep.subr.bf16.mxu0 0
      %2225 = vmatpush1.bf16.msra.mxu0 %v2164
      %2226 = vmatprep.subr.bf16.mxu0 0
      %2227 = vmatpush1.bf16.msra.mxu0 %v2165
      %2228 = vmatprep.subr.bf16.mxu0 0
      %2229 = vmatpush1.bf16.msra.mxu0 %v2166
      %2230 = vmatprep.subr.bf16.mxu0 0
      %2231 = vmatpush1.bf16.msra.mxu0 %v2167
      %2232 = vmatprep.mubr.bf16.mxu0 %v1955
      %2233 = vmatmul.mubr.bf16.gmra.mrb[0].mxu0 %v1954
      %v2234 = vpop.f32.mrb[0].mxu0
      %v2235 = vadd.f32 0.0, %v2234
      %v2236 = vpop.f32.mrb[0].mxu0
      %v2237 = vpop.f32.mrb[0].mxu0
      %v2238 = vadd.f32 0.0, %v2237
      %v2239 = vpop.f32.mrb[0].mxu0
      %2240 = vmatprep.mubr.bf16.mxu0 %v1958
      %2241 = vmatmul.mubr.bf16.gmra.mrb[0].mxu0 %v1957
      %v2242 = vpop.f32.mrb[0].mxu0
      %v2243 = vadd.f32 0.0, %v2242
      %v2244 = vpop.f32.mrb[0].mxu0
      %v2245 = vpop.f32.mrb[0].mxu0
      %v2246 = vadd.f32 0.0, %v2245
      %v2247 = vpop.f32.mrb[0].mxu0
      %2248 = vmatprep.mubr.bf16.mxu0 %v1961
      %2249 = vmatmul.mubr.bf16.gmra.mrb[0].mxu0 %v1960
      %v2250 = vpop.f32.mrb[0].mxu0
      %v2251 = vadd.f32 0.0, %v2250
      %v2252 = vpop.f32.mrb[0].mxu0
      %v2253 = vpop.f32.mrb[0].mxu0
      %v2254 = vadd.f32 0.0, %v2253
      %v2255 = vpop.f32.mrb[0].mxu0
      %2256 = vmatprep.mubr.bf16.mxu0 %v1964
      %2257 = vmatmul.mubr.bf16.gmra.mrb[0].mxu0 %v1963
      %v2258 = vpop.f32.mrb[0].mxu0
      %v2259 = vadd.f32 0.0, %v2258
      %v2260 = vpop.f32.mrb[0].mxu0
      %v2261 = vpop.f32.mrb[0].mxu0
      %v2262 = vadd.f32 0.0, %v2261
      %v2263 = vpop.f32.mrb[0].mxu0
      %2264 = vmatprep.mubr.bf16.mxu0 %v1967
      %2265 = vmatmul.mubr.bf16.gmra.mrb[0].mxu0 %v1966
      %v2266 = vpop.f32.mrb[0].mxu0
      %v2267 = vadd.f32 0.0, %v2266
      %v2268 = vpop.f32.mrb[0].mxu0
      %v2269 = vpop.f32.mrb[0].mxu0
      %v2270 = vadd.f32 0.0, %v2269
      %v2271 = vpop.f32.mrb[0].mxu0
      %2272 = vmatprep.mubr.bf16.mxu0 %v1970
      %2273 = vmatmul.mubr.bf16.gmra.mrb[0].mxu0 %v1969
      %v2274 = vpop.f32.mrb[0].mxu0
      %v2275 = vadd.f32 0.0, %v2274
      %v2276 = vpop.f32.mrb[0].mxu0
      %v2277 = vpop.f32.mrb[0].mxu0
      %v2278 = vadd.f32 0.0, %v2277
      %v2279 = vpop.f32.mrb[0].mxu0
      %2280 = vmatprep.mubr.bf16.mxu0 %v1973
      %2281 = vmatmul.mubr.bf16.gmra.mrb[0].mxu0 %v1972
      %v2282 = vpop.f32.mrb[0].mxu0
      %v2283 = vadd.f32 0.0, %v2282
      %v2284 = vpop.f32.mrb[0].mxu0
      %v2285 = vpop.f32.mrb[0].mxu0
      %v2286 = vadd.f32 0.0, %v2285
      %v2287 = vpop.f32.mrb[0].mxu0
      %2288 = vmatprep.mubr.bf16.mxu0 %v1976
      %2289 = vmatmul.mubr.bf16.gmra.mrb[0].mxu0 %v1975
      %v2290 = vpop.f32.mrb[0].mxu0
      %v2291 = vadd.f32 0.0, %v2290
      %v2292 = vpop.f32.mrb[0].mxu0
      %v2293 = vpop.f32.mrb[0].mxu0
      %v2294 = vadd.f32 0.0, %v2293
      %v2295 = vpop.f32.mrb[0].mxu0
      %2296 = vmatprep.mubr.bf16.mxu0 %v1979
      %2297 = vmatmul.mubr.bf16.gmra.mrb[0].mxu0 %v1978
      %v2298 = vpop.f32.mrb[0].mxu0
      %v2299 = vadd.f32 0.0, %v2298
      %v2300 = vpop.f32.mrb[0].mxu0
      %v2301 = vpop.f32.mrb[0].mxu0
      %v2302 = vadd.f32 0.0, %v2301
      %v2303 = vpop.f32.mrb[0].mxu0
      %2304 = vmatprep.mubr.bf16.mxu0 %v1982
      %2305 = vmatmul.mubr.bf16.gmra.mrb[0].mxu0 %v1981
      %v2306 = vpop.f32.mrb[0].mxu0
      %v2307 = vadd.f32 0.0, %v2306
      %v2308 = vpop.f32.mrb[0].mxu0
      %v2309 = vpop.f32.mrb[0].mxu0
      %v2310 = vadd.f32 0.0, %v2309
      %v2311 = vpop.f32.mrb[0].mxu0
      %2312 = vmatprep.mubr.bf16.mxu0 %v1985
      %2313 = vmatmul.mubr.bf16.gmra.mrb[0].mxu0 %v1984
      %v2314 = vpop.f32.mrb[0].mxu0
      %v2315 = vadd.f32 0.0, %v2314
      %v2316 = vpop.f32.mrb[0].mxu0
      %v2317 = vpop.f32.mrb[0].mxu0
      %v2318 = vadd.f32 0.0, %v2317
      %v2319 = vpop.f32.mrb[0].mxu0
      %2320 = vmatprep.mubr.bf16.mxu0 %v1988
      %2321 = vmatmul.mubr.bf16.gmra.mrb[0].mxu0 %v1987
      %v2322 = vpop.f32.mrb[0].mxu0
      %v2323 = vadd.f32 0.0, %v2322
      %v2324 = vpop.f32.mrb[0].mxu0
      %v2325 = vpop.f32.mrb[0].mxu0
      %v2326 = vadd.f32 0.0, %v2325
      %v2327 = vpop.f32.mrb[0].mxu0
      %2328 = vmatprep.mubr.bf16.mxu0 %v1991
      %2329 = vmatmul.mubr.bf16.gmra.mrb[0].mxu0 %v1990
      %v2330 = vpop.f32.mrb[0].mxu0
      %v2331 = vadd.f32 0.0, %v2330
      %v2332 = vpop.f32.mrb[0].mxu0
      %v2333 = vpop.f32.mrb[0].mxu0
      %v2334 = vadd.f32 0.0, %v2333
      %v2335 = vpop.f32.mrb[0].mxu0
      %2336 = vmatprep.mubr.bf16.mxu0 %v1994
      %2337 = vmatmul.mubr.bf16.gmra.mrb[0].mxu0 %v1993
      %v2338 = vpop.f32.mrb[0].mxu0
      %v2339 = vadd.f32 0.0, %v2338
      %v2340 = vpop.f32.mrb[0].mxu0
      %v2341 = vpop.f32.mrb[0].mxu0
      %v2342 = vadd.f32 0.0, %v2341
      %v2343 = vpop.f32.mrb[0].mxu0
      %2344 = vmatprep.mubr.bf16.mxu0 %v1997
      %2345 = vmatmul.mubr.bf16.gmra.mrb[0].mxu0 %v1996
      %v2346 = vpop.f32.mrb[0].mxu0
      %v2347 = vadd.f32 0.0, %v2346
      %v2348 = vpop.f32.mrb[0].mxu0
      %v2349 = vpop.f32.mrb[0].mxu0
      %v2350 = vadd.f32 0.0, %v2349
      %v2351 = vpop.f32.mrb[0].mxu0
      %2352 = vmatprep.mubr.bf16.mxu0 %v2000
      %2353 = vmatmul.mubr.bf16.gmra.mrb[0].mxu0 %v1999
      %v2354 = vpop.f32.mrb[0].mxu0
      %v2355 = vadd.f32 0.0, %v2354
      %v2356 = vpop.f32.mrb[0].mxu0
      %v2357 = vpop.f32.mrb[0].mxu0
      %v2358 = vadd.f32 0.0, %v2357
      %v2359 = vpop.f32.mrb[0].mxu0
      %2360 = vmatprep.mubr.bf16.mxu0 %v2003
      %2361 = vmatmul.mubr.bf16.gmra.mrb[0].mxu0 %v2002
      %v2362 = vpop.f32.mrb[0].mxu0
      %v2363 = vadd.f32 0.0, %v2362
      %v2364 = vpop.f32.mrb[0].mxu0
      %v2365 = vpop.f32.mrb[0].mxu0
      %v2366 = vadd.f32 0.0, %v2365
      %v2367 = vpop.f32.mrb[0].mxu0
      %2368 = vmatprep.mubr.bf16.mxu0 %v2006
      %2369 = vmatmul.mubr.bf16.gmra.mrb[0].mxu0 %v2005
      %v2370 = vpop.f32.mrb[0].mxu0
      %v2371 = vadd.f32 0.0, %v2370
      %v2372 = vpop.f32.mrb[0].mxu0
      %v2373 = vpop.f32.mrb[0].mxu0
      %v2374 = vadd.f32 0.0, %v2373
      %v2375 = vpop.f32.mrb[0].mxu0
      %2376 = vdwg.mxu0
      %2377 = vmatprep.subr.bf16.mxu0 0
      %2378 = vmatpush1.bf16.msra.mxu0 %v2168
      %2379 = vmatprep.subr.bf16.mxu0 0
      %2380 = vmatpush1.bf16.msra.mxu0 %v2169
      %2381 = vmatprep.subr.bf16.mxu0 0
      %2382 = vmatpush1.bf16.msra.mxu0 %v2170
      %2383 = vmatprep.subr.bf16.mxu0 0
      %2384 = vmatpush1.bf16.msra.mxu0 %v2171
      %2385 = vmatprep.subr.bf16.mxu0 0
      %2386 = vmatpush1.bf16.msra.mxu0 %v2172
      %2387 = vmatprep.subr.bf16.mxu0 0
      %2388 = vmatpush1.bf16.msra.mxu0 %v2173
      %2389 = vmatprep.subr.bf16.mxu0 0
      %2390 = vmatpush1.bf16.msra.mxu0 %v2174
      %2391 = vmatprep.subr.bf16.mxu0 0
      %2392 = vmatpush1.bf16.msra.mxu0 %v2175
      %2393 = vmatprep.subr.bf16.mxu0 0
      %2394 = vmatpush1.bf16.msra.mxu0 0
      %2395 = vmatprep.subr.bf16.mxu0 0
      %2396 = vmatpush1.bf16.msra.mxu0 0
      %2397 = vmatprep.subr.bf16.mxu0 0
      %2398 = vmatpush1.bf16.msra.mxu0 0
      %2399 = vmatprep.subr.bf16.mxu0 0
      %2400 = vmatpush1.bf16.msra.mxu0 0
      %2401 = vmatprep.subr.bf16.mxu0 0
      %2402 = vmatpush1.bf16.msra.mxu0 0
      %2403 = vmatprep.subr.bf16.mxu0 0
      %2404 = vmatpush1.bf16.msra.mxu0 0
      %2405 = vmatprep.subr.bf16.mxu0 0
      %2406 = vmatpush1.bf16.msra.mxu0 0
      %2407 = vmatprep.subr.bf16.mxu0 0
      %2408 = vmatpush1.bf16.msra.mxu0 0
      %2409 = vmatprep.mubr.bf16.mxu0 0
      %2410 = vmatmul.mubr.bf16.gmra.mrb[0].mxu0 %v1956
      %v2411 = vpop.f32.mrb[0].mxu0
      %v2412 = vadd.f32 %v2235, %v2411
      %v2413 = vpop.f32.mrb[0].mxu0
      %v2414 = vpop.f32.mrb[0].mxu0
      %v2415 = vadd.f32 %v2238, %v2414
      %v2416 = vpop.f32.mrb[0].mxu0
      %2417 = vmatprep.mubr.bf16.mxu0 0
      %2418 = vmatmul.mubr.bf16.gmra.mrb[0].mxu0 %v1959
      %v2419 = vpop.f32.mrb[0].mxu0
      %v2420 = vadd.f32 %v2243, %v2419
      %v2421 = vpop.f32.mrb[0].mxu0
      %v2422 = vpop.f32.mrb[0].mxu0
      %v2423 = vadd.f32 %v2246, %v2422
      %v2424 = vpop.f32.mrb[0].mxu0
      %2425 = vmatprep.mubr.bf16.mxu0 0
      %2426 = vmatmul.mubr.bf16.gmra.mrb[0].mxu0 %v1962
      %v2427 = vpop.f32.mrb[0].mxu0
      %v2428 = vadd.f32 %v2251, %v2427
      %v2429 = vpop.f32.mrb[0].mxu0
      %v2430 = vpop.f32.mrb[0].mxu0
      %v2431 = vadd.f32 %v2254, %v2430
      %v2432 = vpop.f32.mrb[0].mxu0
      %2433 = vmatprep.mubr.bf16.mxu0 0
      %2434 = vmatmul.mubr.bf16.gmra.mrb[0].mxu0 %v1965
      %v2435 = vpop.f32.mrb[0].mxu0
      %v2436 = vadd.f32 %v2259, %v2435
      %v2437 = vpop.f32.mrb[0].mxu0
      %v2438 = vpop.f32.mrb[0].mxu0
      %v2439 = vadd.f32 %v2262, %v2438
      %v2440 = vpop.f32.mrb[0].mxu0
      %2441 = vmatprep.mubr.bf16.mxu0 0
      %2442 = vmatmul.mubr.bf16.gmra.mrb[0].mxu0 %v1968
      %v2443 = vpop.f32.mrb[0].mxu0
      %v2444 = vadd.f32 %v2267, %v2443
      %v2445 = vpop.f32.mrb[0].mxu0
      %v2446 = vpop.f32.mrb[0].mxu0
      %v2447 = vadd.f32 %v2270, %v2446
      %v2448 = vpop.f32.mrb[0].mxu0
      %2449 = vmatprep.mubr.bf16.mxu0 0
      %2450 = vmatmul.mubr.bf16.gmra.mrb[0].mxu0 %v1971
      %v2451 = vpop.f32.mrb[0].mxu0
      %v2452 = vadd.f32 %v2275, %v2451
      %v2453 = vpop.f32.mrb[0].mxu0
      %v2454 = vpop.f32.mrb[0].mxu0
      %v2455 = vadd.f32 %v2278, %v2454
      %v2456 = vpop.f32.mrb[0].mxu0
      %2457 = vmatprep.mubr.bf16.mxu0 0
      %2458 = vmatmul.mubr.bf16.gmra.mrb[0].mxu0 %v1974
      %v2459 = vpop.f32.mrb[0].mxu0
      %v2460 = vadd.f32 %v2283, %v2459
      %v2461 = vpop.f32.mrb[0].mxu0
      %v2462 = vpop.f32.mrb[0].mxu0
      %v2463 = vadd.f32 %v2286, %v2462
      %v2464 = vpop.f32.mrb[0].mxu0
      %2465 = vmatprep.mubr.bf16.mxu0 0
      %2466 = vmatmul.mubr.bf16.gmra.mrb[0].mxu0 %v1977
      %v2467 = vpop.f32.mrb[0].mxu0
      %v2468 = vadd.f32 %v2291, %v2467
      %v2469 = vpop.f32.mrb[0].mxu0
      %v2470 = vpop.f32.mrb[0].mxu0
      %v2471 = vadd.f32 %v2294, %v2470
      %v2472 = vpop.f32.mrb[0].mxu0
      %2473 = vmatprep.mubr.bf16.mxu0 0
      %2474 = vmatmul.mubr.bf16.gmra.mrb[0].mxu0 %v1980
      %v2475 = vpop.f32.mrb[0].mxu0
      %v2476 = vadd.f32 %v2299, %v2475
      %v2477 = vpop.f32.mrb[0].mxu0
      %v2478 = vpop.f32.mrb[0].mxu0
      %v2479 = vadd.f32 %v2302, %v2478
      %v2480 = vpop.f32.mrb[0].mxu0
      %2481 = vmatprep.mubr.bf16.mxu0 0
      %2482 = vmatmul.mubr.bf16.gmra.mrb[0].mxu0 %v1983
      %v2483 = vpop.f32.mrb[0].mxu0
      %v2484 = vadd.f32 %v2307, %v2483
      %v2485 = vpop.f32.mrb[0].mxu0
      %v2486 = vpop.f32.mrb[0].mxu0
      %v2487 = vadd.f32 %v2310, %v2486
      %v2488 = vpop.f32.mrb[0].mxu0
      %2489 = vmatprep.mubr.bf16.mxu0 0
      %2490 = vmatmul.mubr.bf16.gmra.mrb[0].mxu0 %v1986
      %v2491 = vpop.f32.mrb[0].mxu0
      %v2492 = vadd.f32 %v2315, %v2491
      %v2493 = vpop.f32.mrb[0].mxu0
      %v2494 = vpop.f32.mrb[0].mxu0
      %v2495 = vadd.f32 %v2318, %v2494
      %v2496 = vpop.f32.mrb[0].mxu0
      %2497 = vmatprep.mubr.bf16.mxu0 0
      %2498 = vmatmul.mubr.bf16.gmra.mrb[0].mxu0 %v1989
      %v2499 = vpop.f32.mrb[0].mxu0
      %v2500 = vadd.f32 %v2323, %v2499
      %v2501 = vpop.f32.mrb[0].mxu0
      %v2502 = vpop.f32.mrb[0].mxu0
      %v2503 = vadd.f32 %v2326, %v2502
      %v2504 = vpop.f32.mrb[0].mxu0
      %2505 = vmatprep.mubr.bf16.mxu0 0
      %2506 = vmatmul.mubr.bf16.gmra.mrb[0].mxu0 %v1992
      %v2507 = vpop.f32.mrb[0].mxu0
      %v2508 = vadd.f32 %v2331, %v2507
      %v2509 = vpop.f32.mrb[0].mxu0
      %v2510 = vpop.f32.mrb[0].mxu0
      %v2511 = vadd.f32 %v2334, %v2510
      %v2512 = vpop.f32.mrb[0].mxu0
      %2513 = vmatprep.mubr.bf16.mxu0 0
      %2514 = vmatmul.mubr.bf16.gmra.mrb[0].mxu0 %v1995
      %v2515 = vpop.f32.mrb[0].mxu0
      %v2516 = vadd.f32 %v2339, %v2515
      %v2517 = vpop.f32.mrb[0].mxu0
      %v2518 = vpop.f32.mrb[0].mxu0
      %v2519 = vadd.f32 %v2342, %v2518
      %v2520 = vpop.f32.mrb[0].mxu0
      %2521 = vmatprep.mubr.bf16.mxu0 0
      %2522 = vmatmul.mubr.bf16.gmra.mrb[0].mxu0 %v1998
      %v2523 = vpop.f32.mrb[0].mxu0
      %v2524 = vadd.f32 %v2347, %v2523
      %v2525 = vpop.f32.mrb[0].mxu0
      %v2526 = vpop.f32.mrb[0].mxu0
      %v2527 = vadd.f32 %v2350, %v2526
      %v2528 = vpop.f32.mrb[0].mxu0
      %2529 = vmatprep.mubr.bf16.mxu0 0
      %2530 = vmatmul.mubr.bf16.gmra.mrb[0].mxu0 %v2001
      %v2531 = vpop.f32.mrb[0].mxu0
      %v2532 = vadd.f32 %v2355, %v2531
      %v2533 = vpop.f32.mrb[0].mxu0
      %v2534 = vpop.f32.mrb[0].mxu0
      %v2535 = vadd.f32 %v2358, %v2534
      %v2536 = vpop.f32.mrb[0].mxu0
      %2537 = vmatprep.mubr.bf16.mxu0 0
      %2538 = vmatmul.mubr.bf16.gmra.mrb[0].mxu0 %v2004
      %v2539 = vpop.f32.mrb[0].mxu0
      %v2540 = vadd.f32 %v2363, %v2539
      %v2541 = vpop.f32.mrb[0].mxu0
      %v2542 = vpop.f32.mrb[0].mxu0
      %v2543 = vadd.f32 %v2366, %v2542
      %v2544 = vpop.f32.mrb[0].mxu0
      %2545 = vmatprep.mubr.bf16.mxu0 0
      %2546 = vmatmul.mubr.bf16.gmra.mrb[0].mxu0 %v2007
      %v2547 = vpop.f32.mrb[0].mxu0
      %v2548 = vadd.f32 %v2371, %v2547
      %v2549 = vpop.f32.mrb[0].mxu0
      %v2550 = vpop.f32.mrb[0].mxu0
      %v2551 = vadd.f32 %v2374, %v2550
      %v2552 = vpop.f32.mrb[0].mxu0
      %2553 = vdwg.mxu0
      %v2554 = vadd.f32 %v1918, %v2412
      %v2555 = vadd.f32 %v1919, %v2415
      %v2556 = vadd.f32 %v1920, %v2420
      %v2557 = vadd.f32 %v1921, %v2423
      %v2558 = vadd.f32 %v1922, %v2428
      %v2559 = vadd.f32 %v1923, %v2431
      %v2560 = vadd.f32 %v1924, %v2436
      %v2561 = vadd.f32 %v1925, %v2439
      %v2562 = vadd.f32 %v1926, %v2444
      %v2563 = vadd.f32 %v1927, %v2447
      %v2564 = vadd.f32 %v1928, %v2452
      %v2565 = vadd.f32 %v1929, %v2455
      %v2566 = vadd.f32 %v1930, %v2460
      %v2567 = vadd.f32 %v1931, %v2463
      %v2568 = vadd.f32 %v1932, %v2468
      %v2569 = vadd.f32 %v1933, %v2471
      %v2570 = vadd.f32 %v1934, %v2476
      %v2571 = vadd.f32 %v1935, %v2479
      %v2572 = vadd.f32 %v1936, %v2484
      %v2573 = vadd.f32 %v1937, %v2487
      %v2574 = vadd.f32 %v1938, %v2492
      %v2575 = vadd.f32 %v1939, %v2495
      %v2576 = vadd.f32 %v1940, %v2500
      %v2577 = vadd.f32 %v1941, %v2503
      %v2578 = vadd.f32 %v1942, %v2508
      %v2579 = vadd.f32 %v1943, %v2511
      %v2580 = vadd.f32 %v1944, %v2516
      %v2581 = vadd.f32 %v1945, %v2519
      %v2582 = vadd.f32 %v1946, %v2524
      %v2583 = vadd.f32 %v1947, %v2527
      %v2584 = vadd.f32 %v1948, %v2532
      %v2585 = vadd.f32 %v1949, %v2535
      %v2586 = vadd.f32 %v1950, %v2540
      %v2587 = vadd.f32 %v1951, %v2543
      %v2588 = vadd.f32 %v1952, %v2548
      %v2589 = vadd.f32 %v1953, %v2551
      %2590 = vst [vmem:[#allocation4] sm:$0xff] %v2554
      %2591 = vst [vmem:[#allocation4 + $0x8] sm:$0xff] %v2555
      %2592 = vst [vmem:[#allocation4 + $0x10] sm:$0xff] %v2556
      %2593 = vst [vmem:[#allocation4 + $0x18] sm:$0xff] %v2557
      %2594 = vst [vmem:[#allocation4 + $0x20] sm:$0xff] %v2558
      %2595 = vst [vmem:[#allocation4 + $0x28] sm:$0xff] %v2559
      %2596 = vst [vmem:[#allocation4 + $0x30] sm:$0xff] %v2560
      %2597 = vst [vmem:[#allocation4 + $0x38] sm:$0xff] %v2561
      %2598 = vst [vmem:[#allocation4 + $0x40] sm:$0xff] %v2562
      %2599 = vst [vmem:[#allocation4 + $0x48] sm:$0xff] %v2563
      %2600 = vst [vmem:[#allocation4 + $0x50] sm:$0xff] %v2564
      %2601 = vst [vmem:[#allocation4 + $0x58] sm:$0xff] %v2565
      %2602 = vst [vmem:[#allocation4 + $0x60] sm:$0xff] %v2566
      %2603 = vst [vmem:[#allocation4 + $0x68] sm:$0xff] %v2567
      %2604 = vst [vmem:[#allocation4 + $0x70] sm:$0xff] %v2568
      %2605 = vst [vmem:[#allocation4 + $0x78] sm:$0xff] %v2569
      %2606 = vst [vmem:[#allocation4 + $0x80] sm:$0xff] %v2570
      %2607 = vst [vmem:[#allocation4 + $0x88] sm:$0xff] %v2571
      %2608 = vst [vmem:[#allocation4 + $0x90] sm:$0xff] %v2572
      %2609 = vst [vmem:[#allocation4 + $0x98] sm:$0xff] %v2573
      %2610 = vst [vmem:[#allocation4 + $0xa0] sm:$0xff] %v2574
      %2611 = vst [vmem:[#allocation4 + $0xa8] sm:$0xff] %v2575
      %2612 = vst [vmem:[#allocation4 + $0xb0] sm:$0xff] %v2576
      %2613 = vst [vmem:[#allocation4 + $0xb8] sm:$0xff] %v2577
      %2614 = vst [vmem:[#allocation4 + $0xc0] sm:$0xff] %v2578
      %2615 = vst [vmem:[#allocation4 + $0xc8] sm:$0xff] %v2579
      %2616 = vst [vmem:[#allocation4 + $0xd0] sm:$0xff] %v2580
      %2617 = vst [vmem:[#allocation4 + $0xd8] sm:$0xff] %v2581
      %2618 = vst [vmem:[#allocation4 + $0xe0] sm:$0xff] %v2582
      %2619 = vst [vmem:[#allocation4 + $0xe8] sm:$0xff] %v2583
      %2620 = vst [vmem:[#allocation4 + $0xf0] sm:$0xff] %v2584
      %2621 = vst [vmem:[#allocation4 + $0xf8] sm:$0xff] %v2585
      %2622 = vst [vmem:[#allocation4 + $0x100] sm:$0xff] %v2586
      %2623 = vst [vmem:[#allocation4 + $0x108] sm:$0xff] %v2587
      %2624 = vst [vmem:[#allocation4 + $0x110] sm:$0xff] %v2588
      %2625 = vst [vmem:[#allocation4 + $0x118] sm:$0xff] %v2589
      %v2626 = vld [vmem:[#allocation2 + $0x8] sm:$0x80]
      %v2627 = vld [vmem:[#allocation2 + $0x10] sm:$0xff]
      %v2628 = vld [vmem:[#allocation2 + $0x18] sm:$0xff]
      %v2629 = vld [vmem:[#allocation2 + $0x20] sm:$0xff]
      %v2630 = vld [vmem:[#allocation2 + $0x28] sm:$0xff]
      %v2631 = vld [vmem:[#allocation2 + $0x30] sm:$0xff]
      %v2632 = vld [vmem:[#allocation2 + $0x38] sm:$0xff]
      %v2633 = vld [vmem:[#allocation2 + $0x40] sm:$0xff]
      %v2634 = vld [vmem:[#allocation2 + $0x48] sm:$0xff]
      %v2635 = vld [vmem:[#allocation2 + $0x50] sm:$0xff]
      %v2636 = vld [vmem:[#allocation2 + $0x58] sm:$0xff]
      %v2637 = vld [vmem:[#allocation2 + $0x60] sm:$0xff]
      %v2638 = vld [vmem:[#allocation2 + $0x68] sm:$0xff]
      %v2639 = vld [vmem:[#allocation2 + $0x70] sm:$0xff]
      %v2640 = vld [vmem:[#allocation2 + $0x78] sm:$0xff]
      %v2641 = vld [vmem:[#allocation2 + $0x80] sm:$0xff]
      %v2642 = vld [vmem:[#allocation2 + $0x88] sm:$0xff]
      %v2643 = vld [vmem:[#allocation2 + $0x90] sm:$0xff]
      %v2644 = vld [vmem:[#allocation2 + $0x98] sm:$0xff]
      %v2646 = vshrl.u32 %v2626, 16
      %v2648 = vrot.slane %v2646, 7
      %v2650 = vshrl.u32 %v2627, 16
      %v2652 = vrot.slane %v2650, 7
      %v2653 = vshll.u32 %v2627, 16
      %v2655 = vor.u32 %v2652, %v2653
      %v2656 = vsel %vm1733, %v2648, %v2655
      %v2658 = vshrl.u32 %v2628, 16
      %v2660 = vrot.slane %v2658, 7
      %v2661 = vshll.u32 %v2628, 16
      %v2663 = vor.u32 %v2660, %v2661
      %v2664 = vsel %vm1733, %v2652, %v2663
      %v2666 = vshrl.u32 %v2629, 16
      %v2668 = vrot.slane %v2666, 7
      %v2669 = vshll.u32 %v2629, 16
      %v2671 = vor.u32 %v2668, %v2669
      %v2672 = vsel %vm1733, %v2660, %v2671
      %v2674 = vshrl.u32 %v2630, 16
      %v2676 = vrot.slane %v2674, 7
      %v2677 = vshll.u32 %v2630, 16
      %v2679 = vor.u32 %v2676, %v2677
      %v2680 = vsel %vm1733, %v2668, %v2679
      %v2682 = vshrl.u32 %v2631, 16
      %v2684 = vrot.slane %v2682, 7
      %v2685 = vshll.u32 %v2631, 16
      %v2687 = vor.u32 %v2684, %v2685
      %v2688 = vsel %vm1733, %v2676, %v2687
      %v2690 = vshrl.u32 %v2632, 16
      %v2692 = vrot.slane %v2690, 7
      %v2693 = vshll.u32 %v2632, 16
      %v2695 = vor.u32 %v2692, %v2693
      %v2696 = vsel %vm1733, %v2684, %v2695
      %v2698 = vshrl.u32 %v2633, 16
      %v2700 = vrot.slane %v2698, 7
      %v2701 = vshll.u32 %v2633, 16
      %v2703 = vor.u32 %v2700, %v2701
      %v2704 = vsel %vm1733, %v2692, %v2703
      %v2706 = vshrl.u32 %v2634, 16
      %v2708 = vrot.slane %v2706, 7
      %v2709 = vshll.u32 %v2634, 16
      %v2711 = vor.u32 %v2708, %v2709
      %v2712 = vsel %vm1733, %v2700, %v2711
      %v2714 = vshrl.u32 %v2635, 16
      %v2716 = vrot.slane %v2714, 7
      %v2717 = vshll.u32 %v2635, 16
      %v2719 = vor.u32 %v2716, %v2717
      %v2720 = vsel %vm1733, %v2708, %v2719
      %v2722 = vshrl.u32 %v2636, 16
      %v2724 = vrot.slane %v2722, 7
      %v2725 = vshll.u32 %v2636, 16
      %v2727 = vor.u32 %v2724, %v2725
      %v2728 = vsel %vm1733, %v2716, %v2727
      %v2730 = vshrl.u32 %v2637, 16
      %v2732 = vrot.slane %v2730, 7
      %v2733 = vshll.u32 %v2637, 16
      %v2735 = vor.u32 %v2732, %v2733
      %v2736 = vsel %vm1733, %v2724, %v2735
      %v2738 = vshrl.u32 %v2638, 16
      %v2740 = vrot.slane %v2738, 7
      %v2741 = vshll.u32 %v2638, 16
      %v2743 = vor.u32 %v2740, %v2741
      %v2744 = vsel %vm1733, %v2732, %v2743
      %v2746 = vshrl.u32 %v2639, 16
      %v2748 = vrot.slane %v2746, 7
      %v2749 = vshll.u32 %v2639, 16
      %v2751 = vor.u32 %v2748, %v2749
      %v2752 = vsel %vm1733, %v2740, %v2751
      %v2754 = vshrl.u32 %v2640, 16
      %v2756 = vrot.slane %v2754, 7
      %v2757 = vshll.u32 %v2640, 16
      %v2759 = vor.u32 %v2756, %v2757
      %v2760 = vsel %vm1733, %v2748, %v2759
      %v2762 = vshrl.u32 %v2641, 16
      %v2764 = vrot.slane %v2762, 7
      %v2765 = vshll.u32 %v2641, 16
      %v2767 = vor.u32 %v2764, %v2765
      %v2768 = vsel %vm1733, %v2756, %v2767
      %v2770 = vshrl.u32 %v2642, 16
      %v2772 = vrot.slane %v2770, 7
      %v2773 = vshll.u32 %v2642, 16
      %v2775 = vor.u32 %v2772, %v2773
      %v2776 = vsel %vm1733, %v2764, %v2775
      %v2778 = vshrl.u32 %v2643, 16
      %v2780 = vrot.slane %v2778, 7
      %v2781 = vshll.u32 %v2643, 16
      %v2783 = vor.u32 %v2780, %v2781
      %v2784 = vsel %vm1733, %v2772, %v2783
      %v2786 = vshrl.u32 %v2644, 16
      %v2788 = vrot.slane %v2786, 7
      %v2789 = vshll.u32 %v2644, 16
      %v2791 = vor.u32 %v2788, %v2789
      %v2792 = vsel %vm1733, %v2780, %v2791
      %2811 = vst [vmem:[#allocation3] sm:$0xff] %v2656
      %2812 = vst [vmem:[#allocation3 + $0x18] sm:$0xff] %v2664
      %2813 = vst [vmem:[#allocation3 + $0x30] sm:$0xff] %v2672
      %2814 = vst [vmem:[#allocation3 + $0x48] sm:$0xff] %v2680
      %2815 = vst [vmem:[#allocation3 + $0x60] sm:$0xff] %v2688
      %2816 = vst [vmem:[#allocation3 + $0x78] sm:$0xff] %v2696
      %2817 = vst [vmem:[#allocation3 + $0x90] sm:$0xff] %v2704
      %2818 = vst [vmem:[#allocation3 + $0xa8] sm:$0xff] %v2712
      %2819 = vst [vmem:[#allocation3 + $0xc0] sm:$0xff] %v2720
      %2820 = vst [vmem:[#allocation3 + $0xd8] sm:$0xff] %v2728
      %2821 = vst [vmem:[#allocation3 + $0xf0] sm:$0xff] %v2736
      %2822 = vst [vmem:[#allocation3 + $0x108] sm:$0xff] %v2744
      %2823 = vst [vmem:[#allocation3 + $0x120] sm:$0xff] %v2752
      %2824 = vst [vmem:[#allocation3 + $0x138] sm:$0xff] %v2760
      %2825 = vst [vmem:[#allocation3 + $0x150] sm:$0xff] %v2768
      %2826 = vst [vmem:[#allocation3 + $0x168] sm:$0xff] %v2776
      %2827 = vst [vmem:[#allocation3 + $0x180] sm:$0xff] %v2784
      %2828 = vst [vmem:[#allocation3 + $0x198] sm:$0xff] %v2792
      %v2829 = vld [vmem:[#allocation2 + $0x10] sm:$0xff]
      %v2830 = vld [vmem:[#allocation2 + $0x18] sm:$0xff]
      %v2831 = vld [vmem:[#allocation2 + $0x20] sm:$0xff]
      %v2832 = vld [vmem:[#allocation2 + $0x28] sm:$0xff]
      %v2833 = vld [vmem:[#allocation2 + $0x30] sm:$0xff]
      %v2834 = vld [vmem:[#allocation2 + $0x38] sm:$0xff]
      %v2835 = vld [vmem:[#allocation2 + $0x40] sm:$0xff]
      %v2836 = vld [vmem:[#allocation2 + $0x48] sm:$0xff]
      %v2837 = vld [vmem:[#allocation2 + $0x50] sm:$0xff]
      %v2838 = vld [vmem:[#allocation2 + $0x58] sm:$0xff]
      %v2839 = vld [vmem:[#allocation2 + $0x60] sm:$0xff]
      %v2840 = vld [vmem:[#allocation2 + $0x68] sm:$0xff]
      %v2841 = vld [vmem:[#allocation2 + $0x70] sm:$0xff]
      %v2842 = vld [vmem:[#allocation2 + $0x78] sm:$0xff]
      %v2843 = vld [vmem:[#allocation2 + $0x80] sm:$0xff]
      %v2844 = vld [vmem:[#allocation2 + $0x88] sm:$0xff]
      %v2845 = vld [vmem:[#allocation2 + $0x90] sm:$0xff]
      %v2846 = vld [vmem:[#allocation2 + $0x98] sm:$0xff]
      %2847 = vst [vmem:[#allocation3 + $0x8] sm:$0xff] %v2829
      %2848 = vst [vmem:[#allocation3 + $0x20] sm:$0xff] %v2830
      %2849 = vst [vmem:[#allocation3 + $0x38] sm:$0xff] %v2831
      %2850 = vst [vmem:[#allocation3 + $0x50] sm:$0xff] %v2832
      %2851 = vst [vmem:[#allocation3 + $0x68] sm:$0xff] %v2833
      %2852 = vst [vmem:[#allocation3 + $0x80] sm:$0xff] %v2834
      %2853 = vst [vmem:[#allocation3 + $0x98] sm:$0xff] %v2835
      %2854 = vst [vmem:[#allocation3 + $0xb0] sm:$0xff] %v2836
      %2855 = vst [vmem:[#allocation3 + $0xc8] sm:$0xff] %v2837
      %2856 = vst [vmem:[#allocation3 + $0xe0] sm:$0xff] %v2838
      %2857 = vst [vmem:[#allocation3 + $0xf8] sm:$0xff] %v2839
      %2858 = vst [vmem:[#allocation3 + $0x110] sm:$0xff] %v2840
      %2859 = vst [vmem:[#allocation3 + $0x128] sm:$0xff] %v2841
      %2860 = vst [vmem:[#allocation3 + $0x140] sm:$0xff] %v2842
      %2861 = vst [vmem:[#allocation3 + $0x158] sm:$0xff] %v2843
      %2862 = vst [vmem:[#allocation3 + $0x170] sm:$0xff] %v2844
      %2863 = vst [vmem:[#allocation3 + $0x188] sm:$0xff] %v2845
      %2864 = vst [vmem:[#allocation3 + $0x1a0] sm:$0xff] %v2846
      %v2865 = vld [vmem:[#allocation2 + $0x10] sm:$0xff]
      %v2866 = vld [vmem:[#allocation2 + $0x18] sm:$0xff]
      %v2867 = vld [vmem:[#allocation2 + $0x20] sm:$0xff]
      %v2868 = vld [vmem:[#allocation2 + $0x28] sm:$0xff]
      %v2869 = vld [vmem:[#allocation2 + $0x30] sm:$0xff]
      %v2870 = vld [vmem:[#allocation2 + $0x38] sm:$0xff]
      %v2871 = vld [vmem:[#allocation2 + $0x40] sm:$0xff]
      %v2872 = vld [vmem:[#allocation2 + $0x48] sm:$0xff]
      %v2873 = vld [vmem:[#allocation2 + $0x50] sm:$0xff]
      %v2874 = vld [vmem:[#allocation2 + $0x58] sm:$0xff]
      %v2875 = vld [vmem:[#allocation2 + $0x60] sm:$0xff]
      %v2876 = vld [vmem:[#allocation2 + $0x68] sm:$0xff]
      %v2877 = vld [vmem:[#allocation2 + $0x70] sm:$0xff]
      %v2878 = vld [vmem:[#allocation2 + $0x78] sm:$0xff]
      %v2879 = vld [vmem:[#allocation2 + $0x80] sm:$0xff]
      %v2880 = vld [vmem:[#allocation2 + $0x88] sm:$0xff]
      %v2881 = vld [vmem:[#allocation2 + $0x90] sm:$0xff]
      %v2882 = vld [vmem:[#allocation2 + $0x98] sm:$0xff]
      %v2883 = vld [vmem:[#allocation2 + $0xa0] sm:$0x1]
      %vm2884 = vsmask.f32 7424
      %v2886 = vshrl.u32 %v2865, 16
      %v2888 = vshll.u32 %v2865, 16
      %v2890 = vrot.slane %v2888, 1
      %v2891 = vor.u32 %v2886, %v2890
      %v2893 = vshll.u32 %v2866, 16
      %v2895 = vrot.slane %v2893, 1
      %v2896 = vsel %vm2884, %v2891, %v2895
      %v2897 = vshrl.u32 %v2866, 16
      %v2899 = vor.u32 %v2897, %v2895
      %v2901 = vshll.u32 %v2867, 16
      %v2903 = vrot.slane %v2901, 1
      %v2904 = vsel %vm2884, %v2899, %v2903
      %v2905 = vshrl.u32 %v2867, 16
      %v2907 = vor.u32 %v2905, %v2903
      %v2909 = vshll.u32 %v2868, 16
      %v2911 = vrot.slane %v2909, 1
      %v2912 = vsel %vm2884, %v2907, %v2911
      %v2913 = vshrl.u32 %v2868, 16
      %v2915 = vor.u32 %v2913, %v2911
      %v2917 = vshll.u32 %v2869, 16
      %v2919 = vrot.slane %v2917, 1
      %v2920 = vsel %vm2884, %v2915, %v2919
      %v2921 = vshrl.u32 %v2869, 16
      %v2923 = vor.u32 %v2921, %v2919
      %v2925 = vshll.u32 %v2870, 16
      %v2927 = vrot.slane %v2925, 1
      %v2928 = vsel %vm2884, %v2923, %v2927
      %v2929 = vshrl.u32 %v2870, 16
      %v2931 = vor.u32 %v2929, %v2927
      %v2933 = vshll.u32 %v2871, 16
      %v2935 = vrot.slane %v2933, 1
      %v2936 = vsel %vm2884, %v2931, %v2935
      %v2937 = vshrl.u32 %v2871, 16
      %v2939 = vor.u32 %v2937, %v2935
      %v2941 = vshll.u32 %v2872, 16
      %v2943 = vrot.slane %v2941, 1
      %v2944 = vsel %vm2884, %v2939, %v2943
      %v2945 = vshrl.u32 %v2872, 16
      %v2947 = vor.u32 %v2945, %v2943
      %v2949 = vshll.u32 %v2873, 16
      %v2951 = vrot.slane %v2949, 1
      %v2952 = vsel %vm2884, %v2947, %v2951
      %v2953 = vshrl.u32 %v2873, 16
      %v2955 = vor.u32 %v2953, %v2951
      %v2957 = vshll.u32 %v2874, 16
      %v2959 = vrot.slane %v2957, 1
      %v2960 = vsel %vm2884, %v2955, %v2959
      %v2961 = vshrl.u32 %v2874, 16
      %v2963 = vor.u32 %v2961, %v2959
      %v2965 = vshll.u32 %v2875, 16
      %v2967 = vrot.slane %v2965, 1
      %v2968 = vsel %vm2884, %v2963, %v2967
      %v2969 = vshrl.u32 %v2875, 16
      %v2971 = vor.u32 %v2969, %v2967
      %v2973 = vshll.u32 %v2876, 16
      %v2975 = vrot.slane %v2973, 1
      %v2976 = vsel %vm2884, %v2971, %v2975
      %v2977 = vshrl.u32 %v2876, 16
      %v2979 = vor.u32 %v2977, %v2975
      %v2981 = vshll.u32 %v2877, 16
      %v2983 = vrot.slane %v2981, 1
      %v2984 = vsel %vm2884, %v2979, %v2983
      %v2985 = vshrl.u32 %v2877, 16
      %v2987 = vor.u32 %v2985, %v2983
      %v2989 = vshll.u32 %v2878, 16
      %v2991 = vrot.slane %v2989, 1
      %v2992 = vsel %vm2884, %v2987, %v2991
      %v2993 = vshrl.u32 %v2878, 16
      %v2995 = vor.u32 %v2993, %v2991
      %v2997 = vshll.u32 %v2879, 16
      %v2999 = vrot.slane %v2997, 1
      %v3000 = vsel %vm2884, %v2995, %v2999
      %v3001 = vshrl.u32 %v2879, 16
      %v3003 = vor.u32 %v3001, %v2999
      %v3005 = vshll.u32 %v2880, 16
      %v3007 = vrot.slane %v3005, 1
      %v3008 = vsel %vm2884, %v3003, %v3007
      %v3009 = vshrl.u32 %v2880, 16
      %v3011 = vor.u32 %v3009, %v3007
      %v3013 = vshll.u32 %v2881, 16
      %v3015 = vrot.slane %v3013, 1
      %v3016 = vsel %vm2884, %v3011, %v3015
      %v3017 = vshrl.u32 %v2881, 16
      %v3019 = vor.u32 %v3017, %v3015
      %v3021 = vshll.u32 %v2882, 16
      %v3023 = vrot.slane %v3021, 1
      %v3024 = vsel %vm2884, %v3019, %v3023
      %v3025 = vshrl.u32 %v2882, 16
      %v3027 = vor.u32 %v3025, %v3023
      %v3029 = vshll.u32 %v2883, 16
      %v3031 = vrot.slane %v3029, 1
      %v3032 = vsel %vm2884, %v3027, %v3031
      %3051 = vst [vmem:[#allocation3 + $0x10] sm:$0xff] %v2896
      %3052 = vst [vmem:[#allocation3 + $0x28] sm:$0xff] %v2904
      %3053 = vst [vmem:[#allocation3 + $0x40] sm:$0xff] %v2912
      %3054 = vst [vmem:[#allocation3 + $0x58] sm:$0xff] %v2920
      %3055 = vst [vmem:[#allocation3 + $0x70] sm:$0xff] %v2928
      %3056 = vst [vmem:[#allocation3 + $0x88] sm:$0xff] %v2936
      %3057 = vst [vmem:[#allocation3 + $0xa0] sm:$0xff] %v2944
      %3058 = vst [vmem:[#allocation3 + $0xb8] sm:$0xff] %v2952
      %3059 = vst [vmem:[#allocation3 + $0xd0] sm:$0xff] %v2960
      %3060 = vst [vmem:[#allocation3 + $0xe8] sm:$0xff] %v2968
      %3061 = vst [vmem:[#allocation3 + $0x100] sm:$0xff] %v2976
      %3062 = vst [vmem:[#allocation3 + $0x118] sm:$0xff] %v2984
      %3063 = vst [vmem:[#allocation3 + $0x130] sm:$0xff] %v2992
      %3064 = vst [vmem:[#allocation3 + $0x148] sm:$0xff] %v3000
      %3065 = vst [vmem:[#allocation3 + $0x160] sm:$0xff] %v3008
      %3066 = vst [vmem:[#allocation3 + $0x178] sm:$0xff] %v3016
      %3067 = vst [vmem:[#allocation3 + $0x190] sm:$0xff] %v3024
      %3068 = vst [vmem:[#allocation3 + $0x1a8] sm:$0xff] %v3032
      %v3069 = vld [vmem:[#allocation4] sm:$0xff]
      %v3070 = vld [vmem:[#allocation4 + $0x8] sm:$0xff]
      %v3071 = vld [vmem:[#allocation4 + $0x10] sm:$0xff]
      %v3072 = vld [vmem:[#allocation4 + $0x18] sm:$0xff]
      %v3073 = vld [vmem:[#allocation4 + $0x20] sm:$0xff]
      %v3074 = vld [vmem:[#allocation4 + $0x28] sm:$0xff]
      %v3075 = vld [vmem:[#allocation4 + $0x30] sm:$0xff]
      %v3076 = vld [vmem:[#allocation4 + $0x38] sm:$0xff]
      %v3077 = vld [vmem:[#allocation4 + $0x40] sm:$0xff]
      %v3078 = vld [vmem:[#allocation4 + $0x48] sm:$0xff]
      %v3079 = vld [vmem:[#allocation4 + $0x50] sm:$0xff]
      %v3080 = vld [vmem:[#allocation4 + $0x58] sm:$0xff]
      %v3081 = vld [vmem:[#allocation4 + $0x60] sm:$0xff]
      %v3082 = vld [vmem:[#allocation4 + $0x68] sm:$0xff]
      %v3083 = vld [vmem:[#allocation4 + $0x70] sm:$0xff]
      %v3084 = vld [vmem:[#allocation4 + $0x78] sm:$0xff]
      %v3085 = vld [vmem:[#allocation4 + $0x80] sm:$0xff]
      %v3086 = vld [vmem:[#allocation4 + $0x88] sm:$0xff]
      %v3087 = vld [vmem:[#allocation4 + $0x90] sm:$0xff]
      %v3088 = vld [vmem:[#allocation4 + $0x98] sm:$0xff]
      %v3089 = vld [vmem:[#allocation4 + $0xa0] sm:$0xff]
      %v3090 = vld [vmem:[#allocation4 + $0xa8] sm:$0xff]
      %v3091 = vld [vmem:[#allocation4 + $0xb0] sm:$0xff]
      %v3092 = vld [vmem:[#allocation4 + $0xb8] sm:$0xff]
      %v3093 = vld [vmem:[#allocation4 + $0xc0] sm:$0xff]
      %v3094 = vld [vmem:[#allocation4 + $0xc8] sm:$0xff]
      %v3095 = vld [vmem:[#allocation4 + $0xd0] sm:$0xff]
      %v3096 = vld [vmem:[#allocation4 + $0xd8] sm:$0xff]
      %v3097 = vld [vmem:[#allocation4 + $0xe0] sm:$0xff]
      %v3098 = vld [vmem:[#allocation4 + $0xe8] sm:$0xff]
      %v3099 = vld [vmem:[#allocation4 + $0xf0] sm:$0xff]
      %v3100 = vld [vmem:[#allocation4 + $0xf8] sm:$0xff]
      %v3101 = vld [vmem:[#allocation4 + $0x100] sm:$0xff]
      %v3102 = vld [vmem:[#allocation4 + $0x108] sm:$0xff]
      %v3103 = vld [vmem:[#allocation4 + $0x110] sm:$0xff]
      %v3104 = vld [vmem:[#allocation4 + $0x118] sm:$0xff]
      %v3105 = vld [vmem:[#allocation3] sm:$0xff]
      %v3106 = vld [vmem:[#allocation3 + $0x8] sm:$0xff]
      %v3107 = vld [vmem:[#allocation3 + $0x10] sm:$0xff]
      %v3108 = vld [vmem:[#allocation3 + $0x18] sm:$0xff]
      %v3109 = vld [vmem:[#allocation3 + $0x20] sm:$0xff]
      %v3110 = vld [vmem:[#allocation3 + $0x28] sm:$0xff]
      %v3111 = vld [vmem:[#allocation3 + $0x30] sm:$0xff]
      %v3112 = vld [vmem:[#allocation3 + $0x38] sm:$0xff]
      %v3113 = vld [vmem:[#allocation3 + $0x40] sm:$0xff]
      %v3114 = vld [vmem:[#allocation3 + $0x48] sm:$0xff]
      %v3115 = vld [vmem:[#allocation3 + $0x50] sm:$0xff]
      %v3116 = vld [vmem:[#allocation3 + $0x58] sm:$0xff]
      %v3117 = vld [vmem:[#allocation3 + $0x60] sm:$0xff]
      %v3118 = vld [vmem:[#allocation3 + $0x68] sm:$0xff]
      %v3119 = vld [vmem:[#allocation3 + $0x70] sm:$0xff]
      %v3120 = vld [vmem:[#allocation3 + $0x78] sm:$0xff]
      %v3121 = vld [vmem:[#allocation3 + $0x80] sm:$0xff]
      %v3122 = vld [vmem:[#allocation3 + $0x88] sm:$0xff]
      %v3123 = vld [vmem:[#allocation3 + $0x90] sm:$0xff]
      %v3124 = vld [vmem:[#allocation3 + $0x98] sm:$0xff]
      %v3125 = vld [vmem:[#allocation3 + $0xa0] sm:$0xff]
      %v3126 = vld [vmem:[#allocation3 + $0xa8] sm:$0xff]
      %v3127 = vld [vmem:[#allocation3 + $0xb0] sm:$0xff]
      %v3128 = vld [vmem:[#allocation3 + $0xb8] sm:$0xff]
      %v3129 = vld [vmem:[#allocation3 + $0xc0] sm:$0xff]
      %v3130 = vld [vmem:[#allocation3 + $0xc8] sm:$0xff]
      %v3131 = vld [vmem:[#allocation3 + $0xd0] sm:$0xff]
      %v3132 = vld [vmem:[#allocation3 + $0xd8] sm:$0xff]
      %v3133 = vld [vmem:[#allocation3 + $0xe0] sm:$0xff]
      %v3134 = vld [vmem:[#allocation3 + $0xe8] sm:$0xff]
      %v3135 = vld [vmem:[#allocation3 + $0xf0] sm:$0xff]
      %v3136 = vld [vmem:[#allocation3 + $0xf8] sm:$0xff]
      %v3137 = vld [vmem:[#allocation3 + $0x100] sm:$0xff]
      %v3138 = vld [vmem:[#allocation3 + $0x108] sm:$0xff]
      %v3139 = vld [vmem:[#allocation3 + $0x110] sm:$0xff]
      %v3140 = vld [vmem:[#allocation3 + $0x118] sm:$0xff]
      %v3141 = vld [vmem:[#allocation3 + $0x120] sm:$0xff]
      %v3142 = vld [vmem:[#allocation3 + $0x128] sm:$0xff]
      %v3143 = vld [vmem:[#allocation3 + $0x130] sm:$0xff]
      %v3144 = vld [vmem:[#allocation3 + $0x138] sm:$0xff]
      %v3145 = vld [vmem:[#allocation3 + $0x140] sm:$0xff]
      %v3146 = vld [vmem:[#allocation3 + $0x148] sm:$0xff]
      %v3147 = vld [vmem:[#allocation3 + $0x150] sm:$0xff]
      %v3148 = vld [vmem:[#allocation3 + $0x158] sm:$0xff]
      %v3149 = vld [vmem:[#allocation3 + $0x160] sm:$0xff]
      %v3150 = vld [vmem:[#allocation3 + $0x168] sm:$0xff]
      %v3151 = vld [vmem:[#allocation3 + $0x170] sm:$0xff]
      %v3152 = vld [vmem:[#allocation3 + $0x178] sm:$0xff]
      %v3153 = vld [vmem:[#allocation3 + $0x180] sm:$0xff]
      %v3154 = vld [vmem:[#allocation3 + $0x188] sm:$0xff]
      %v3155 = vld [vmem:[#allocation3 + $0x190] sm:$0xff]
      %v3156 = vld [vmem:[#allocation3 + $0x198] sm:$0xff]
      %v3157 = vld [vmem:[#allocation3 + $0x1a0] sm:$0xff]
      %v3158 = vld [vmem:[#allocation3 + $0x1a8] sm:$0xff]
      %v3159 = vld [vmem:[%s3 + $0xc0] sm:$0xf]
      %v3160 = vld [vmem:[%s3 + $0xc4] sm:$0xf]
      %v3161 = vld [vmem:[%s3 + $0xc8] sm:$0xf]
      %v3162 = vld [vmem:[%s3 + $0xcc] sm:$0xf]
      %v3163 = vld [vmem:[%s3 + $0xd0] sm:$0xf]
      %v3164 = vld [vmem:[%s3 + $0xd4] sm:$0xf]
      %v3165 = vld [vmem:[%s3 + $0xd8] sm:$0xf]
      %v3166 = vld [vmem:[%s3 + $0xdc] sm:$0xf]
      %v3167 = vld [vmem:[%s3 + $0xe0] sm:$0xf]
      %v3168 = vld [vmem:[%s3 + $0xe4] sm:$0xf]
      %v3169 = vld [vmem:[%s3 + $0xe8] sm:$0xf]
      %v3170 = vld [vmem:[%s3 + $0xec] sm:$0xf]
      %v3171 = vld [vmem:[%s3 + $0xf0] sm:$0xf]
      %v3172 = vld [vmem:[%s3 + $0xf4] sm:$0xf]
      %v3173 = vld [vmem:[%s3 + $0xf8] sm:$0xf]
      %v3174 = vld [vmem:[%s3 + $0xfc] sm:$0xf]
      %v3175 = vld [vmem:[%s3 + $0x100] sm:$0xf]
      %v3176 = vld [vmem:[%s3 + $0x104] sm:$0xf]
      %v3177 = vld [vmem:[%s3 + $0x108] sm:$0xf]
      %v3178 = vld [vmem:[%s3 + $0x10c] sm:$0xf]
      %v3179 = vld [vmem:[%s3 + $0x110] sm:$0xf]
      %v3180 = vld [vmem:[%s3 + $0x114] sm:$0xf]
      %v3181 = vld [vmem:[%s3 + $0x118] sm:$0xf]
      %v3182 = vld [vmem:[%s3 + $0x11c] sm:$0xf]
      %v3183 = vld [vmem:[%s3 + $0x120] sm:$0xf]
      %v3184 = vld [vmem:[%s3 + $0x124] sm:$0xf]
      %v3185 = vld [vmem:[%s3 + $0x128] sm:$0xf]
      %v3186 = vld [vmem:[%s3 + $0x12c] sm:$0xf]
      %v3187 = vld [vmem:[%s3 + $0x130] sm:$0xf]
      %v3188 = vld [vmem:[%s3 + $0x134] sm:$0xf]
      %v3189 = vld [vmem:[%s3 + $0x138] sm:$0xf]
      %v3190 = vld [vmem:[%s3 + $0x13c] sm:$0xf]
      %v3191 = vld [vmem:[%s3 + $0x140] sm:$0xf]
      %v3192 = vld [vmem:[%s3 + $0x144] sm:$0xf]
      %v3193 = vld [vmem:[%s3 + $0x148] sm:$0xf]
      %v3194 = vld [vmem:[%s3 + $0x14c] sm:$0xf]
      %v3195 = vld [vmem:[%s3 + $0x150] sm:$0xf]
      %v3196 = vld [vmem:[%s3 + $0x154] sm:$0xf]
      %v3197 = vld [vmem:[%s3 + $0x158] sm:$0xf]
      %v3198 = vld [vmem:[%s3 + $0x15c] sm:$0xf]
      %v3199 = vld [vmem:[%s3 + $0x160] sm:$0xf]
      %v3200 = vld [vmem:[%s3 + $0x164] sm:$0xf]
      %v3201 = vld [vmem:[%s3 + $0x168] sm:$0xf]
      %v3202 = vld [vmem:[%s3 + $0x16c] sm:$0xf]
      %v3203 = vld [vmem:[%s3 + $0x170] sm:$0xf]
      %v3204 = vld [vmem:[%s3 + $0x174] sm:$0xf]
      %v3205 = vld [vmem:[%s3 + $0x178] sm:$0xf]
      %v3206 = vld [vmem:[%s3 + $0x17c] sm:$0xf]
      %v3255 = vunpack.c.l.b16 %v3159
      %v3256 = vunpack.c.l.b16 %v3160
      %v3257 = vunpack.c.l.b16 %v3161
      %v3258 = vunpack.c.l.b16 %v3162
      %v3259 = vunpack.c.l.b16 %v3163
      %v3260 = vunpack.c.l.b16 %v3164
      %v3261 = vunpack.c.l.b16 %v3165
      %v3262 = vunpack.c.l.b16 %v3166
      %v3263 = vunpack.c.l.b16 %v3167
      %v3264 = vunpack.c.l.b16 %v3168
      %v3265 = vunpack.c.l.b16 %v3169
      %v3266 = vunpack.c.l.b16 %v3170
      %v3267 = vunpack.c.l.b16 %v3171
      %v3268 = vunpack.c.l.b16 %v3172
      %v3269 = vunpack.c.l.b16 %v3173
      %v3270 = vunpack.c.l.b16 %v3174
      %v3271 = vunpack.c.l.b16 %v3175
      %v3272 = vunpack.c.l.b16 %v3176
      %v3273 = vunpack.c.l.b16 %v3177
      %v3274 = vunpack.c.l.b16 %v3178
      %v3275 = vunpack.c.l.b16 %v3179
      %v3276 = vunpack.c.l.b16 %v3180
      %v3277 = vunpack.c.l.b16 %v3181
      %v3278 = vunpack.c.l.b16 %v3182
      %v3279 = vunpack.c.l.b16 %v3183
      %v3280 = vunpack.c.l.b16 %v3184
      %v3281 = vunpack.c.l.b16 %v3185
      %v3282 = vunpack.c.l.b16 %v3186
      %v3283 = vunpack.c.l.b16 %v3187
      %v3284 = vunpack.c.l.b16 %v3188
      %v3285 = vunpack.c.l.b16 %v3189
      %v3286 = vunpack.c.l.b16 %v3190
      %v3287 = vunpack.c.l.b16 %v3191
      %v3288 = vunpack.c.l.b16 %v3192
      %v3289 = vunpack.c.l.b16 %v3193
      %v3290 = vunpack.c.l.b16 %v3194
      %v3291 = vunpack.c.l.b16 %v3195
      %v3292 = vunpack.c.l.b16 %v3196
      %v3293 = vunpack.c.l.b16 %v3197
      %v3294 = vunpack.c.l.b16 %v3198
      %v3295 = vunpack.c.l.b16 %v3199
      %v3296 = vunpack.c.l.b16 %v3200
      %v3297 = vunpack.c.l.b16 %v3201
      %v3298 = vunpack.c.l.b16 %v3202
      %v3299 = vunpack.c.l.b16 %v3203
      %v3300 = vunpack.c.l.b16 %v3204
      %v3301 = vunpack.c.l.b16 %v3205
      %v3302 = vunpack.c.l.b16 %v3206
      %v3303 = vpack.c.b16 %v3256, %v3255
      %v3304 = vpack.c.b16 %v3258, %v3257
      %v3305 = vpack.c.b16 %v3260, %v3259
      %v3306 = vpack.c.b16 %v3262, %v3261
      %v3307 = vpack.c.b16 %v3264, %v3263
      %v3308 = vpack.c.b16 %v3266, %v3265
      %v3309 = vpack.c.b16 %v3268, %v3267
      %v3310 = vpack.c.b16 %v3270, %v3269
      %v3311 = vpack.c.b16 %v3272, %v3271
      %v3312 = vpack.c.b16 %v3274, %v3273
      %v3313 = vpack.c.b16 %v3276, %v3275
      %v3314 = vpack.c.b16 %v3278, %v3277
      %v3315 = vpack.c.b16 %v3280, %v3279
      %v3316 = vpack.c.b16 %v3282, %v3281
      %v3317 = vpack.c.b16 %v3284, %v3283
      %v3318 = vpack.c.b16 %v3286, %v3285
      %v3319 = vpack.c.b16 %v3288, %v3287
      %v3320 = vpack.c.b16 %v3290, %v3289
      %v3321 = vpack.c.b16 %v3292, %v3291
      %v3322 = vpack.c.b16 %v3294, %v3293
      %v3323 = vpack.c.b16 %v3296, %v3295
      %v3324 = vpack.c.b16 %v3298, %v3297
      %v3325 = vpack.c.b16 %v3300, %v3299
      %v3326 = vpack.c.b16 %v3302, %v3301
      %3351 = vmatprep.subr.bf16.mxu0 0
      %3352 = vmatpush1.bf16.msra.mxu0 %v3303
      %3353 = vmatprep.subr.bf16.mxu0 0
      %3354 = vmatpush1.bf16.msra.mxu0 %v3304
      %3355 = vmatprep.subr.bf16.mxu0 0
      %3356 = vmatpush1.bf16.msra.mxu0 %v3305
      %3357 = vmatprep.subr.bf16.mxu0 0
      %3358 = vmatpush1.bf16.msra.mxu0 %v3306
      %3359 = vmatprep.subr.bf16.mxu0 0
      %3360 = vmatpush1.bf16.msra.mxu0 %v3307
      %3361 = vmatprep.subr.bf16.mxu0 0
      %3362 = vmatpush1.bf16.msra.mxu0 %v3308
      %3363 = vmatprep.subr.bf16.mxu0 0
      %3364 = vmatpush1.bf16.msra.mxu0 %v3309
      %3365 = vmatprep.subr.bf16.mxu0 0
      %3366 = vmatpush1.bf16.msra.mxu0 %v3310
      %3367 = vmatprep.subr.bf16.mxu0 0
      %3368 = vmatpush1.bf16.msra.mxu0 %v3311
      %3369 = vmatprep.subr.bf16.mxu0 0
      %3370 = vmatpush1.bf16.msra.mxu0 %v3312
      %3371 = vmatprep.subr.bf16.mxu0 0
      %3372 = vmatpush1.bf16.msra.mxu0 %v3313
      %3373 = vmatprep.subr.bf16.mxu0 0
      %3374 = vmatpush1.bf16.msra.mxu0 %v3314
      %3375 = vmatprep.subr.bf16.mxu0 0
      %3376 = vmatpush1.bf16.msra.mxu0 %v3315
      %3377 = vmatprep.subr.bf16.mxu0 0
      %3378 = vmatpush1.bf16.msra.mxu0 %v3316
      %3379 = vmatprep.subr.bf16.mxu0 0
      %3380 = vmatpush1.bf16.msra.mxu0 %v3317
      %3381 = vmatprep.subr.bf16.mxu0 0
      %3382 = vmatpush1.bf16.msra.mxu0 %v3318
      %3383 = vmatprep.mubr.bf16.mxu0 %v3106
      %3384 = vmatmul.mubr.bf16.gmra.mrb[0].mxu0 %v3105
      %v3385 = vpop.f32.mrb[0].mxu0
      %v3386 = vadd.f32 0.0, %v3385
      %v3387 = vpop.f32.mrb[0].mxu0
      %v3388 = vpop.f32.mrb[0].mxu0
      %v3389 = vadd.f32 0.0, %v3388
      %v3390 = vpop.f32.mrb[0].mxu0
      %3391 = vmatprep.mubr.bf16.mxu0 %v3109
      %3392 = vmatmul.mubr.bf16.gmra.mrb[0].mxu0 %v3108
      %v3393 = vpop.f32.mrb[0].mxu0
      %v3394 = vadd.f32 0.0, %v3393
      %v3395 = vpop.f32.mrb[0].mxu0
      %v3396 = vpop.f32.mrb[0].mxu0
      %v3397 = vadd.f32 0.0, %v3396
      %v3398 = vpop.f32.mrb[0].mxu0
      %3399 = vmatprep.mubr.bf16.mxu0 %v3112
      %3400 = vmatmul.mubr.bf16.gmra.mrb[0].mxu0 %v3111
      %v3401 = vpop.f32.mrb[0].mxu0
      %v3402 = vadd.f32 0.0, %v3401
      %v3403 = vpop.f32.mrb[0].mxu0
      %v3404 = vpop.f32.mrb[0].mxu0
      %v3405 = vadd.f32 0.0, %v3404
      %v3406 = vpop.f32.mrb[0].mxu0
      %3407 = vmatprep.mubr.bf16.mxu0 %v3115
      %3408 = vmatmul.mubr.bf16.gmra.mrb[0].mxu0 %v3114
      %v3409 = vpop.f32.mrb[0].mxu0
      %v3410 = vadd.f32 0.0, %v3409
      %v3411 = vpop.f32.mrb[0].mxu0
      %v3412 = vpop.f32.mrb[0].mxu0
      %v3413 = vadd.f32 0.0, %v3412
      %v3414 = vpop.f32.mrb[0].mxu0
      %3415 = vmatprep.mubr.bf16.mxu0 %v3118
      %3416 = vmatmul.mubr.bf16.gmra.mrb[0].mxu0 %v3117
      %v3417 = vpop.f32.mrb[0].mxu0
      %v3418 = vadd.f32 0.0, %v3417
      %v3419 = vpop.f32.mrb[0].mxu0
      %v3420 = vpop.f32.mrb[0].mxu0
      %v3421 = vadd.f32 0.0, %v3420
      %v3422 = vpop.f32.mrb[0].mxu0
      %3423 = vmatprep.mubr.bf16.mxu0 %v3121
      %3424 = vmatmul.mubr.bf16.gmra.mrb[0].mxu0 %v3120
      %v3425 = vpop.f32.mrb[0].mxu0
      %v3426 = vadd.f32 0.0, %v3425
      %v3427 = vpop.f32.mrb[0].mxu0
      %v3428 = vpop.f32.mrb[0].mxu0
      %v3429 = vadd.f32 0.0, %v3428
      %v3430 = vpop.f32.mrb[0].mxu0
      %3431 = vmatprep.mubr.bf16.mxu0 %v3124
      %3432 = vmatmul.mubr.bf16.gmra.mrb[0].mxu0 %v3123
      %v3433 = vpop.f32.mrb[0].mxu0
      %v3434 = vadd.f32 0.0, %v3433
      %v3435 = vpop.f32.mrb[0].mxu0
      %v3436 = vpop.f32.mrb[0].mxu0
      %v3437 = vadd.f32 0.0, %v3436
      %v3438 = vpop.f32.mrb[0].mxu0
      %3439 = vmatprep.mubr.bf16.mxu0 %v3127
      %3440 = vmatmul.mubr.bf16.gmra.mrb[0].mxu0 %v3126
      %v3441 = vpop.f32.mrb[0].mxu0
      %v3442 = vadd.f32 0.0, %v3441
      %v3443 = vpop.f32.mrb[0].mxu0
      %v3444 = vpop.f32.mrb[0].mxu0
      %v3445 = vadd.f32 0.0, %v3444
      %v3446 = vpop.f32.mrb[0].mxu0
      %3447 = vmatprep.mubr.bf16.mxu0 %v3130
      %3448 = vmatmul.mubr.bf16.gmra.mrb[0].mxu0 %v3129
      %v3449 = vpop.f32.mrb[0].mxu0
      %v3450 = vadd.f32 0.0, %v3449
      %v3451 = vpop.f32.mrb[0].mxu0
      %v3452 = vpop.f32.mrb[0].mxu0
      %v3453 = vadd.f32 0.0, %v3452
      %v3454 = vpop.f32.mrb[0].mxu0
      %3455 = vmatprep.mubr.bf16.mxu0 %v3133
      %3456 = vmatmul.mubr.bf16.gmra.mrb[0].mxu0 %v3132
      %v3457 = vpop.f32.mrb[0].mxu0
      %v3458 = vadd.f32 0.0, %v3457
      %v3459 = vpop.f32.mrb[0].mxu0
      %v3460 = vpop.f32.mrb[0].mxu0
      %v3461 = vadd.f32 0.0, %v3460
      %v3462 = vpop.f32.mrb[0].mxu0
      %3463 = vmatprep.mubr.bf16.mxu0 %v3136
      %3464 = vmatmul.mubr.bf16.gmra.mrb[0].mxu0 %v3135
      %v3465 = vpop.f32.mrb[0].mxu0
      %v3466 = vadd.f32 0.0, %v3465
      %v3467 = vpop.f32.mrb[0].mxu0
      %v3468 = vpop.f32.mrb[0].mxu0
      %v3469 = vadd.f32 0.0, %v3468
      %v3470 = vpop.f32.mrb[0].mxu0
      %3471 = vmatprep.mubr.bf16.mxu0 %v3139
      %3472 = vmatmul.mubr.bf16.gmra.mrb[0].mxu0 %v3138
      %v3473 = vpop.f32.mrb[0].mxu0
      %v3474 = vadd.f32 0.0, %v3473
      %v3475 = vpop.f32.mrb[0].mxu0
      %v3476 = vpop.f32.mrb[0].mxu0
      %v3477 = vadd.f32 0.0, %v3476
      %v3478 = vpop.f32.mrb[0].mxu0
      %3479 = vmatprep.mubr.bf16.mxu0 %v3142
      %3480 = vmatmul.mubr.bf16.gmra.mrb[0].mxu0 %v3141
      %v3481 = vpop.f32.mrb[0].mxu0
      %v3482 = vadd.f32 0.0, %v3481
      %v3483 = vpop.f32.mrb[0].mxu0
      %v3484 = vpop.f32.mrb[0].mxu0
      %v3485 = vadd.f32 0.0, %v3484
      %v3486 = vpop.f32.mrb[0].mxu0
      %3487 = vmatprep.mubr.bf16.mxu0 %v3145
      %3488 = vmatmul.mubr.bf16.gmra.mrb[0].mxu0 %v3144
      %v3489 = vpop.f32.mrb[0].mxu0
      %v3490 = vadd.f32 0.0, %v3489
      %v3491 = vpop.f32.mrb[0].mxu0
      %v3492 = vpop.f32.mrb[0].mxu0
      %v3493 = vadd.f32 0.0, %v3492
      %v3494 = vpop.f32.mrb[0].mxu0
      %3495 = vmatprep.mubr.bf16.mxu0 %v3148
      %3496 = vmatmul.mubr.bf16.gmra.mrb[0].mxu0 %v3147
      %v3497 = vpop.f32.mrb[0].mxu0
      %v3498 = vadd.f32 0.0, %v3497
      %v3499 = vpop.f32.mrb[0].mxu0
      %v3500 = vpop.f32.mrb[0].mxu0
      %v3501 = vadd.f32 0.0, %v3500
      %v3502 = vpop.f32.mrb[0].mxu0
      %3503 = vmatprep.mubr.bf16.mxu0 %v3151
      %3504 = vmatmul.mubr.bf16.gmra.mrb[0].mxu0 %v3150
      %v3505 = vpop.f32.mrb[0].mxu0
      %v3506 = vadd.f32 0.0, %v3505
      %v3507 = vpop.f32.mrb[0].mxu0
      %v3508 = vpop.f32.mrb[0].mxu0
      %v3509 = vadd.f32 0.0, %v3508
      %v3510 = vpop.f32.mrb[0].mxu0
      %3511 = vmatprep.mubr.bf16.mxu0 %v3154
      %3512 = vmatmul.mubr.bf16.gmra.mrb[0].mxu0 %v3153
      %v3513 = vpop.f32.mrb[0].mxu0
      %v3514 = vadd.f32 0.0, %v3513
      %v3515 = vpop.f32.mrb[0].mxu0
      %v3516 = vpop.f32.mrb[0].mxu0
      %v3517 = vadd.f32 0.0, %v3516
      %v3518 = vpop.f32.mrb[0].mxu0
      %3519 = vmatprep.mubr.bf16.mxu0 %v3157
      %3520 = vmatmul.mubr.bf16.gmra.mrb[0].mxu0 %v3156
      %v3521 = vpop.f32.mrb[0].mxu0
      %v3522 = vadd.f32 0.0, %v3521
      %v3523 = vpop.f32.mrb[0].mxu0
      %v3524 = vpop.f32.mrb[0].mxu0
      %v3525 = vadd.f32 0.0, %v3524
      %v3526 = vpop.f32.mrb[0].mxu0
      %3527 = vdwg.mxu0
      %3528 = vmatprep.subr.bf16.mxu0 0
      %3529 = vmatpush1.bf16.msra.mxu0 %v3319
      %3530 = vmatprep.subr.bf16.mxu0 0
      %3531 = vmatpush1.bf16.msra.mxu0 %v3320
      %3532 = vmatprep.subr.bf16.mxu0 0
      %3533 = vmatpush1.bf16.msra.mxu0 %v3321
      %3534 = vmatprep.subr.bf16.mxu0 0
      %3535 = vmatpush1.bf16.msra.mxu0 %v3322
      %3536 = vmatprep.subr.bf16.mxu0 0
      %3537 = vmatpush1.bf16.msra.mxu0 %v3323
      %3538 = vmatprep.subr.bf16.mxu0 0
      %3539 = vmatpush1.bf16.msra.mxu0 %v3324
      %3540 = vmatprep.subr.bf16.mxu0 0
      %3541 = vmatpush1.bf16.msra.mxu0 %v3325
      %3542 = vmatprep.subr.bf16.mxu0 0
      %3543 = vmatpush1.bf16.msra.mxu0 %v3326
      %3544 = vmatprep.subr.bf16.mxu0 0
      %3545 = vmatpush1.bf16.msra.mxu0 0
      %3546 = vmatprep.subr.bf16.mxu0 0
      %3547 = vmatpush1.bf16.msra.mxu0 0
      %3548 = vmatprep.subr.bf16.mxu0 0
      %3549 = vmatpush1.bf16.msra.mxu0 0
      %3550 = vmatprep.subr.bf16.mxu0 0
      %3551 = vmatpush1.bf16.msra.mxu0 0
      %3552 = vmatprep.subr.bf16.mxu0 0
      %3553 = vmatpush1.bf16.msra.mxu0 0
      %3554 = vmatprep.subr.bf16.mxu0 0
      %3555 = vmatpush1.bf16.msra.mxu0 0
      %3556 = vmatprep.subr.bf16.mxu0 0
      %3557 = vmatpush1.bf16.msra.mxu0 0
      %3558 = vmatprep.subr.bf16.mxu0 0
      %3559 = vmatpush1.bf16.msra.mxu0 0
      %3560 = vmatprep.mubr.bf16.mxu0 0
      %3561 = vmatmul.mubr.bf16.gmra.mrb[0].mxu0 %v3107
      %v3562 = vpop.f32.mrb[0].mxu0
      %v3563 = vadd.f32 %v3386, %v3562
      %v3564 = vpop.f32.mrb[0].mxu0
      %v3565 = vpop.f32.mrb[0].mxu0
      %v3566 = vadd.f32 %v3389, %v3565
      %v3567 = vpop.f32.mrb[0].mxu0
      %3568 = vmatprep.mubr.bf16.mxu0 0
      %3569 = vmatmul.mubr.bf16.gmra.mrb[0].mxu0 %v3110
      %v3570 = vpop.f32.mrb[0].mxu0
      %v3571 = vadd.f32 %v3394, %v3570
      %v3572 = vpop.f32.mrb[0].mxu0
      %v3573 = vpop.f32.mrb[0].mxu0
      %v3574 = vadd.f32 %v3397, %v3573
      %v3575 = vpop.f32.mrb[0].mxu0
      %3576 = vmatprep.mubr.bf16.mxu0 0
      %3577 = vmatmul.mubr.bf16.gmra.mrb[0].mxu0 %v3113
      %v3578 = vpop.f32.mrb[0].mxu0
      %v3579 = vadd.f32 %v3402, %v3578
      %v3580 = vpop.f32.mrb[0].mxu0
      %v3581 = vpop.f32.mrb[0].mxu0
      %v3582 = vadd.f32 %v3405, %v3581
      %v3583 = vpop.f32.mrb[0].mxu0
      %3584 = vmatprep.mubr.bf16.mxu0 0
      %3585 = vmatmul.mubr.bf16.gmra.mrb[0].mxu0 %v3116
      %v3586 = vpop.f32.mrb[0].mxu0
      %v3587 = vadd.f32 %v3410, %v3586
      %v3588 = vpop.f32.mrb[0].mxu0
      %v3589 = vpop.f32.mrb[0].mxu0
      %v3590 = vadd.f32 %v3413, %v3589
      %v3591 = vpop.f32.mrb[0].mxu0
      %3592 = vmatprep.mubr.bf16.mxu0 0
      %3593 = vmatmul.mubr.bf16.gmra.mrb[0].mxu0 %v3119
      %v3594 = vpop.f32.mrb[0].mxu0
      %v3595 = vadd.f32 %v3418, %v3594
      %v3596 = vpop.f32.mrb[0].mxu0
      %v3597 = vpop.f32.mrb[0].mxu0
      %v3598 = vadd.f32 %v3421, %v3597
      %v3599 = vpop.f32.mrb[0].mxu0
      %3600 = vmatprep.mubr.bf16.mxu0 0
      %3601 = vmatmul.mubr.bf16.gmra.mrb[0].mxu0 %v3122
      %v3602 = vpop.f32.mrb[0].mxu0
      %v3603 = vadd.f32 %v3426, %v3602
      %v3604 = vpop.f32.mrb[0].mxu0
      %v3605 = vpop.f32.mrb[0].mxu0
      %v3606 = vadd.f32 %v3429, %v3605
      %v3607 = vpop.f32.mrb[0].mxu0
      %3608 = vmatprep.mubr.bf16.mxu0 0
      %3609 = vmatmul.mubr.bf16.gmra.mrb[0].mxu0 %v3125
      %v3610 = vpop.f32.mrb[0].mxu0
      %v3611 = vadd.f32 %v3434, %v3610
      %v3612 = vpop.f32.mrb[0].mxu0
      %v3613 = vpop.f32.mrb[0].mxu0
      %v3614 = vadd.f32 %v3437, %v3613
      %v3615 = vpop.f32.mrb[0].mxu0
      %3616 = vmatprep.mubr.bf16.mxu0 0
      %3617 = vmatmul.mubr.bf16.gmra.mrb[0].mxu0 %v3128
      %v3618 = vpop.f32.mrb[0].mxu0
      %v3619 = vadd.f32 %v3442, %v3618
      %v3620 = vpop.f32.mrb[0].mxu0
      %v3621 = vpop.f32.mrb[0].mxu0
      %v3622 = vadd.f32 %v3445, %v3621
      %v3623 = vpop.f32.mrb[0].mxu0
      %3624 = vmatprep.mubr.bf16.mxu0 0
      %3625 = vmatmul.mubr.bf16.gmra.mrb[0].mxu0 %v3131
      %v3626 = vpop.f32.mrb[0].mxu0
      %v3627 = vadd.f32 %v3450, %v3626
      %v3628 = vpop.f32.mrb[0].mxu0
      %v3629 = vpop.f32.mrb[0].mxu0
      %v3630 = vadd.f32 %v3453, %v3629
      %v3631 = vpop.f32.mrb[0].mxu0
      %3632 = vmatprep.mubr.bf16.mxu0 0
      %3633 = vmatmul.mubr.bf16.gmra.mrb[0].mxu0 %v3134
      %v3634 = vpop.f32.mrb[0].mxu0
      %v3635 = vadd.f32 %v3458, %v3634
      %v3636 = vpop.f32.mrb[0].mxu0
      %v3637 = vpop.f32.mrb[0].mxu0
      %v3638 = vadd.f32 %v3461, %v3637
      %v3639 = vpop.f32.mrb[0].mxu0
      %3640 = vmatprep.mubr.bf16.mxu0 0
      %3641 = vmatmul.mubr.bf16.gmra.mrb[0].mxu0 %v3137
      %v3642 = vpop.f32.mrb[0].mxu0
      %v3643 = vadd.f32 %v3466, %v3642
      %v3644 = vpop.f32.mrb[0].mxu0
      %v3645 = vpop.f32.mrb[0].mxu0
      %v3646 = vadd.f32 %v3469, %v3645
      %v3647 = vpop.f32.mrb[0].mxu0
      %3648 = vmatprep.mubr.bf16.mxu0 0
      %3649 = vmatmul.mubr.bf16.gmra.mrb[0].mxu0 %v3140
      %v3650 = vpop.f32.mrb[0].mxu0
      %v3651 = vadd.f32 %v3474, %v3650
      %v3652 = vpop.f32.mrb[0].mxu0
      %v3653 = vpop.f32.mrb[0].mxu0
      %v3654 = vadd.f32 %v3477, %v3653
      %v3655 = vpop.f32.mrb[0].mxu0
      %3656 = vmatprep.mubr.bf16.mxu0 0
      %3657 = vmatmul.mubr.bf16.gmra.mrb[0].mxu0 %v3143
      %v3658 = vpop.f32.mrb[0].mxu0
      %v3659 = vadd.f32 %v3482, %v3658
      %v3660 = vpop.f32.mrb[0].mxu0
      %v3661 = vpop.f32.mrb[0].mxu0
      %v3662 = vadd.f32 %v3485, %v3661
      %v3663 = vpop.f32.mrb[0].mxu0
      %3664 = vmatprep.mubr.bf16.mxu0 0
      %3665 = vmatmul.mubr.bf16.gmra.mrb[0].mxu0 %v3146
      %v3666 = vpop.f32.mrb[0].mxu0
      %v3667 = vadd.f32 %v3490, %v3666
      %v3668 = vpop.f32.mrb[0].mxu0
      %v3669 = vpop.f32.mrb[0].mxu0
      %v3670 = vadd.f32 %v3493, %v3669
      %v3671 = vpop.f32.mrb[0].mxu0
      %3672 = vmatprep.mubr.bf16.mxu0 0
      %3673 = vmatmul.mubr.bf16.gmra.mrb[0].mxu0 %v3149
      %v3674 = vpop.f32.mrb[0].mxu0
      %v3675 = vadd.f32 %v3498, %v3674
      %v3676 = vpop.f32.mrb[0].mxu0
      %v3677 = vpop.f32.mrb[0].mxu0
      %v3678 = vadd.f32 %v3501, %v3677
      %v3679 = vpop.f32.mrb[0].mxu0
      %3680 = vmatprep.mubr.bf16.mxu0 0
      %3681 = vmatmul.mubr.bf16.gmra.mrb[0].mxu0 %v3152
      %v3682 = vpop.f32.mrb[0].mxu0
      %v3683 = vadd.f32 %v3506, %v3682
      %v3684 = vpop.f32.mrb[0].mxu0
      %v3685 = vpop.f32.mrb[0].mxu0
      %v3686 = vadd.f32 %v3509, %v3685
      %v3687 = vpop.f32.mrb[0].mxu0
      %3688 = vmatprep.mubr.bf16.mxu0 0
      %3689 = vmatmul.mubr.bf16.gmra.mrb[0].mxu0 %v3155
      %v3690 = vpop.f32.mrb[0].mxu0
      %v3691 = vadd.f32 %v3514, %v3690
      %v3692 = vpop.f32.mrb[0].mxu0
      %v3693 = vpop.f32.mrb[0].mxu0
      %v3694 = vadd.f32 %v3517, %v3693
      %v3695 = vpop.f32.mrb[0].mxu0
      %3696 = vmatprep.mubr.bf16.mxu0 0
      %3697 = vmatmul.mubr.bf16.gmra.mrb[0].mxu0 %v3158
      %v3698 = vpop.f32.mrb[0].mxu0
      %v3699 = vadd.f32 %v3522, %v3698
      %v3700 = vpop.f32.mrb[0].mxu0
      %v3701 = vpop.f32.mrb[0].mxu0
      %v3702 = vadd.f32 %v3525, %v3701
      %v3703 = vpop.f32.mrb[0].mxu0
      %3704 = vdwg.mxu0
      %v3705 = vadd.f32 %v3069, %v3563
      %v3706 = vadd.f32 %v3070, %v3566
      %v3707 = vadd.f32 %v3071, %v3571
      %v3708 = vadd.f32 %v3072, %v3574
      %v3709 = vadd.f32 %v3073, %v3579
      %v3710 = vadd.f32 %v3074, %v3582
      %v3711 = vadd.f32 %v3075, %v3587
      %v3712 = vadd.f32 %v3076, %v3590
      %v3713 = vadd.f32 %v3077, %v3595
      %v3714 = vadd.f32 %v3078, %v3598
      %v3715 = vadd.f32 %v3079, %v3603
      %v3716 = vadd.f32 %v3080, %v3606
      %v3717 = vadd.f32 %v3081, %v3611
      %v3718 = vadd.f32 %v3082, %v3614
      %v3719 = vadd.f32 %v3083, %v3619
      %v3720 = vadd.f32 %v3084, %v3622
      %v3721 = vadd.f32 %v3085, %v3627
      %v3722 = vadd.f32 %v3086, %v3630
      %v3723 = vadd.f32 %v3087, %v3635
      %v3724 = vadd.f32 %v3088, %v3638
      %v3725 = vadd.f32 %v3089, %v3643
      %v3726 = vadd.f32 %v3090, %v3646
      %v3727 = vadd.f32 %v3091, %v3651
      %v3728 = vadd.f32 %v3092, %v3654
      %v3729 = vadd.f32 %v3093, %v3659
      %v3730 = vadd.f32 %v3094, %v3662
      %v3731 = vadd.f32 %v3095, %v3667
      %v3732 = vadd.f32 %v3096, %v3670
      %v3733 = vadd.f32 %v3097, %v3675
      %v3734 = vadd.f32 %v3098, %v3678
      %v3735 = vadd.f32 %v3099, %v3683
      %v3736 = vadd.f32 %v3100, %v3686
      %v3737 = vadd.f32 %v3101, %v3691
      %v3738 = vadd.f32 %v3102, %v3694
      %v3739 = vadd.f32 %v3103, %v3699
      %v3740 = vadd.f32 %v3104, %v3702
      %3741 = vst [vmem:[#allocation4] sm:$0xff] %v3705
      %3742 = vst [vmem:[#allocation4 + $0x8] sm:$0xff] %v3706
      %3743 = vst [vmem:[#allocation4 + $0x10] sm:$0xff] %v3707
      %3744 = vst [vmem:[#allocation4 + $0x18] sm:$0xff] %v3708
      %3745 = vst [vmem:[#allocation4 + $0x20] sm:$0xff] %v3709
      %3746 = vst [vmem:[#allocation4 + $0x28] sm:$0xff] %v3710
      %3747 = vst [vmem:[#allocation4 + $0x30] sm:$0xff] %v3711
      %3748 = vst [vmem:[#allocation4 + $0x38] sm:$0xff] %v3712
      %3749 = vst [vmem:[#allocation4 + $0x40] sm:$0xff] %v3713
      %3750 = vst [vmem:[#allocation4 + $0x48] sm:$0xff] %v3714
      %3751 = vst [vmem:[#allocation4 + $0x50] sm:$0xff] %v3715
      %3752 = vst [vmem:[#allocation4 + $0x58] sm:$0xff] %v3716
      %3753 = vst [vmem:[#allocation4 + $0x60] sm:$0xff] %v3717
      %3754 = vst [vmem:[#allocation4 + $0x68] sm:$0xff] %v3718
      %3755 = vst [vmem:[#allocation4 + $0x70] sm:$0xff] %v3719
      %3756 = vst [vmem:[#allocation4 + $0x78] sm:$0xff] %v3720
      %3757 = vst [vmem:[#allocation4 + $0x80] sm:$0xff] %v3721
      %3758 = vst [vmem:[#allocation4 + $0x88] sm:$0xff] %v3722
      %3759 = vst [vmem:[#allocation4 + $0x90] sm:$0xff] %v3723
      %3760 = vst [vmem:[#allocation4 + $0x98] sm:$0xff] %v3724
      %3761 = vst [vmem:[#allocation4 + $0xa0] sm:$0xff] %v3725
      %3762 = vst [vmem:[#allocation4 + $0xa8] sm:$0xff] %v3726
      %3763 = vst [vmem:[#allocation4 + $0xb0] sm:$0xff] %v3727
      %3764 = vst [vmem:[#allocation4 + $0xb8] sm:$0xff] %v3728
      %3765 = vst [vmem:[#allocation4 + $0xc0] sm:$0xff] %v3729
      %3766 = vst [vmem:[#allocation4 + $0xc8] sm:$0xff] %v3730
      %3767 = vst [vmem:[#allocation4 + $0xd0] sm:$0xff] %v3731
      %3768 = vst [vmem:[#allocation4 + $0xd8] sm:$0xff] %v3732
      %3769 = vst [vmem:[#allocation4 + $0xe0] sm:$0xff] %v3733
      %3770 = vst [vmem:[#allocation4 + $0xe8] sm:$0xff] %v3734
      %3771 = vst [vmem:[#allocation4 + $0xf0] sm:$0xff] %v3735
      %3772 = vst [vmem:[#allocation4 + $0xf8] sm:$0xff] %v3736
      %3773 = vst [vmem:[#allocation4 + $0x100] sm:$0xff] %v3737
      %3774 = vst [vmem:[#allocation4 + $0x108] sm:$0xff] %v3738
      %3775 = vst [vmem:[#allocation4 + $0x110] sm:$0xff] %v3739
      %3776 = vst [vmem:[#allocation4 + $0x118] sm:$0xff] %v3740
      %v3777 = vld [vmem:[#allocation2 + $0x18] sm:$0xff]
      %v3778 = vld [vmem:[#allocation2 + $0x20] sm:$0xff]
      %v3779 = vld [vmem:[#allocation2 + $0x28] sm:$0xff]
      %v3780 = vld [vmem:[#allocation2 + $0x30] sm:$0xff]
      %v3781 = vld [vmem:[#allocation2 + $0x38] sm:$0xff]
      %v3782 = vld [vmem:[#allocation2 + $0x40] sm:$0xff]
      %v3783 = vld [vmem:[#allocation2 + $0x48] sm:$0xff]
      %v3784 = vld [vmem:[#allocation2 + $0x50] sm:$0xff]
      %v3785 = vld [vmem:[#allocation2 + $0x58] sm:$0xff]
      %v3786 = vld [vmem:[#allocation2 + $0x60] sm:$0xff]
      %v3787 = vld [vmem:[#allocation2 + $0x68] sm:$0xff]
      %v3788 = vld [vmem:[#allocation2 + $0x70] sm:$0xff]
      %v3789 = vld [vmem:[#allocation2 + $0x78] sm:$0xff]
      %v3790 = vld [vmem:[#allocation2 + $0x80] sm:$0xff]
      %v3791 = vld [vmem:[#allocation2 + $0x88] sm:$0xff]
      %v3792 = vld [vmem:[#allocation2 + $0x90] sm:$0xff]
      %v3793 = vld [vmem:[#allocation2 + $0x98] sm:$0xff]
      %v3794 = vld [vmem:[#allocation2 + $0xa0] sm:$0xff]
      %v3795 = vld [vmem:[#allocation2 + $0xa8] sm:$0x1]
      %v3797 = vshrl.u32 %v3777, 16
      %v3799 = vshll.u32 %v3777, 16
      %v3801 = vrot.slane %v3799, 1
      %v3802 = vor.u32 %v3797, %v3801
      %v3804 = vshll.u32 %v3778, 16
      %v3806 = vrot.slane %v3804, 1
      %v3807 = vsel %vm2884, %v3802, %v3806
      %v3808 = vshrl.u32 %v3778, 16
      %v3810 = vor.u32 %v3808, %v3806
      %v3812 = vshll.u32 %v3779, 16
      %v3814 = vrot.slane %v3812, 1
      %v3815 = vsel %vm2884, %v3810, %v3814
      %v3816 = vshrl.u32 %v3779, 16
      %v3818 = vor.u32 %v3816, %v3814
      %v3820 = vshll.u32 %v3780, 16
      %v3822 = vrot.slane %v3820, 1
      %v3823 = vsel %vm2884, %v3818, %v3822
      %v3824 = vshrl.u32 %v3780, 16
      %v3826 = vor.u32 %v3824, %v3822
      %v3828 = vshll.u32 %v3781, 16
      %v3830 = vrot.slane %v3828, 1
      %v3831 = vsel %vm2884, %v3826, %v3830
      %v3832 = vshrl.u32 %v3781, 16
      %v3834 = vor.u32 %v3832, %v3830
      %v3836 = vshll.u32 %v3782, 16
      %v3838 = vrot.slane %v3836, 1
      %v3839 = vsel %vm2884, %v3834, %v3838
      %v3840 = vshrl.u32 %v3782, 16
      %v3842 = vor.u32 %v3840, %v3838
      %v3844 = vshll.u32 %v3783, 16
      %v3846 = vrot.slane %v3844, 1
      %v3847 = vsel %vm2884, %v3842, %v3846
      %v3848 = vshrl.u32 %v3783, 16
      %v3850 = vor.u32 %v3848, %v3846
      %v3852 = vshll.u32 %v3784, 16
      %v3854 = vrot.slane %v3852, 1
      %v3855 = vsel %vm2884, %v3850, %v3854
      %v3856 = vshrl.u32 %v3784, 16
      %v3858 = vor.u32 %v3856, %v3854
      %v3860 = vshll.u32 %v3785, 16
      %v3862 = vrot.slane %v3860, 1
      %v3863 = vsel %vm2884, %v3858, %v3862
      %v3864 = vshrl.u32 %v3785, 16
      %v3866 = vor.u32 %v3864, %v3862
      %v3868 = vshll.u32 %v3786, 16
      %v3870 = vrot.slane %v3868, 1
      %v3871 = vsel %vm2884, %v3866, %v3870
      %v3872 = vshrl.u32 %v3786, 16
      %v3874 = vor.u32 %v3872, %v3870
      %v3876 = vshll.u32 %v3787, 16
      %v3878 = vrot.slane %v3876, 1
      %v3879 = vsel %vm2884, %v3874, %v3878
      %v3880 = vshrl.u32 %v3787, 16
      %v3882 = vor.u32 %v3880, %v3878
      %v3884 = vshll.u32 %v3788, 16
      %v3886 = vrot.slane %v3884, 1
      %v3887 = vsel %vm2884, %v3882, %v3886
      %v3888 = vshrl.u32 %v3788, 16
      %v3890 = vor.u32 %v3888, %v3886
      %v3892 = vshll.u32 %v3789, 16
      %v3894 = vrot.slane %v3892, 1
      %v3895 = vsel %vm2884, %v3890, %v3894
      %v3896 = vshrl.u32 %v3789, 16
      %v3898 = vor.u32 %v3896, %v3894
      %v3900 = vshll.u32 %v3790, 16
      %v3902 = vrot.slane %v3900, 1
      %v3903 = vsel %vm2884, %v3898, %v3902
      %v3904 = vshrl.u32 %v3790, 16
      %v3906 = vor.u32 %v3904, %v3902
      %v3908 = vshll.u32 %v3791, 16
      %v3910 = vrot.slane %v3908, 1
      %v3911 = vsel %vm2884, %v3906, %v3910
      %v3912 = vshrl.u32 %v3791, 16
      %v3914 = vor.u32 %v3912, %v3910
      %v3916 = vshll.u32 %v3792, 16
      %v3918 = vrot.slane %v3916, 1
      %v3919 = vsel %vm2884, %v3914, %v3918
      %v3920 = vshrl.u32 %v3792, 16
      %v3922 = vor.u32 %v3920, %v3918
      %v3924 = vshll.u32 %v3793, 16
      %v3926 = vrot.slane %v3924, 1
      %v3927 = vsel %vm2884, %v3922, %v3926
      %v3928 = vshrl.u32 %v3793, 16
      %v3930 = vor.u32 %v3928, %v3926
      %v3932 = vshll.u32 %v3794, 16
      %v3934 = vrot.slane %v3932, 1
      %v3935 = vsel %vm2884, %v3930, %v3934
      %v3936 = vshrl.u32 %v3794, 16
      %v3938 = vor.u32 %v3936, %v3934
      %v3940 = vshll.u32 %v3795, 16
      %v3942 = vrot.slane %v3940, 1
      %v3943 = vsel %vm2884, %v3938, %v3942
      %3962 = vst [vmem:[#allocation3] sm:$0xff] %v3807
      %3963 = vst [vmem:[#allocation3 + $0x18] sm:$0xff] %v3815
      %3964 = vst [vmem:[#allocation3 + $0x30] sm:$0xff] %v3823
      %3965 = vst [vmem:[#allocation3 + $0x48] sm:$0xff] %v3831
      %3966 = vst [vmem:[#allocation3 + $0x60] sm:$0xff] %v3839
      %3967 = vst [vmem:[#allocation3 + $0x78] sm:$0xff] %v3847
      %3968 = vst [vmem:[#allocation3 + $0x90] sm:$0xff] %v3855
      %3969 = vst [vmem:[#allocation3 + $0xa8] sm:$0xff] %v3863
      %3970 = vst [vmem:[#allocation3 + $0xc0] sm:$0xff] %v3871
      %3971 = vst [vmem:[#allocation3 + $0xd8] sm:$0xff] %v3879
      %3972 = vst [vmem:[#allocation3 + $0xf0] sm:$0xff] %v3887
      %3973 = vst [vmem:[#allocation3 + $0x108] sm:$0xff] %v3895
      %3974 = vst [vmem:[#allocation3 + $0x120] sm:$0xff] %v3903
      %3975 = vst [vmem:[#allocation3 + $0x138] sm:$0xff] %v3911
      %3976 = vst [vmem:[#allocation3 + $0x150] sm:$0xff] %v3919
      %3977 = vst [vmem:[#allocation3 + $0x168] sm:$0xff] %v3927
      %3978 = vst [vmem:[#allocation3 + $0x180] sm:$0xff] %v3935
      %3979 = vst [vmem:[#allocation3 + $0x198] sm:$0xff] %v3943
      %v3980 = vld [vmem:[#allocation2 + $0x18] sm:$0xfe]
      %v3981 = vld [vmem:[#allocation2 + $0x20] sm:$0xff]
      %v3982 = vld [vmem:[#allocation2 + $0x28] sm:$0xff]
      %v3983 = vld [vmem:[#allocation2 + $0x30] sm:$0xff]
      %v3984 = vld [vmem:[#allocation2 + $0x38] sm:$0xff]
      %v3985 = vld [vmem:[#allocation2 + $0x40] sm:$0xff]
      %v3986 = vld [vmem:[#allocation2 + $0x48] sm:$0xff]
      %v3987 = vld [vmem:[#allocation2 + $0x50] sm:$0xff]
      %v3988 = vld [vmem:[#allocation2 + $0x58] sm:$0xff]
      %v3989 = vld [vmem:[#allocation2 + $0x60] sm:$0xff]
      %v3990 = vld [vmem:[#allocation2 + $0x68] sm:$0xff]
      %v3991 = vld [vmem:[#allocation2 + $0x70] sm:$0xff]
      %v3992 = vld [vmem:[#allocation2 + $0x78] sm:$0xff]
      %v3993 = vld [vmem:[#allocation2 + $0x80] sm:$0xff]
      %v3994 = vld [vmem:[#allocation2 + $0x88] sm:$0xff]
      %v3995 = vld [vmem:[#allocation2 + $0x90] sm:$0xff]
      %v3996 = vld [vmem:[#allocation2 + $0x98] sm:$0xff]
      %v3997 = vld [vmem:[#allocation2 + $0xa0] sm:$0xff]
      %v3998 = vld [vmem:[#allocation2 + $0xa8] sm:$0x1]
      %vm4018 = vcmask 1046528
      %v4019 = vrot.slane %v3980, 1
      %v4020 = vrot.slane %v3981, 1
      %v4021 = vsel %vm4018, %v4019, %v4020
      %v4022 = vrot.slane %v3982, 1
      %v4023 = vsel %vm4018, %v4020, %v4022
      %v4024 = vrot.slane %v3983, 1
      %v4025 = vsel %vm4018, %v4022, %v4024
      %v4026 = vrot.slane %v3984, 1
      %v4027 = vsel %vm4018, %v4024, %v4026
      %v4028 = vrot.slane %v3985, 1
      %v4029 = vsel %vm4018, %v4026, %v4028
      %v4030 = vrot.slane %v3986, 1
      %v4031 = vsel %vm4018, %v4028, %v4030
      %v4032 = vrot.slane %v3987, 1
      %v4033 = vsel %vm4018, %v4030, %v4032
      %v4034 = vrot.slane %v3988, 1
      %v4035 = vsel %vm4018, %v4032, %v4034
      %v4036 = vrot.slane %v3989, 1
      %v4037 = vsel %vm4018, %v4034, %v4036
      %v4038 = vrot.slane %v3990, 1
      %v4039 = vsel %vm4018, %v4036, %v4038
      %v4040 = vrot.slane %v3991, 1
      %v4041 = vsel %vm4018, %v4038, %v4040
      %v4042 = vrot.slane %v3992, 1
      %v4043 = vsel %vm4018, %v4040, %v4042
      %v4044 = vrot.slane %v3993, 1
      %v4045 = vsel %vm4018, %v4042, %v4044
      %v4046 = vrot.slane %v3994, 1
      %v4047 = vsel %vm4018, %v4044, %v4046
      %v4048 = vrot.slane %v3995, 1
      %v4049 = vsel %vm4018, %v4046, %v4048
      %v4050 = vrot.slane %v3996, 1
      %v4051 = vsel %vm4018, %v4048, %v4050
      %v4052 = vrot.slane %v3997, 1
      %v4053 = vsel %vm4018, %v4050, %v4052
      %v4054 = vrot.slane %v3998, 1
      %v4055 = vsel %vm4018, %v4052, %v4054
      %4074 = vst [vmem:[#allocation3 + $0x8] sm:$0xff] %v4021
      %4075 = vst [vmem:[#allocation3 + $0x20] sm:$0xff] %v4023
      %4076 = vst [vmem:[#allocation3 + $0x38] sm:$0xff] %v4025
      %4077 = vst [vmem:[#allocation3 + $0x50] sm:$0xff] %v4027
      %4078 = vst [vmem:[#allocation3 + $0x68] sm:$0xff] %v4029
      %4079 = vst [vmem:[#allocation3 + $0x80] sm:$0xff] %v4031
      %4080 = vst [vmem:[#allocation3 + $0x98] sm:$0xff] %v4033
      %4081 = vst [vmem:[#allocation3 + $0xb0] sm:$0xff] %v4035
      %4082 = vst [vmem:[#allocation3 + $0xc8] sm:$0xff] %v4037
      %4083 = vst [vmem:[#allocation3 + $0xe0] sm:$0xff] %v4039
      %4084 = vst [vmem:[#allocation3 + $0xf8] sm:$0xff] %v4041
      %4085 = vst [vmem:[#allocation3 + $0x110] sm:$0xff] %v4043
      %4086 = vst [vmem:[#allocation3 + $0x128] sm:$0xff] %v4045
      %4087 = vst [vmem:[#allocation3 + $0x140] sm:$0xff] %v4047
      %4088 = vst [vmem:[#allocation3 + $0x158] sm:$0xff] %v4049
      %4089 = vst [vmem:[#allocation3 + $0x170] sm:$0xff] %v4051
      %4090 = vst [vmem:[#allocation3 + $0x188] sm:$0xff] %v4053
      %4091 = vst [vmem:[#allocation3 + $0x1a0] sm:$0xff] %v4055
      %v4092 = vld [vmem:[#allocation2 + $0x18] sm:$0xfe]
      %v4093 = vld [vmem:[#allocation2 + $0x20] sm:$0xff]
      %v4094 = vld [vmem:[#allocation2 + $0x28] sm:$0xff]
      %v4095 = vld [vmem:[#allocation2 + $0x30] sm:$0xff]
      %v4096 = vld [vmem:[#allocation2 + $0x38] sm:$0xff]
      %v4097 = vld [vmem:[#allocation2 + $0x40] sm:$0xff]
      %v4098 = vld [vmem:[#allocation2 + $0x48] sm:$0xff]
      %v4099 = vld [vmem:[#allocation2 + $0x50] sm:$0xff]
      %v4100 = vld [vmem:[#allocation2 + $0x58] sm:$0xff]
      %v4101 = vld [vmem:[#allocation2 + $0x60] sm:$0xff]
      %v4102 = vld [vmem:[#allocation2 + $0x68] sm:$0xff]
      %v4103 = vld [vmem:[#allocation2 + $0x70] sm:$0xff]
      %v4104 = vld [vmem:[#allocation2 + $0x78] sm:$0xff]
      %v4105 = vld [vmem:[#allocation2 + $0x80] sm:$0xff]
      %v4106 = vld [vmem:[#allocation2 + $0x88] sm:$0xff]
      %v4107 = vld [vmem:[#allocation2 + $0x90] sm:$0xff]
      %v4108 = vld [vmem:[#allocation2 + $0x98] sm:$0xff]
      %v4109 = vld [vmem:[#allocation2 + $0xa0] sm:$0xff]
      %v4110 = vld [vmem:[#allocation2 + $0xa8] sm:$0x3]
      %vm4111 = vsmask.f32 6400
      %v4113 = vshrl.u32 %v4092, 16
      %v4115 = vrot.slane %v4113, 1
      %v4116 = vshll.u32 %v4092, 16
      %v4118 = vrot.slane %v4116, 2
      %v4119 = vor.u32 %v4115, %v4118
      %v4121 = vshrl.u32 %v4093, 16
      %v4123 = vrot.slane %v4121, 1
      %v4124 = vshll.u32 %v4093, 16
      %v4126 = vrot.slane %v4124, 2
      %v4127 = vor.u32 %v4123, %v4126
      %v4128 = vsel %vm4111, %v4119, %v4127
      %v4130 = vshrl.u32 %v4094, 16
      %v4132 = vrot.slane %v4130, 1
      %v4133 = vshll.u32 %v4094, 16
      %v4135 = vrot.slane %v4133, 2
      %v4136 = vor.u32 %v4132, %v4135
      %v4137 = vsel %vm4111, %v4127, %v4136
      %v4139 = vshrl.u32 %v4095, 16
      %v4141 = vrot.slane %v4139, 1
      %v4142 = vshll.u32 %v4095, 16
      %v4144 = vrot.slane %v4142, 2
      %v4145 = vor.u32 %v4141, %v4144
      %v4146 = vsel %vm4111, %v4136, %v4145
      %v4148 = vshrl.u32 %v4096, 16
      %v4150 = vrot.slane %v4148, 1
      %v4151 = vshll.u32 %v4096, 16
      %v4153 = vrot.slane %v4151, 2
      %v4154 = vor.u32 %v4150, %v4153
      %v4155 = vsel %vm4111, %v4145, %v4154
      %v4157 = vshrl.u32 %v4097, 16
      %v4159 = vrot.slane %v4157, 1
      %v4160 = vshll.u32 %v4097, 16
      %v4162 = vrot.slane %v4160, 2
      %v4163 = vor.u32 %v4159, %v4162
      %v4164 = vsel %vm4111, %v4154, %v4163
      %v4166 = vshrl.u32 %v4098, 16
      %v4168 = vrot.slane %v4166, 1
      %v4169 = vshll.u32 %v4098, 16
      %v4171 = vrot.slane %v4169, 2
      %v4172 = vor.u32 %v4168, %v4171
      %v4173 = vsel %vm4111, %v4163, %v4172
      %v4175 = vshrl.u32 %v4099, 16
      %v4177 = vrot.slane %v4175, 1
      %v4178 = vshll.u32 %v4099, 16
      %v4180 = vrot.slane %v4178, 2
      %v4181 = vor.u32 %v4177, %v4180
      %v4182 = vsel %vm4111, %v4172, %v4181
      %v4184 = vshrl.u32 %v4100, 16
      %v4186 = vrot.slane %v4184, 1
      %v4187 = vshll.u32 %v4100, 16
      %v4189 = vrot.slane %v4187, 2
      %v4190 = vor.u32 %v4186, %v4189
      %v4191 = vsel %vm4111, %v4181, %v4190
      %v4193 = vshrl.u32 %v4101, 16
      %v4195 = vrot.slane %v4193, 1
      %v4196 = vshll.u32 %v4101, 16
      %v4198 = vrot.slane %v4196, 2
      %v4199 = vor.u32 %v4195, %v4198
      %v4200 = vsel %vm4111, %v4190, %v4199
      %v4202 = vshrl.u32 %v4102, 16
      %v4204 = vrot.slane %v4202, 1
      %v4205 = vshll.u32 %v4102, 16
      %v4207 = vrot.slane %v4205, 2
      %v4208 = vor.u32 %v4204, %v4207
      %v4209 = vsel %vm4111, %v4199, %v4208
      %v4211 = vshrl.u32 %v4103, 16
      %v4213 = vrot.slane %v4211, 1
      %v4214 = vshll.u32 %v4103, 16
      %v4216 = vrot.slane %v4214, 2
      %v4217 = vor.u32 %v4213, %v4216
      %v4218 = vsel %vm4111, %v4208, %v4217
      %v4220 = vshrl.u32 %v4104, 16
      %v4222 = vrot.slane %v4220, 1
      %v4223 = vshll.u32 %v4104, 16
      %v4225 = vrot.slane %v4223, 2
      %v4226 = vor.u32 %v4222, %v4225
      %v4227 = vsel %vm4111, %v4217, %v4226
      %v4229 = vshrl.u32 %v4105, 16
      %v4231 = vrot.slane %v4229, 1
      %v4232 = vshll.u32 %v4105, 16
      %v4234 = vrot.slane %v4232, 2
      %v4235 = vor.u32 %v4231, %v4234
      %v4236 = vsel %vm4111, %v4226, %v4235
      %v4238 = vshrl.u32 %v4106, 16
      %v4240 = vrot.slane %v4238, 1
      %v4241 = vshll.u32 %v4106, 16
      %v4243 = vrot.slane %v4241, 2
      %v4244 = vor.u32 %v4240, %v4243
      %v4245 = vsel %vm4111, %v4235, %v4244
      %v4247 = vshrl.u32 %v4107, 16
      %v4249 = vrot.slane %v4247, 1
      %v4250 = vshll.u32 %v4107, 16
      %v4252 = vrot.slane %v4250, 2
      %v4253 = vor.u32 %v4249, %v4252
      %v4254 = vsel %vm4111, %v4244, %v4253
      %v4256 = vshrl.u32 %v4108, 16
      %v4258 = vrot.slane %v4256, 1
      %v4259 = vshll.u32 %v4108, 16
      %v4261 = vrot.slane %v4259, 2
      %v4262 = vor.u32 %v4258, %v4261
      %v4263 = vsel %vm4111, %v4253, %v4262
      %v4265 = vshrl.u32 %v4109, 16
      %v4267 = vrot.slane %v4265, 1
      %v4268 = vshll.u32 %v4109, 16
      %v4270 = vrot.slane %v4268, 2
      %v4271 = vor.u32 %v4267, %v4270
      %v4272 = vsel %vm4111, %v4262, %v4271
      %v4274 = vshrl.u32 %v4110, 16
      %v4276 = vrot.slane %v4274, 1
      %v4277 = vshll.u32 %v4110, 16
      %v4279 = vrot.slane %v4277, 2
      %v4280 = vor.u32 %v4276, %v4279
      %v4281 = vsel %vm4111, %v4271, %v4280
      %4300 = vst [vmem:[#allocation3 + $0x10] sm:$0xff] %v4128
      %4301 = vst [vmem:[#allocation3 + $0x28] sm:$0xff] %v4137
      %4302 = vst [vmem:[#allocation3 + $0x40] sm:$0xff] %v4146
      %4303 = vst [vmem:[#allocation3 + $0x58] sm:$0xff] %v4155
      %4304 = vst [vmem:[#allocation3 + $0x70] sm:$0xff] %v4164
      %4305 = vst [vmem:[#allocation3 + $0x88] sm:$0xff] %v4173
      %4306 = vst [vmem:[#allocation3 + $0xa0] sm:$0xff] %v4182
      %4307 = vst [vmem:[#allocation3 + $0xb8] sm:$0xff] %v4191
      %4308 = vst [vmem:[#allocation3 + $0xd0] sm:$0xff] %v4200
      %4309 = vst [vmem:[#allocation3 + $0xe8] sm:$0xff] %v4209
      %4310 = vst [vmem:[#allocation3 + $0x100] sm:$0xff] %v4218
      %4311 = vst [vmem:[#allocation3 + $0x118] sm:$0xff] %v4227
      %4312 = vst [vmem:[#allocation3 + $0x130] sm:$0xff] %v4236
      %4313 = vst [vmem:[#allocation3 + $0x148] sm:$0xff] %v4245
      %4314 = vst [vmem:[#allocation3 + $0x160] sm:$0xff] %v4254
      %4315 = vst [vmem:[#allocation3 + $0x178] sm:$0xff] %v4263
      %4316 = vst [vmem:[#allocation3 + $0x190] sm:$0xff] %v4272
      %4317 = vst [vmem:[#allocation3 + $0x1a8] sm:$0xff] %v4281
      %v4318 = vld [vmem:[#allocation4] sm:$0xff]
      %v4319 = vld [vmem:[#allocation4 + $0x8] sm:$0xff]
      %v4320 = vld [vmem:[#allocation4 + $0x10] sm:$0xff]
      %v4321 = vld [vmem:[#allocation4 + $0x18] sm:$0xff]
      %v4322 = vld [vmem:[#allocation4 + $0x20] sm:$0xff]
      %v4323 = vld [vmem:[#allocation4 + $0x28] sm:$0xff]
      %v4324 = vld [vmem:[#allocation4 + $0x30] sm:$0xff]
      %v4325 = vld [vmem:[#allocation4 + $0x38] sm:$0xff]
      %v4326 = vld [vmem:[#allocation4 + $0x40] sm:$0xff]
      %v4327 = vld [vmem:[#allocation4 + $0x48] sm:$0xff]
      %v4328 = vld [vmem:[#allocation4 + $0x50] sm:$0xff]
      %v4329 = vld [vmem:[#allocation4 + $0x58] sm:$0xff]
      %v4330 = vld [vmem:[#allocation4 + $0x60] sm:$0xff]
      %v4331 = vld [vmem:[#allocation4 + $0x68] sm:$0xff]
      %v4332 = vld [vmem:[#allocation4 + $0x70] sm:$0xff]
      %v4333 = vld [vmem:[#allocation4 + $0x78] sm:$0xff]
      %v4334 = vld [vmem:[#allocation4 + $0x80] sm:$0xff]
      %v4335 = vld [vmem:[#allocation4 + $0x88] sm:$0xff]
      %v4336 = vld [vmem:[#allocation4 + $0x90] sm:$0xff]
      %v4337 = vld [vmem:[#allocation4 + $0x98] sm:$0xff]
      %v4338 = vld [vmem:[#allocation4 + $0xa0] sm:$0xff]
      %v4339 = vld [vmem:[#allocation4 + $0xa8] sm:$0xff]
      %v4340 = vld [vmem:[#allocation4 + $0xb0] sm:$0xff]
      %v4341 = vld [vmem:[#allocation4 + $0xb8] sm:$0xff]
      %v4342 = vld [vmem:[#allocation4 + $0xc0] sm:$0xff]
      %v4343 = vld [vmem:[#allocation4 + $0xc8] sm:$0xff]
      %v4344 = vld [vmem:[#allocation4 + $0xd0] sm:$0xff]
      %v4345 = vld [vmem:[#allocation4 + $0xd8] sm:$0xff]
      %v4346 = vld [vmem:[#allocation4 + $0xe0] sm:$0xff]
      %v4347 = vld [vmem:[#allocation4 + $0xe8] sm:$0xff]
      %v4348 = vld [vmem:[#allocation4 + $0xf0] sm:$0xff]
      %v4349 = vld [vmem:[#allocation4 + $0xf8] sm:$0xff]
      %v4350 = vld [vmem:[#allocation4 + $0x100] sm:$0xff]
      %v4351 = vld [vmem:[#allocation4 + $0x108] sm:$0xff]
      %v4352 = vld [vmem:[#allocation4 + $0x110] sm:$0xff]
      %v4353 = vld [vmem:[#allocation4 + $0x118] sm:$0xff]
      %v4354 = vld [vmem:[#allocation3] sm:$0xff]
      %v4355 = vld [vmem:[#allocation3 + $0x8] sm:$0xff]
      %v4356 = vld [vmem:[#allocation3 + $0x10] sm:$0xff]
      %v4357 = vld [vmem:[#allocation3 + $0x18] sm:$0xff]
      %v4358 = vld [vmem:[#allocation3 + $0x20] sm:$0xff]
      %v4359 = vld [vmem:[#allocation3 + $0x28] sm:$0xff]
      %v4360 = vld [vmem:[#allocation3 + $0x30] sm:$0xff]
      %v4361 = vld [vmem:[#allocation3 + $0x38] sm:$0xff]
      %v4362 = vld [vmem:[#allocation3 + $0x40] sm:$0xff]
      %v4363 = vld [vmem:[#allocation3 + $0x48] sm:$0xff]
      %v4364 = vld [vmem:[#allocation3 + $0x50] sm:$0xff]
      %v4365 = vld [vmem:[#allocation3 + $0x58] sm:$0xff]
      %v4366 = vld [vmem:[#allocation3 + $0x60] sm:$0xff]
      %v4367 = vld [vmem:[#allocation3 + $0x68] sm:$0xff]
      %v4368 = vld [vmem:[#allocation3 + $0x70] sm:$0xff]
      %v4369 = vld [vmem:[#allocation3 + $0x78] sm:$0xff]
      %v4370 = vld [vmem:[#allocation3 + $0x80] sm:$0xff]
      %v4371 = vld [vmem:[#allocation3 + $0x88] sm:$0xff]
      %v4372 = vld [vmem:[#allocation3 + $0x90] sm:$0xff]
      %v4373 = vld [vmem:[#allocation3 + $0x98] sm:$0xff]
      %v4374 = vld [vmem:[#allocation3 + $0xa0] sm:$0xff]
      %v4375 = vld [vmem:[#allocation3 + $0xa8] sm:$0xff]
      %v4376 = vld [vmem:[#allocation3 + $0xb0] sm:$0xff]
      %v4377 = vld [vmem:[#allocation3 + $0xb8] sm:$0xff]
      %v4378 = vld [vmem:[#allocation3 + $0xc0] sm:$0xff]
      %v4379 = vld [vmem:[#allocation3 + $0xc8] sm:$0xff]
      %v4380 = vld [vmem:[#allocation3 + $0xd0] sm:$0xff]
      %v4381 = vld [vmem:[#allocation3 + $0xd8] sm:$0xff]
      %v4382 = vld [vmem:[#allocation3 + $0xe0] sm:$0xff]
      %v4383 = vld [vmem:[#allocation3 + $0xe8] sm:$0xff]
      %v4384 = vld [vmem:[#allocation3 + $0xf0] sm:$0xff]
      %v4385 = vld [vmem:[#allocation3 + $0xf8] sm:$0xff]
      %v4386 = vld [vmem:[#allocation3 + $0x100] sm:$0xff]
      %v4387 = vld [vmem:[#allocation3 + $0x108] sm:$0xff]
      %v4388 = vld [vmem:[#allocation3 + $0x110] sm:$0xff]
      %v4389 = vld [vmem:[#allocation3 + $0x118] sm:$0xff]
      %v4390 = vld [vmem:[#allocation3 + $0x120] sm:$0xff]
      %v4391 = vld [vmem:[#allocation3 + $0x128] sm:$0xff]
      %v4392 = vld [vmem:[#allocation3 + $0x130] sm:$0xff]
      %v4393 = vld [vmem:[#allocation3 + $0x138] sm:$0xff]
      %v4394 = vld [vmem:[#allocation3 + $0x140] sm:$0xff]
      %v4395 = vld [vmem:[#allocation3 + $0x148] sm:$0xff]
      %v4396 = vld [vmem:[#allocation3 + $0x150] sm:$0xff]
      %v4397 = vld [vmem:[#allocation3 + $0x158] sm:$0xff]
      %v4398 = vld [vmem:[#allocation3 + $0x160] sm:$0xff]
      %v4399 = vld [vmem:[#allocation3 + $0x168] sm:$0xff]
      %v4400 = vld [vmem:[#allocation3 + $0x170] sm:$0xff]
      %v4401 = vld [vmem:[#allocation3 + $0x178] sm:$0xff]
      %v4402 = vld [vmem:[#allocation3 + $0x180] sm:$0xff]
      %v4403 = vld [vmem:[#allocation3 + $0x188] sm:$0xff]
      %v4404 = vld [vmem:[#allocation3 + $0x190] sm:$0xff]
      %v4405 = vld [vmem:[#allocation3 + $0x198] sm:$0xff]
      %v4406 = vld [vmem:[#allocation3 + $0x1a0] sm:$0xff]
      %v4407 = vld [vmem:[#allocation3 + $0x1a8] sm:$0xff]
      %v4408 = vld [vmem:[%s3 + $0x180] sm:$0xf]
      %v4409 = vld [vmem:[%s3 + $0x184] sm:$0xf]
      %v4410 = vld [vmem:[%s3 + $0x188] sm:$0xf]
      %v4411 = vld [vmem:[%s3 + $0x18c] sm:$0xf]
      %v4412 = vld [vmem:[%s3 + $0x190] sm:$0xf]
      %v4413 = vld [vmem:[%s3 + $0x194] sm:$0xf]
      %v4414 = vld [vmem:[%s3 + $0x198] sm:$0xf]
      %v4415 = vld [vmem:[%s3 + $0x19c] sm:$0xf]
      %v4416 = vld [vmem:[%s3 + $0x1a0] sm:$0xf]
      %v4417 = vld [vmem:[%s3 + $0x1a4] sm:$0xf]
      %v4418 = vld [vmem:[%s3 + $0x1a8] sm:$0xf]
      %v4419 = vld [vmem:[%s3 + $0x1ac] sm:$0xf]
      %v4420 = vld [vmem:[%s3 + $0x1b0] sm:$0xf]
      %v4421 = vld [vmem:[%s3 + $0x1b4] sm:$0xf]
      %v4422 = vld [vmem:[%s3 + $0x1b8] sm:$0xf]
      %v4423 = vld [vmem:[%s3 + $0x1bc] sm:$0xf]
      %v4424 = vld [vmem:[%s3 + $0x1c0] sm:$0xf]
      %v4425 = vld [vmem:[%s3 + $0x1c4] sm:$0xf]
      %v4426 = vld [vmem:[%s3 + $0x1c8] sm:$0xf]
      %v4427 = vld [vmem:[%s3 + $0x1cc] sm:$0xf]
      %v4428 = vld [vmem:[%s3 + $0x1d0] sm:$0xf]
      %v4429 = vld [vmem:[%s3 + $0x1d4] sm:$0xf]
      %v4430 = vld [vmem:[%s3 + $0x1d8] sm:$0xf]
      %v4431 = vld [vmem:[%s3 + $0x1dc] sm:$0xf]
      %v4432 = vld [vmem:[%s3 + $0x1e0] sm:$0xf]
      %v4433 = vld [vmem:[%s3 + $0x1e4] sm:$0xf]
      %v4434 = vld [vmem:[%s3 + $0x1e8] sm:$0xf]
      %v4435 = vld [vmem:[%s3 + $0x1ec] sm:$0xf]
      %v4436 = vld [vmem:[%s3 + $0x1f0] sm:$0xf]
      %v4437 = vld [vmem:[%s3 + $0x1f4] sm:$0xf]
      %v4438 = vld [vmem:[%s3 + $0x1f8] sm:$0xf]
      %v4439 = vld [vmem:[%s3 + $0x1fc] sm:$0xf]
      %v4440 = vld [vmem:[%s3 + $0x200] sm:$0xf]
      %v4441 = vld [vmem:[%s3 + $0x204] sm:$0xf]
      %v4442 = vld [vmem:[%s3 + $0x208] sm:$0xf]
      %v4443 = vld [vmem:[%s3 + $0x20c] sm:$0xf]
      %v4444 = vld [vmem:[%s3 + $0x210] sm:$0xf]
      %v4445 = vld [vmem:[%s3 + $0x214] sm:$0xf]
      %v4446 = vld [vmem:[%s3 + $0x218] sm:$0xf]
      %v4447 = vld [vmem:[%s3 + $0x21c] sm:$0xf]
      %v4448 = vld [vmem:[%s3 + $0x220] sm:$0xf]
      %v4449 = vld [vmem:[%s3 + $0x224] sm:$0xf]
      %v4450 = vld [vmem:[%s3 + $0x228] sm:$0xf]
      %v4451 = vld [vmem:[%s3 + $0x22c] sm:$0xf]
      %v4452 = vld [vmem:[%s3 + $0x230] sm:$0xf]
      %v4453 = vld [vmem:[%s3 + $0x234] sm:$0xf]
      %v4454 = vld [vmem:[%s3 + $0x238] sm:$0xf]
      %v4455 = vld [vmem:[%s3 + $0x23c] sm:$0xf]
      %v4504 = vunpack.c.l.b16 %v4408
      %v4505 = vunpack.c.l.b16 %v4409
      %v4506 = vunpack.c.l.b16 %v4410
      %v4507 = vunpack.c.l.b16 %v4411
      %v4508 = vunpack.c.l.b16 %v4412
      %v4509 = vunpack.c.l.b16 %v4413
      %v4510 = vunpack.c.l.b16 %v4414
      %v4511 = vunpack.c.l.b16 %v4415
      %v4512 = vunpack.c.l.b16 %v4416
      %v4513 = vunpack.c.l.b16 %v4417
      %v4514 = vunpack.c.l.b16 %v4418
      %v4515 = vunpack.c.l.b16 %v4419
      %v4516 = vunpack.c.l.b16 %v4420
      %v4517 = vunpack.c.l.b16 %v4421
      %v4518 = vunpack.c.l.b16 %v4422
      %v4519 = vunpack.c.l.b16 %v4423
      %v4520 = vunpack.c.l.b16 %v4424
      %v4521 = vunpack.c.l.b16 %v4425
      %v4522 = vunpack.c.l.b16 %v4426
      %v4523 = vunpack.c.l.b16 %v4427
      %v4524 = vunpack.c.l.b16 %v4428
      %v4525 = vunpack.c.l.b16 %v4429
      %v4526 = vunpack.c.l.b16 %v4430
      %v4527 = vunpack.c.l.b16 %v4431
      %v4528 = vunpack.c.l.b16 %v4432
      %v4529 = vunpack.c.l.b16 %v4433
      %v4530 = vunpack.c.l.b16 %v4434
      %v4531 = vunpack.c.l.b16 %v4435
      %v4532 = vunpack.c.l.b16 %v4436
      %v4533 = vunpack.c.l.b16 %v4437
      %v4534 = vunpack.c.l.b16 %v4438
      %v4535 = vunpack.c.l.b16 %v4439
      %v4536 = vunpack.c.l.b16 %v4440
      %v4537 = vunpack.c.l.b16 %v4441
      %v4538 = vunpack.c.l.b16 %v4442
      %v4539 = vunpack.c.l.b16 %v4443
      %v4540 = vunpack.c.l.b16 %v4444
      %v4541 = vunpack.c.l.b16 %v4445
      %v4542 = vunpack.c.l.b16 %v4446
      %v4543 = vunpack.c.l.b16 %v4447
      %v4544 = vunpack.c.l.b16 %v4448
      %v4545 = vunpack.c.l.b16 %v4449
      %v4546 = vunpack.c.l.b16 %v4450
      %v4547 = vunpack.c.l.b16 %v4451
      %v4548 = vunpack.c.l.b16 %v4452
      %v4549 = vunpack.c.l.b16 %v4453
      %v4550 = vunpack.c.l.b16 %v4454
      %v4551 = vunpack.c.l.b16 %v4455
      %v4552 = vpack.c.b16 %v4505, %v4504
      %v4553 = vpack.c.b16 %v4507, %v4506
      %v4554 = vpack.c.b16 %v4509, %v4508
      %v4555 = vpack.c.b16 %v4511, %v4510
      %v4556 = vpack.c.b16 %v4513, %v4512
      %v4557 = vpack.c.b16 %v4515, %v4514
      %v4558 = vpack.c.b16 %v4517, %v4516
      %v4559 = vpack.c.b16 %v4519, %v4518
      %v4560 = vpack.c.b16 %v4521, %v4520
      %v4561 = vpack.c.b16 %v4523, %v4522
      %v4562 = vpack.c.b16 %v4525, %v4524
      %v4563 = vpack.c.b16 %v4527, %v4526
      %v4564 = vpack.c.b16 %v4529, %v4528
      %v4565 = vpack.c.b16 %v4531, %v4530
      %v4566 = vpack.c.b16 %v4533, %v4532
      %v4567 = vpack.c.b16 %v4535, %v4534
      %v4568 = vpack.c.b16 %v4537, %v4536
      %v4569 = vpack.c.b16 %v4539, %v4538
      %v4570 = vpack.c.b16 %v4541, %v4540
      %v4571 = vpack.c.b16 %v4543, %v4542
      %v4572 = vpack.c.b16 %v4545, %v4544
      %v4573 = vpack.c.b16 %v4547, %v4546
      %v4574 = vpack.c.b16 %v4549, %v4548
      %v4575 = vpack.c.b16 %v4551, %v4550
      %4600 = vmatprep.subr.bf16.mxu0 0
      %4601 = vmatpush1.bf16.msra.mxu0 %v4552
      %4602 = vmatprep.subr.bf16.mxu0 0
      %4603 = vmatpush1.bf16.msra.mxu0 %v4553
      %4604 = vmatprep.subr.bf16.mxu0 0
      %4605 = vmatpush1.bf16.msra.mxu0 %v4554
      %4606 = vmatprep.subr.bf16.mxu0 0
      %4607 = vmatpush1.bf16.msra.mxu0 %v4555
      %4608 = vmatprep.subr.bf16.mxu0 0
      %4609 = vmatpush1.bf16.msra.mxu0 %v4556
      %4610 = vmatprep.subr.bf16.mxu0 0
      %4611 = vmatpush1.bf16.msra.mxu0 %v4557
      %4612 = vmatprep.subr.bf16.mxu0 0
      %4613 = vmatpush1.bf16.msra.mxu0 %v4558
      %4614 = vmatprep.subr.bf16.mxu0 0
      %4615 = vmatpush1.bf16.msra.mxu0 %v4559
      %4616 = vmatprep.subr.bf16.mxu0 0
      %4617 = vmatpush1.bf16.msra.mxu0 %v4560
      %4618 = vmatprep.subr.bf16.mxu0 0
      %4619 = vmatpush1.bf16.msra.mxu0 %v4561
      %4620 = vmatprep.subr.bf16.mxu0 0
      %4621 = vmatpush1.bf16.msra.mxu0 %v4562
      %4622 = vmatprep.subr.bf16.mxu0 0
      %4623 = vmatpush1.bf16.msra.mxu0 %v4563
      %4624 = vmatprep.subr.bf16.mxu0 0
      %4625 = vmatpush1.bf16.msra.mxu0 %v4564
      %4626 = vmatprep.subr.bf16.mxu0 0
      %4627 = vmatpush1.bf16.msra.mxu0 %v4565
      %4628 = vmatprep.subr.bf16.mxu0 0
      %4629 = vmatpush1.bf16.msra.mxu0 %v4566
      %4630 = vmatprep.subr.bf16.mxu0 0
      %4631 = vmatpush1.bf16.msra.mxu0 %v4567
      %4632 = vmatprep.mubr.bf16.mxu0 %v4355
      %4633 = vmatmul.mubr.bf16.gmra.mrb[0].mxu0 %v4354
      %v4634 = vpop.f32.mrb[0].mxu0
      %v4635 = vadd.f32 0.0, %v4634
      %v4636 = vpop.f32.mrb[0].mxu0
      %v4637 = vpop.f32.mrb[0].mxu0
      %v4638 = vadd.f32 0.0, %v4637
      %v4639 = vpop.f32.mrb[0].mxu0
      %4640 = vmatprep.mubr.bf16.mxu0 %v4358
      %4641 = vmatmul.mubr.bf16.gmra.mrb[0].mxu0 %v4357
      %v4642 = vpop.f32.mrb[0].mxu0
      %v4643 = vadd.f32 0.0, %v4642
      %v4644 = vpop.f32.mrb[0].mxu0
      %v4645 = vpop.f32.mrb[0].mxu0
      %v4646 = vadd.f32 0.0, %v4645
      %v4647 = vpop.f32.mrb[0].mxu0
      %4648 = vmatprep.mubr.bf16.mxu0 %v4361
      %4649 = vmatmul.mubr.bf16.gmra.mrb[0].mxu0 %v4360
      %v4650 = vpop.f32.mrb[0].mxu0
      %v4651 = vadd.f32 0.0, %v4650
      %v4652 = vpop.f32.mrb[0].mxu0
      %v4653 = vpop.f32.mrb[0].mxu0
      %v4654 = vadd.f32 0.0, %v4653
      %v4655 = vpop.f32.mrb[0].mxu0
      %4656 = vmatprep.mubr.bf16.mxu0 %v4364
      %4657 = vmatmul.mubr.bf16.gmra.mrb[0].mxu0 %v4363
      %v4658 = vpop.f32.mrb[0].mxu0
      %v4659 = vadd.f32 0.0, %v4658
      %v4660 = vpop.f32.mrb[0].mxu0
      %v4661 = vpop.f32.mrb[0].mxu0
      %v4662 = vadd.f32 0.0, %v4661
      %v4663 = vpop.f32.mrb[0].mxu0
      %4664 = vmatprep.mubr.bf16.mxu0 %v4367
      %4665 = vmatmul.mubr.bf16.gmra.mrb[0].mxu0 %v4366
      %v4666 = vpop.f32.mrb[0].mxu0
      %v4667 = vadd.f32 0.0, %v4666
      %v4668 = vpop.f32.mrb[0].mxu0
      %v4669 = vpop.f32.mrb[0].mxu0
      %v4670 = vadd.f32 0.0, %v4669
      %v4671 = vpop.f32.mrb[0].mxu0
      %4672 = vmatprep.mubr.bf16.mxu0 %v4370
      %4673 = vmatmul.mubr.bf16.gmra.mrb[0].mxu0 %v4369
      %v4674 = vpop.f32.mrb[0].mxu0
      %v4675 = vadd.f32 0.0, %v4674
      %v4676 = vpop.f32.mrb[0].mxu0
      %v4677 = vpop.f32.mrb[0].mxu0
      %v4678 = vadd.f32 0.0, %v4677
      %v4679 = vpop.f32.mrb[0].mxu0
      %4680 = vmatprep.mubr.bf16.mxu0 %v4373
      %4681 = vmatmul.mubr.bf16.gmra.mrb[0].mxu0 %v4372
      %v4682 = vpop.f32.mrb[0].mxu0
      %v4683 = vadd.f32 0.0, %v4682
      %v4684 = vpop.f32.mrb[0].mxu0
      %v4685 = vpop.f32.mrb[0].mxu0
      %v4686 = vadd.f32 0.0, %v4685
      %v4687 = vpop.f32.mrb[0].mxu0
      %4688 = vmatprep.mubr.bf16.mxu0 %v4376
      %4689 = vmatmul.mubr.bf16.gmra.mrb[0].mxu0 %v4375
      %v4690 = vpop.f32.mrb[0].mxu0
      %v4691 = vadd.f32 0.0, %v4690
      %v4692 = vpop.f32.mrb[0].mxu0
      %v4693 = vpop.f32.mrb[0].mxu0
      %v4694 = vadd.f32 0.0, %v4693
      %v4695 = vpop.f32.mrb[0].mxu0
      %4696 = vmatprep.mubr.bf16.mxu0 %v4379
      %4697 = vmatmul.mubr.bf16.gmra.mrb[0].mxu0 %v4378
      %v4698 = vpop.f32.mrb[0].mxu0
      %v4699 = vadd.f32 0.0, %v4698
      %v4700 = vpop.f32.mrb[0].mxu0
      %v4701 = vpop.f32.mrb[0].mxu0
      %v4702 = vadd.f32 0.0, %v4701
      %v4703 = vpop.f32.mrb[0].mxu0
      %4704 = vmatprep.mubr.bf16.mxu0 %v4382
      %4705 = vmatmul.mubr.bf16.gmra.mrb[0].mxu0 %v4381
      %v4706 = vpop.f32.mrb[0].mxu0
      %v4707 = vadd.f32 0.0, %v4706
      %v4708 = vpop.f32.mrb[0].mxu0
      %v4709 = vpop.f32.mrb[0].mxu0
      %v4710 = vadd.f32 0.0, %v4709
      %v4711 = vpop.f32.mrb[0].mxu0
      %4712 = vmatprep.mubr.bf16.mxu0 %v4385
      %4713 = vmatmul.mubr.bf16.gmra.mrb[0].mxu0 %v4384
      %v4714 = vpop.f32.mrb[0].mxu0
      %v4715 = vadd.f32 0.0, %v4714
      %v4716 = vpop.f32.mrb[0].mxu0
      %v4717 = vpop.f32.mrb[0].mxu0
      %v4718 = vadd.f32 0.0, %v4717
      %v4719 = vpop.f32.mrb[0].mxu0
      %4720 = vmatprep.mubr.bf16.mxu0 %v4388
      %4721 = vmatmul.mubr.bf16.gmra.mrb[0].mxu0 %v4387
      %v4722 = vpop.f32.mrb[0].mxu0
      %v4723 = vadd.f32 0.0, %v4722
      %v4724 = vpop.f32.mrb[0].mxu0
      %v4725 = vpop.f32.mrb[0].mxu0
      %v4726 = vadd.f32 0.0, %v4725
      %v4727 = vpop.f32.mrb[0].mxu0
      %4728 = vmatprep.mubr.bf16.mxu0 %v4391
      %4729 = vmatmul.mubr.bf16.gmra.mrb[0].mxu0 %v4390
      %v4730 = vpop.f32.mrb[0].mxu0
      %v4731 = vadd.f32 0.0, %v4730
      %v4732 = vpop.f32.mrb[0].mxu0
      %v4733 = vpop.f32.mrb[0].mxu0
      %v4734 = vadd.f32 0.0, %v4733
      %v4735 = vpop.f32.mrb[0].mxu0
      %4736 = vmatprep.mubr.bf16.mxu0 %v4394
      %4737 = vmatmul.mubr.bf16.gmra.mrb[0].mxu0 %v4393
      %v4738 = vpop.f32.mrb[0].mxu0
      %v4739 = vadd.f32 0.0, %v4738
      %v4740 = vpop.f32.mrb[0].mxu0
      %v4741 = vpop.f32.mrb[0].mxu0
      %v4742 = vadd.f32 0.0, %v4741
      %v4743 = vpop.f32.mrb[0].mxu0
      %4744 = vmatprep.mubr.bf16.mxu0 %v4397
      %4745 = vmatmul.mubr.bf16.gmra.mrb[0].mxu0 %v4396
      %v4746 = vpop.f32.mrb[0].mxu0
      %v4747 = vadd.f32 0.0, %v4746
      %v4748 = vpop.f32.mrb[0].mxu0
      %v4749 = vpop.f32.mrb[0].mxu0
      %v4750 = vadd.f32 0.0, %v4749
      %v4751 = vpop.f32.mrb[0].mxu0
      %4752 = vmatprep.mubr.bf16.mxu0 %v4400
      %4753 = vmatmul.mubr.bf16.gmra.mrb[0].mxu0 %v4399
      %v4754 = vpop.f32.mrb[0].mxu0
      %v4755 = vadd.f32 0.0, %v4754
      %v4756 = vpop.f32.mrb[0].mxu0
      %v4757 = vpop.f32.mrb[0].mxu0
      %v4758 = vadd.f32 0.0, %v4757
      %v4759 = vpop.f32.mrb[0].mxu0
      %4760 = vmatprep.mubr.bf16.mxu0 %v4403
      %4761 = vmatmul.mubr.bf16.gmra.mrb[0].mxu0 %v4402
      %v4762 = vpop.f32.mrb[0].mxu0
      %v4763 = vadd.f32 0.0, %v4762
      %v4764 = vpop.f32.mrb[0].mxu0
      %v4765 = vpop.f32.mrb[0].mxu0
      %v4766 = vadd.f32 0.0, %v4765
      %v4767 = vpop.f32.mrb[0].mxu0
      %4768 = vmatprep.mubr.bf16.mxu0 %v4406
      %4769 = vmatmul.mubr.bf16.gmra.mrb[0].mxu0 %v4405
      %v4770 = vpop.f32.mrb[0].mxu0
      %v4771 = vadd.f32 0.0, %v4770
      %v4772 = vpop.f32.mrb[0].mxu0
      %v4773 = vpop.f32.mrb[0].mxu0
      %v4774 = vadd.f32 0.0, %v4773
      %v4775 = vpop.f32.mrb[0].mxu0
      %4776 = vdwg.mxu0
      %4777 = vmatprep.subr.bf16.mxu0 0
      %4778 = vmatpush1.bf16.msra.mxu0 %v4568
      %4779 = vmatprep.subr.bf16.mxu0 0
      %4780 = vmatpush1.bf16.msra.mxu0 %v4569
      %4781 = vmatprep.subr.bf16.mxu0 0
      %4782 = vmatpush1.bf16.msra.mxu0 %v4570
      %4783 = vmatprep.subr.bf16.mxu0 0
      %4784 = vmatpush1.bf16.msra.mxu0 %v4571
      %4785 = vmatprep.subr.bf16.mxu0 0
      %4786 = vmatpush1.bf16.msra.mxu0 %v4572
      %4787 = vmatprep.subr.bf16.mxu0 0
      %4788 = vmatpush1.bf16.msra.mxu0 %v4573
      %4789 = vmatprep.subr.bf16.mxu0 0
      %4790 = vmatpush1.bf16.msra.mxu0 %v4574
      %4791 = vmatprep.subr.bf16.mxu0 0
      %4792 = vmatpush1.bf16.msra.mxu0 %v4575
      %4793 = vmatprep.subr.bf16.mxu0 0
      %4794 = vmatpush1.bf16.msra.mxu0 0
      %4795 = vmatprep.subr.bf16.mxu0 0
      %4796 = vmatpush1.bf16.msra.mxu0 0
      %4797 = vmatprep.subr.bf16.mxu0 0
      %4798 = vmatpush1.bf16.msra.mxu0 0
      %4799 = vmatprep.subr.bf16.mxu0 0
      %4800 = vmatpush1.bf16.msra.mxu0 0
      %4801 = vmatprep.subr.bf16.mxu0 0
      %4802 = vmatpush1.bf16.msra.mxu0 0
      %4803 = vmatprep.subr.bf16.mxu0 0
      %4804 = vmatpush1.bf16.msra.mxu0 0
      %4805 = vmatprep.subr.bf16.mxu0 0
      %4806 = vmatpush1.bf16.msra.mxu0 0
      %4807 = vmatprep.subr.bf16.mxu0 0
      %4808 = vmatpush1.bf16.msra.mxu0 0
      %4809 = vmatprep.mubr.bf16.mxu0 0
      %4810 = vmatmul.mubr.bf16.gmra.mrb[0].mxu0 %v4356
      %v4811 = vpop.f32.mrb[0].mxu0
      %v4812 = vadd.f32 %v4635, %v4811
      %v4813 = vpop.f32.mrb[0].mxu0
      %v4814 = vpop.f32.mrb[0].mxu0
      %v4815 = vadd.f32 %v4638, %v4814
      %v4816 = vpop.f32.mrb[0].mxu0
      %4817 = vmatprep.mubr.bf16.mxu0 0
      %4818 = vmatmul.mubr.bf16.gmra.mrb[0].mxu0 %v4359
      %v4819 = vpop.f32.mrb[0].mxu0
      %v4820 = vadd.f32 %v4643, %v4819
      %v4821 = vpop.f32.mrb[0].mxu0
      %v4822 = vpop.f32.mrb[0].mxu0
      %v4823 = vadd.f32 %v4646, %v4822
      %v4824 = vpop.f32.mrb[0].mxu0
      %4825 = vmatprep.mubr.bf16.mxu0 0
      %4826 = vmatmul.mubr.bf16.gmra.mrb[0].mxu0 %v4362
      %v4827 = vpop.f32.mrb[0].mxu0
      %v4828 = vadd.f32 %v4651, %v4827
      %v4829 = vpop.f32.mrb[0].mxu0
      %v4830 = vpop.f32.mrb[0].mxu0
      %v4831 = vadd.f32 %v4654, %v4830
      %v4832 = vpop.f32.mrb[0].mxu0
      %4833 = vmatprep.mubr.bf16.mxu0 0
      %4834 = vmatmul.mubr.bf16.gmra.mrb[0].mxu0 %v4365
      %v4835 = vpop.f32.mrb[0].mxu0
      %v4836 = vadd.f32 %v4659, %v4835
      %v4837 = vpop.f32.mrb[0].mxu0
      %v4838 = vpop.f32.mrb[0].mxu0
      %v4839 = vadd.f32 %v4662, %v4838
      %v4840 = vpop.f32.mrb[0].mxu0
      %4841 = vmatprep.mubr.bf16.mxu0 0
      %4842 = vmatmul.mubr.bf16.gmra.mrb[0].mxu0 %v4368
      %v4843 = vpop.f32.mrb[0].mxu0
      %v4844 = vadd.f32 %v4667, %v4843
      %v4845 = vpop.f32.mrb[0].mxu0
      %v4846 = vpop.f32.mrb[0].mxu0
      %v4847 = vadd.f32 %v4670, %v4846
      %v4848 = vpop.f32.mrb[0].mxu0
      %4849 = vmatprep.mubr.bf16.mxu0 0
      %4850 = vmatmul.mubr.bf16.gmra.mrb[0].mxu0 %v4371
      %v4851 = vpop.f32.mrb[0].mxu0
      %v4852 = vadd.f32 %v4675, %v4851
      %v4853 = vpop.f32.mrb[0].mxu0
      %v4854 = vpop.f32.mrb[0].mxu0
      %v4855 = vadd.f32 %v4678, %v4854
      %v4856 = vpop.f32.mrb[0].mxu0
      %4857 = vmatprep.mubr.bf16.mxu0 0
      %4858 = vmatmul.mubr.bf16.gmra.mrb[0].mxu0 %v4374
      %v4859 = vpop.f32.mrb[0].mxu0
      %v4860 = vadd.f32 %v4683, %v4859
      %v4861 = vpop.f32.mrb[0].mxu0
      %v4862 = vpop.f32.mrb[0].mxu0
      %v4863 = vadd.f32 %v4686, %v4862
      %v4864 = vpop.f32.mrb[0].mxu0
      %4865 = vmatprep.mubr.bf16.mxu0 0
      %4866 = vmatmul.mubr.bf16.gmra.mrb[0].mxu0 %v4377
      %v4867 = vpop.f32.mrb[0].mxu0
      %v4868 = vadd.f32 %v4691, %v4867
      %v4869 = vpop.f32.mrb[0].mxu0
      %v4870 = vpop.f32.mrb[0].mxu0
      %v4871 = vadd.f32 %v4694, %v4870
      %v4872 = vpop.f32.mrb[0].mxu0
      %4873 = vmatprep.mubr.bf16.mxu0 0
      %4874 = vmatmul.mubr.bf16.gmra.mrb[0].mxu0 %v4380
      %v4875 = vpop.f32.mrb[0].mxu0
      %v4876 = vadd.f32 %v4699, %v4875
      %v4877 = vpop.f32.mrb[0].mxu0
      %v4878 = vpop.f32.mrb[0].mxu0
      %v4879 = vadd.f32 %v4702, %v4878
      %v4880 = vpop.f32.mrb[0].mxu0
      %4881 = vmatprep.mubr.bf16.mxu0 0
      %4882 = vmatmul.mubr.bf16.gmra.mrb[0].mxu0 %v4383
      %v4883 = vpop.f32.mrb[0].mxu0
      %v4884 = vadd.f32 %v4707, %v4883
      %v4885 = vpop.f32.mrb[0].mxu0
      %v4886 = vpop.f32.mrb[0].mxu0
      %v4887 = vadd.f32 %v4710, %v4886
      %v4888 = vpop.f32.mrb[0].mxu0
      %4889 = vmatprep.mubr.bf16.mxu0 0
      %4890 = vmatmul.mubr.bf16.gmra.mrb[0].mxu0 %v4386
      %v4891 = vpop.f32.mrb[0].mxu0
      %v4892 = vadd.f32 %v4715, %v4891
      %v4893 = vpop.f32.mrb[0].mxu0
      %v4894 = vpop.f32.mrb[0].mxu0
      %v4895 = vadd.f32 %v4718, %v4894
      %v4896 = vpop.f32.mrb[0].mxu0
      %4897 = vmatprep.mubr.bf16.mxu0 0
      %4898 = vmatmul.mubr.bf16.gmra.mrb[0].mxu0 %v4389
      %v4899 = vpop.f32.mrb[0].mxu0
      %v4900 = vadd.f32 %v4723, %v4899
      %v4901 = vpop.f32.mrb[0].mxu0
      %v4902 = vpop.f32.mrb[0].mxu0
      %v4903 = vadd.f32 %v4726, %v4902
      %v4904 = vpop.f32.mrb[0].mxu0
      %4905 = vmatprep.mubr.bf16.mxu0 0
      %4906 = vmatmul.mubr.bf16.gmra.mrb[0].mxu0 %v4392
      %v4907 = vpop.f32.mrb[0].mxu0
      %v4908 = vadd.f32 %v4731, %v4907
      %v4909 = vpop.f32.mrb[0].mxu0
      %v4910 = vpop.f32.mrb[0].mxu0
      %v4911 = vadd.f32 %v4734, %v4910
      %v4912 = vpop.f32.mrb[0].mxu0
      %4913 = vmatprep.mubr.bf16.mxu0 0
      %4914 = vmatmul.mubr.bf16.gmra.mrb[0].mxu0 %v4395
      %v4915 = vpop.f32.mrb[0].mxu0
      %v4916 = vadd.f32 %v4739, %v4915
      %v4917 = vpop.f32.mrb[0].mxu0
      %v4918 = vpop.f32.mrb[0].mxu0
      %v4919 = vadd.f32 %v4742, %v4918
      %v4920 = vpop.f32.mrb[0].mxu0
      %4921 = vmatprep.mubr.bf16.mxu0 0
      %4922 = vmatmul.mubr.bf16.gmra.mrb[0].mxu0 %v4398
      %v4923 = vpop.f32.mrb[0].mxu0
      %v4924 = vadd.f32 %v4747, %v4923
      %v4925 = vpop.f32.mrb[0].mxu0
      %v4926 = vpop.f32.mrb[0].mxu0
      %v4927 = vadd.f32 %v4750, %v4926
      %v4928 = vpop.f32.mrb[0].mxu0
      %4929 = vmatprep.mubr.bf16.mxu0 0
      %4930 = vmatmul.mubr.bf16.gmra.mrb[0].mxu0 %v4401
      %v4931 = vpop.f32.mrb[0].mxu0
      %v4932 = vadd.f32 %v4755, %v4931
      %v4933 = vpop.f32.mrb[0].mxu0
      %v4934 = vpop.f32.mrb[0].mxu0
      %v4935 = vadd.f32 %v4758, %v4934
      %v4936 = vpop.f32.mrb[0].mxu0
      %4937 = vmatprep.mubr.bf16.mxu0 0
      %4938 = vmatmul.mubr.bf16.gmra.mrb[0].mxu0 %v4404
      %v4939 = vpop.f32.mrb[0].mxu0
      %v4940 = vadd.f32 %v4763, %v4939
      %v4941 = vpop.f32.mrb[0].mxu0
      %v4942 = vpop.f32.mrb[0].mxu0
      %v4943 = vadd.f32 %v4766, %v4942
      %v4944 = vpop.f32.mrb[0].mxu0
      %4945 = vmatprep.mubr.bf16.mxu0 0
      %4946 = vmatmul.mubr.bf16.gmra.mrb[0].mxu0 %v4407
      %v4947 = vpop.f32.mrb[0].mxu0
      %v4948 = vadd.f32 %v4771, %v4947
      %v4949 = vpop.f32.mrb[0].mxu0
      %v4950 = vpop.f32.mrb[0].mxu0
      %v4951 = vadd.f32 %v4774, %v4950
      %v4952 = vpop.f32.mrb[0].mxu0
      %4953 = vdwg.mxu0
      %v4954 = vadd.f32 %v4318, %v4812
      %v4955 = vadd.f32 %v4319, %v4815
      %v4956 = vadd.f32 %v4320, %v4820
      %v4957 = vadd.f32 %v4321, %v4823
      %v4958 = vadd.f32 %v4322, %v4828
      %v4959 = vadd.f32 %v4323, %v4831
      %v4960 = vadd.f32 %v4324, %v4836
      %v4961 = vadd.f32 %v4325, %v4839
      %v4962 = vadd.f32 %v4326, %v4844
      %v4963 = vadd.f32 %v4327, %v4847
      %v4964 = vadd.f32 %v4328, %v4852
      %v4965 = vadd.f32 %v4329, %v4855
      %v4966 = vadd.f32 %v4330, %v4860
      %v4967 = vadd.f32 %v4331, %v4863
      %v4968 = vadd.f32 %v4332, %v4868
      %v4969 = vadd.f32 %v4333, %v4871
      %v4970 = vadd.f32 %v4334, %v4876
      %v4971 = vadd.f32 %v4335, %v4879
      %v4972 = vadd.f32 %v4336, %v4884
      %v4973 = vadd.f32 %v4337, %v4887
      %v4974 = vadd.f32 %v4338, %v4892
      %v4975 = vadd.f32 %v4339, %v4895
      %v4976 = vadd.f32 %v4340, %v4900
      %v4977 = vadd.f32 %v4341, %v4903
      %v4978 = vadd.f32 %v4342, %v4908
      %v4979 = vadd.f32 %v4343, %v4911
      %v4980 = vadd.f32 %v4344, %v4916
      %v4981 = vadd.f32 %v4345, %v4919
      %v4982 = vadd.f32 %v4346, %v4924
      %v4983 = vadd.f32 %v4347, %v4927
      %v4984 = vadd.f32 %v4348, %v4932
      %v4985 = vadd.f32 %v4349, %v4935
      %v4986 = vadd.f32 %v4350, %v4940
      %v4987 = vadd.f32 %v4351, %v4943
      %v4988 = vadd.f32 %v4352, %v4948
      %v4989 = vadd.f32 %v4353, %v4951
      %4990 = vst [vmem:[#allocation4] sm:$0xff] %v4954
      %4991 = vst [vmem:[#allocation4 + $0x8] sm:$0xff] %v4955
      %4992 = vst [vmem:[#allocation4 + $0x10] sm:$0xff] %v4956
      %4993 = vst [vmem:[#allocation4 + $0x18] sm:$0xff] %v4957
      %4994 = vst [vmem:[#allocation4 + $0x20] sm:$0xff] %v4958
      %4995 = vst [vmem:[#allocation4 + $0x28] sm:$0xff] %v4959
      %4996 = vst [vmem:[#allocation4 + $0x30] sm:$0xff] %v4960
      %4997 = vst [vmem:[#allocation4 + $0x38] sm:$0xff] %v4961
      %4998 = vst [vmem:[#allocation4 + $0x40] sm:$0xff] %v4962
      %4999 = vst [vmem:[#allocation4 + $0x48] sm:$0xff] %v4963
      %5000 = vst [vmem:[#allocation4 + $0x50] sm:$0xff] %v4964
      %5001 = vst [vmem:[#allocation4 + $0x58] sm:$0xff] %v4965
      %5002 = vst [vmem:[#allocation4 + $0x60] sm:$0xff] %v4966
      %5003 = vst [vmem:[#allocation4 + $0x68] sm:$0xff] %v4967
      %5004 = vst [vmem:[#allocation4 + $0x70] sm:$0xff] %v4968
      %5005 = vst [vmem:[#allocation4 + $0x78] sm:$0xff] %v4969
      %5006 = vst [vmem:[#allocation4 + $0x80] sm:$0xff] %v4970
      %5007 = vst [vmem:[#allocation4 + $0x88] sm:$0xff] %v4971
      %5008 = vst [vmem:[#allocation4 + $0x90] sm:$0xff] %v4972
      %5009 = vst [vmem:[#allocation4 + $0x98] sm:$0xff] %v4973
      %5010 = vst [vmem:[#allocation4 + $0xa0] sm:$0xff] %v4974
      %5011 = vst [vmem:[#allocation4 + $0xa8] sm:$0xff] %v4975
      %5012 = vst [vmem:[#allocation4 + $0xb0] sm:$0xff] %v4976
      %5013 = vst [vmem:[#allocation4 + $0xb8] sm:$0xff] %v4977
      %5014 = vst [vmem:[#allocation4 + $0xc0] sm:$0xff] %v4978
      %5015 = vst [vmem:[#allocation4 + $0xc8] sm:$0xff] %v4979
      %5016 = vst [vmem:[#allocation4 + $0xd0] sm:$0xff] %v4980
      %5017 = vst [vmem:[#allocation4 + $0xd8] sm:$0xff] %v4981
      %5018 = vst [vmem:[#allocation4 + $0xe0] sm:$0xff] %v4982
      %5019 = vst [vmem:[#allocation4 + $0xe8] sm:$0xff] %v4983
      %5020 = vst [vmem:[#allocation4 + $0xf0] sm:$0xff] %v4984
      %5021 = vst [vmem:[#allocation4 + $0xf8] sm:$0xff] %v4985
      %5022 = vst [vmem:[#allocation4 + $0x100] sm:$0xff] %v4986
      %5023 = vst [vmem:[#allocation4 + $0x108] sm:$0xff] %v4987
      %5024 = vst [vmem:[#allocation4 + $0x110] sm:$0xff] %v4988
      %5025 = vst [vmem:[#allocation4 + $0x118] sm:$0xff] %v4989
      %v5026 = vld [vmem:[#allocation4] sm:$0xff]
      %v5027 = vld [vmem:[#allocation4 + $0x8] sm:$0xff]
      %v5028 = vld [vmem:[#allocation4 + $0x10] sm:$0xff]
      %v5029 = vld [vmem:[#allocation4 + $0x18] sm:$0xff]
      %v5030 = vld [vmem:[#allocation4 + $0x20] sm:$0xff]
      %v5031 = vld [vmem:[#allocation4 + $0x28] sm:$0xff]
      %v5032 = vld [vmem:[#allocation4 + $0x30] sm:$0xff]
      %v5033 = vld [vmem:[#allocation4 + $0x38] sm:$0xff]
      %v5034 = vld [vmem:[#allocation4 + $0x40] sm:$0xff]
      %v5035 = vld [vmem:[#allocation4 + $0x48] sm:$0xff]
      %v5036 = vld [vmem:[#allocation4 + $0x50] sm:$0xff]
      %v5037 = vld [vmem:[#allocation4 + $0x58] sm:$0xff]
      %v5038 = vld [vmem:[#allocation4 + $0x60] sm:$0xff]
      %v5039 = vld [vmem:[#allocation4 + $0x68] sm:$0xff]
      %v5040 = vld [vmem:[#allocation4 + $0x70] sm:$0xff]
      %v5041 = vld [vmem:[#allocation4 + $0x78] sm:$0xff]
      %v5042 = vld [vmem:[#allocation4 + $0x80] sm:$0xff]
      %v5043 = vld [vmem:[#allocation4 + $0x88] sm:$0xff]
      %v5044 = vld [vmem:[#allocation4 + $0x90] sm:$0xff]
      %v5045 = vld [vmem:[#allocation4 + $0x98] sm:$0xff]
      %v5046 = vld [vmem:[#allocation4 + $0xa0] sm:$0xff]
      %v5047 = vld [vmem:[#allocation4 + $0xa8] sm:$0xff]
      %v5048 = vld [vmem:[#allocation4 + $0xb0] sm:$0xff]
      %v5049 = vld [vmem:[#allocation4 + $0xb8] sm:$0xff]
      %v5050 = vld [vmem:[#allocation4 + $0xc0] sm:$0xff]
      %v5051 = vld [vmem:[#allocation4 + $0xc8] sm:$0xff]
      %v5052 = vld [vmem:[#allocation4 + $0xd0] sm:$0xff]
      %v5053 = vld [vmem:[#allocation4 + $0xd8] sm:$0xff]
      %v5054 = vld [vmem:[#allocation4 + $0xe0] sm:$0xff]
      %v5055 = vld [vmem:[#allocation4 + $0xe8] sm:$0xff]
      %v5056 = vld [vmem:[#allocation4 + $0xf0] sm:$0xff]
      %v5057 = vld [vmem:[#allocation4 + $0xf8] sm:$0xff]
      %v5058 = vld [vmem:[#allocation4 + $0x100] sm:$0xff]
      %v5059 = vld [vmem:[#allocation4 + $0x108] sm:$0xff]
      %v5060 = vld [vmem:[#allocation4 + $0x110] sm:$0xff]
      %v5061 = vld [vmem:[#allocation4 + $0x118] sm:$0xff]
      %v5062 = vsel %vm1228, %v5026, 0.0
      %v5063 = vsel %vm1229, %v5027, 0.0
      %v5064 = vsel %vm1230, %v5028, 0.0
      %v5065 = vsel %vm1231, %v5029, 0.0
      %v5066 = vsel %vm1232, %v5030, 0.0
      %v5067 = vsel %vm1233, %v5031, 0.0
      %v5068 = vsel %vm1234, %v5032, 0.0
      %v5069 = vsel %vm1235, %v5033, 0.0
      %v5070 = vsel %vm1236, %v5034, 0.0
      %v5071 = vsel %vm1237, %v5035, 0.0
      %v5072 = vsel %vm1238, %v5036, 0.0
      %v5073 = vsel %vm1239, %v5037, 0.0
      %v5074 = vsel %vm1240, %v5038, 0.0
      %v5075 = vsel %vm1241, %v5039, 0.0
      %v5076 = vsel %vm1242, %v5040, 0.0
      %v5077 = vsel %vm1243, %v5041, 0.0
      %v5078 = vsel %vm1244, %v5042, 0.0
      %v5079 = vsel %vm1245, %v5043, 0.0
      %v5080 = vsel %vm1246, %v5044, 0.0
      %v5081 = vsel %vm1247, %v5045, 0.0
      %v5082 = vsel %vm1248, %v5046, 0.0
      %v5083 = vsel %vm1249, %v5047, 0.0
      %v5084 = vsel %vm1250, %v5048, 0.0
      %v5085 = vsel %vm1251, %v5049, 0.0
      %v5086 = vsel %vm1252, %v5050, 0.0
      %v5087 = vsel %vm1253, %v5051, 0.0
      %v5088 = vsel %vm1254, %v5052, 0.0
      %v5089 = vsel %vm1255, %v5053, 0.0
      %v5090 = vsel %vm1256, %v5054, 0.0
      %v5091 = vsel %vm1257, %v5055, 0.0
      %v5092 = vsel %vm1258, %v5056, 0.0
      %v5093 = vsel %vm1259, %v5057, 0.0
      %v5094 = vsel %vm1260, %v5058, 0.0
      %v5095 = vsel %vm1261, %v5059, 0.0
      %v5096 = vsel %vm1262, %v5060, 0.0
      %v5097 = vsel %vm1263, %v5061, 0.0
      %v5098 = vadd.f32 %v5062, %v5063
      %v5099 = vadd.f32 %v5098, %v5064
      %v5100 = vadd.f32 %v5099, %v5065
      %v5101 = vadd.f32 %v5100, %v5066
      %v5102 = vadd.f32 %v5101, %v5067
      %v5103 = vadd.f32 %v5102, %v5068
      %v5104 = vadd.f32 %v5103, %v5069
      %v5105 = vadd.f32 %v5104, %v5070
      %v5106 = vadd.f32 %v5105, %v5071
      %v5107 = vadd.f32 %v5106, %v5072
      %v5108 = vadd.f32 %v5107, %v5073
      %v5109 = vadd.f32 %v5108, %v5074
      %v5110 = vadd.f32 %v5109, %v5075
      %v5111 = vadd.f32 %v5110, %v5076
      %v5112 = vadd.f32 %v5111, %v5077
      %v5113 = vadd.f32 %v5112, %v5078
      %v5114 = vadd.f32 %v5113, %v5079
      %v5115 = vadd.f32 %v5114, %v5080
      %v5116 = vadd.f32 %v5115, %v5081
      %v5117 = vadd.f32 %v5116, %v5082
      %v5118 = vadd.f32 %v5117, %v5083
      %v5119 = vadd.f32 %v5118, %v5084
      %v5120 = vadd.f32 %v5119, %v5085
      %v5121 = vadd.f32 %v5120, %v5086
      %v5122 = vadd.f32 %v5121, %v5087
      %v5123 = vadd.f32 %v5122, %v5088
      %v5124 = vadd.f32 %v5123, %v5089
      %v5125 = vadd.f32 %v5124, %v5090
      %v5126 = vadd.f32 %v5125, %v5091
      %v5127 = vadd.f32 %v5126, %v5092
      %v5128 = vadd.f32 %v5127, %v5093
      %v5129 = vadd.f32 %v5128, %v5094
      %v5130 = vadd.f32 %v5129, %v5095
      %v5131 = vadd.f32 %v5130, %v5096
      %v5132 = vadd.f32 %v5131, %v5097
      %v5133 = vrot.slane %v5132, 4
      %v5134 = vadd.f32 %v5132, %v5133
      %v5135 = vrot.slane %v5134, 2
      %v5136 = vadd.f32 %v5134, %v5135
      %v5137 = vrot.slane %v5136, 1
      %v5138 = vadd.f32 %v5136, %v5137
      %v5139 = vmul.f32 %v5062, %v5062
      %v5140 = vmul.f32 %v5063, %v5063
      %v5141 = vmul.f32 %v5064, %v5064
      %v5142 = vmul.f32 %v5065, %v5065
      %v5143 = vmul.f32 %v5066, %v5066
      %v5144 = vmul.f32 %v5067, %v5067
      %v5145 = vmul.f32 %v5068, %v5068
      %v5146 = vmul.f32 %v5069, %v5069
      %v5147 = vmul.f32 %v5070, %v5070
      %v5148 = vmul.f32 %v5071, %v5071
      %v5149 = vmul.f32 %v5072, %v5072
      %v5150 = vmul.f32 %v5073, %v5073
      %v5151 = vmul.f32 %v5074, %v5074
      %v5152 = vmul.f32 %v5075, %v5075
      %v5153 = vmul.f32 %v5076, %v5076
      %v5154 = vmul.f32 %v5077, %v5077
      %v5155 = vmul.f32 %v5078, %v5078
      %v5156 = vmul.f32 %v5079, %v5079
      %v5157 = vmul.f32 %v5080, %v5080
      %v5158 = vmul.f32 %v5081, %v5081
      %v5159 = vmul.f32 %v5082, %v5082
      %v5160 = vmul.f32 %v5083, %v5083
      %v5161 = vmul.f32 %v5084, %v5084
      %v5162 = vmul.f32 %v5085, %v5085
      %v5163 = vmul.f32 %v5086, %v5086
      %v5164 = vmul.f32 %v5087, %v5087
      %v5165 = vmul.f32 %v5088, %v5088
      %v5166 = vmul.f32 %v5089, %v5089
      %v5167 = vmul.f32 %v5090, %v5090
      %v5168 = vmul.f32 %v5091, %v5091
      %v5169 = vmul.f32 %v5092, %v5092
      %v5170 = vmul.f32 %v5093, %v5093
      %v5171 = vmul.f32 %v5094, %v5094
      %v5172 = vmul.f32 %v5095, %v5095
      %v5173 = vmul.f32 %v5096, %v5096
      %v5174 = vmul.f32 %v5097, %v5097
      %v5175 = vadd.f32 %v5139, %v5140
      %v5176 = vadd.f32 %v5175, %v5141
      %v5177 = vadd.f32 %v5176, %v5142
      %v5178 = vadd.f32 %v5177, %v5143
      %v5179 = vadd.f32 %v5178, %v5144
      %v5180 = vadd.f32 %v5179, %v5145
      %v5181 = vadd.f32 %v5180, %v5146
      %v5182 = vadd.f32 %v5181, %v5147
      %v5183 = vadd.f32 %v5182, %v5148
      %v5184 = vadd.f32 %v5183, %v5149
      %v5185 = vadd.f32 %v5184, %v5150
      %v5186 = vadd.f32 %v5185, %v5151
      %v5187 = vadd.f32 %v5186, %v5152
      %v5188 = vadd.f32 %v5187, %v5153
      %v5189 = vadd.f32 %v5188, %v5154
      %v5190 = vadd.f32 %v5189, %v5155
      %v5191 = vadd.f32 %v5190, %v5156
      %v5192 = vadd.f32 %v5191, %v5157
      %v5193 = vadd.f32 %v5192, %v5158
      %v5194 = vadd.f32 %v5193, %v5159
      %v5195 = vadd.f32 %v5194, %v5160
      %v5196 = vadd.f32 %v5195, %v5161
      %v5197 = vadd.f32 %v5196, %v5162
      %v5198 = vadd.f32 %v5197, %v5163
      %v5199 = vadd.f32 %v5198, %v5164
      %v5200 = vadd.f32 %v5199, %v5165
      %v5201 = vadd.f32 %v5200, %v5166
      %v5202 = vadd.f32 %v5201, %v5167
      %v5203 = vadd.f32 %v5202, %v5168
      %v5204 = vadd.f32 %v5203, %v5169
      %v5205 = vadd.f32 %v5204, %v5170
      %v5206 = vadd.f32 %v5205, %v5171
      %v5207 = vadd.f32 %v5206, %v5172
      %v5208 = vadd.f32 %v5207, %v5173
      %v5209 = vadd.f32 %v5208, %v5174
      %v5210 = vrot.slane %v5209, 4
      %v5211 = vadd.f32 %v5209, %v5210
      %v5212 = vrot.slane %v5211, 2
      %v5213 = vadd.f32 %v5211, %v5212
      %v5214 = vrot.slane %v5213, 1
      %v5215 = vadd.f32 %v5213, %v5214
      %vm5216 = vcmp.eq.s32.totalorder %v472, 0
      %v5217 = vsel %vm5216, %v5138, 0.0
      %5218 = vst [vmem:[%s271] sm:$0xff] %v5217
      %v5219 = vsel %vm5216, %v5215, 0.0
      %5220 = vst [vmem:[%s275] sm:$0xff] %v5219
      %v5221 = vpack.c.bf16 %v5027, %v5026
      %v5222 = vpack.c.bf16 %v5029, %v5028
      %v5223 = vpack.c.bf16 %v5031, %v5030
      %v5224 = vpack.c.bf16 %v5033, %v5032
      %v5225 = vpack.c.bf16 %v5035, %v5034
      %v5226 = vpack.c.bf16 %v5037, %v5036
      %v5227 = vpack.c.bf16 %v5039, %v5038
      %v5228 = vpack.c.bf16 %v5041, %v5040
      %v5229 = vpack.c.bf16 %v5043, %v5042
      %v5230 = vpack.c.bf16 %v5045, %v5044
      %v5231 = vpack.c.bf16 %v5047, %v5046
      %v5232 = vpack.c.bf16 %v5049, %v5048
      %v5233 = vpack.c.bf16 %v5051, %v5050
      %v5234 = vpack.c.bf16 %v5053, %v5052
      %v5235 = vpack.c.bf16 %v5055, %v5054
      %v5236 = vpack.c.bf16 %v5057, %v5056
      %v5237 = vpack.c.bf16 %v5059, %v5058
      %v5238 = vpack.c.bf16 %v5061, %v5060
      %v5257 = vunpack.c.l.b16 %v5221
      %v5258 = vunpack.c.h.b16 %v5221
      %v5259 = vunpack.c.l.b16 %v5222
      %v5260 = vunpack.c.h.b16 %v5222
      %v5261 = vunpack.c.l.b16 %v5223
      %v5262 = vunpack.c.h.b16 %v5223
      %v5263 = vunpack.c.l.b16 %v5224
      %v5264 = vunpack.c.h.b16 %v5224
      %v5265 = vunpack.c.l.b16 %v5225
      %v5266 = vunpack.c.h.b16 %v5225
      %v5267 = vunpack.c.l.b16 %v5226
      %v5268 = vunpack.c.h.b16 %v5226
      %v5269 = vunpack.c.l.b16 %v5227
      %v5270 = vunpack.c.h.b16 %v5227
      %v5271 = vunpack.c.l.b16 %v5228
      %v5272 = vunpack.c.h.b16 %v5228
      %v5273 = vunpack.c.l.b16 %v5229
      %v5274 = vunpack.c.h.b16 %v5229
      %v5275 = vunpack.c.l.b16 %v5230
      %v5276 = vunpack.c.h.b16 %v5230
      %v5277 = vunpack.c.l.b16 %v5231
      %v5278 = vunpack.c.h.b16 %v5231
      %v5279 = vunpack.c.l.b16 %v5232
      %v5280 = vunpack.c.h.b16 %v5232
      %v5281 = vunpack.c.l.b16 %v5233
      %v5282 = vunpack.c.h.b16 %v5233
      %v5283 = vunpack.c.l.b16 %v5234
      %v5284 = vunpack.c.h.b16 %v5234
      %v5285 = vunpack.c.l.b16 %v5235
      %v5286 = vunpack.c.h.b16 %v5235
      %v5287 = vunpack.c.l.b16 %v5236
      %v5288 = vunpack.c.h.b16 %v5236
      %v5289 = vunpack.c.l.b16 %v5237
      %v5290 = vunpack.c.h.b16 %v5237
      %v5291 = vunpack.c.l.b16 %v5238
      %v5292 = vunpack.c.h.b16 %v5238
      %v5293 = vpack.c.b16 %v5257, %v5257
      %v5294 = vpack.c.b16 %v5258, %v5258
      %v5295 = vpack.c.b16 %v5259, %v5259
      %v5296 = vpack.c.b16 %v5260, %v5260
      %v5297 = vpack.c.b16 %v5261, %v5261
      %v5298 = vpack.c.b16 %v5262, %v5262
      %v5299 = vpack.c.b16 %v5263, %v5263
      %v5300 = vpack.c.b16 %v5264, %v5264
      %v5301 = vpack.c.b16 %v5265, %v5265
      %v5302 = vpack.c.b16 %v5266, %v5266
      %v5303 = vpack.c.b16 %v5267, %v5267
      %v5304 = vpack.c.b16 %v5268, %v5268
      %v5305 = vpack.c.b16 %v5269, %v5269
      %v5306 = vpack.c.b16 %v5270, %v5270
      %v5307 = vpack.c.b16 %v5271, %v5271
      %v5308 = vpack.c.b16 %v5272, %v5272
      %v5309 = vpack.c.b16 %v5273, %v5273
      %v5310 = vpack.c.b16 %v5274, %v5274
      %v5311 = vpack.c.b16 %v5275, %v5275
      %v5312 = vpack.c.b16 %v5276, %v5276
      %v5313 = vpack.c.b16 %v5277, %v5277
      %v5314 = vpack.c.b16 %v5278, %v5278
      %v5315 = vpack.c.b16 %v5279, %v5279
      %v5316 = vpack.c.b16 %v5280, %v5280
      %v5317 = vpack.c.b16 %v5281, %v5281
      %v5318 = vpack.c.b16 %v5282, %v5282
      %v5319 = vpack.c.b16 %v5283, %v5283
      %v5320 = vpack.c.b16 %v5284, %v5284
      %v5321 = vpack.c.b16 %v5285, %v5285
      %v5322 = vpack.c.b16 %v5286, %v5286
      %v5323 = vpack.c.b16 %v5287, %v5287
      %v5324 = vpack.c.b16 %v5288, %v5288
      %v5325 = vpack.c.b16 %v5289, %v5289
      %v5326 = vpack.c.b16 %v5290, %v5290
      %v5327 = vpack.c.b16 %v5291, %v5291
      %v5328 = vpack.c.b16 %v5292, %v5292
      %5365 = vst [vmem:[%s266] sm:$0xf] %v5293
      %5366 = vst [vmem:[%s266 + $0x4] sm:$0xf] %v5294
      %5367 = vst [vmem:[%s266 + $0x8] sm:$0xf] %v5295
      %5368 = vst [vmem:[%s266 + $0xc] sm:$0xf] %v5296
      %5369 = vst [vmem:[%s266 + $0x10] sm:$0xf] %v5297
      %5370 = vst [vmem:[%s266 + $0x14] sm:$0xf] %v5298
      %5371 = vst [vmem:[%s266 + $0x18] sm:$0xf] %v5299
      %5372 = vst [vmem:[%s266 + $0x1c] sm:$0xf] %v5300
      %5373 = vst [vmem:[%s266 + $0x20] sm:$0xf] %v5301
      %5374 = vst [vmem:[%s266 + $0x24] sm:$0xf] %v5302
      %5375 = vst [vmem:[%s266 + $0x28] sm:$0xf] %v5303
      %5376 = vst [vmem:[%s266 + $0x2c] sm:$0xf] %v5304
      %5377 = vst [vmem:[%s266 + $0x30] sm:$0xf] %v5305
      %5378 = vst [vmem:[%s266 + $0x34] sm:$0xf] %v5306
      %5379 = vst [vmem:[%s266 + $0x38] sm:$0xf] %v5307
      %5380 = vst [vmem:[%s266 + $0x3c] sm:$0xf] %v5308
      %5381 = vst [vmem:[%s266 + $0x40] sm:$0xf] %v5309
      %5382 = vst [vmem:[%s266 + $0x44] sm:$0xf] %v5310
      %5383 = vst [vmem:[%s266 + $0x48] sm:$0xf] %v5311
      %5384 = vst [vmem:[%s266 + $0x4c] sm:$0xf] %v5312
      %5385 = vst [vmem:[%s266 + $0x50] sm:$0xf] %v5313
      %5386 = vst [vmem:[%s266 + $0x54] sm:$0xf] %v5314
      %5387 = vst [vmem:[%s266 + $0x58] sm:$0xf] %v5315
      %5388 = vst [vmem:[%s266 + $0x5c] sm:$0xf] %v5316
      %5389 = vst [vmem:[%s266 + $0x60] sm:$0xf] %v5317
      %5390 = vst [vmem:[%s266 + $0x64] sm:$0xf] %v5318
      %5391 = vst [vmem:[%s266 + $0x68] sm:$0xf] %v5319
      %5392 = vst [vmem:[%s266 + $0x6c] sm:$0xf] %v5320
      %5393 = vst [vmem:[%s266 + $0x70] sm:$0xf] %v5321
      %5394 = vst [vmem:[%s266 + $0x74] sm:$0xf] %v5322
      %5395 = vst [vmem:[%s266 + $0x78] sm:$0xf] %v5323
      %5396 = vst [vmem:[%s266 + $0x7c] sm:$0xf] %v5324
      %5397 = vst [vmem:[%s266 + $0x80] sm:$0xf] %v5325
      %5398 = vst [vmem:[%s266 + $0x84] sm:$0xf] %v5326
      %5399 = vst [vmem:[%s266 + $0x88] sm:$0xf] %v5327
      %5400 = vst [vmem:[%s266 + $0x8c] sm:$0xf] %v5328
      %s5401 = smul.u32 36, %s18
      %p5402 = scmp.lt.s32.totalorder %s5401, 71
      %s5403 = scalar_select %p5402, %s5401, 71
      %s5404 = smul.addr %s5403, 4
      %s5405 = scalar_lea.vmem %s4, %s5404
      %p5406 = scmp.lt.s32.totalorder %s18, 1
      %s5407 = scalar_select %p5406, %s18, 1
      %s5408 = smul.addr %s5407, 8
      %s5409 = scalar_lea.vmem %s5, %s5408
      %p5410 = scmp.lt.s32.totalorder %s18, 1
      %s5411 = scalar_select %p5410, %s18, 1
      %s5412 = smul.addr %s5411, 8
      %s5413 = scalar_lea.vmem %s6, %s5412
      // Predicated region
      $region37: #{double_conv.4} parent=35 // pred_check
        %p5414 = pneg %p125
      $region38: #{double_conv.4} parent=35 // pred_check_branch
        %5416 = sbr.rel (%p5414) target = $region40
      $region39: #{double_conv.4} parent=35 // pred_region
        %s5417 = smul.u32 36, %s18
      $region40: #{double_conv.4} parent=35 // pred_fallthru
        _
      // Predicated region
      $region41: #{double_conv.4} parent=35 // pred_check
        %p5418 = pneg %p151
      $region42: #{double_conv.4} parent=35 // pred_check_branch
        %5420 = sbr.rel (%p5418) target = $region44
      $region43: #{double_conv.4} parent=35 // pred_region
        _
      $region44: #{double_conv.4} parent=35 // pred_fallthru
        _
      // Predicated region
      $region45: #{double_conv.4} parent=35 // pred_check
        %p5421 = pneg %p177
      $region46: #{double_conv.4} parent=35 // pred_check_branch
        %5423 = sbr.rel (%p5421) target = $region48
      $region47: #{double_conv.4} parent=35 // pred_region
        _
      $region48: #{double_conv.4} parent=35 // pred_fallthru
        _
    $region36: #{double_conv.4} parent=5 // pred_fallthru
      _
    %p5424 = scmp.le.s32.totalorder 2, %s13
    // Predicated region
    $region49: #{double_conv.4} parent=5 // pred_check
      %p5425 = pneg %p5424
    $region50: #{double_conv.4} parent=5 // pred_check_branch
      %5427 = sbr.rel (%p5425) target = $region52
    $region51: #{double_conv.4} parent=5 // pred_region
      %s5428 = ssub.s32 %s13, 2
      // Predicated region
      $region53: #{double_conv.4} parent=51 // pred_check
        %p5429 = pneg %p131
      $region54: #{double_conv.4} parent=51 // pred_check_branch
        %5431 = sbr.rel (%p5429) target = $region56
      $region55: #{double_conv.4} parent=51 // pred_region
        %s5432 = smul.u32 36, %s19
        %p5433 = scmp.lt.s32.totalorder %s5432, 71
        %s5434 = scalar_select %p5433, %s5432, 71
        %s5435 = smul.addr %s5434, 4
        %s5436 = scalar_lea.vmem %s4, %s5435
      $region56: #{double_conv.4} parent=51 // pred_fallthru
        _
      // Predicated region
      $region57: #{double_conv.4} parent=51 // pred_check
        %p5437 = pneg %p157
      $region58: #{double_conv.4} parent=51 // pred_check_branch
        %5439 = sbr.rel (%p5437) target = $region60
      $region59: #{double_conv.4} parent=51 // pred_region
        %p5440 = scmp.lt.s32.totalorder %s19, 1
        %s5441 = scalar_select %p5440, %s19, 1
        %s5442 = smul.addr %s5441, 8
        %s5443 = scalar_lea.vmem %s5, %s5442
      $region60: #{double_conv.4} parent=51 // pred_fallthru
        _
      // Predicated region
      $region61: #{double_conv.4} parent=51 // pred_check
        %p5444 = pneg %p183
      $region62: #{double_conv.4} parent=51 // pred_check_branch
        %5446 = sbr.rel (%p5444) target = $region64
      $region63: #{double_conv.4} parent=51 // pred_region
        %p5447 = scmp.lt.s32.totalorder %s19, 1
        %s5448 = scalar_select %p5447, %s19, 1
        %s5449 = smul.addr %s5448, 8
        %s5450 = scalar_lea.vmem %s6, %s5449
      $region64: #{double_conv.4} parent=51 // pred_fallthru
        _
    $region52: #{double_conv.4} parent=5 // pred_fallthru
      _
  $region6: #{double_conv.4} parent=0 // loop_footer
    %s17 = sadd.s32 1, %s13
  $region7: #{double_conv.4} parent=0 // loop_footer_branch
    %12 = sbr.rel target = $region3
  $region8: #{double_conv.4} parent=0 // loop_exit
    _

// kernel: double_conv.3
$region0: #{double_conv.3}
  #allocation0 [shape = 'u32[]', space=smem, size = 0x4, offset = 0x4, fixed_abs, tag = 'smem constant byte address 0x4 - core index']
  #allocation1 [shape = 'u32[144,128]{1,0:T(1,128)}', space=vmem, size = 0x12000, scoped, tag = 'internal scratch']
  #allocation2 [shape = 'bf16[288,384]{1,0:T(16,128)(2,1)}', space=vmem, size = 0x36000, scoped, tag = 'scratch operand']
  #allocation3 [shape = 'f32[288,128]{1,0:T(8,128)}', space=vmem, size = 0x24000, scoped, tag = 'scratch operand']
  %s0 = inlined_call_operand.vmem [shape: bf16[672,128], index: 0, kind: input, shape index: {}]
  %s1 = inlined_call_operand.vmem [shape: bf16[1152,128], index: 1, kind: input, shape index: {}]
  %s2 = inlined_call_operand.vmem [shape: bf16[576,128], index: 2, kind: output, shape index: {0}]
  %s3 = inlined_call_operand.vmem [shape: f32[16,128], index: 3, kind: output, shape index: {1}]
  %s4 = inlined_call_operand.vmem [shape: f32[16,128], index: 4, kind: output, shape index: {2}]
  %5 = xla_tuple %s2, %s3, %s4
  %s6 = sld [smem:[#allocation0]]
  $region57: #{double_conv.3} parent=0
    _
  %s8 = ssub.s32 1, %s6
  %s9 = scalar_select 0, %s8, %s6
  loop: start=0, step=1, limit=4
  $region2: #{double_conv.3} parent=0 // loop_pre_header
    _
  $region3: #{double_conv.3} parent=0 // loop_header
    %s11 = sphi 0, %s15
    %p12 = scmp.ge.s32.totalorder %s11, 4
    %s21 = sphi 0, %s23
    %s24 = sphi 0, %s21
    %s25 = sphi 0, %s24
    %s41 = sphi 0, %s25
    %s45 = sphi 0, %s45
    %s47 = sphi 0, %s45
    %s48 = sphi 0, %s47
    %s62 = sphi 0, %s48
    %s68 = sphi 0, %s70
    %s71 = sphi 0, %s68
    %s72 = sphi 0, %s71
    %s88 = sphi 0, %s72
    %s94 = sphi 0, %s96
    %s97 = sphi 0, %s94
    %s98 = sphi 0, %s97
    %s114 = sphi 0, %s98
    %s120 = sphi 0, %s122
    %s123 = sphi 0, %s120
    %s124 = sphi 0, %s123
    %s140 = sphi 0, %s124
  $region4: #{double_conv.3} parent=0 // loop_header_branch
    %14 = sbr.rel (%p12) target = $region8
  $region5: #{double_conv.3} parent=0 // loop_body
    %s16 = ssub.s32 %s11, 1
    %s17 = ssub.s32 %s11, 2
    %s18 = sadd.s32 %s11, 1
    %s19 = ssub.s32 %s11, %s18
    %p20 = scmp.eq.s32.totalorder %s19, 0
    %s22 = sadd.s32 %s21, 1
    %s23 = scalar_select %p20, %s21, %s22
    %p26 = pneg %p20
    %p27 = scmp.eq.s32.totalorder %s11, 1
    %p28 = por %p26, %p27
    %p29 = scmp.ne.s32.totalorder %s21, %s24
    %p30 = scmp.eq.s32.totalorder %s11, 0
    %p31 = por %p29, %p30
    %p32 = scmp.ne.s32.totalorder %s21, %s24
    %p33 = scmp.eq.s32.totalorder %s16, 1
    %p34 = por %p32, %p33
    %p35 = scmp.ne.s32.totalorder %s24, %s25
    %p36 = scmp.eq.s32.totalorder %s16, 0
    %p37 = por %p35, %p36
    %p38 = scmp.ne.s32.totalorder %s24, %s25
    %p39 = scmp.eq.s32.totalorder %s17, 1
    %p40 = por %p38, %p39
    %p42 = scmp.ne.s32.totalorder %s25, %s41
    %p43 = scmp.eq.s32.totalorder %s17, 0
    %p44 = por %p42, %p43
    %s46 = sadd.s32 %s45, 1
    %p49 = scmp.eq.s32.totalorder %s11, 1
    %p50 = scmp.ne.s32.totalorder %s45, %s47
    %p51 = scmp.eq.s32.totalorder %s11, 0
    %p52 = por %p50, %p51
    %p53 = scmp.ne.s32.totalorder %s45, %s47
    %p54 = scmp.eq.s32.totalorder %s16, 1
    %p55 = por %p53, %p54
    %p56 = scmp.ne.s32.totalorder %s47, %s48
    %p57 = scmp.eq.s32.totalorder %s16, 0
    %p58 = por %p56, %p57
    %p59 = scmp.ne.s32.totalorder %s47, %s48
    %p60 = scmp.eq.s32.totalorder %s17, 1
    %p61 = por %p59, %p60
    %p63 = scmp.ne.s32.totalorder %s48, %s62
    %p64 = scmp.eq.s32.totalorder %s17, 0
    %p65 = por %p63, %p64
    %s66 = ssub.s32 %s11, %s18
    %p67 = scmp.eq.s32.totalorder %s66, 0
    %s69 = sadd.s32 %s68, 1
    %s70 = scalar_select %p67, %s68, %s69
    %p73 = pneg %p67
    %p74 = scmp.eq.s32.totalorder %s11, 1
    %p75 = por %p73, %p74
    %p76 = scmp.ne.s32.totalorder %s68, %s71
    %p77 = scmp.eq.s32.totalorder %s11, 0
    %p78 = por %p76, %p77
    %p79 = scmp.ne.s32.totalorder %s68, %s71
    %p80 = scmp.eq.s32.totalorder %s16, 1
    %p81 = por %p79, %p80
    %p82 = scmp.ne.s32.totalorder %s71, %s72
    %p83 = scmp.eq.s32.totalorder %s16, 0
    %p84 = por %p82, %p83
    %p85 = scmp.ne.s32.totalorder %s71, %s72
    %p86 = scmp.eq.s32.totalorder %s17, 1
    %p87 = por %p85, %p86
    %p89 = scmp.ne.s32.totalorder %s72, %s88
    %p90 = scmp.eq.s32.totalorder %s17, 0
    %p91 = por %p89, %p90
    %s92 = ssub.s32 %s11, %s18
    %p93 = scmp.eq.s32.totalorder %s92, 0
    %s95 = sadd.s32 %s94, 1
    %s96 = scalar_select %p93, %s94, %s95
    %p99 = pneg %p93
    %p100 = scmp.eq.s32.totalorder %s11, 1
    %p101 = por %p99, %p100
    %p102 = scmp.ne.s32.totalorder %s94, %s97
    %p103 = scmp.eq.s32.totalorder %s11, 0
    %p104 = por %p102, %p103
    %p105 = scmp.ne.s32.totalorder %s94, %s97
    %p106 = scmp.eq.s32.totalorder %s16, 1
    %p107 = por %p105, %p106
    %p108 = scmp.ne.s32.totalorder %s97, %s98
    %p109 = scmp.eq.s32.totalorder %s16, 0
    %p110 = por %p108, %p109
    %p111 = scmp.ne.s32.totalorder %s97, %s98
    %p112 = scmp.eq.s32.totalorder %s17, 1
    %p113 = por %p111, %p112
    %p115 = scmp.ne.s32.totalorder %s98, %s114
    %p116 = scmp.eq.s32.totalorder %s17, 0
    %p117 = por %p115, %p116
    %s118 = ssub.s32 %s11, %s18
    %p119 = scmp.eq.s32.totalorder %s118, 0
    %s121 = sadd.s32 %s120, 1
    %s122 = scalar_select %p119, %s120, %s121
    %p125 = pneg %p119
    %p126 = scmp.eq.s32.totalorder %s11, 1
    %p127 = por %p125, %p126
    %p128 = scmp.ne.s32.totalorder %s120, %s123
    %p129 = scmp.eq.s32.totalorder %s11, 0
    %p130 = por %p128, %p129
    %p131 = scmp.ne.s32.totalorder %s120, %s123
    %p132 = scmp.eq.s32.totalorder %s16, 1
    %p133 = por %p131, %p132
    %p134 = scmp.ne.s32.totalorder %s123, %s124
    %p135 = scmp.eq.s32.totalorder %s16, 0
    %p136 = por %p134, %p135
    %p137 = scmp.ne.s32.totalorder %s123, %s124
    %p138 = scmp.eq.s32.totalorder %s17, 1
    %p139 = por %p137, %p138
    %p141 = scmp.ne.s32.totalorder %s124, %s140
    %p142 = scmp.eq.s32.totalorder %s17, 0
    %p143 = por %p141, %p142
    %p144 = scmp.le.s32.totalorder 1, %s11
    %p145 = scmp.lt.s32.totalorder %s11, 3
    %p146 = pnand %p144, %p145
    %p147 = pneg %p146
    // Predicated region
    $region9: #{double_conv.3} parent=5 // pred_check
      _
    $region10: #{double_conv.3} parent=5 // pred_check_branch
      %149 = sbr.rel (%p146) target = $region12
    $region11: #{double_conv.3} parent=5 // pred_region
      %s150 = ssub.s32 %s11, 1
      // Predicated region
      $region13: #{double_conv.3} parent=11 // pred_check
        %p151 = pneg %p58
      $region14: #{double_conv.3} parent=11 // pred_check_branch
        %153 = sbr.rel (%p151) target = $region16
      $region15: #{double_conv.3} parent=11 // pred_region
        _
      $region16: #{double_conv.3} parent=11 // pred_fallthru
        _
    $region12: #{double_conv.3} parent=5 // pred_fallthru
      _
    %p154 = scmp.lt.s32.totalorder %s11, 2
    // Predicated region
    $region17: #{double_conv.3} parent=5 // pred_check
      %p155 = pneg %p154
    $region18: #{double_conv.3} parent=5 // pred_check_branch
      %157 = sbr.rel (%p155) target = $region20
    $region19: #{double_conv.3} parent=5 // pred_region
      // Predicated region
      $region21: #{double_conv.3} parent=19 // pred_check
        %p158 = pneg %p31
      $region22: #{double_conv.3} parent=19 // pred_check_branch
        %160 = sbr.rel (%p158) target = $region24
      $region23: #{double_conv.3} parent=19 // pred_region
        %s161 = smul.u32 42, %s11
        %p162 = scmp.lt.s32.totalorder %s161, 83
        %s163 = scalar_select %p162, %s161, 83
        %s164 = smul.addr %s163, 4
        %s165 = scalar_lea.vmem %s0, %s164
        %s166 = smul.u32 42, %s11
      $region24: #{double_conv.3} parent=19 // pred_fallthru
        _
    $region20: #{double_conv.3} parent=5 // pred_fallthru
      _
    %p167 = scmp.le.s32.totalorder 1, %s11
    %p168 = scmp.lt.s32.totalorder %s11, 3
    %p169 = pnand %p167, %p168
    %p170 = pneg %p169
    // Predicated region
    $region25: #{double_conv.3} parent=5 // pred_check
      _
    $region26: #{double_conv.3} parent=5 // pred_check_branch
      %172 = sbr.rel (%p169) target = $region28
    $region27: #{double_conv.3} parent=5 // pred_region
      %s173 = ssub.s32 %s11, 1
      %s174 = smul.u32 42, %s16
      %p175 = scmp.lt.s32.totalorder %s174, 83
      %s176 = scalar_select %p175, %s174, 83
      %s177 = smul.addr %s176, 4
      %s178 = scalar_lea.vmem %s0, %s177
      %p179 = pneg %p37
      %p180 = pneg %p34
      %p181 = pneg %p58
      %p182 = pneg %p55
      %p183 = pneg %p84
      %p184 = pneg %p81
      %s185 = smul.u32 36, %s16
      %p186 = scmp.lt.s32.totalorder %s185, 71
      %s187 = scalar_select %p186, %s185, 71
      %s188 = smul.addr %s187, 4
      %s189 = scalar_lea.vmem %s2, %s188
      %p190 = pneg %p110
      %p191 = pneg %p107
      %p192 = scmp.lt.s32.totalorder %s16, 1
      %s193 = scalar_select %p192, %s16, 1
      %s194 = smul.addr %s193, 8
      %s195 = scalar_lea.vmem %s3, %s194
      %p196 = pneg %p136
      %p197 = pneg %p133
      %p198 = scmp.lt.s32.totalorder %s16, 1
      %s199 = scalar_select %p198, %s16, 1
      %s200 = smul.addr %s199, 8
      %s201 = scalar_lea.vmem %s4, %s200
      %s202 = smul.u32 42, %s16
      %p203 = scmp.lt.s32.totalorder %s202, 83
      %s204 = scalar_select %p203, %s202, 83
      %s205 = smul.addr %s204, 4
      %s206 = scalar_lea.vmem %s0, %s205
      %s207 = smul.u32 42, %s16
      %s208 = smul.u32 36, %s16
      %p209 = scmp.lt.s32.totalorder %s208, 71
      %s210 = scalar_select %p209, %s208, 71
      %s211 = smul.addr %s210, 4
      %s212 = scalar_lea.vmem %s2, %s211
      %s213 = smul.u32 36, %s16
      %p214 = scmp.lt.s32.totalorder %s16, 1
      %s215 = scalar_select %p214, %s16, 1
      %s216 = smul.addr %s215, 8
      %s217 = scalar_lea.vmem %s3, %s216
      %p218 = scmp.lt.s32.totalorder %s16, 1
      %s219 = scalar_select %p218, %s16, 1
      %s220 = smul.addr %s219, 8
      %s221 = scalar_lea.vmem %s4, %s220
      %223 = vst [vmem:[#allocation3] sm:$0xff] 0.0
      %224 = vst [vmem:[#allocation3 + $0x8] sm:$0xff] 0.0
      %225 = vst [vmem:[#allocation3 + $0x10] sm:$0xff] 0.0
      %226 = vst [vmem:[#allocation3 + $0x18] sm:$0xff] 0.0
      %227 = vst [vmem:[#allocation3 + $0x20] sm:$0xff] 0.0
      %228 = vst [vmem:[#allocation3 + $0x28] sm:$0xff] 0.0
      %229 = vst [vmem:[#allocation3 + $0x30] sm:$0xff] 0.0
      %230 = vst [vmem:[#allocation3 + $0x38] sm:$0xff] 0.0
      %231 = vst [vmem:[#allocation3 + $0x40] sm:$0xff] 0.0
      %232 = vst [vmem:[#allocation3 + $0x48] sm:$0xff] 0.0
      %233 = vst [vmem:[#allocation3 + $0x50] sm:$0xff] 0.0
      %234 = vst [vmem:[#allocation3 + $0x58] sm:$0xff] 0.0
      %235 = vst [vmem:[#allocation3 + $0x60] sm:$0xff] 0.0
      %236 = vst [vmem:[#allocation3 + $0x68] sm:$0xff] 0.0
      %237 = vst [vmem:[#allocation3 + $0x70] sm:$0xff] 0.0
      %238 = vst [vmem:[#allocation3 + $0x78] sm:$0xff] 0.0
      %239 = vst [vmem:[#allocation3 + $0x80] sm:$0xff] 0.0
      %240 = vst [vmem:[#allocation3 + $0x88] sm:$0xff] 0.0
      %241 = vst [vmem:[#allocation3 + $0x90] sm:$0xff] 0.0
      %242 = vst [vmem:[#allocation3 + $0x98] sm:$0xff] 0.0
      %243 = vst [vmem:[#allocation3 + $0xa0] sm:$0xff] 0.0
      %244 = vst [vmem:[#allocation3 + $0xa8] sm:$0xff] 0.0
      %245 = vst [vmem:[#allocation3 + $0xb0] sm:$0xff] 0.0
      %246 = vst [vmem:[#allocation3 + $0xb8] sm:$0xff] 0.0
      %247 = vst [vmem:[#allocation3 + $0xc0] sm:$0xff] 0.0
      %248 = vst [vmem:[#allocation3 + $0xc8] sm:$0xff] 0.0
      %249 = vst [vmem:[#allocation3 + $0xd0] sm:$0xff] 0.0
      %250 = vst [vmem:[#allocation3 + $0xd8] sm:$0xff] 0.0
      %251 = vst [vmem:[#allocation3 + $0xe0] sm:$0xff] 0.0
      %252 = vst [vmem:[#allocation3 + $0xe8] sm:$0xff] 0.0
      %253 = vst [vmem:[#allocation3 + $0xf0] sm:$0xff] 0.0
      %254 = vst [vmem:[#allocation3 + $0xf8] sm:$0xff] 0.0
      %255 = vst [vmem:[#allocation3 + $0x100] sm:$0xff] 0.0
      %256 = vst [vmem:[#allocation3 + $0x108] sm:$0xff] 0.0
      %257 = vst [vmem:[#allocation3 + $0x110] sm:$0xff] 0.0
      %258 = vst [vmem:[#allocation3 + $0x118] sm:$0xff] 0.0
      %v259 = vld [vmem:[%s206] sm:$0xf]
      %v260 = vld [vmem:[%s206 + $0x4] sm:$0xf]
      %v261 = vld [vmem:[%s206 + $0x8] sm:$0xf]
      %v262 = vld [vmem:[%s206 + $0xc] sm:$0xf]
      %v263 = vld [vmem:[%s206 + $0x10] sm:$0xf]
      %v264 = vld [vmem:[%s206 + $0x14] sm:$0xf]
      %v265 = vld [vmem:[%s206 + $0x18] sm:$0xf]
      %v266 = vld [vmem:[%s206 + $0x1c] sm:$0xf]
      %v267 = vld [vmem:[%s206 + $0x20] sm:$0xf]
      %v268 = vld [vmem:[%s206 + $0x24] sm:$0xf]
      %v269 = vld [vmem:[%s206 + $0x28] sm:$0xf]
      %v270 = vld [vmem:[%s206 + $0x2c] sm:$0xf]
      %v271 = vld [vmem:[%s206 + $0x30] sm:$0xf]
      %v272 = vld [vmem:[%s206 + $0x34] sm:$0xf]
      %v273 = vld [vmem:[%s206 + $0x38] sm:$0xf]
      %v274 = vld [vmem:[%s206 + $0x3c] sm:$0xf]
      %v275 = vld [vmem:[%s206 + $0x40] sm:$0xf]
      %v276 = vld [vmem:[%s206 + $0x44] sm:$0xf]
      %v277 = vld [vmem:[%s206 + $0x48] sm:$0xf]
      %v278 = vld [vmem:[%s206 + $0x4c] sm:$0xf]
      %v279 = vld [vmem:[%s206 + $0x50] sm:$0xf]
      %v280 = vld [vmem:[%s206 + $0x54] sm:$0xf]
      %v281 = vld [vmem:[%s206 + $0x58] sm:$0xf]
      %v282 = vld [vmem:[%s206 + $0x5c] sm:$0xf]
      %v283 = vld [vmem:[%s206 + $0x60] sm:$0xf]
      %v284 = vld [vmem:[%s206 + $0x64] sm:$0xf]
      %v285 = vld [vmem:[%s206 + $0x68] sm:$0xf]
      %v286 = vld [vmem:[%s206 + $0x6c] sm:$0xf]
      %v287 = vld [vmem:[%s206 + $0x70] sm:$0xf]
      %v288 = vld [vmem:[%s206 + $0x74] sm:$0xf]
      %v289 = vld [vmem:[%s206 + $0x78] sm:$0xf]
      %v290 = vld [vmem:[%s206 + $0x7c] sm:$0xf]
      %v291 = vld [vmem:[%s206 + $0x80] sm:$0xf]
      %v292 = vld [vmem:[%s206 + $0x84] sm:$0xf]
      %v293 = vld [vmem:[%s206 + $0x88] sm:$0xf]
      %v294 = vld [vmem:[%s206 + $0x8c] sm:$0xf]
      %v331 = vunpack.c.l.b16 %v259
      %v332 = vunpack.c.l.b16 %v260
      %v333 = vunpack.c.l.b16 %v261
      %v334 = vunpack.c.l.b16 %v262
      %v335 = vunpack.c.l.b16 %v263
      %v336 = vunpack.c.l.b16 %v264
      %v337 = vunpack.c.l.b16 %v265
      %v338 = vunpack.c.l.b16 %v266
      %v339 = vunpack.c.l.b16 %v267
      %v340 = vunpack.c.l.b16 %v268
      %v341 = vunpack.c.l.b16 %v269
      %v342 = vunpack.c.l.b16 %v270
      %v343 = vunpack.c.l.b16 %v271
      %v344 = vunpack.c.l.b16 %v272
      %v345 = vunpack.c.l.b16 %v273
      %v346 = vunpack.c.l.b16 %v274
      %v347 = vunpack.c.l.b16 %v275
      %v348 = vunpack.c.l.b16 %v276
      %v349 = vunpack.c.l.b16 %v277
      %v350 = vunpack.c.l.b16 %v278
      %v351 = vunpack.c.l.b16 %v279
      %v352 = vunpack.c.l.b16 %v280
      %v353 = vunpack.c.l.b16 %v281
      %v354 = vunpack.c.l.b16 %v282
      %v355 = vunpack.c.l.b16 %v283
      %v356 = vunpack.c.l.b16 %v284
      %v357 = vunpack.c.l.b16 %v285
      %v358 = vunpack.c.l.b16 %v286
      %v359 = vunpack.c.l.b16 %v287
      %v360 = vunpack.c.l.b16 %v288
      %v361 = vunpack.c.l.b16 %v289
      %v362 = vunpack.c.l.b16 %v290
      %v363 = vunpack.c.l.b16 %v291
      %v364 = vunpack.c.l.b16 %v292
      %v365 = vunpack.c.l.b16 %v293
      %v366 = vunpack.c.l.b16 %v294
      %v367 = vpack.c.b16 %v332, %v331
      %v368 = vpack.c.b16 %v334, %v333
      %v369 = vpack.c.b16 %v336, %v335
      %v370 = vpack.c.b16 %v338, %v337
      %v371 = vpack.c.b16 %v340, %v339
      %v372 = vpack.c.b16 %v342, %v341
      %v373 = vpack.c.b16 %v344, %v343
      %v374 = vpack.c.b16 %v346, %v345
      %v375 = vpack.c.b16 %v348, %v347
      %v376 = vpack.c.b16 %v350, %v349
      %v377 = vpack.c.b16 %v352, %v351
      %v378 = vpack.c.b16 %v354, %v353
      %v379 = vpack.c.b16 %v356, %v355
      %v380 = vpack.c.b16 %v358, %v357
      %v381 = vpack.c.b16 %v360, %v359
      %v382 = vpack.c.b16 %v362, %v361
      %v383 = vpack.c.b16 %v364, %v363
      %v384 = vpack.c.b16 %v366, %v365
      %403 = vst [vmem:[#allocation2] sm:$0xff] %v367
      %404 = vst [vmem:[#allocation2 + $0x18] sm:$0xff] %v368
      %405 = vst [vmem:[#allocation2 + $0x30] sm:$0xff] %v369
      %406 = vst [vmem:[#allocation2 + $0x48] sm:$0xff] %v370
      %407 = vst [vmem:[#allocation2 + $0x60] sm:$0xff] %v371
      %408 = vst [vmem:[#allocation2 + $0x78] sm:$0xff] %v372
      %409 = vst [vmem:[#allocation2 + $0x90] sm:$0xff] %v373
      %410 = vst [vmem:[#allocation2 + $0xa8] sm:$0xff] %v374
      %411 = vst [vmem:[#allocation2 + $0xc0] sm:$0xff] %v375
      %412 = vst [vmem:[#allocation2 + $0xd8] sm:$0xff] %v376
      %413 = vst [vmem:[#allocation2 + $0xf0] sm:$0xff] %v377
      %414 = vst [vmem:[#allocation2 + $0x108] sm:$0xff] %v378
      %415 = vst [vmem:[#allocation2 + $0x120] sm:$0xff] %v379
      %416 = vst [vmem:[#allocation2 + $0x138] sm:$0xff] %v380
      %417 = vst [vmem:[#allocation2 + $0x150] sm:$0xff] %v381
      %418 = vst [vmem:[#allocation2 + $0x168] sm:$0xff] %v382
      %419 = vst [vmem:[#allocation2 + $0x180] sm:$0xff] %v383
      %420 = vst [vmem:[#allocation2 + $0x198] sm:$0xff] %v384
      %v421 = vld [vmem:[%s206] sm:$0xf]
      %v422 = vld [vmem:[%s206 + $0x4] sm:$0xf]
      %v423 = vld [vmem:[%s206 + $0x8] sm:$0xf]
      %v424 = vld [vmem:[%s206 + $0xc] sm:$0xf]
      %v425 = vld [vmem:[%s206 + $0x10] sm:$0xf]
      %v426 = vld [vmem:[%s206 + $0x14] sm:$0xf]
      %v427 = vld [vmem:[%s206 + $0x18] sm:$0xf]
      %v428 = vld [vmem:[%s206 + $0x1c] sm:$0xf]
      %v429 = vld [vmem:[%s206 + $0x20] sm:$0xf]
      %v430 = vld [vmem:[%s206 + $0x24] sm:$0xf]
      %v431 = vld [vmem:[%s206 + $0x28] sm:$0xf]
      %v432 = vld [vmem:[%s206 + $0x2c] sm:$0xf]
      %v433 = vld [vmem:[%s206 + $0x30] sm:$0xf]
      %v434 = vld [vmem:[%s206 + $0x34] sm:$0xf]
      %v435 = vld [vmem:[%s206 + $0x38] sm:$0xf]
      %v436 = vld [vmem:[%s206 + $0x3c] sm:$0xf]
      %v437 = vld [vmem:[%s206 + $0x40] sm:$0xf]
      %v438 = vld [vmem:[%s206 + $0x44] sm:$0xf]
      %v439 = vld [vmem:[%s206 + $0x48] sm:$0xf]
      %v440 = vld [vmem:[%s206 + $0x4c] sm:$0xf]
      %v441 = vld [vmem:[%s206 + $0x50] sm:$0xf]
      %v442 = vld [vmem:[%s206 + $0x54] sm:$0xf]
      %v443 = vld [vmem:[%s206 + $0x58] sm:$0xf]
      %v444 = vld [vmem:[%s206 + $0x5c] sm:$0xf]
      %v445 = vld [vmem:[%s206 + $0x60] sm:$0xf]
      %v446 = vld [vmem:[%s206 + $0x64] sm:$0xf]
      %v447 = vld [vmem:[%s206 + $0x68] sm:$0xf]
      %v448 = vld [vmem:[%s206 + $0x6c] sm:$0xf]
      %v449 = vld [vmem:[%s206 + $0x70] sm:$0xf]
      %v450 = vld [vmem:[%s206 + $0x74] sm:$0xf]
      %v451 = vld [vmem:[%s206 + $0x78] sm:$0xf]
      %v452 = vld [vmem:[%s206 + $0x7c] sm:$0xf]
      %v453 = vld [vmem:[%s206 + $0x80] sm:$0xf]
      %v454 = vld [vmem:[%s206 + $0x84] sm:$0xf]
      %v455 = vld [vmem:[%s206 + $0x88] sm:$0xf]
      %v456 = vld [vmem:[%s206 + $0x8c] sm:$0xf]
      %v457 = vld [vmem:[%s206 + $0x90] sm:$0x1]
      %v495 = vunpack.c.l.b16 %v421
      %v496 = vunpack.c.l.b16 %v422
      %v497 = vunpack.c.l.b16 %v423
      %v498 = vunpack.c.l.b16 %v424
      %v499 = vunpack.c.l.b16 %v425
      %v500 = vunpack.c.l.b16 %v426
      %v501 = vunpack.c.l.b16 %v427
      %v502 = vunpack.c.l.b16 %v428
      %v503 = vunpack.c.l.b16 %v429
      %v504 = vunpack.c.l.b16 %v430
      %v505 = vunpack.c.l.b16 %v431
      %v506 = vunpack.c.l.b16 %v432
      %v507 = vunpack.c.l.b16 %v433
      %v508 = vunpack.c.l.b16 %v434
      %v509 = vunpack.c.l.b16 %v435
      %v510 = vunpack.c.l.b16 %v436
      %v511 = vunpack.c.l.b16 %v437
      %v512 = vunpack.c.l.b16 %v438
      %v513 = vunpack.c.l.b16 %v439
      %v514 = vunpack.c.l.b16 %v440
      %v515 = vunpack.c.l.b16 %v441
      %v516 = vunpack.c.l.b16 %v442
      %v517 = vunpack.c.l.b16 %v443
      %v518 = vunpack.c.l.b16 %v444
      %v519 = vunpack.c.l.b16 %v445
      %v520 = vunpack.c.l.b16 %v446
      %v521 = vunpack.c.l.b16 %v447
      %v522 = vunpack.c.l.b16 %v448
      %v523 = vunpack.c.l.b16 %v449
      %v524 = vunpack.c.l.b16 %v450
      %v525 = vunpack.c.l.b16 %v451
      %v526 = vunpack.c.l.b16 %v452
      %v527 = vunpack.c.l.b16 %v453
      %v528 = vunpack.c.l.b16 %v454
      %v529 = vunpack.c.l.b16 %v455
      %v530 = vunpack.c.l.b16 %v456
      %v531 = vunpack.c.l.b16 %v457
      %v532 = vpack.c.b16 %v496, %v495
      %v533 = vpack.c.b16 %v498, %v497
      %v534 = vpack.c.b16 %v500, %v499
      %v535 = vpack.c.b16 %v502, %v501
      %v536 = vpack.c.b16 %v504, %v503
      %v537 = vpack.c.b16 %v506, %v505
      %v538 = vpack.c.b16 %v508, %v507
      %v539 = vpack.c.b16 %v510, %v509
      %v540 = vpack.c.b16 %v512, %v511
      %v541 = vpack.c.b16 %v514, %v513
      %v542 = vpack.c.b16 %v516, %v515
      %v543 = vpack.c.b16 %v518, %v517
      %v544 = vpack.c.b16 %v520, %v519
      %v545 = vpack.c.b16 %v522, %v521
      %v546 = vpack.c.b16 %v524, %v523
      %v547 = vpack.c.b16 %v526, %v525
      %v548 = vpack.c.b16 %v528, %v527
      %v549 = vpack.c.b16 %v530, %v529
      %v550 = vpack.c.b16 %v531, %v531
      %vm551 = vsmask.f32 7424
      %v553 = vshrl.u32 %v532, 16
      %v555 = vshll.u32 %v532, 16
      %v557 = vrot.slane %v555, 1
      %v558 = vor.u32 %v553, %v557
      %v560 = vshll.u32 %v533, 16
      %v562 = vrot.slane %v560, 1
      %v563 = vsel %vm551, %v558, %v562
      %v564 = vshrl.u32 %v533, 16
      %v566 = vor.u32 %v564, %v562
      %v568 = vshll.u32 %v534, 16
      %v570 = vrot.slane %v568, 1
      %v571 = vsel %vm551, %v566, %v570
      %v572 = vshrl.u32 %v534, 16
      %v574 = vor.u32 %v572, %v570
      %v576 = vshll.u32 %v535, 16
      %v578 = vrot.slane %v576, 1
      %v579 = vsel %vm551, %v574, %v578
      %v580 = vshrl.u32 %v535, 16
      %v582 = vor.u32 %v580, %v578
      %v584 = vshll.u32 %v536, 16
      %v586 = vrot.slane %v584, 1
      %v587 = vsel %vm551, %v582, %v586
      %v588 = vshrl.u32 %v536, 16
      %v590 = vor.u32 %v588, %v586
      %v592 = vshll.u32 %v537, 16
      %v594 = vrot.slane %v592, 1
      %v595 = vsel %vm551, %v590, %v594
      %v596 = vshrl.u32 %v537, 16
      %v598 = vor.u32 %v596, %v594
      %v600 = vshll.u32 %v538, 16
      %v602 = vrot.slane %v600, 1
      %v603 = vsel %vm551, %v598, %v602
      %v604 = vshrl.u32 %v538, 16
      %v606 = vor.u32 %v604, %v602
      %v608 = vshll.u32 %v539, 16
      %v610 = vrot.slane %v608, 1
      %v611 = vsel %vm551, %v606, %v610
      %v612 = vshrl.u32 %v539, 16
      %v614 = vor.u32 %v612, %v610
      %v616 = vshll.u32 %v540, 16
      %v618 = vrot.slane %v616, 1
      %v619 = vsel %vm551, %v614, %v618
      %v620 = vshrl.u32 %v540, 16
      %v622 = vor.u32 %v620, %v618
      %v624 = vshll.u32 %v541, 16
      %v626 = vrot.slane %v624, 1
      %v627 = vsel %vm551, %v622, %v626
      %v628 = vshrl.u32 %v541, 16
      %v630 = vor.u32 %v628, %v626
      %v632 = vshll.u32 %v542, 16
      %v634 = vrot.slane %v632, 1
      %v635 = vsel %vm551, %v630, %v634
      %v636 = vshrl.u32 %v542, 16
      %v638 = vor.u32 %v636, %v634
      %v640 = vshll.u32 %v543, 16
      %v642 = vrot.slane %v640, 1
      %v643 = vsel %vm551, %v638, %v642
      %v644 = vshrl.u32 %v543, 16
      %v646 = vor.u32 %v644, %v642
      %v648 = vshll.u32 %v544, 16
      %v650 = vrot.slane %v648, 1
      %v651 = vsel %vm551, %v646, %v650
      %v652 = vshrl.u32 %v544, 16
      %v654 = vor.u32 %v652, %v650
      %v656 = vshll.u32 %v545, 16
      %v658 = vrot.slane %v656, 1
      %v659 = vsel %vm551, %v654, %v658
      %v660 = vshrl.u32 %v545, 16
      %v662 = vor.u32 %v660, %v658
      %v664 = vshll.u32 %v546, 16
      %v666 = vrot.slane %v664, 1
      %v667 = vsel %vm551, %v662, %v666
      %v668 = vshrl.u32 %v546, 16
      %v670 = vor.u32 %v668, %v666
      %v672 = vshll.u32 %v547, 16
      %v674 = vrot.slane %v672, 1
      %v675 = vsel %vm551, %v670, %v674
      %v676 = vshrl.u32 %v547, 16
      %v678 = vor.u32 %v676, %v674
      %v680 = vshll.u32 %v548, 16
      %v682 = vrot.slane %v680, 1
      %v683 = vsel %vm551, %v678, %v682
      %v684 = vshrl.u32 %v548, 16
      %v686 = vor.u32 %v684, %v682
      %v688 = vshll.u32 %v549, 16
      %v690 = vrot.slane %v688, 1
      %v691 = vsel %vm551, %v686, %v690
      %v692 = vshrl.u32 %v549, 16
      %v694 = vor.u32 %v692, %v690
      %v696 = vshll.u32 %v550, 16
      %v698 = vrot.slane %v696, 1
      %v699 = vsel %vm551, %v694, %v698
      %718 = vst [vmem:[#allocation2 + $0x8] sm:$0xff] %v563
      %719 = vst [vmem:[#allocation2 + $0x20] sm:$0xff] %v571
      %720 = vst [vmem:[#allocation2 + $0x38] sm:$0xff] %v579
      %721 = vst [vmem:[#allocation2 + $0x50] sm:$0xff] %v587
      %722 = vst [vmem:[#allocation2 + $0x68] sm:$0xff] %v595
      %723 = vst [vmem:[#allocation2 + $0x80] sm:$0xff] %v603
      %724 = vst [vmem:[#allocation2 + $0x98] sm:$0xff] %v611
      %725 = vst [vmem:[#allocation2 + $0xb0] sm:$0xff] %v619
      %726 = vst [vmem:[#allocation2 + $0xc8] sm:$0xff] %v627
      %727 = vst [vmem:[#allocation2 + $0xe0] sm:$0xff] %v635
      %728 = vst [vmem:[#allocation2 + $0xf8] sm:$0xff] %v643
      %729 = vst [vmem:[#allocation2 + $0x110] sm:$0xff] %v651
      %730 = vst [vmem:[#allocation2 + $0x128] sm:$0xff] %v659
      %731 = vst [vmem:[#allocation2 + $0x140] sm:$0xff] %v667
      %732 = vst [vmem:[#allocation2 + $0x158] sm:$0xff] %v675
      %733 = vst [vmem:[#allocation2 + $0x170] sm:$0xff] %v683
      %734 = vst [vmem:[#allocation2 + $0x188] sm:$0xff] %v691
      %735 = vst [vmem:[#allocation2 + $0x1a0] sm:$0xff] %v699
      %v736 = vld [vmem:[%s206] sm:$0xe]
      %v737 = vld [vmem:[%s206 + $0x4] sm:$0xf]
      %v738 = vld [vmem:[%s206 + $0x8] sm:$0xf]
      %v739 = vld [vmem:[%s206 + $0xc] sm:$0xf]
      %v740 = vld [vmem:[%s206 + $0x10] sm:$0xf]
      %v741 = vld [vmem:[%s206 + $0x14] sm:$0xf]
      %v742 = vld [vmem:[%s206 + $0x18] sm:$0xf]
      %v743 = vld [vmem:[%s206 + $0x1c] sm:$0xf]
      %v744 = vld [vmem:[%s206 + $0x20] sm:$0xf]
      %v745 = vld [vmem:[%s206 + $0x24] sm:$0xf]
      %v746 = vld [vmem:[%s206 + $0x28] sm:$0xf]
      %v747 = vld [vmem:[%s206 + $0x2c] sm:$0xf]
      %v748 = vld [vmem:[%s206 + $0x30] sm:$0xf]
      %v749 = vld [vmem:[%s206 + $0x34] sm:$0xf]
      %v750 = vld [vmem:[%s206 + $0x38] sm:$0xf]
      %v751 = vld [vmem:[%s206 + $0x3c] sm:$0xf]
      %v752 = vld [vmem:[%s206 + $0x40] sm:$0xf]
      %v753 = vld [vmem:[%s206 + $0x44] sm:$0xf]
      %v754 = vld [vmem:[%s206 + $0x48] sm:$0xf]
      %v755 = vld [vmem:[%s206 + $0x4c] sm:$0xf]
      %v756 = vld [vmem:[%s206 + $0x50] sm:$0xf]
      %v757 = vld [vmem:[%s206 + $0x54] sm:$0xf]
      %v758 = vld [vmem:[%s206 + $0x58] sm:$0xf]
      %v759 = vld [vmem:[%s206 + $0x5c] sm:$0xf]
      %v760 = vld [vmem:[%s206 + $0x60] sm:$0xf]
      %v761 = vld [vmem:[%s206 + $0x64] sm:$0xf]
      %v762 = vld [vmem:[%s206 + $0x68] sm:$0xf]
      %v763 = vld [vmem:[%s206 + $0x6c] sm:$0xf]
      %v764 = vld [vmem:[%s206 + $0x70] sm:$0xf]
      %v765 = vld [vmem:[%s206 + $0x74] sm:$0xf]
      %v766 = vld [vmem:[%s206 + $0x78] sm:$0xf]
      %v767 = vld [vmem:[%s206 + $0x7c] sm:$0xf]
      %v768 = vld [vmem:[%s206 + $0x80] sm:$0xf]
      %v769 = vld [vmem:[%s206 + $0x84] sm:$0xf]
      %v770 = vld [vmem:[%s206 + $0x88] sm:$0xf]
      %v771 = vld [vmem:[%s206 + $0x8c] sm:$0xf]
      %v772 = vld [vmem:[%s206 + $0x90] sm:$0x1]
      %v810 = vunpack.c.l.b16 %v736
      %v811 = vunpack.c.l.b16 %v737
      %v812 = vunpack.c.l.b16 %v738
      %v813 = vunpack.c.l.b16 %v739
      %v814 = vunpack.c.l.b16 %v740
      %v815 = vunpack.c.l.b16 %v741
      %v816 = vunpack.c.l.b16 %v742
      %v817 = vunpack.c.l.b16 %v743
      %v818 = vunpack.c.l.b16 %v744
      %v819 = vunpack.c.l.b16 %v745
      %v820 = vunpack.c.l.b16 %v746
      %v821 = vunpack.c.l.b16 %v747
      %v822 = vunpack.c.l.b16 %v748
      %v823 = vunpack.c.l.b16 %v749
      %v824 = vunpack.c.l.b16 %v750
      %v825 = vunpack.c.l.b16 %v751
      %v826 = vunpack.c.l.b16 %v752
      %v827 = vunpack.c.l.b16 %v753
      %v828 = vunpack.c.l.b16 %v754
      %v829 = vunpack.c.l.b16 %v755
      %v830 = vunpack.c.l.b16 %v756
      %v831 = vunpack.c.l.b16 %v757
      %v832 = vunpack.c.l.b16 %v758
      %v833 = vunpack.c.l.b16 %v759
      %v834 = vunpack.c.l.b16 %v760
      %v835 = vunpack.c.l.b16 %v761
      %v836 = vunpack.c.l.b16 %v762
      %v837 = vunpack.c.l.b16 %v763
      %v838 = vunpack.c.l.b16 %v764
      %v839 = vunpack.c.l.b16 %v765
      %v840 = vunpack.c.l.b16 %v766
      %v841 = vunpack.c.l.b16 %v767
      %v842 = vunpack.c.l.b16 %v768
      %v843 = vunpack.c.l.b16 %v769
      %v844 = vunpack.c.l.b16 %v770
      %v845 = vunpack.c.l.b16 %v771
      %v846 = vunpack.c.l.b16 %v772
      %v847 = vpack.c.b16 %v811, %v810
      %v848 = vpack.c.b16 %v813, %v812
      %v849 = vpack.c.b16 %v815, %v814
      %v850 = vpack.c.b16 %v817, %v816
      %v851 = vpack.c.b16 %v819, %v818
      %v852 = vpack.c.b16 %v821, %v820
      %v853 = vpack.c.b16 %v823, %v822
      %v854 = vpack.c.b16 %v825, %v824
      %v855 = vpack.c.b16 %v827, %v826
      %v856 = vpack.c.b16 %v829, %v828
      %v857 = vpack.c.b16 %v831, %v830
      %v858 = vpack.c.b16 %v833, %v832
      %v859 = vpack.c.b16 %v835, %v834
      %v860 = vpack.c.b16 %v837, %v836
      %v861 = vpack.c.b16 %v839, %v838
      %v862 = vpack.c.b16 %v841, %v840
      %v863 = vpack.c.b16 %v843, %v842
      %v864 = vpack.c.b16 %v845, %v844
      %v865 = vpack.c.b16 %v846, %v846
      %vm866 = vcmask 1046528
      %v867 = vrot.slane %v847, 1
      %v868 = vrot.slane %v848, 1
      %v869 = vsel %vm866, %v867, %v868
      %v870 = vrot.slane %v849, 1
      %v871 = vsel %vm866, %v868, %v870
      %v872 = vrot.slane %v850, 1
      %v873 = vsel %vm866, %v870, %v872
      %v874 = vrot.slane %v851, 1
      %v875 = vsel %vm866, %v872, %v874
      %v876 = vrot.slane %v852, 1
      %v877 = vsel %vm866, %v874, %v876
      %v878 = vrot.slane %v853, 1
      %v879 = vsel %vm866, %v876, %v878
      %v880 = vrot.slane %v854, 1
      %v881 = vsel %vm866, %v878, %v880
      %v882 = vrot.slane %v855, 1
      %v883 = vsel %vm866, %v880, %v882
      %v884 = vrot.slane %v856, 1
      %v885 = vsel %vm866, %v882, %v884
      %v886 = vrot.slane %v857, 1
      %v887 = vsel %vm866, %v884, %v886
      %v888 = vrot.slane %v858, 1
      %v889 = vsel %vm866, %v886, %v888
      %v890 = vrot.slane %v859, 1
      %v891 = vsel %vm866, %v888, %v890
      %v892 = vrot.slane %v860, 1
      %v893 = vsel %vm866, %v890, %v892
      %v894 = vrot.slane %v861, 1
      %v895 = vsel %vm866, %v892, %v894
      %v896 = vrot.slane %v862, 1
      %v897 = vsel %vm866, %v894, %v896
      %v898 = vrot.slane %v863, 1
      %v899 = vsel %vm866, %v896, %v898
      %v900 = vrot.slane %v864, 1
      %v901 = vsel %vm866, %v898, %v900
      %v902 = vrot.slane %v865, 1
      %v903 = vsel %vm866, %v900, %v902
      %922 = vst [vmem:[#allocation2 + $0x10] sm:$0xff] %v869
      %923 = vst [vmem:[#allocation2 + $0x28] sm:$0xff] %v871
      %924 = vst [vmem:[#allocation2 + $0x40] sm:$0xff] %v873
      %925 = vst [vmem:[#allocation2 + $0x58] sm:$0xff] %v875
      %926 = vst [vmem:[#allocation2 + $0x70] sm:$0xff] %v877
      %927 = vst [vmem:[#allocation2 + $0x88] sm:$0xff] %v879
      %928 = vst [vmem:[#allocation2 + $0xa0] sm:$0xff] %v881
      %929 = vst [vmem:[#allocation2 + $0xb8] sm:$0xff] %v883
      %930 = vst [vmem:[#allocation2 + $0xd0] sm:$0xff] %v885
      %931 = vst [vmem:[#allocation2 + $0xe8] sm:$0xff] %v887
      %932 = vst [vmem:[#allocation2 + $0x100] sm:$0xff] %v889
      %933 = vst [vmem:[#allocation2 + $0x118] sm:$0xff] %v891
      %934 = vst [vmem:[#allocation2 + $0x130] sm:$0xff] %v893
      %935 = vst [vmem:[#allocation2 + $0x148] sm:$0xff] %v895
      %936 = vst [vmem:[#allocation2 + $0x160] sm:$0xff] %v897
      %937 = vst [vmem:[#allocation2 + $0x178] sm:$0xff] %v899
      %938 = vst [vmem:[#allocation2 + $0x190] sm:$0xff] %v901
      %939 = vst [vmem:[#allocation2 + $0x1a8] sm:$0xff] %v903
      %v940 = vld [vmem:[#allocation3] sm:$0xff]
      %v941 = vld [vmem:[#allocation3 + $0x8] sm:$0xff]
      %v942 = vld [vmem:[#allocation3 + $0x10] sm:$0xff]
      %v943 = vld [vmem:[#allocation3 + $0x18] sm:$0xff]
      %v944 = vld [vmem:[#allocation3 + $0x20] sm:$0xff]
      %v945 = vld [vmem:[#allocation3 + $0x28] sm:$0xff]
      %v946 = vld [vmem:[#allocation3 + $0x30] sm:$0xff]
      %v947 = vld [vmem:[#allocation3 + $0x38] sm:$0xff]
      %v948 = vld [vmem:[#allocation3 + $0x40] sm:$0xff]
      %v949 = vld [vmem:[#allocation3 + $0x48] sm:$0xff]
      %v950 = vld [vmem:[#allocation3 + $0x50] sm:$0xff]
      %v951 = vld [vmem:[#allocation3 + $0x58] sm:$0xff]
      %v952 = vld [vmem:[#allocation3 + $0x60] sm:$0xff]
      %v953 = vld [vmem:[#allocation3 + $0x68] sm:$0xff]
      %v954 = vld [vmem:[#allocation3 + $0x70] sm:$0xff]
      %v955 = vld [vmem:[#allocation3 + $0x78] sm:$0xff]
      %v956 = vld [vmem:[#allocation3 + $0x80] sm:$0xff]
      %v957 = vld [vmem:[#allocation3 + $0x88] sm:$0xff]
      %v958 = vld [vmem:[#allocation3 + $0x90] sm:$0xff]
      %v959 = vld [vmem:[#allocation3 + $0x98] sm:$0xff]
      %v960 = vld [vmem:[#allocation3 + $0xa0] sm:$0xff]
      %v961 = vld [vmem:[#allocation3 + $0xa8] sm:$0xff]
      %v962 = vld [vmem:[#allocation3 + $0xb0] sm:$0xff]
      %v963 = vld [vmem:[#allocation3 + $0xb8] sm:$0xff]
      %v964 = vld [vmem:[#allocation3 + $0xc0] sm:$0xff]
      %v965 = vld [vmem:[#allocation3 + $0xc8] sm:$0xff]
      %v966 = vld [vmem:[#allocation3 + $0xd0] sm:$0xff]
      %v967 = vld [vmem:[#allocation3 + $0xd8] sm:$0xff]
      %v968 = vld [vmem:[#allocation3 + $0xe0] sm:$0xff]
      %v969 = vld [vmem:[#allocation3 + $0xe8] sm:$0xff]
      %v970 = vld [vmem:[#allocation3 + $0xf0] sm:$0xff]
      %v971 = vld [vmem:[#allocation3 + $0xf8] sm:$0xff]
      %v972 = vld [vmem:[#allocation3 + $0x100] sm:$0xff]
      %v973 = vld [vmem:[#allocation3 + $0x108] sm:$0xff]
      %v974 = vld [vmem:[#allocation3 + $0x110] sm:$0xff]
      %v975 = vld [vmem:[#allocation3 + $0x118] sm:$0xff]
      %v976 = vld [vmem:[#allocation2] sm:$0xff]
      %v977 = vld [vmem:[#allocation2 + $0x8] sm:$0xff]
      %v978 = vld [vmem:[#allocation2 + $0x10] sm:$0xff]
      %v979 = vld [vmem:[#allocation2 + $0x18] sm:$0xff]
      %v980 = vld [vmem:[#allocation2 + $0x20] sm:$0xff]
      %v981 = vld [vmem:[#allocation2 + $0x28] sm:$0xff]
      %v982 = vld [vmem:[#allocation2 + $0x30] sm:$0xff]
      %v983 = vld [vmem:[#allocation2 + $0x38] sm:$0xff]
      %v984 = vld [vmem:[#allocation2 + $0x40] sm:$0xff]
      %v985 = vld [vmem:[#allocation2 + $0x48] sm:$0xff]
      %v986 = vld [vmem:[#allocation2 + $0x50] sm:$0xff]
      %v987 = vld [vmem:[#allocation2 + $0x58] sm:$0xff]
      %v988 = vld [vmem:[#allocation2 + $0x60] sm:$0xff]
      %v989 = vld [vmem:[#allocation2 + $0x68] sm:$0xff]
      %v990 = vld [vmem:[#allocation2 + $0x70] sm:$0xff]
      %v991 = vld [vmem:[#allocation2 + $0x78] sm:$0xff]
      %v992 = vld [vmem:[#allocation2 + $0x80] sm:$0xff]
      %v993 = vld [vmem:[#allocation2 + $0x88] sm:$0xff]
      %v994 = vld [vmem:[#allocation2 + $0x90] sm:$0xff]
      %v995 = vld [vmem:[#allocation2 + $0x98] sm:$0xff]
      %v996 = vld [vmem:[#allocation2 + $0xa0] sm:$0xff]
      %v997 = vld [vmem:[#allocation2 + $0xa8] sm:$0xff]
      %v998 = vld [vmem:[#allocation2 + $0xb0] sm:$0xff]
      %v999 = vld [vmem:[#allocation2 + $0xb8] sm:$0xff]
      %v1000 = vld [vmem:[#allocation2 + $0xc0] sm:$0xff]
      %v1001 = vld [vmem:[#allocation2 + $0xc8] sm:$0xff]
      %v1002 = vld [vmem:[#allocation2 + $0xd0] sm:$0xff]
      %v1003 = vld [vmem:[#allocation2 + $0xd8] sm:$0xff]
      %v1004 = vld [vmem:[#allocation2 + $0xe0] sm:$0xff]
      %v1005 = vld [vmem:[#allocation2 + $0xe8] sm:$0xff]
      %v1006 = vld [vmem:[#allocation2 + $0xf0] sm:$0xff]
      %v1007 = vld [vmem:[#allocation2 + $0xf8] sm:$0xff]
      %v1008 = vld [vmem:[#allocation2 + $0x100] sm:$0xff]
      %v1009 = vld [vmem:[#allocation2 + $0x108] sm:$0xff]
      %v1010 = vld [vmem:[#allocation2 + $0x110] sm:$0xff]
      %v1011 = vld [vmem:[#allocation2 + $0x118] sm:$0xff]
      %v1012 = vld [vmem:[#allocation2 + $0x120] sm:$0xff]
      %v1013 = vld [vmem:[#allocation2 + $0x128] sm:$0xff]
      %v1014 = vld [vmem:[#allocation2 + $0x130] sm:$0xff]
      %v1015 = vld [vmem:[#allocation2 + $0x138] sm:$0xff]
      %v1016 = vld [vmem:[#allocation2 + $0x140] sm:$0xff]
      %v1017 = vld [vmem:[#allocation2 + $0x148] sm:$0xff]
      %v1018 = vld [vmem:[#allocation2 + $0x150] sm:$0xff]
      %v1019 = vld [vmem:[#allocation2 + $0x158] sm:$0xff]
      %v1020 = vld [vmem:[#allocation2 + $0x160] sm:$0xff]
      %v1021 = vld [vmem:[#allocation2 + $0x168] sm:$0xff]
      %v1022 = vld [vmem:[#allocation2 + $0x170] sm:$0xff]
      %v1023 = vld [vmem:[#allocation2 + $0x178] sm:$0xff]
      %v1024 = vld [vmem:[#allocation2 + $0x180] sm:$0xff]
      %v1025 = vld [vmem:[#allocation2 + $0x188] sm:$0xff]
      %v1026 = vld [vmem:[#allocation2 + $0x190] sm:$0xff]
      %v1027 = vld [vmem:[#allocation2 + $0x198] sm:$0xff]
      %v1028 = vld [vmem:[#allocation2 + $0x1a0] sm:$0xff]
      %v1029 = vld [vmem:[#allocation2 + $0x1a8] sm:$0xff]
      %v1030 = vld [vmem:[%s1] sm:$0xf]
      %v1031 = vld [vmem:[%s1 + $0x4] sm:$0xf]
      %v1032 = vld [vmem:[%s1 + $0x8] sm:$0xf]
      %v1033 = vld [vmem:[%s1 + $0xc] sm:$0xf]
      %v1034 = vld [vmem:[%s1 + $0x10] sm:$0xf]
      %v1035 = vld [vmem:[%s1 + $0x14] sm:$0xf]
      %v1036 = vld [vmem:[%s1 + $0x18] sm:$0xf]
      %v1037 = vld [vmem:[%s1 + $0x1c] sm:$0xf]
      %v1038 = vld [vmem:[%s1 + $0x20] sm:$0xf]
      %v1039 = vld [vmem:[%s1 + $0x24] sm:$0xf]
      %v1040 = vld [vmem:[%s1 + $0x28] sm:$0xf]
      %v1041 = vld [vmem:[%s1 + $0x2c] sm:$0xf]
      %v1042 = vld [vmem:[%s1 + $0x30] sm:$0xf]
      %v1043 = vld [vmem:[%s1 + $0x34] sm:$0xf]
      %v1044 = vld [vmem:[%s1 + $0x38] sm:$0xf]
      %v1045 = vld [vmem:[%s1 + $0x3c] sm:$0xf]
      %v1046 = vld [vmem:[%s1 + $0x40] sm:$0xf]
      %v1047 = vld [vmem:[%s1 + $0x44] sm:$0xf]
      %v1048 = vld [vmem:[%s1 + $0x48] sm:$0xf]
      %v1049 = vld [vmem:[%s1 + $0x4c] sm:$0xf]
      %v1050 = vld [vmem:[%s1 + $0x50] sm:$0xf]
      %v1051 = vld [vmem:[%s1 + $0x54] sm:$0xf]
      %v1052 = vld [vmem:[%s1 + $0x58] sm:$0xf]
      %v1053 = vld [vmem:[%s1 + $0x5c] sm:$0xf]
      %v1054 = vld [vmem:[%s1 + $0x60] sm:$0xf]
      %v1055 = vld [vmem:[%s1 + $0x64] sm:$0xf]
      %v1056 = vld [vmem:[%s1 + $0x68] sm:$0xf]
      %v1057 = vld [vmem:[%s1 + $0x6c] sm:$0xf]
      %v1058 = vld [vmem:[%s1 + $0x70] sm:$0xf]
      %v1059 = vld [vmem:[%s1 + $0x74] sm:$0xf]
      %v1060 = vld [vmem:[%s1 + $0x78] sm:$0xf]
      %v1061 = vld [vmem:[%s1 + $0x7c] sm:$0xf]
      %v1062 = vld [vmem:[%s1 + $0x80] sm:$0xf]
      %v1063 = vld [vmem:[%s1 + $0x84] sm:$0xf]
      %v1064 = vld [vmem:[%s1 + $0x88] sm:$0xf]
      %v1065 = vld [vmem:[%s1 + $0x8c] sm:$0xf]
      %v1066 = vld [vmem:[%s1 + $0x90] sm:$0xf]
      %v1067 = vld [vmem:[%s1 + $0x94] sm:$0xf]
      %v1068 = vld [vmem:[%s1 + $0x98] sm:$0xf]
      %v1069 = vld [vmem:[%s1 + $0x9c] sm:$0xf]
      %v1070 = vld [vmem:[%s1 + $0xa0] sm:$0xf]
      %v1071 = vld [vmem:[%s1 + $0xa4] sm:$0xf]
      %v1072 = vld [vmem:[%s1 + $0xa8] sm:$0xf]
      %v1073 = vld [vmem:[%s1 + $0xac] sm:$0xf]
      %v1074 = vld [vmem:[%s1 + $0xb0] sm:$0xf]
      %v1075 = vld [vmem:[%s1 + $0xb4] sm:$0xf]
      %v1076 = vld [vmem:[%s1 + $0xb8] sm:$0xf]
      %v1077 = vld [vmem:[%s1 + $0xbc] sm:$0xf]
      %v1126 = vunpack.c.l.b16 %v1030
      %v1127 = vunpack.c.l.b16 %v1031
      %v1128 = vunpack.c.l.b16 %v1032
      %v1129 = vunpack.c.l.b16 %v1033
      %v1130 = vunpack.c.l.b16 %v1034
      %v1131 = vunpack.c.l.b16 %v1035
      %v1132 = vunpack.c.l.b16 %v1036
      %v1133 = vunpack.c.l.b16 %v1037
      %v1134 = vunpack.c.l.b16 %v1038
      %v1135 = vunpack.c.l.b16 %v1039
      %v1136 = vunpack.c.l.b16 %v1040
      %v1137 = vunpack.c.l.b16 %v1041
      %v1138 = vunpack.c.l.b16 %v1042
      %v1139 = vunpack.c.l.b16 %v1043
      %v1140 = vunpack.c.l.b16 %v1044
      %v1141 = vunpack.c.l.b16 %v1045
      %v1142 = vunpack.c.l.b16 %v1046
      %v1143 = vunpack.c.l.b16 %v1047
      %v1144 = vunpack.c.l.b16 %v1048
      %v1145 = vunpack.c.l.b16 %v1049
      %v1146 = vunpack.c.l.b16 %v1050
      %v1147 = vunpack.c.l.b16 %v1051
      %v1148 = vunpack.c.l.b16 %v1052
      %v1149 = vunpack.c.l.b16 %v1053
      %v1150 = vunpack.c.l.b16 %v1054
      %v1151 = vunpack.c.l.b16 %v1055
      %v1152 = vunpack.c.l.b16 %v1056
      %v1153 = vunpack.c.l.b16 %v1057
      %v1154 = vunpack.c.l.b16 %v1058
      %v1155 = vunpack.c.l.b16 %v1059
      %v1156 = vunpack.c.l.b16 %v1060
      %v1157 = vunpack.c.l.b16 %v1061
      %v1158 = vunpack.c.l.b16 %v1062
      %v1159 = vunpack.c.l.b16 %v1063
      %v1160 = vunpack.c.l.b16 %v1064
      %v1161 = vunpack.c.l.b16 %v1065
      %v1162 = vunpack.c.l.b16 %v1066
      %v1163 = vunpack.c.l.b16 %v1067
      %v1164 = vunpack.c.l.b16 %v1068
      %v1165 = vunpack.c.l.b16 %v1069
      %v1166 = vunpack.c.l.b16 %v1070
      %v1167 = vunpack.c.l.b16 %v1071
      %v1168 = vunpack.c.l.b16 %v1072
      %v1169 = vunpack.c.l.b16 %v1073
      %v1170 = vunpack.c.l.b16 %v1074
      %v1171 = vunpack.c.l.b16 %v1075
      %v1172 = vunpack.c.l.b16 %v1076
      %v1173 = vunpack.c.l.b16 %v1077
      %v1174 = vpack.c.b16 %v1127, %v1126
      %v1175 = vpack.c.b16 %v1129, %v1128
      %v1176 = vpack.c.b16 %v1131, %v1130
      %v1177 = vpack.c.b16 %v1133, %v1132
      %v1178 = vpack.c.b16 %v1135, %v1134
      %v1179 = vpack.c.b16 %v1137, %v1136
      %v1180 = vpack.c.b16 %v1139, %v1138
      %v1181 = vpack.c.b16 %v1141, %v1140
      %v1182 = vpack.c.b16 %v1143, %v1142
      %v1183 = vpack.c.b16 %v1145, %v1144
      %v1184 = vpack.c.b16 %v1147, %v1146
      %v1185 = vpack.c.b16 %v1149, %v1148
      %v1186 = vpack.c.b16 %v1151, %v1150
      %v1187 = vpack.c.b16 %v1153, %v1152
      %v1188 = vpack.c.b16 %v1155, %v1154
      %v1189 = vpack.c.b16 %v1157, %v1156
      %v1190 = vpack.c.b16 %v1159, %v1158
      %v1191 = vpack.c.b16 %v1161, %v1160
      %v1192 = vpack.c.b16 %v1163, %v1162
      %v1193 = vpack.c.b16 %v1165, %v1164
      %v1194 = vpack.c.b16 %v1167, %v1166
      %v1195 = vpack.c.b16 %v1169, %v1168
      %v1196 = vpack.c.b16 %v1171, %v1170
      %v1197 = vpack.c.b16 %v1173, %v1172
      %1222 = vmatprep.subr.bf16.mxu0 0
      %1223 = vmatpush1.bf16.msra.mxu0 %v1174
      %1224 = vmatprep.subr.bf16.mxu0 0
      %1225 = vmatpush1.bf16.msra.mxu0 %v1175
      %1226 = vmatprep.subr.bf16.mxu0 0
      %1227 = vmatpush1.bf16.msra.mxu0 %v1176
      %1228 = vmatprep.subr.bf16.mxu0 0
      %1229 = vmatpush1.bf16.msra.mxu0 %v1177
      %1230 = vmatprep.subr.bf16.mxu0 0
      %1231 = vmatpush1.bf16.msra.mxu0 %v1178
      %1232 = vmatprep.subr.bf16.mxu0 0
      %1233 = vmatpush1.bf16.msra.mxu0 %v1179
      %1234 = vmatprep.subr.bf16.mxu0 0
      %1235 = vmatpush1.bf16.msra.mxu0 %v1180
      %1236 = vmatprep.subr.bf16.mxu0 0
      %1237 = vmatpush1.bf16.msra.mxu0 %v1181
      %1238 = vmatprep.subr.bf16.mxu0 0
      %1239 = vmatpush1.bf16.msra.mxu0 %v1182
      %1240 = vmatprep.subr.bf16.mxu0 0
      %1241 = vmatpush1.bf16.msra.mxu0 %v1183
      %1242 = vmatprep.subr.bf16.mxu0 0
      %1243 = vmatpush1.bf16.msra.mxu0 %v1184
      %1244 = vmatprep.subr.bf16.mxu0 0
      %1245 = vmatpush1.bf16.msra.mxu0 %v1185
      %1246 = vmatprep.subr.bf16.mxu0 0
      %1247 = vmatpush1.bf16.msra.mxu0 %v1186
      %1248 = vmatprep.subr.bf16.mxu0 0
      %1249 = vmatpush1.bf16.msra.mxu0 %v1187
      %1250 = vmatprep.subr.bf16.mxu0 0
      %1251 = vmatpush1.bf16.msra.mxu0 %v1188
      %1252 = vmatprep.subr.bf16.mxu0 0
      %1253 = vmatpush1.bf16.msra.mxu0 %v1189
      %1254 = vmatprep.mubr.bf16.mxu0 %v977
      %1255 = vmatmul.mubr.bf16.gmra.mrb[0].mxu0 %v976
      %v1256 = vpop.f32.mrb[0].mxu0
      %v1257 = vadd.f32 0.0, %v1256
      %v1258 = vpop.f32.mrb[0].mxu0
      %v1259 = vpop.f32.mrb[0].mxu0
      %v1260 = vadd.f32 0.0, %v1259
      %v1261 = vpop.f32.mrb[0].mxu0
      %1262 = vmatprep.mubr.bf16.mxu0 %v980
      %1263 = vmatmul.mubr.bf16.gmra.mrb[0].mxu0 %v979
      %v1264 = vpop.f32.mrb[0].mxu0
      %v1265 = vadd.f32 0.0, %v1264
      %v1266 = vpop.f32.mrb[0].mxu0
      %v1267 = vpop.f32.mrb[0].mxu0
      %v1268 = vadd.f32 0.0, %v1267
      %v1269 = vpop.f32.mrb[0].mxu0
      %1270 = vmatprep.mubr.bf16.mxu0 %v983
      %1271 = vmatmul.mubr.bf16.gmra.mrb[0].mxu0 %v982
      %v1272 = vpop.f32.mrb[0].mxu0
      %v1273 = vadd.f32 0.0, %v1272
      %v1274 = vpop.f32.mrb[0].mxu0
      %v1275 = vpop.f32.mrb[0].mxu0
      %v1276 = vadd.f32 0.0, %v1275
      %v1277 = vpop.f32.mrb[0].mxu0
      %1278 = vmatprep.mubr.bf16.mxu0 %v986
      %1279 = vmatmul.mubr.bf16.gmra.mrb[0].mxu0 %v985
      %v1280 = vpop.f32.mrb[0].mxu0
      %v1281 = vadd.f32 0.0, %v1280
      %v1282 = vpop.f32.mrb[0].mxu0
      %v1283 = vpop.f32.mrb[0].mxu0
      %v1284 = vadd.f32 0.0, %v1283
      %v1285 = vpop.f32.mrb[0].mxu0
      %1286 = vmatprep.mubr.bf16.mxu0 %v989
      %1287 = vmatmul.mubr.bf16.gmra.mrb[0].mxu0 %v988
      %v1288 = vpop.f32.mrb[0].mxu0
      %v1289 = vadd.f32 0.0, %v1288
      %v1290 = vpop.f32.mrb[0].mxu0
      %v1291 = vpop.f32.mrb[0].mxu0
      %v1292 = vadd.f32 0.0, %v1291
      %v1293 = vpop.f32.mrb[0].mxu0
      %1294 = vmatprep.mubr.bf16.mxu0 %v992
      %1295 = vmatmul.mubr.bf16.gmra.mrb[0].mxu0 %v991
      %v1296 = vpop.f32.mrb[0].mxu0
      %v1297 = vadd.f32 0.0, %v1296
      %v1298 = vpop.f32.mrb[0].mxu0
      %v1299 = vpop.f32.mrb[0].mxu0
      %v1300 = vadd.f32 0.0, %v1299
      %v1301 = vpop.f32.mrb[0].mxu0
      %1302 = vmatprep.mubr.bf16.mxu0 %v995
      %1303 = vmatmul.mubr.bf16.gmra.mrb[0].mxu0 %v994
      %v1304 = vpop.f32.mrb[0].mxu0
      %v1305 = vadd.f32 0.0, %v1304
      %v1306 = vpop.f32.mrb[0].mxu0
      %v1307 = vpop.f32.mrb[0].mxu0
      %v1308 = vadd.f32 0.0, %v1307
      %v1309 = vpop.f32.mrb[0].mxu0
      %1310 = vmatprep.mubr.bf16.mxu0 %v998
      %1311 = vmatmul.mubr.bf16.gmra.mrb[0].mxu0 %v997
      %v1312 = vpop.f32.mrb[0].mxu0
      %v1313 = vadd.f32 0.0, %v1312
      %v1314 = vpop.f32.mrb[0].mxu0
      %v1315 = vpop.f32.mrb[0].mxu0
      %v1316 = vadd.f32 0.0, %v1315
      %v1317 = vpop.f32.mrb[0].mxu0
      %1318 = vmatprep.mubr.bf16.mxu0 %v1001
      %1319 = vmatmul.mubr.bf16.gmra.mrb[0].mxu0 %v1000
      %v1320 = vpop.f32.mrb[0].mxu0
      %v1321 = vadd.f32 0.0, %v1320
      %v1322 = vpop.f32.mrb[0].mxu0
      %v1323 = vpop.f32.mrb[0].mxu0
      %v1324 = vadd.f32 0.0, %v1323
      %v1325 = vpop.f32.mrb[0].mxu0
      %1326 = vmatprep.mubr.bf16.mxu0 %v1004
      %1327 = vmatmul.mubr.bf16.gmra.mrb[0].mxu0 %v1003
      %v1328 = vpop.f32.mrb[0].mxu0
      %v1329 = vadd.f32 0.0, %v1328
      %v1330 = vpop.f32.mrb[0].mxu0
      %v1331 = vpop.f32.mrb[0].mxu0
      %v1332 = vadd.f32 0.0, %v1331
      %v1333 = vpop.f32.mrb[0].mxu0
      %1334 = vmatprep.mubr.bf16.mxu0 %v1007
      %1335 = vmatmul.mubr.bf16.gmra.mrb[0].mxu0 %v1006
      %v1336 = vpop.f32.mrb[0].mxu0
      %v1337 = vadd.f32 0.0, %v1336
      %v1338 = vpop.f32.mrb[0].mxu0
      %v1339 = vpop.f32.mrb[0].mxu0
      %v1340 = vadd.f32 0.0, %v1339
      %v1341 = vpop.f32.mrb[0].mxu0
      %1342 = vmatprep.mubr.bf16.mxu0 %v1010
      %1343 = vmatmul.mubr.bf16.gmra.mrb[0].mxu0 %v1009
      %v1344 = vpop.f32.mrb[0].mxu0
      %v1345 = vadd.f32 0.0, %v1344
      %v1346 = vpop.f32.mrb[0].mxu0
      %v1347 = vpop.f32.mrb[0].mxu0
      %v1348 = vadd.f32 0.0, %v1347
      %v1349 = vpop.f32.mrb[0].mxu0
      %1350 = vmatprep.mubr.bf16.mxu0 %v1013
      %1351 = vmatmul.mubr.bf16.gmra.mrb[0].mxu0 %v1012
      %v1352 = vpop.f32.mrb[0].mxu0
      %v1353 = vadd.f32 0.0, %v1352
      %v1354 = vpop.f32.mrb[0].mxu0
      %v1355 = vpop.f32.mrb[0].mxu0
      %v1356 = vadd.f32 0.0, %v1355
      %v1357 = vpop.f32.mrb[0].mxu0
      %1358 = vmatprep.mubr.bf16.mxu0 %v1016
      %1359 = vmatmul.mubr.bf16.gmra.mrb[0].mxu0 %v1015
      %v1360 = vpop.f32.mrb[0].mxu0
      %v1361 = vadd.f32 0.0, %v1360
      %v1362 = vpop.f32.mrb[0].mxu0
      %v1363 = vpop.f32.mrb[0].mxu0
      %v1364 = vadd.f32 0.0, %v1363
      %v1365 = vpop.f32.mrb[0].mxu0
      %1366 = vmatprep.mubr.bf16.mxu0 %v1019
      %1367 = vmatmul.mubr.bf16.gmra.mrb[0].mxu0 %v1018
      %v1368 = vpop.f32.mrb[0].mxu0
      %v1369 = vadd.f32 0.0, %v1368
      %v1370 = vpop.f32.mrb[0].mxu0
      %v1371 = vpop.f32.mrb[0].mxu0
      %v1372 = vadd.f32 0.0, %v1371
      %v1373 = vpop.f32.mrb[0].mxu0
      %1374 = vmatprep.mubr.bf16.mxu0 %v1022
      %1375 = vmatmul.mubr.bf16.gmra.mrb[0].mxu0 %v1021
      %v1376 = vpop.f32.mrb[0].mxu0
      %v1377 = vadd.f32 0.0, %v1376
      %v1378 = vpop.f32.mrb[0].mxu0
      %v1379 = vpop.f32.mrb[0].mxu0
      %v1380 = vadd.f32 0.0, %v1379
      %v1381 = vpop.f32.mrb[0].mxu0
      %1382 = vmatprep.mubr.bf16.mxu0 %v1025
      %1383 = vmatmul.mubr.bf16.gmra.mrb[0].mxu0 %v1024
      %v1384 = vpop.f32.mrb[0].mxu0
      %v1385 = vadd.f32 0.0, %v1384
      %v1386 = vpop.f32.mrb[0].mxu0
      %v1387 = vpop.f32.mrb[0].mxu0
      %v1388 = vadd.f32 0.0, %v1387
      %v1389 = vpop.f32.mrb[0].mxu0
      %1390 = vmatprep.mubr.bf16.mxu0 %v1028
      %1391 = vmatmul.mubr.bf16.gmra.mrb[0].mxu0 %v1027
      %v1392 = vpop.f32.mrb[0].mxu0
      %v1393 = vadd.f32 0.0, %v1392
      %v1394 = vpop.f32.mrb[0].mxu0
      %v1395 = vpop.f32.mrb[0].mxu0
      %v1396 = vadd.f32 0.0, %v1395
      %v1397 = vpop.f32.mrb[0].mxu0
      %1398 = vdwg.mxu0
      %1399 = vmatprep.subr.bf16.mxu0 0
      %1400 = vmatpush1.bf16.msra.mxu0 %v1190
      %1401 = vmatprep.subr.bf16.mxu0 0
      %1402 = vmatpush1.bf16.msra.mxu0 %v1191
      %1403 = vmatprep.subr.bf16.mxu0 0
      %1404 = vmatpush1.bf16.msra.mxu0 %v1192
      %1405 = vmatprep.subr.bf16.mxu0 0
      %1406 = vmatpush1.bf16.msra.mxu0 %v1193
      %1407 = vmatprep.subr.bf16.mxu0 0
      %1408 = vmatpush1.bf16.msra.mxu0 %v1194
      %1409 = vmatprep.subr.bf16.mxu0 0
      %1410 = vmatpush1.bf16.msra.mxu0 %v1195
      %1411 = vmatprep.subr.bf16.mxu0 0
      %1412 = vmatpush1.bf16.msra.mxu0 %v1196
      %1413 = vmatprep.subr.bf16.mxu0 0
      %1414 = vmatpush1.bf16.msra.mxu0 %v1197
      %1415 = vmatprep.subr.bf16.mxu0 0
      %1416 = vmatpush1.bf16.msra.mxu0 0
      %1417 = vmatprep.subr.bf16.mxu0 0
      %1418 = vmatpush1.bf16.msra.mxu0 0
      %1419 = vmatprep.subr.bf16.mxu0 0
      %1420 = vmatpush1.bf16.msra.mxu0 0
      %1421 = vmatprep.subr.bf16.mxu0 0
      %1422 = vmatpush1.bf16.msra.mxu0 0
      %1423 = vmatprep.subr.bf16.mxu0 0
      %1424 = vmatpush1.bf16.msra.mxu0 0
      %1425 = vmatprep.subr.bf16.mxu0 0
      %1426 = vmatpush1.bf16.msra.mxu0 0
      %1427 = vmatprep.subr.bf16.mxu0 0
      %1428 = vmatpush1.bf16.msra.mxu0 0
      %1429 = vmatprep.subr.bf16.mxu0 0
      %1430 = vmatpush1.bf16.msra.mxu0 0
      %1431 = vmatprep.mubr.bf16.mxu0 0
      %1432 = vmatmul.mubr.bf16.gmra.mrb[0].mxu0 %v978
      %v1433 = vpop.f32.mrb[0].mxu0
      %v1434 = vadd.f32 %v1257, %v1433
      %v1435 = vpop.f32.mrb[0].mxu0
      %v1436 = vpop.f32.mrb[0].mxu0
      %v1437 = vadd.f32 %v1260, %v1436
      %v1438 = vpop.f32.mrb[0].mxu0
      %1439 = vmatprep.mubr.bf16.mxu0 0
      %1440 = vmatmul.mubr.bf16.gmra.mrb[0].mxu0 %v981
      %v1441 = vpop.f32.mrb[0].mxu0
      %v1442 = vadd.f32 %v1265, %v1441
      %v1443 = vpop.f32.mrb[0].mxu0
      %v1444 = vpop.f32.mrb[0].mxu0
      %v1445 = vadd.f32 %v1268, %v1444
      %v1446 = vpop.f32.mrb[0].mxu0
      %1447 = vmatprep.mubr.bf16.mxu0 0
      %1448 = vmatmul.mubr.bf16.gmra.mrb[0].mxu0 %v984
      %v1449 = vpop.f32.mrb[0].mxu0
      %v1450 = vadd.f32 %v1273, %v1449
      %v1451 = vpop.f32.mrb[0].mxu0
      %v1452 = vpop.f32.mrb[0].mxu0
      %v1453 = vadd.f32 %v1276, %v1452
      %v1454 = vpop.f32.mrb[0].mxu0
      %1455 = vmatprep.mubr.bf16.mxu0 0
      %1456 = vmatmul.mubr.bf16.gmra.mrb[0].mxu0 %v987
      %v1457 = vpop.f32.mrb[0].mxu0
      %v1458 = vadd.f32 %v1281, %v1457
      %v1459 = vpop.f32.mrb[0].mxu0
      %v1460 = vpop.f32.mrb[0].mxu0
      %v1461 = vadd.f32 %v1284, %v1460
      %v1462 = vpop.f32.mrb[0].mxu0
      %1463 = vmatprep.mubr.bf16.mxu0 0
      %1464 = vmatmul.mubr.bf16.gmra.mrb[0].mxu0 %v990
      %v1465 = vpop.f32.mrb[0].mxu0
      %v1466 = vadd.f32 %v1289, %v1465
      %v1467 = vpop.f32.mrb[0].mxu0
      %v1468 = vpop.f32.mrb[0].mxu0
      %v1469 = vadd.f32 %v1292, %v1468
      %v1470 = vpop.f32.mrb[0].mxu0
      %1471 = vmatprep.mubr.bf16.mxu0 0
      %1472 = vmatmul.mubr.bf16.gmra.mrb[0].mxu0 %v993
      %v1473 = vpop.f32.mrb[0].mxu0
      %v1474 = vadd.f32 %v1297, %v1473
      %v1475 = vpop.f32.mrb[0].mxu0
      %v1476 = vpop.f32.mrb[0].mxu0
      %v1477 = vadd.f32 %v1300, %v1476
      %v1478 = vpop.f32.mrb[0].mxu0
      %1479 = vmatprep.mubr.bf16.mxu0 0
      %1480 = vmatmul.mubr.bf16.gmra.mrb[0].mxu0 %v996
      %v1481 = vpop.f32.mrb[0].mxu0
      %v1482 = vadd.f32 %v1305, %v1481
      %v1483 = vpop.f32.mrb[0].mxu0
      %v1484 = vpop.f32.mrb[0].mxu0
      %v1485 = vadd.f32 %v1308, %v1484
      %v1486 = vpop.f32.mrb[0].mxu0
      %1487 = vmatprep.mubr.bf16.mxu0 0
      %1488 = vmatmul.mubr.bf16.gmra.mrb[0].mxu0 %v999
      %v1489 = vpop.f32.mrb[0].mxu0
      %v1490 = vadd.f32 %v1313, %v1489
      %v1491 = vpop.f32.mrb[0].mxu0
      %v1492 = vpop.f32.mrb[0].mxu0
      %v1493 = vadd.f32 %v1316, %v1492
      %v1494 = vpop.f32.mrb[0].mxu0
      %1495 = vmatprep.mubr.bf16.mxu0 0
      %1496 = vmatmul.mubr.bf16.gmra.mrb[0].mxu0 %v1002
      %v1497 = vpop.f32.mrb[0].mxu0
      %v1498 = vadd.f32 %v1321, %v1497
      %v1499 = vpop.f32.mrb[0].mxu0
      %v1500 = vpop.f32.mrb[0].mxu0
      %v1501 = vadd.f32 %v1324, %v1500
      %v1502 = vpop.f32.mrb[0].mxu0
      %1503 = vmatprep.mubr.bf16.mxu0 0
      %1504 = vmatmul.mubr.bf16.gmra.mrb[0].mxu0 %v1005
      %v1505 = vpop.f32.mrb[0].mxu0
      %v1506 = vadd.f32 %v1329, %v1505
      %v1507 = vpop.f32.mrb[0].mxu0
      %v1508 = vpop.f32.mrb[0].mxu0
      %v1509 = vadd.f32 %v1332, %v1508
      %v1510 = vpop.f32.mrb[0].mxu0
      %1511 = vmatprep.mubr.bf16.mxu0 0
      %1512 = vmatmul.mubr.bf16.gmra.mrb[0].mxu0 %v1008
      %v1513 = vpop.f32.mrb[0].mxu0
      %v1514 = vadd.f32 %v1337, %v1513
      %v1515 = vpop.f32.mrb[0].mxu0
      %v1516 = vpop.f32.mrb[0].mxu0
      %v1517 = vadd.f32 %v1340, %v1516
      %v1518 = vpop.f32.mrb[0].mxu0
      %1519 = vmatprep.mubr.bf16.mxu0 0
      %1520 = vmatmul.mubr.bf16.gmra.mrb[0].mxu0 %v1011
      %v1521 = vpop.f32.mrb[0].mxu0
      %v1522 = vadd.f32 %v1345, %v1521
      %v1523 = vpop.f32.mrb[0].mxu0
      %v1524 = vpop.f32.mrb[0].mxu0
      %v1525 = vadd.f32 %v1348, %v1524
      %v1526 = vpop.f32.mrb[0].mxu0
      %1527 = vmatprep.mubr.bf16.mxu0 0
      %1528 = vmatmul.mubr.bf16.gmra.mrb[0].mxu0 %v1014
      %v1529 = vpop.f32.mrb[0].mxu0
      %v1530 = vadd.f32 %v1353, %v1529
      %v1531 = vpop.f32.mrb[0].mxu0
      %v1532 = vpop.f32.mrb[0].mxu0
      %v1533 = vadd.f32 %v1356, %v1532
      %v1534 = vpop.f32.mrb[0].mxu0
      %1535 = vmatprep.mubr.bf16.mxu0 0
      %1536 = vmatmul.mubr.bf16.gmra.mrb[0].mxu0 %v1017
      %v1537 = vpop.f32.mrb[0].mxu0
      %v1538 = vadd.f32 %v1361, %v1537
      %v1539 = vpop.f32.mrb[0].mxu0
      %v1540 = vpop.f32.mrb[0].mxu0
      %v1541 = vadd.f32 %v1364, %v1540
      %v1542 = vpop.f32.mrb[0].mxu0
      %1543 = vmatprep.mubr.bf16.mxu0 0
      %1544 = vmatmul.mubr.bf16.gmra.mrb[0].mxu0 %v1020
      %v1545 = vpop.f32.mrb[0].mxu0
      %v1546 = vadd.f32 %v1369, %v1545
      %v1547 = vpop.f32.mrb[0].mxu0
      %v1548 = vpop.f32.mrb[0].mxu0
      %v1549 = vadd.f32 %v1372, %v1548
      %v1550 = vpop.f32.mrb[0].mxu0
      %1551 = vmatprep.mubr.bf16.mxu0 0
      %1552 = vmatmul.mubr.bf16.gmra.mrb[0].mxu0 %v1023
      %v1553 = vpop.f32.mrb[0].mxu0
      %v1554 = vadd.f32 %v1377, %v1553
      %v1555 = vpop.f32.mrb[0].mxu0
      %v1556 = vpop.f32.mrb[0].mxu0
      %v1557 = vadd.f32 %v1380, %v1556
      %v1558 = vpop.f32.mrb[0].mxu0
      %1559 = vmatprep.mubr.bf16.mxu0 0
      %1560 = vmatmul.mubr.bf16.gmra.mrb[0].mxu0 %v1026
      %v1561 = vpop.f32.mrb[0].mxu0
      %v1562 = vadd.f32 %v1385, %v1561
      %v1563 = vpop.f32.mrb[0].mxu0
      %v1564 = vpop.f32.mrb[0].mxu0
      %v1565 = vadd.f32 %v1388, %v1564
      %v1566 = vpop.f32.mrb[0].mxu0
      %1567 = vmatprep.mubr.bf16.mxu0 0
      %1568 = vmatmul.mubr.bf16.gmra.mrb[0].mxu0 %v1029
      %v1569 = vpop.f32.mrb[0].mxu0
      %v1570 = vadd.f32 %v1393, %v1569
      %v1571 = vpop.f32.mrb[0].mxu0
      %v1572 = vpop.f32.mrb[0].mxu0
      %v1573 = vadd.f32 %v1396, %v1572
      %v1574 = vpop.f32.mrb[0].mxu0
      %1575 = vdwg.mxu0
      %v1576 = vadd.f32 %v940, %v1434
      %v1577 = vadd.f32 %v941, %v1437
      %v1578 = vadd.f32 %v942, %v1442
      %v1579 = vadd.f32 %v943, %v1445
      %v1580 = vadd.f32 %v944, %v1450
      %v1581 = vadd.f32 %v945, %v1453
      %v1582 = vadd.f32 %v946, %v1458
      %v1583 = vadd.f32 %v947, %v1461
      %v1584 = vadd.f32 %v948, %v1466
      %v1585 = vadd.f32 %v949, %v1469
      %v1586 = vadd.f32 %v950, %v1474
      %v1587 = vadd.f32 %v951, %v1477
      %v1588 = vadd.f32 %v952, %v1482
      %v1589 = vadd.f32 %v953, %v1485
      %v1590 = vadd.f32 %v954, %v1490
      %v1591 = vadd.f32 %v955, %v1493
      %v1592 = vadd.f32 %v956, %v1498
      %v1593 = vadd.f32 %v957, %v1501
      %v1594 = vadd.f32 %v958, %v1506
      %v1595 = vadd.f32 %v959, %v1509
      %v1596 = vadd.f32 %v960, %v1514
      %v1597 = vadd.f32 %v961, %v1517
      %v1598 = vadd.f32 %v962, %v1522
      %v1599 = vadd.f32 %v963, %v1525
      %v1600 = vadd.f32 %v964, %v1530
      %v1601 = vadd.f32 %v965, %v1533
      %v1602 = vadd.f32 %v966, %v1538
      %v1603 = vadd.f32 %v967, %v1541
      %v1604 = vadd.f32 %v968, %v1546
      %v1605 = vadd.f32 %v969, %v1549
      %v1606 = vadd.f32 %v970, %v1554
      %v1607 = vadd.f32 %v971, %v1557
      %v1608 = vadd.f32 %v972, %v1562
      %v1609 = vadd.f32 %v973, %v1565
      %v1610 = vadd.f32 %v974, %v1570
      %v1611 = vadd.f32 %v975, %v1573
      %1612 = vst [vmem:[#allocation3] sm:$0xff] %v1576
      %1613 = vst [vmem:[#allocation3 + $0x8] sm:$0xff] %v1577
      %1614 = vst [vmem:[#allocation3 + $0x10] sm:$0xff] %v1578
      %1615 = vst [vmem:[#allocation3 + $0x18] sm:$0xff] %v1579
      %1616 = vst [vmem:[#allocation3 + $0x20] sm:$0xff] %v1580
      %1617 = vst [vmem:[#allocation3 + $0x28] sm:$0xff] %v1581
      %1618 = vst [vmem:[#allocation3 + $0x30] sm:$0xff] %v1582
      %1619 = vst [vmem:[#allocation3 + $0x38] sm:$0xff] %v1583
      %1620 = vst [vmem:[#allocation3 + $0x40] sm:$0xff] %v1584
      %1621 = vst [vmem:[#allocation3 + $0x48] sm:$0xff] %v1585
      %1622 = vst [vmem:[#allocation3 + $0x50] sm:$0xff] %v1586
      %1623 = vst [vmem:[#allocation3 + $0x58] sm:$0xff] %v1587
      %1624 = vst [vmem:[#allocation3 + $0x60] sm:$0xff] %v1588
      %1625 = vst [vmem:[#allocation3 + $0x68] sm:$0xff] %v1589
      %1626 = vst [vmem:[#allocation3 + $0x70] sm:$0xff] %v1590
      %1627 = vst [vmem:[#allocation3 + $0x78] sm:$0xff] %v1591
      %1628 = vst [vmem:[#allocation3 + $0x80] sm:$0xff] %v1592
      %1629 = vst [vmem:[#allocation3 + $0x88] sm:$0xff] %v1593
      %1630 = vst [vmem:[#allocation3 + $0x90] sm:$0xff] %v1594
      %1631 = vst [vmem:[#allocation3 + $0x98] sm:$0xff] %v1595
      %1632 = vst [vmem:[#allocation3 + $0xa0] sm:$0xff] %v1596
      %1633 = vst [vmem:[#allocation3 + $0xa8] sm:$0xff] %v1597
      %1634 = vst [vmem:[#allocation3 + $0xb0] sm:$0xff] %v1598
      %1635 = vst [vmem:[#allocation3 + $0xb8] sm:$0xff] %v1599
      %1636 = vst [vmem:[#allocation3 + $0xc0] sm:$0xff] %v1600
      %1637 = vst [vmem:[#allocation3 + $0xc8] sm:$0xff] %v1601
      %1638 = vst [vmem:[#allocation3 + $0xd0] sm:$0xff] %v1602
      %1639 = vst [vmem:[#allocation3 + $0xd8] sm:$0xff] %v1603
      %1640 = vst [vmem:[#allocation3 + $0xe0] sm:$0xff] %v1604
      %1641 = vst [vmem:[#allocation3 + $0xe8] sm:$0xff] %v1605
      %1642 = vst [vmem:[#allocation3 + $0xf0] sm:$0xff] %v1606
      %1643 = vst [vmem:[#allocation3 + $0xf8] sm:$0xff] %v1607
      %1644 = vst [vmem:[#allocation3 + $0x100] sm:$0xff] %v1608
      %1645 = vst [vmem:[#allocation3 + $0x108] sm:$0xff] %v1609
      %1646 = vst [vmem:[#allocation3 + $0x110] sm:$0xff] %v1610
      %1647 = vst [vmem:[#allocation3 + $0x118] sm:$0xff] %v1611
      %v1648 = vld [vmem:[%s206 + $0x8] sm:$0xe]
      %v1649 = vld [vmem:[%s206 + $0xc] sm:$0xf]
      %v1650 = vld [vmem:[%s206 + $0x10] sm:$0xf]
      %v1651 = vld [vmem:[%s206 + $0x14] sm:$0xf]
      %v1652 = vld [vmem:[%s206 + $0x18] sm:$0xf]
      %v1653 = vld [vmem:[%s206 + $0x1c] sm:$0xf]
      %v1654 = vld [vmem:[%s206 + $0x20] sm:$0xf]
      %v1655 = vld [vmem:[%s206 + $0x24] sm:$0xf]
      %v1656 = vld [vmem:[%s206 + $0x28] sm:$0xf]
      %v1657 = vld [vmem:[%s206 + $0x2c] sm:$0xf]
      %v1658 = vld [vmem:[%s206 + $0x30] sm:$0xf]
      %v1659 = vld [vmem:[%s206 + $0x34] sm:$0xf]
      %v1660 = vld [vmem:[%s206 + $0x38] sm:$0xf]
      %v1661 = vld [vmem:[%s206 + $0x3c] sm:$0xf]
      %v1662 = vld [vmem:[%s206 + $0x40] sm:$0xf]
      %v1663 = vld [vmem:[%s206 + $0x44] sm:$0xf]
      %v1664 = vld [vmem:[%s206 + $0x48] sm:$0xf]
      %v1665 = vld [vmem:[%s206 + $0x4c] sm:$0xf]
      %v1666 = vld [vmem:[%s206 + $0x50] sm:$0xf]
      %v1667 = vld [vmem:[%s206 + $0x54] sm:$0xf]
      %v1668 = vld [vmem:[%s206 + $0x58] sm:$0xf]
      %v1669 = vld [vmem:[%s206 + $0x5c] sm:$0xf]
      %v1670 = vld [vmem:[%s206 + $0x60] sm:$0xf]
      %v1671 = vld [vmem:[%s206 + $0x64] sm:$0xf]
      %v1672 = vld [vmem:[%s206 + $0x68] sm:$0xf]
      %v1673 = vld [vmem:[%s206 + $0x6c] sm:$0xf]
      %v1674 = vld [vmem:[%s206 + $0x70] sm:$0xf]
      %v1675 = vld [vmem:[%s206 + $0x74] sm:$0xf]
      %v1676 = vld [vmem:[%s206 + $0x78] sm:$0xf]
      %v1677 = vld [vmem:[%s206 + $0x7c] sm:$0xf]
      %v1678 = vld [vmem:[%s206 + $0x80] sm:$0xf]
      %v1679 = vld [vmem:[%s206 + $0x84] sm:$0xf]
      %v1680 = vld [vmem:[%s206 + $0x88] sm:$0xf]
      %v1681 = vld [vmem:[%s206 + $0x8c] sm:$0xf]
      %v1682 = vld [vmem:[%s206 + $0x90] sm:$0xf]
      %v1683 = vld [vmem:[%s206 + $0x94] sm:$0xf]
      %v1684 = vld [vmem:[%s206 + $0x98] sm:$0x1]
      %v1722 = vunpack.c.l.b16 %v1648
      %v1723 = vunpack.c.l.b16 %v1649
      %v1724 = vunpack.c.l.b16 %v1650
      %v1725 = vunpack.c.l.b16 %v1651
      %v1726 = vunpack.c.l.b16 %v1652
      %v1727 = vunpack.c.l.b16 %v1653
      %v1728 = vunpack.c.l.b16 %v1654
      %v1729 = vunpack.c.l.b16 %v1655
      %v1730 = vunpack.c.l.b16 %v1656
      %v1731 = vunpack.c.l.b16 %v1657
      %v1732 = vunpack.c.l.b16 %v1658
      %v1733 = vunpack.c.l.b16 %v1659
      %v1734 = vunpack.c.l.b16 %v1660
      %v1735 = vunpack.c.l.b16 %v1661
      %v1736 = vunpack.c.l.b16 %v1662
      %v1737 = vunpack.c.l.b16 %v1663
      %v1738 = vunpack.c.l.b16 %v1664
      %v1739 = vunpack.c.l.b16 %v1665
      %v1740 = vunpack.c.l.b16 %v1666
      %v1741 = vunpack.c.l.b16 %v1667
      %v1742 = vunpack.c.l.b16 %v1668
      %v1743 = vunpack.c.l.b16 %v1669
      %v1744 = vunpack.c.l.b16 %v1670
      %v1745 = vunpack.c.l.b16 %v1671
      %v1746 = vunpack.c.l.b16 %v1672
      %v1747 = vunpack.c.l.b16 %v1673
      %v1748 = vunpack.c.l.b16 %v1674
      %v1749 = vunpack.c.l.b16 %v1675
      %v1750 = vunpack.c.l.b16 %v1676
      %v1751 = vunpack.c.l.b16 %v1677
      %v1752 = vunpack.c.l.b16 %v1678
      %v1753 = vunpack.c.l.b16 %v1679
      %v1754 = vunpack.c.l.b16 %v1680
      %v1755 = vunpack.c.l.b16 %v1681
      %v1756 = vunpack.c.l.b16 %v1682
      %v1757 = vunpack.c.l.b16 %v1683
      %v1758 = vunpack.c.l.b16 %v1684
      %v1759 = vpack.c.b16 %v1723, %v1722
      %v1760 = vpack.c.b16 %v1725, %v1724
      %v1761 = vpack.c.b16 %v1727, %v1726
      %v1762 = vpack.c.b16 %v1729, %v1728
      %v1763 = vpack.c.b16 %v1731, %v1730
      %v1764 = vpack.c.b16 %v1733, %v1732
      %v1765 = vpack.c.b16 %v1735, %v1734
      %v1766 = vpack.c.b16 %v1737, %v1736
      %v1767 = vpack.c.b16 %v1739, %v1738
      %v1768 = vpack.c.b16 %v1741, %v1740
      %v1769 = vpack.c.b16 %v1743, %v1742
      %v1770 = vpack.c.b16 %v1745, %v1744
      %v1771 = vpack.c.b16 %v1747, %v1746
      %v1772 = vpack.c.b16 %v1749, %v1748
      %v1773 = vpack.c.b16 %v1751, %v1750
      %v1774 = vpack.c.b16 %v1753, %v1752
      %v1775 = vpack.c.b16 %v1755, %v1754
      %v1776 = vpack.c.b16 %v1757, %v1756
      %v1777 = vpack.c.b16 %v1758, %v1758
      %v1778 = vrot.slane %v1759, 1
      %v1779 = vrot.slane %v1760, 1
      %v1780 = vsel %vm866, %v1778, %v1779
      %v1781 = vrot.slane %v1761, 1
      %v1782 = vsel %vm866, %v1779, %v1781
      %v1783 = vrot.slane %v1762, 1
      %v1784 = vsel %vm866, %v1781, %v1783
      %v1785 = vrot.slane %v1763, 1
      %v1786 = vsel %vm866, %v1783, %v1785
      %v1787 = vrot.slane %v1764, 1
      %v1788 = vsel %vm866, %v1785, %v1787
      %v1789 = vrot.slane %v1765, 1
      %v1790 = vsel %vm866, %v1787, %v1789
      %v1791 = vrot.slane %v1766, 1
      %v1792 = vsel %vm866, %v1789, %v1791
      %v1793 = vrot.slane %v1767, 1
      %v1794 = vsel %vm866, %v1791, %v1793
      %v1795 = vrot.slane %v1768, 1
      %v1796 = vsel %vm866, %v1793, %v1795
      %v1797 = vrot.slane %v1769, 1
      %v1798 = vsel %vm866, %v1795, %v1797
      %v1799 = vrot.slane %v1770, 1
      %v1800 = vsel %vm866, %v1797, %v1799
      %v1801 = vrot.slane %v1771, 1
      %v1802 = vsel %vm866, %v1799, %v1801
      %v1803 = vrot.slane %v1772, 1
      %v1804 = vsel %vm866, %v1801, %v1803
      %v1805 = vrot.slane %v1773, 1
      %v1806 = vsel %vm866, %v1803, %v1805
      %v1807 = vrot.slane %v1774, 1
      %v1808 = vsel %vm866, %v1805, %v1807
      %v1809 = vrot.slane %v1775, 1
      %v1810 = vsel %vm866, %v1807, %v1809
      %v1811 = vrot.slane %v1776, 1
      %v1812 = vsel %vm866, %v1809, %v1811
      %v1813 = vrot.slane %v1777, 1
      %v1814 = vsel %vm866, %v1811, %v1813
      %1833 = vst [vmem:[#allocation2] sm:$0xff] %v1780
      %1834 = vst [vmem:[#allocation2 + $0x18] sm:$0xff] %v1782
      %1835 = vst [vmem:[#allocation2 + $0x30] sm:$0xff] %v1784
      %1836 = vst [vmem:[#allocation2 + $0x48] sm:$0xff] %v1786
      %1837 = vst [vmem:[#allocation2 + $0x60] sm:$0xff] %v1788
      %1838 = vst [vmem:[#allocation2 + $0x78] sm:$0xff] %v1790
      %1839 = vst [vmem:[#allocation2 + $0x90] sm:$0xff] %v1792
      %1840 = vst [vmem:[#allocation2 + $0xa8] sm:$0xff] %v1794
      %1841 = vst [vmem:[#allocation2 + $0xc0] sm:$0xff] %v1796
      %1842 = vst [vmem:[#allocation2 + $0xd8] sm:$0xff] %v1798
      %1843 = vst [vmem:[#allocation2 + $0xf0] sm:$0xff] %v1800
      %1844 = vst [vmem:[#allocation2 + $0x108] sm:$0xff] %v1802
      %1845 = vst [vmem:[#allocation2 + $0x120] sm:$0xff] %v1804
      %1846 = vst [vmem:[#allocation2 + $0x138] sm:$0xff] %v1806
      %1847 = vst [vmem:[#allocation2 + $0x150] sm:$0xff] %v1808
      %1848 = vst [vmem:[#allocation2 + $0x168] sm:$0xff] %v1810
      %1849 = vst [vmem:[#allocation2 + $0x180] sm:$0xff] %v1812
      %1850 = vst [vmem:[#allocation2 + $0x198] sm:$0xff] %v1814
      %v1851 = vld [vmem:[%s206 + $0x8] sm:$0xe]
      %v1852 = vld [vmem:[%s206 + $0xc] sm:$0xf]
      %v1853 = vld [vmem:[%s206 + $0x10] sm:$0xf]
      %v1854 = vld [vmem:[%s206 + $0x14] sm:$0xf]
      %v1855 = vld [vmem:[%s206 + $0x18] sm:$0xf]
      %v1856 = vld [vmem:[%s206 + $0x1c] sm:$0xf]
      %v1857 = vld [vmem:[%s206 + $0x20] sm:$0xf]
      %v1858 = vld [vmem:[%s206 + $0x24] sm:$0xf]
      %v1859 = vld [vmem:[%s206 + $0x28] sm:$0xf]
      %v1860 = vld [vmem:[%s206 + $0x2c] sm:$0xf]
      %v1861 = vld [vmem:[%s206 + $0x30] sm:$0xf]
      %v1862 = vld [vmem:[%s206 + $0x34] sm:$0xf]
      %v1863 = vld [vmem:[%s206 + $0x38] sm:$0xf]
      %v1864 = vld [vmem:[%s206 + $0x3c] sm:$0xf]
      %v1865 = vld [vmem:[%s206 + $0x40] sm:$0xf]
      %v1866 = vld [vmem:[%s206 + $0x44] sm:$0xf]
      %v1867 = vld [vmem:[%s206 + $0x48] sm:$0xf]
      %v1868 = vld [vmem:[%s206 + $0x4c] sm:$0xf]
      %v1869 = vld [vmem:[%s206 + $0x50] sm:$0xf]
      %v1870 = vld [vmem:[%s206 + $0x54] sm:$0xf]
      %v1871 = vld [vmem:[%s206 + $0x58] sm:$0xf]
      %v1872 = vld [vmem:[%s206 + $0x5c] sm:$0xf]
      %v1873 = vld [vmem:[%s206 + $0x60] sm:$0xf]
      %v1874 = vld [vmem:[%s206 + $0x64] sm:$0xf]
      %v1875 = vld [vmem:[%s206 + $0x68] sm:$0xf]
      %v1876 = vld [vmem:[%s206 + $0x6c] sm:$0xf]
      %v1877 = vld [vmem:[%s206 + $0x70] sm:$0xf]
      %v1878 = vld [vmem:[%s206 + $0x74] sm:$0xf]
      %v1879 = vld [vmem:[%s206 + $0x78] sm:$0xf]
      %v1880 = vld [vmem:[%s206 + $0x7c] sm:$0xf]
      %v1881 = vld [vmem:[%s206 + $0x80] sm:$0xf]
      %v1882 = vld [vmem:[%s206 + $0x84] sm:$0xf]
      %v1883 = vld [vmem:[%s206 + $0x88] sm:$0xf]
      %v1884 = vld [vmem:[%s206 + $0x8c] sm:$0xf]
      %v1885 = vld [vmem:[%s206 + $0x90] sm:$0xf]
      %v1886 = vld [vmem:[%s206 + $0x94] sm:$0xf]
      %v1887 = vld [vmem:[%s206 + $0x98] sm:$0x3]
      %v1925 = vunpack.c.l.b16 %v1851
      %v1926 = vunpack.c.l.b16 %v1852
      %v1927 = vunpack.c.l.b16 %v1853
      %v1928 = vunpack.c.l.b16 %v1854
      %v1929 = vunpack.c.l.b16 %v1855
      %v1930 = vunpack.c.l.b16 %v1856
      %v1931 = vunpack.c.l.b16 %v1857
      %v1932 = vunpack.c.l.b16 %v1858
      %v1933 = vunpack.c.l.b16 %v1859
      %v1934 = vunpack.c.l.b16 %v1860
      %v1935 = vunpack.c.l.b16 %v1861
      %v1936 = vunpack.c.l.b16 %v1862
      %v1937 = vunpack.c.l.b16 %v1863
      %v1938 = vunpack.c.l.b16 %v1864
      %v1939 = vunpack.c.l.b16 %v1865
      %v1940 = vunpack.c.l.b16 %v1866
      %v1941 = vunpack.c.l.b16 %v1867
      %v1942 = vunpack.c.l.b16 %v1868
      %v1943 = vunpack.c.l.b16 %v1869
      %v1944 = vunpack.c.l.b16 %v1870
      %v1945 = vunpack.c.l.b16 %v1871
      %v1946 = vunpack.c.l.b16 %v1872
      %v1947 = vunpack.c.l.b16 %v1873
      %v1948 = vunpack.c.l.b16 %v1874
      %v1949 = vunpack.c.l.b16 %v1875
      %v1950 = vunpack.c.l.b16 %v1876
      %v1951 = vunpack.c.l.b16 %v1877
      %v1952 = vunpack.c.l.b16 %v1878
      %v1953 = vunpack.c.l.b16 %v1879
      %v1954 = vunpack.c.l.b16 %v1880
      %v1955 = vunpack.c.l.b16 %v1881
      %v1956 = vunpack.c.l.b16 %v1882
      %v1957 = vunpack.c.l.b16 %v1883
      %v1958 = vunpack.c.l.b16 %v1884
      %v1959 = vunpack.c.l.b16 %v1885
      %v1960 = vunpack.c.l.b16 %v1886
      %v1961 = vunpack.c.l.b16 %v1887
      %v1962 = vpack.c.b16 %v1926, %v1925
      %v1963 = vpack.c.b16 %v1928, %v1927
      %v1964 = vpack.c.b16 %v1930, %v1929
      %v1965 = vpack.c.b16 %v1932, %v1931
      %v1966 = vpack.c.b16 %v1934, %v1933
      %v1967 = vpack.c.b16 %v1936, %v1935
      %v1968 = vpack.c.b16 %v1938, %v1937
      %v1969 = vpack.c.b16 %v1940, %v1939
      %v1970 = vpack.c.b16 %v1942, %v1941
      %v1971 = vpack.c.b16 %v1944, %v1943
      %v1972 = vpack.c.b16 %v1946, %v1945
      %v1973 = vpack.c.b16 %v1948, %v1947
      %v1974 = vpack.c.b16 %v1950, %v1949
      %v1975 = vpack.c.b16 %v1952, %v1951
      %v1976 = vpack.c.b16 %v1954, %v1953
      %v1977 = vpack.c.b16 %v1956, %v1955
      %v1978 = vpack.c.b16 %v1958, %v1957
      %v1979 = vpack.c.b16 %v1960, %v1959
      %v1980 = vpack.c.b16 %v1961, %v1961
      %vm1981 = vsmask.f32 6400
      %v1983 = vshrl.u32 %v1962, 16
      %v1985 = vrot.slane %v1983, 1
      %v1986 = vshll.u32 %v1962, 16
      %v1988 = vrot.slane %v1986, 2
      %v1989 = vor.u32 %v1985, %v1988
      %v1991 = vshrl.u32 %v1963, 16
      %v1993 = vrot.slane %v1991, 1
      %v1994 = vshll.u32 %v1963, 16
      %v1996 = vrot.slane %v1994, 2
      %v1997 = vor.u32 %v1993, %v1996
      %v1998 = vsel %vm1981, %v1989, %v1997
      %v2000 = vshrl.u32 %v1964, 16
      %v2002 = vrot.slane %v2000, 1
      %v2003 = vshll.u32 %v1964, 16
      %v2005 = vrot.slane %v2003, 2
      %v2006 = vor.u32 %v2002, %v2005
      %v2007 = vsel %vm1981, %v1997, %v2006
      %v2009 = vshrl.u32 %v1965, 16
      %v2011 = vrot.slane %v2009, 1
      %v2012 = vshll.u32 %v1965, 16
      %v2014 = vrot.slane %v2012, 2
      %v2015 = vor.u32 %v2011, %v2014
      %v2016 = vsel %vm1981, %v2006, %v2015
      %v2018 = vshrl.u32 %v1966, 16
      %v2020 = vrot.slane %v2018, 1
      %v2021 = vshll.u32 %v1966, 16
      %v2023 = vrot.slane %v2021, 2
      %v2024 = vor.u32 %v2020, %v2023
      %v2025 = vsel %vm1981, %v2015, %v2024
      %v2027 = vshrl.u32 %v1967, 16
      %v2029 = vrot.slane %v2027, 1
      %v2030 = vshll.u32 %v1967, 16
      %v2032 = vrot.slane %v2030, 2
      %v2033 = vor.u32 %v2029, %v2032
      %v2034 = vsel %vm1981, %v2024, %v2033
      %v2036 = vshrl.u32 %v1968, 16
      %v2038 = vrot.slane %v2036, 1
      %v2039 = vshll.u32 %v1968, 16
      %v2041 = vrot.slane %v2039, 2
      %v2042 = vor.u32 %v2038, %v2041
      %v2043 = vsel %vm1981, %v2033, %v2042
      %v2045 = vshrl.u32 %v1969, 16
      %v2047 = vrot.slane %v2045, 1
      %v2048 = vshll.u32 %v1969, 16
      %v2050 = vrot.slane %v2048, 2
      %v2051 = vor.u32 %v2047, %v2050
      %v2052 = vsel %vm1981, %v2042, %v2051
      %v2054 = vshrl.u32 %v1970, 16
      %v2056 = vrot.slane %v2054, 1
      %v2057 = vshll.u32 %v1970, 16
      %v2059 = vrot.slane %v2057, 2
      %v2060 = vor.u32 %v2056, %v2059
      %v2061 = vsel %vm1981, %v2051, %v2060
      %v2063 = vshrl.u32 %v1971, 16
      %v2065 = vrot.slane %v2063, 1
      %v2066 = vshll.u32 %v1971, 16
      %v2068 = vrot.slane %v2066, 2
      %v2069 = vor.u32 %v2065, %v2068
      %v2070 = vsel %vm1981, %v2060, %v2069
      %v2072 = vshrl.u32 %v1972, 16
      %v2074 = vrot.slane %v2072, 1
      %v2075 = vshll.u32 %v1972, 16
      %v2077 = vrot.slane %v2075, 2
      %v2078 = vor.u32 %v2074, %v2077
      %v2079 = vsel %vm1981, %v2069, %v2078
      %v2081 = vshrl.u32 %v1973, 16
      %v2083 = vrot.slane %v2081, 1
      %v2084 = vshll.u32 %v1973, 16
      %v2086 = vrot.slane %v2084, 2
      %v2087 = vor.u32 %v2083, %v2086
      %v2088 = vsel %vm1981, %v2078, %v2087
      %v2090 = vshrl.u32 %v1974, 16
      %v2092 = vrot.slane %v2090, 1
      %v2093 = vshll.u32 %v1974, 16
      %v2095 = vrot.slane %v2093, 2
      %v2096 = vor.u32 %v2092, %v2095
      %v2097 = vsel %vm1981, %v2087, %v2096
      %v2099 = vshrl.u32 %v1975, 16
      %v2101 = vrot.slane %v2099, 1
      %v2102 = vshll.u32 %v1975, 16
      %v2104 = vrot.slane %v2102, 2
      %v2105 = vor.u32 %v2101, %v2104
      %v2106 = vsel %vm1981, %v2096, %v2105
      %v2108 = vshrl.u32 %v1976, 16
      %v2110 = vrot.slane %v2108, 1
      %v2111 = vshll.u32 %v1976, 16
      %v2113 = vrot.slane %v2111, 2
      %v2114 = vor.u32 %v2110, %v2113
      %v2115 = vsel %vm1981, %v2105, %v2114
      %v2117 = vshrl.u32 %v1977, 16
      %v2119 = vrot.slane %v2117, 1
      %v2120 = vshll.u32 %v1977, 16
      %v2122 = vrot.slane %v2120, 2
      %v2123 = vor.u32 %v2119, %v2122
      %v2124 = vsel %vm1981, %v2114, %v2123
      %v2126 = vshrl.u32 %v1978, 16
      %v2128 = vrot.slane %v2126, 1
      %v2129 = vshll.u32 %v1978, 16
      %v2131 = vrot.slane %v2129, 2
      %v2132 = vor.u32 %v2128, %v2131
      %v2133 = vsel %vm1981, %v2123, %v2132
      %v2135 = vshrl.u32 %v1979, 16
      %v2137 = vrot.slane %v2135, 1
      %v2138 = vshll.u32 %v1979, 16
      %v2140 = vrot.slane %v2138, 2
      %v2141 = vor.u32 %v2137, %v2140
      %v2142 = vsel %vm1981, %v2132, %v2141
      %v2144 = vshrl.u32 %v1980, 16
      %v2146 = vrot.slane %v2144, 1
      %v2147 = vshll.u32 %v1980, 16
      %v2149 = vrot.slane %v2147, 2
      %v2150 = vor.u32 %v2146, %v2149
      %v2151 = vsel %vm1981, %v2141, %v2150
      %2170 = vst [vmem:[#allocation2 + $0x8] sm:$0xff] %v1998
      %2171 = vst [vmem:[#allocation2 + $0x20] sm:$0xff] %v2007
      %2172 = vst [vmem:[#allocation2 + $0x38] sm:$0xff] %v2016
      %2173 = vst [vmem:[#allocation2 + $0x50] sm:$0xff] %v2025
      %2174 = vst [vmem:[#allocation2 + $0x68] sm:$0xff] %v2034
      %2175 = vst [vmem:[#allocation2 + $0x80] sm:$0xff] %v2043
      %2176 = vst [vmem:[#allocation2 + $0x98] sm:$0xff] %v2052
      %2177 = vst [vmem:[#allocation2 + $0xb0] sm:$0xff] %v2061
      %2178 = vst [vmem:[#allocation2 + $0xc8] sm:$0xff] %v2070
      %2179 = vst [vmem:[#allocation2 + $0xe0] sm:$0xff] %v2079
      %2180 = vst [vmem:[#allocation2 + $0xf8] sm:$0xff] %v2088
      %2181 = vst [vmem:[#allocation2 + $0x110] sm:$0xff] %v2097
      %2182 = vst [vmem:[#allocation2 + $0x128] sm:$0xff] %v2106
      %2183 = vst [vmem:[#allocation2 + $0x140] sm:$0xff] %v2115
      %2184 = vst [vmem:[#allocation2 + $0x158] sm:$0xff] %v2124
      %2185 = vst [vmem:[#allocation2 + $0x170] sm:$0xff] %v2133
      %2186 = vst [vmem:[#allocation2 + $0x188] sm:$0xff] %v2142
      %2187 = vst [vmem:[#allocation2 + $0x1a0] sm:$0xff] %v2151
      %v2188 = vld [vmem:[%s206 + $0x8] sm:$0xc]
      %v2189 = vld [vmem:[%s206 + $0xc] sm:$0xf]
      %v2190 = vld [vmem:[%s206 + $0x10] sm:$0xf]
      %v2191 = vld [vmem:[%s206 + $0x14] sm:$0xf]
      %v2192 = vld [vmem:[%s206 + $0x18] sm:$0xf]
      %v2193 = vld [vmem:[%s206 + $0x1c] sm:$0xf]
      %v2194 = vld [vmem:[%s206 + $0x20] sm:$0xf]
      %v2195 = vld [vmem:[%s206 + $0x24] sm:$0xf]
      %v2196 = vld [vmem:[%s206 + $0x28] sm:$0xf]
      %v2197 = vld [vmem:[%s206 + $0x2c] sm:$0xf]
      %v2198 = vld [vmem:[%s206 + $0x30] sm:$0xf]
      %v2199 = vld [vmem:[%s206 + $0x34] sm:$0xf]
      %v2200 = vld [vmem:[%s206 + $0x38] sm:$0xf]
      %v2201 = vld [vmem:[%s206 + $0x3c] sm:$0xf]
      %v2202 = vld [vmem:[%s206 + $0x40] sm:$0xf]
      %v2203 = vld [vmem:[%s206 + $0x44] sm:$0xf]
      %v2204 = vld [vmem:[%s206 + $0x48] sm:$0xf]
      %v2205 = vld [vmem:[%s206 + $0x4c] sm:$0xf]
      %v2206 = vld [vmem:[%s206 + $0x50] sm:$0xf]
      %v2207 = vld [vmem:[%s206 + $0x54] sm:$0xf]
      %v2208 = vld [vmem:[%s206 + $0x58] sm:$0xf]
      %v2209 = vld [vmem:[%s206 + $0x5c] sm:$0xf]
      %v2210 = vld [vmem:[%s206 + $0x60] sm:$0xf]
      %v2211 = vld [vmem:[%s206 + $0x64] sm:$0xf]
      %v2212 = vld [vmem:[%s206 + $0x68] sm:$0xf]
      %v2213 = vld [vmem:[%s206 + $0x6c] sm:$0xf]
      %v2214 = vld [vmem:[%s206 + $0x70] sm:$0xf]
      %v2215 = vld [vmem:[%s206 + $0x74] sm:$0xf]
      %v2216 = vld [vmem:[%s206 + $0x78] sm:$0xf]
      %v2217 = vld [vmem:[%s206 + $0x7c] sm:$0xf]
      %v2218 = vld [vmem:[%s206 + $0x80] sm:$0xf]
      %v2219 = vld [vmem:[%s206 + $0x84] sm:$0xf]
      %v2220 = vld [vmem:[%s206 + $0x88] sm:$0xf]
      %v2221 = vld [vmem:[%s206 + $0x8c] sm:$0xf]
      %v2222 = vld [vmem:[%s206 + $0x90] sm:$0xf]
      %v2223 = vld [vmem:[%s206 + $0x94] sm:$0xf]
      %v2224 = vld [vmem:[%s206 + $0x98] sm:$0x3]
      %v2262 = vunpack.c.l.b16 %v2188
      %v2263 = vunpack.c.l.b16 %v2189
      %v2264 = vunpack.c.l.b16 %v2190
      %v2265 = vunpack.c.l.b16 %v2191
      %v2266 = vunpack.c.l.b16 %v2192
      %v2267 = vunpack.c.l.b16 %v2193
      %v2268 = vunpack.c.l.b16 %v2194
      %v2269 = vunpack.c.l.b16 %v2195
      %v2270 = vunpack.c.l.b16 %v2196
      %v2271 = vunpack.c.l.b16 %v2197
      %v2272 = vunpack.c.l.b16 %v2198
      %v2273 = vunpack.c.l.b16 %v2199
      %v2274 = vunpack.c.l.b16 %v2200
      %v2275 = vunpack.c.l.b16 %v2201
      %v2276 = vunpack.c.l.b16 %v2202
      %v2277 = vunpack.c.l.b16 %v2203
      %v2278 = vunpack.c.l.b16 %v2204
      %v2279 = vunpack.c.l.b16 %v2205
      %v2280 = vunpack.c.l.b16 %v2206
      %v2281 = vunpack.c.l.b16 %v2207
      %v2282 = vunpack.c.l.b16 %v2208
      %v2283 = vunpack.c.l.b16 %v2209
      %v2284 = vunpack.c.l.b16 %v2210
      %v2285 = vunpack.c.l.b16 %v2211
      %v2286 = vunpack.c.l.b16 %v2212
      %v2287 = vunpack.c.l.b16 %v2213
      %v2288 = vunpack.c.l.b16 %v2214
      %v2289 = vunpack.c.l.b16 %v2215
      %v2290 = vunpack.c.l.b16 %v2216
      %v2291 = vunpack.c.l.b16 %v2217
      %v2292 = vunpack.c.l.b16 %v2218
      %v2293 = vunpack.c.l.b16 %v2219
      %v2294 = vunpack.c.l.b16 %v2220
      %v2295 = vunpack.c.l.b16 %v2221
      %v2296 = vunpack.c.l.b16 %v2222
      %v2297 = vunpack.c.l.b16 %v2223
      %v2298 = vunpack.c.l.b16 %v2224
      %v2299 = vpack.c.b16 %v2263, %v2262
      %v2300 = vpack.c.b16 %v2265, %v2264
      %v2301 = vpack.c.b16 %v2267, %v2266
      %v2302 = vpack.c.b16 %v2269, %v2268
      %v2303 = vpack.c.b16 %v2271, %v2270
      %v2304 = vpack.c.b16 %v2273, %v2272
      %v2305 = vpack.c.b16 %v2275, %v2274
      %v2306 = vpack.c.b16 %v2277, %v2276
      %v2307 = vpack.c.b16 %v2279, %v2278
      %v2308 = vpack.c.b16 %v2281, %v2280
      %v2309 = vpack.c.b16 %v2283, %v2282
      %v2310 = vpack.c.b16 %v2285, %v2284
      %v2311 = vpack.c.b16 %v2287, %v2286
      %v2312 = vpack.c.b16 %v2289, %v2288
      %v2313 = vpack.c.b16 %v2291, %v2290
      %v2314 = vpack.c.b16 %v2293, %v2292
      %v2315 = vpack.c.b16 %v2295, %v2294
      %v2316 = vpack.c.b16 %v2297, %v2296
      %v2317 = vpack.c.b16 %v2298, %v2298
      %vm2318 = vcmask 1045504
      %v2319 = vrot.slane %v2299, 2
      %v2320 = vrot.slane %v2300, 2
      %v2321 = vsel %vm2318, %v2319, %v2320
      %v2322 = vrot.slane %v2301, 2
      %v2323 = vsel %vm2318, %v2320, %v2322
      %v2324 = vrot.slane %v2302, 2
      %v2325 = vsel %vm2318, %v2322, %v2324
      %v2326 = vrot.slane %v2303, 2
      %v2327 = vsel %vm2318, %v2324, %v2326
      %v2328 = vrot.slane %v2304, 2
      %v2329 = vsel %vm2318, %v2326, %v2328
      %v2330 = vrot.slane %v2305, 2
      %v2331 = vsel %vm2318, %v2328, %v2330
      %v2332 = vrot.slane %v2306, 2
      %v2333 = vsel %vm2318, %v2330, %v2332
      %v2334 = vrot.slane %v2307, 2
      %v2335 = vsel %vm2318, %v2332, %v2334
      %v2336 = vrot.slane %v2308, 2
      %v2337 = vsel %vm2318, %v2334, %v2336
      %v2338 = vrot.slane %v2309, 2
      %v2339 = vsel %vm2318, %v2336, %v2338
      %v2340 = vrot.slane %v2310, 2
      %v2341 = vsel %vm2318, %v2338, %v2340
      %v2342 = vrot.slane %v2311, 2
      %v2343 = vsel %vm2318, %v2340, %v2342
      %v2344 = vrot.slane %v2312, 2
      %v2345 = vsel %vm2318, %v2342, %v2344
      %v2346 = vrot.slane %v2313, 2
      %v2347 = vsel %vm2318, %v2344, %v2346
      %v2348 = vrot.slane %v2314, 2
      %v2349 = vsel %vm2318, %v2346, %v2348
      %v2350 = vrot.slane %v2315, 2
      %v2351 = vsel %vm2318, %v2348, %v2350
      %v2352 = vrot.slane %v2316, 2
      %v2353 = vsel %vm2318, %v2350, %v2352
      %v2354 = vrot.slane %v2317, 2
      %v2355 = vsel %vm2318, %v2352, %v2354
      %2374 = vst [vmem:[#allocation2 + $0x10] sm:$0xff] %v2321
      %2375 = vst [vmem:[#allocation2 + $0x28] sm:$0xff] %v2323
      %2376 = vst [vmem:[#allocation2 + $0x40] sm:$0xff] %v2325
      %2377 = vst [vmem:[#allocation2 + $0x58] sm:$0xff] %v2327
      %2378 = vst [vmem:[#allocation2 + $0x70] sm:$0xff] %v2329
      %2379 = vst [vmem:[#allocation2 + $0x88] sm:$0xff] %v2331
      %2380 = vst [vmem:[#allocation2 + $0xa0] sm:$0xff] %v2333
      %2381 = vst [vmem:[#allocation2 + $0xb8] sm:$0xff] %v2335
      %2382 = vst [vmem:[#allocation2 + $0xd0] sm:$0xff] %v2337
      %2383 = vst [vmem:[#allocation2 + $0xe8] sm:$0xff] %v2339
      %2384 = vst [vmem:[#allocation2 + $0x100] sm:$0xff] %v2341
      %2385 = vst [vmem:[#allocation2 + $0x118] sm:$0xff] %v2343
      %2386 = vst [vmem:[#allocation2 + $0x130] sm:$0xff] %v2345
      %2387 = vst [vmem:[#allocation2 + $0x148] sm:$0xff] %v2347
      %2388 = vst [vmem:[#allocation2 + $0x160] sm:$0xff] %v2349
      %2389 = vst [vmem:[#allocation2 + $0x178] sm:$0xff] %v2351
      %2390 = vst [vmem:[#allocation2 + $0x190] sm:$0xff] %v2353
      %2391 = vst [vmem:[#allocation2 + $0x1a8] sm:$0xff] %v2355
      %v2392 = vld [vmem:[#allocation3] sm:$0xff]
      %v2393 = vld [vmem:[#allocation3 + $0x8] sm:$0xff]
      %v2394 = vld [vmem:[#allocation3 + $0x10] sm:$0xff]
      %v2395 = vld [vmem:[#allocation3 + $0x18] sm:$0xff]
      %v2396 = vld [vmem:[#allocation3 + $0x20] sm:$0xff]
      %v2397 = vld [vmem:[#allocation3 + $0x28] sm:$0xff]
      %v2398 = vld [vmem:[#allocation3 + $0x30] sm:$0xff]
      %v2399 = vld [vmem:[#allocation3 + $0x38] sm:$0xff]
      %v2400 = vld [vmem:[#allocation3 + $0x40] sm:$0xff]
      %v2401 = vld [vmem:[#allocation3 + $0x48] sm:$0xff]
      %v2402 = vld [vmem:[#allocation3 + $0x50] sm:$0xff]
      %v2403 = vld [vmem:[#allocation3 + $0x58] sm:$0xff]
      %v2404 = vld [vmem:[#allocation3 + $0x60] sm:$0xff]
      %v2405 = vld [vmem:[#allocation3 + $0x68] sm:$0xff]
      %v2406 = vld [vmem:[#allocation3 + $0x70] sm:$0xff]
      %v2407 = vld [vmem:[#allocation3 + $0x78] sm:$0xff]
      %v2408 = vld [vmem:[#allocation3 + $0x80] sm:$0xff]
      %v2409 = vld [vmem:[#allocation3 + $0x88] sm:$0xff]
      %v2410 = vld [vmem:[#allocation3 + $0x90] sm:$0xff]
      %v2411 = vld [vmem:[#allocation3 + $0x98] sm:$0xff]
      %v2412 = vld [vmem:[#allocation3 + $0xa0] sm:$0xff]
      %v2413 = vld [vmem:[#allocation3 + $0xa8] sm:$0xff]
      %v2414 = vld [vmem:[#allocation3 + $0xb0] sm:$0xff]
      %v2415 = vld [vmem:[#allocation3 + $0xb8] sm:$0xff]
      %v2416 = vld [vmem:[#allocation3 + $0xc0] sm:$0xff]
      %v2417 = vld [vmem:[#allocation3 + $0xc8] sm:$0xff]
      %v2418 = vld [vmem:[#allocation3 + $0xd0] sm:$0xff]
      %v2419 = vld [vmem:[#allocation3 + $0xd8] sm:$0xff]
      %v2420 = vld [vmem:[#allocation3 + $0xe0] sm:$0xff]
      %v2421 = vld [vmem:[#allocation3 + $0xe8] sm:$0xff]
      %v2422 = vld [vmem:[#allocation3 + $0xf0] sm:$0xff]
      %v2423 = vld [vmem:[#allocation3 + $0xf8] sm:$0xff]
      %v2424 = vld [vmem:[#allocation3 + $0x100] sm:$0xff]
      %v2425 = vld [vmem:[#allocation3 + $0x108] sm:$0xff]
      %v2426 = vld [vmem:[#allocation3 + $0x110] sm:$0xff]
      %v2427 = vld [vmem:[#allocation3 + $0x118] sm:$0xff]
      %v2428 = vld [vmem:[#allocation2] sm:$0xff]
      %v2429 = vld [vmem:[#allocation2 + $0x8] sm:$0xff]
      %v2430 = vld [vmem:[#allocation2 + $0x10] sm:$0xff]
      %v2431 = vld [vmem:[#allocation2 + $0x18] sm:$0xff]
      %v2432 = vld [vmem:[#allocation2 + $0x20] sm:$0xff]
      %v2433 = vld [vmem:[#allocation2 + $0x28] sm:$0xff]
      %v2434 = vld [vmem:[#allocation2 + $0x30] sm:$0xff]
      %v2435 = vld [vmem:[#allocation2 + $0x38] sm:$0xff]
      %v2436 = vld [vmem:[#allocation2 + $0x40] sm:$0xff]
      %v2437 = vld [vmem:[#allocation2 + $0x48] sm:$0xff]
      %v2438 = vld [vmem:[#allocation2 + $0x50] sm:$0xff]
      %v2439 = vld [vmem:[#allocation2 + $0x58] sm:$0xff]
      %v2440 = vld [vmem:[#allocation2 + $0x60] sm:$0xff]
      %v2441 = vld [vmem:[#allocation2 + $0x68] sm:$0xff]
      %v2442 = vld [vmem:[#allocation2 + $0x70] sm:$0xff]
      %v2443 = vld [vmem:[#allocation2 + $0x78] sm:$0xff]
      %v2444 = vld [vmem:[#allocation2 + $0x80] sm:$0xff]
      %v2445 = vld [vmem:[#allocation2 + $0x88] sm:$0xff]
      %v2446 = vld [vmem:[#allocation2 + $0x90] sm:$0xff]
      %v2447 = vld [vmem:[#allocation2 + $0x98] sm:$0xff]
      %v2448 = vld [vmem:[#allocation2 + $0xa0] sm:$0xff]
      %v2449 = vld [vmem:[#allocation2 + $0xa8] sm:$0xff]
      %v2450 = vld [vmem:[#allocation2 + $0xb0] sm:$0xff]
      %v2451 = vld [vmem:[#allocation2 + $0xb8] sm:$0xff]
      %v2452 = vld [vmem:[#allocation2 + $0xc0] sm:$0xff]
      %v2453 = vld [vmem:[#allocation2 + $0xc8] sm:$0xff]
      %v2454 = vld [vmem:[#allocation2 + $0xd0] sm:$0xff]
      %v2455 = vld [vmem:[#allocation2 + $0xd8] sm:$0xff]
      %v2456 = vld [vmem:[#allocation2 + $0xe0] sm:$0xff]
      %v2457 = vld [vmem:[#allocation2 + $0xe8] sm:$0xff]
      %v2458 = vld [vmem:[#allocation2 + $0xf0] sm:$0xff]
      %v2459 = vld [vmem:[#allocation2 + $0xf8] sm:$0xff]
      %v2460 = vld [vmem:[#allocation2 + $0x100] sm:$0xff]
      %v2461 = vld [vmem:[#allocation2 + $0x108] sm:$0xff]
      %v2462 = vld [vmem:[#allocation2 + $0x110] sm:$0xff]
      %v2463 = vld [vmem:[#allocation2 + $0x118] sm:$0xff]
      %v2464 = vld [vmem:[#allocation2 + $0x120] sm:$0xff]
      %v2465 = vld [vmem:[#allocation2 + $0x128] sm:$0xff]
      %v2466 = vld [vmem:[#allocation2 + $0x130] sm:$0xff]
      %v2467 = vld [vmem:[#allocation2 + $0x138] sm:$0xff]
      %v2468 = vld [vmem:[#allocation2 + $0x140] sm:$0xff]
      %v2469 = vld [vmem:[#allocation2 + $0x148] sm:$0xff]
      %v2470 = vld [vmem:[#allocation2 + $0x150] sm:$0xff]
      %v2471 = vld [vmem:[#allocation2 + $0x158] sm:$0xff]
      %v2472 = vld [vmem:[#allocation2 + $0x160] sm:$0xff]
      %v2473 = vld [vmem:[#allocation2 + $0x168] sm:$0xff]
      %v2474 = vld [vmem:[#allocation2 + $0x170] sm:$0xff]
      %v2475 = vld [vmem:[#allocation2 + $0x178] sm:$0xff]
      %v2476 = vld [vmem:[#allocation2 + $0x180] sm:$0xff]
      %v2477 = vld [vmem:[#allocation2 + $0x188] sm:$0xff]
      %v2478 = vld [vmem:[#allocation2 + $0x190] sm:$0xff]
      %v2479 = vld [vmem:[#allocation2 + $0x198] sm:$0xff]
      %v2480 = vld [vmem:[#allocation2 + $0x1a0] sm:$0xff]
      %v2481 = vld [vmem:[#allocation2 + $0x1a8] sm:$0xff]
      %v2482 = vld [vmem:[%s1 + $0xc0] sm:$0xf]
      %v2483 = vld [vmem:[%s1 + $0xc4] sm:$0xf]
      %v2484 = vld [vmem:[%s1 + $0xc8] sm:$0xf]
      %v2485 = vld [vmem:[%s1 + $0xcc] sm:$0xf]
      %v2486 = vld [vmem:[%s1 + $0xd0] sm:$0xf]
      %v2487 = vld [vmem:[%s1 + $0xd4] sm:$0xf]
      %v2488 = vld [vmem:[%s1 + $0xd8] sm:$0xf]
      %v2489 = vld [vmem:[%s1 + $0xdc] sm:$0xf]
      %v2490 = vld [vmem:[%s1 + $0xe0] sm:$0xf]
      %v2491 = vld [vmem:[%s1 + $0xe4] sm:$0xf]
      %v2492 = vld [vmem:[%s1 + $0xe8] sm:$0xf]
      %v2493 = vld [vmem:[%s1 + $0xec] sm:$0xf]
      %v2494 = vld [vmem:[%s1 + $0xf0] sm:$0xf]
      %v2495 = vld [vmem:[%s1 + $0xf4] sm:$0xf]
      %v2496 = vld [vmem:[%s1 + $0xf8] sm:$0xf]
      %v2497 = vld [vmem:[%s1 + $0xfc] sm:$0xf]
      %v2498 = vld [vmem:[%s1 + $0x100] sm:$0xf]
      %v2499 = vld [vmem:[%s1 + $0x104] sm:$0xf]
      %v2500 = vld [vmem:[%s1 + $0x108] sm:$0xf]
      %v2501 = vld [vmem:[%s1 + $0x10c] sm:$0xf]
      %v2502 = vld [vmem:[%s1 + $0x110] sm:$0xf]
      %v2503 = vld [vmem:[%s1 + $0x114] sm:$0xf]
      %v2504 = vld [vmem:[%s1 + $0x118] sm:$0xf]
      %v2505 = vld [vmem:[%s1 + $0x11c] sm:$0xf]
      %v2506 = vld [vmem:[%s1 + $0x120] sm:$0xf]
      %v2507 = vld [vmem:[%s1 + $0x124] sm:$0xf]
      %v2508 = vld [vmem:[%s1 + $0x128] sm:$0xf]
      %v2509 = vld [vmem:[%s1 + $0x12c] sm:$0xf]
      %v2510 = vld [vmem:[%s1 + $0x130] sm:$0xf]
      %v2511 = vld [vmem:[%s1 + $0x134] sm:$0xf]
      %v2512 = vld [vmem:[%s1 + $0x138] sm:$0xf]
      %v2513 = vld [vmem:[%s1 + $0x13c] sm:$0xf]
      %v2514 = vld [vmem:[%s1 + $0x140] sm:$0xf]
      %v2515 = vld [vmem:[%s1 + $0x144] sm:$0xf]
      %v2516 = vld [vmem:[%s1 + $0x148] sm:$0xf]
      %v2517 = vld [vmem:[%s1 + $0x14c] sm:$0xf]
      %v2518 = vld [vmem:[%s1 + $0x150] sm:$0xf]
      %v2519 = vld [vmem:[%s1 + $0x154] sm:$0xf]
      %v2520 = vld [vmem:[%s1 + $0x158] sm:$0xf]
      %v2521 = vld [vmem:[%s1 + $0x15c] sm:$0xf]
      %v2522 = vld [vmem:[%s1 + $0x160] sm:$0xf]
      %v2523 = vld [vmem:[%s1 + $0x164] sm:$0xf]
      %v2524 = vld [vmem:[%s1 + $0x168] sm:$0xf]
      %v2525 = vld [vmem:[%s1 + $0x16c] sm:$0xf]
      %v2526 = vld [vmem:[%s1 + $0x170] sm:$0xf]
      %v2527 = vld [vmem:[%s1 + $0x174] sm:$0xf]
      %v2528 = vld [vmem:[%s1 + $0x178] sm:$0xf]
      %v2529 = vld [vmem:[%s1 + $0x17c] sm:$0xf]
      %v2578 = vunpack.c.l.b16 %v2482
      %v2579 = vunpack.c.l.b16 %v2483
      %v2580 = vunpack.c.l.b16 %v2484
      %v2581 = vunpack.c.l.b16 %v2485
      %v2582 = vunpack.c.l.b16 %v2486
      %v2583 = vunpack.c.l.b16 %v2487
      %v2584 = vunpack.c.l.b16 %v2488
      %v2585 = vunpack.c.l.b16 %v2489
      %v2586 = vunpack.c.l.b16 %v2490
      %v2587 = vunpack.c.l.b16 %v2491
      %v2588 = vunpack.c.l.b16 %v2492
      %v2589 = vunpack.c.l.b16 %v2493
      %v2590 = vunpack.c.l.b16 %v2494
      %v2591 = vunpack.c.l.b16 %v2495
      %v2592 = vunpack.c.l.b16 %v2496
      %v2593 = vunpack.c.l.b16 %v2497
      %v2594 = vunpack.c.l.b16 %v2498
      %v2595 = vunpack.c.l.b16 %v2499
      %v2596 = vunpack.c.l.b16 %v2500
      %v2597 = vunpack.c.l.b16 %v2501
      %v2598 = vunpack.c.l.b16 %v2502
      %v2599 = vunpack.c.l.b16 %v2503
      %v2600 = vunpack.c.l.b16 %v2504
      %v2601 = vunpack.c.l.b16 %v2505
      %v2602 = vunpack.c.l.b16 %v2506
      %v2603 = vunpack.c.l.b16 %v2507
      %v2604 = vunpack.c.l.b16 %v2508
      %v2605 = vunpack.c.l.b16 %v2509
      %v2606 = vunpack.c.l.b16 %v2510
      %v2607 = vunpack.c.l.b16 %v2511
      %v2608 = vunpack.c.l.b16 %v2512
      %v2609 = vunpack.c.l.b16 %v2513
      %v2610 = vunpack.c.l.b16 %v2514
      %v2611 = vunpack.c.l.b16 %v2515
      %v2612 = vunpack.c.l.b16 %v2516
      %v2613 = vunpack.c.l.b16 %v2517
      %v2614 = vunpack.c.l.b16 %v2518
      %v2615 = vunpack.c.l.b16 %v2519
      %v2616 = vunpack.c.l.b16 %v2520
      %v2617 = vunpack.c.l.b16 %v2521
      %v2618 = vunpack.c.l.b16 %v2522
      %v2619 = vunpack.c.l.b16 %v2523
      %v2620 = vunpack.c.l.b16 %v2524
      %v2621 = vunpack.c.l.b16 %v2525
      %v2622 = vunpack.c.l.b16 %v2526
      %v2623 = vunpack.c.l.b16 %v2527
      %v2624 = vunpack.c.l.b16 %v2528
      %v2625 = vunpack.c.l.b16 %v2529
      %v2626 = vpack.c.b16 %v2579, %v2578
      %v2627 = vpack.c.b16 %v2581, %v2580
      %v2628 = vpack.c.b16 %v2583, %v2582
      %v2629 = vpack.c.b16 %v2585, %v2584
      %v2630 = vpack.c.b16 %v2587, %v2586
      %v2631 = vpack.c.b16 %v2589, %v2588
      %v2632 = vpack.c.b16 %v2591, %v2590
      %v2633 = vpack.c.b16 %v2593, %v2592
      %v2634 = vpack.c.b16 %v2595, %v2594
      %v2635 = vpack.c.b16 %v2597, %v2596
      %v2636 = vpack.c.b16 %v2599, %v2598
      %v2637 = vpack.c.b16 %v2601, %v2600
      %v2638 = vpack.c.b16 %v2603, %v2602
      %v2639 = vpack.c.b16 %v2605, %v2604
      %v2640 = vpack.c.b16 %v2607, %v2606
      %v2641 = vpack.c.b16 %v2609, %v2608
      %v2642 = vpack.c.b16 %v2611, %v2610
      %v2643 = vpack.c.b16 %v2613, %v2612
      %v2644 = vpack.c.b16 %v2615, %v2614
      %v2645 = vpack.c.b16 %v2617, %v2616
      %v2646 = vpack.c.b16 %v2619, %v2618
      %v2647 = vpack.c.b16 %v2621, %v2620
      %v2648 = vpack.c.b16 %v2623, %v2622
      %v2649 = vpack.c.b16 %v2625, %v2624
      %2674 = vmatprep.subr.bf16.mxu0 0
      %2675 = vmatpush1.bf16.msra.mxu0 %v2626
      %2676 = vmatprep.subr.bf16.mxu0 0
      %2677 = vmatpush1.bf16.msra.mxu0 %v2627
      %2678 = vmatprep.subr.bf16.mxu0 0
      %2679 = vmatpush1.bf16.msra.mxu0 %v2628
      %2680 = vmatprep.subr.bf16.mxu0 0
      %2681 = vmatpush1.bf16.msra.mxu0 %v2629
      %2682 = vmatprep.subr.bf16.mxu0 0
      %2683 = vmatpush1.bf16.msra.mxu0 %v2630
      %2684 = vmatprep.subr.bf16.mxu0 0
      %2685 = vmatpush1.bf16.msra.mxu0 %v2631
      %2686 = vmatprep.subr.bf16.mxu0 0
      %2687 = vmatpush1.bf16.msra.mxu0 %v2632
      %2688 = vmatprep.subr.bf16.mxu0 0
      %2689 = vmatpush1.bf16.msra.mxu0 %v2633
      %2690 = vmatprep.subr.bf16.mxu0 0
      %2691 = vmatpush1.bf16.msra.mxu0 %v2634
      %2692 = vmatprep.subr.bf16.mxu0 0
      %2693 = vmatpush1.bf16.msra.mxu0 %v2635
      %2694 = vmatprep.subr.bf16.mxu0 0
      %2695 = vmatpush1.bf16.msra.mxu0 %v2636
      %2696 = vmatprep.subr.bf16.mxu0 0
      %2697 = vmatpush1.bf16.msra.mxu0 %v2637
      %2698 = vmatprep.subr.bf16.mxu0 0
      %2699 = vmatpush1.bf16.msra.mxu0 %v2638
      %2700 = vmatprep.subr.bf16.mxu0 0
      %2701 = vmatpush1.bf16.msra.mxu0 %v2639
      %2702 = vmatprep.subr.bf16.mxu0 0
      %2703 = vmatpush1.bf16.msra.mxu0 %v2640
      %2704 = vmatprep.subr.bf16.mxu0 0
      %2705 = vmatpush1.bf16.msra.mxu0 %v2641
      %2706 = vmatprep.mubr.bf16.mxu0 %v2429
      %2707 = vmatmul.mubr.bf16.gmra.mrb[0].mxu0 %v2428
      %v2708 = vpop.f32.mrb[0].mxu0
      %v2709 = vadd.f32 0.0, %v2708
      %v2710 = vpop.f32.mrb[0].mxu0
      %v2711 = vpop.f32.mrb[0].mxu0
      %v2712 = vadd.f32 0.0, %v2711
      %v2713 = vpop.f32.mrb[0].mxu0
      %2714 = vmatprep.mubr.bf16.mxu0 %v2432
      %2715 = vmatmul.mubr.bf16.gmra.mrb[0].mxu0 %v2431
      %v2716 = vpop.f32.mrb[0].mxu0
      %v2717 = vadd.f32 0.0, %v2716
      %v2718 = vpop.f32.mrb[0].mxu0
      %v2719 = vpop.f32.mrb[0].mxu0
      %v2720 = vadd.f32 0.0, %v2719
      %v2721 = vpop.f32.mrb[0].mxu0
      %2722 = vmatprep.mubr.bf16.mxu0 %v2435
      %2723 = vmatmul.mubr.bf16.gmra.mrb[0].mxu0 %v2434
      %v2724 = vpop.f32.mrb[0].mxu0
      %v2725 = vadd.f32 0.0, %v2724
      %v2726 = vpop.f32.mrb[0].mxu0
      %v2727 = vpop.f32.mrb[0].mxu0
      %v2728 = vadd.f32 0.0, %v2727
      %v2729 = vpop.f32.mrb[0].mxu0
      %2730 = vmatprep.mubr.bf16.mxu0 %v2438
      %2731 = vmatmul.mubr.bf16.gmra.mrb[0].mxu0 %v2437
      %v2732 = vpop.f32.mrb[0].mxu0
      %v2733 = vadd.f32 0.0, %v2732
      %v2734 = vpop.f32.mrb[0].mxu0
      %v2735 = vpop.f32.mrb[0].mxu0
      %v2736 = vadd.f32 0.0, %v2735
      %v2737 = vpop.f32.mrb[0].mxu0
      %2738 = vmatprep.mubr.bf16.mxu0 %v2441
      %2739 = vmatmul.mubr.bf16.gmra.mrb[0].mxu0 %v2440
      %v2740 = vpop.f32.mrb[0].mxu0
      %v2741 = vadd.f32 0.0, %v2740
      %v2742 = vpop.f32.mrb[0].mxu0
      %v2743 = vpop.f32.mrb[0].mxu0
      %v2744 = vadd.f32 0.0, %v2743
      %v2745 = vpop.f32.mrb[0].mxu0
      %2746 = vmatprep.mubr.bf16.mxu0 %v2444
      %2747 = vmatmul.mubr.bf16.gmra.mrb[0].mxu0 %v2443
      %v2748 = vpop.f32.mrb[0].mxu0
      %v2749 = vadd.f32 0.0, %v2748
      %v2750 = vpop.f32.mrb[0].mxu0
      %v2751 = vpop.f32.mrb[0].mxu0
      %v2752 = vadd.f32 0.0, %v2751
      %v2753 = vpop.f32.mrb[0].mxu0
      %2754 = vmatprep.mubr.bf16.mxu0 %v2447
      %2755 = vmatmul.mubr.bf16.gmra.mrb[0].mxu0 %v2446
      %v2756 = vpop.f32.mrb[0].mxu0
      %v2757 = vadd.f32 0.0, %v2756
      %v2758 = vpop.f32.mrb[0].mxu0
      %v2759 = vpop.f32.mrb[0].mxu0
      %v2760 = vadd.f32 0.0, %v2759
      %v2761 = vpop.f32.mrb[0].mxu0
      %2762 = vmatprep.mubr.bf16.mxu0 %v2450
      %2763 = vmatmul.mubr.bf16.gmra.mrb[0].mxu0 %v2449
      %v2764 = vpop.f32.mrb[0].mxu0
      %v2765 = vadd.f32 0.0, %v2764
      %v2766 = vpop.f32.mrb[0].mxu0
      %v2767 = vpop.f32.mrb[0].mxu0
      %v2768 = vadd.f32 0.0, %v2767
      %v2769 = vpop.f32.mrb[0].mxu0
      %2770 = vmatprep.mubr.bf16.mxu0 %v2453
      %2771 = vmatmul.mubr.bf16.gmra.mrb[0].mxu0 %v2452
      %v2772 = vpop.f32.mrb[0].mxu0
      %v2773 = vadd.f32 0.0, %v2772
      %v2774 = vpop.f32.mrb[0].mxu0
      %v2775 = vpop.f32.mrb[0].mxu0
      %v2776 = vadd.f32 0.0, %v2775
      %v2777 = vpop.f32.mrb[0].mxu0
      %2778 = vmatprep.mubr.bf16.mxu0 %v2456
      %2779 = vmatmul.mubr.bf16.gmra.mrb[0].mxu0 %v2455
      %v2780 = vpop.f32.mrb[0].mxu0
      %v2781 = vadd.f32 0.0, %v2780
      %v2782 = vpop.f32.mrb[0].mxu0
      %v2783 = vpop.f32.mrb[0].mxu0
      %v2784 = vadd.f32 0.0, %v2783
      %v2785 = vpop.f32.mrb[0].mxu0
      %2786 = vmatprep.mubr.bf16.mxu0 %v2459
      %2787 = vmatmul.mubr.bf16.gmra.mrb[0].mxu0 %v2458
      %v2788 = vpop.f32.mrb[0].mxu0
      %v2789 = vadd.f32 0.0, %v2788
      %v2790 = vpop.f32.mrb[0].mxu0
      %v2791 = vpop.f32.mrb[0].mxu0
      %v2792 = vadd.f32 0.0, %v2791
      %v2793 = vpop.f32.mrb[0].mxu0
      %2794 = vmatprep.mubr.bf16.mxu0 %v2462
      %2795 = vmatmul.mubr.bf16.gmra.mrb[0].mxu0 %v2461
      %v2796 = vpop.f32.mrb[0].mxu0
      %v2797 = vadd.f32 0.0, %v2796
      %v2798 = vpop.f32.mrb[0].mxu0
      %v2799 = vpop.f32.mrb[0].mxu0
      %v2800 = vadd.f32 0.0, %v2799
      %v2801 = vpop.f32.mrb[0].mxu0
      %2802 = vmatprep.mubr.bf16.mxu0 %v2465
      %2803 = vmatmul.mubr.bf16.gmra.mrb[0].mxu0 %v2464
      %v2804 = vpop.f32.mrb[0].mxu0
      %v2805 = vadd.f32 0.0, %v2804
      %v2806 = vpop.f32.mrb[0].mxu0
      %v2807 = vpop.f32.mrb[0].mxu0
      %v2808 = vadd.f32 0.0, %v2807
      %v2809 = vpop.f32.mrb[0].mxu0
      %2810 = vmatprep.mubr.bf16.mxu0 %v2468
      %2811 = vmatmul.mubr.bf16.gmra.mrb[0].mxu0 %v2467
      %v2812 = vpop.f32.mrb[0].mxu0
      %v2813 = vadd.f32 0.0, %v2812
      %v2814 = vpop.f32.mrb[0].mxu0
      %v2815 = vpop.f32.mrb[0].mxu0
      %v2816 = vadd.f32 0.0, %v2815
      %v2817 = vpop.f32.mrb[0].mxu0
      %2818 = vmatprep.mubr.bf16.mxu0 %v2471
      %2819 = vmatmul.mubr.bf16.gmra.mrb[0].mxu0 %v2470
      %v2820 = vpop.f32.mrb[0].mxu0
      %v2821 = vadd.f32 0.0, %v2820
      %v2822 = vpop.f32.mrb[0].mxu0
      %v2823 = vpop.f32.mrb[0].mxu0
      %v2824 = vadd.f32 0.0, %v2823
      %v2825 = vpop.f32.mrb[0].mxu0
      %2826 = vmatprep.mubr.bf16.mxu0 %v2474
      %2827 = vmatmul.mubr.bf16.gmra.mrb[0].mxu0 %v2473
      %v2828 = vpop.f32.mrb[0].mxu0
      %v2829 = vadd.f32 0.0, %v2828
      %v2830 = vpop.f32.mrb[0].mxu0
      %v2831 = vpop.f32.mrb[0].mxu0
      %v2832 = vadd.f32 0.0, %v2831
      %v2833 = vpop.f32.mrb[0].mxu0
      %2834 = vmatprep.mubr.bf16.mxu0 %v2477
      %2835 = vmatmul.mubr.bf16.gmra.mrb[0].mxu0 %v2476
      %v2836 = vpop.f32.mrb[0].mxu0
      %v2837 = vadd.f32 0.0, %v2836
      %v2838 = vpop.f32.mrb[0].mxu0
      %v2839 = vpop.f32.mrb[0].mxu0
      %v2840 = vadd.f32 0.0, %v2839
      %v2841 = vpop.f32.mrb[0].mxu0
      %2842 = vmatprep.mubr.bf16.mxu0 %v2480
      %2843 = vmatmul.mubr.bf16.gmra.mrb[0].mxu0 %v2479
      %v2844 = vpop.f32.mrb[0].mxu0
      %v2845 = vadd.f32 0.0, %v2844
      %v2846 = vpop.f32.mrb[0].mxu0
      %v2847 = vpop.f32.mrb[0].mxu0
      %v2848 = vadd.f32 0.0, %v2847
      %v2849 = vpop.f32.mrb[0].mxu0
      %2850 = vdwg.mxu0
      %2851 = vmatprep.subr.bf16.mxu0 0
      %2852 = vmatpush1.bf16.msra.mxu0 %v2642
      %2853 = vmatprep.subr.bf16.mxu0 0
      %2854 = vmatpush1.bf16.msra.mxu0 %v2643
      %2855 = vmatprep.subr.bf16.mxu0 0
      %2856 = vmatpush1.bf16.msra.mxu0 %v2644
      %2857 = vmatprep.subr.bf16.mxu0 0
      %2858 = vmatpush1.bf16.msra.mxu0 %v2645
      %2859 = vmatprep.subr.bf16.mxu0 0
      %2860 = vmatpush1.bf16.msra.mxu0 %v2646
      %2861 = vmatprep.subr.bf16.mxu0 0
      %2862 = vmatpush1.bf16.msra.mxu0 %v2647
      %2863 = vmatprep.subr.bf16.mxu0 0
      %2864 = vmatpush1.bf16.msra.mxu0 %v2648
      %2865 = vmatprep.subr.bf16.mxu0 0
      %2866 = vmatpush1.bf16.msra.mxu0 %v2649
      %2867 = vmatprep.subr.bf16.mxu0 0
      %2868 = vmatpush1.bf16.msra.mxu0 0
      %2869 = vmatprep.subr.bf16.mxu0 0
      %2870 = vmatpush1.bf16.msra.mxu0 0
      %2871 = vmatprep.subr.bf16.mxu0 0
      %2872 = vmatpush1.bf16.msra.mxu0 0
      %2873 = vmatprep.subr.bf16.mxu0 0
      %2874 = vmatpush1.bf16.msra.mxu0 0
      %2875 = vmatprep.subr.bf16.mxu0 0
      %2876 = vmatpush1.bf16.msra.mxu0 0
      %2877 = vmatprep.subr.bf16.mxu0 0
      %2878 = vmatpush1.bf16.msra.mxu0 0
      %2879 = vmatprep.subr.bf16.mxu0 0
      %2880 = vmatpush1.bf16.msra.mxu0 0
      %2881 = vmatprep.subr.bf16.mxu0 0
      %2882 = vmatpush1.bf16.msra.mxu0 0
      %2883 = vmatprep.mubr.bf16.mxu0 0
      %2884 = vmatmul.mubr.bf16.gmra.mrb[0].mxu0 %v2430
      %v2885 = vpop.f32.mrb[0].mxu0
      %v2886 = vadd.f32 %v2709, %v2885
      %v2887 = vpop.f32.mrb[0].mxu0
      %v2888 = vpop.f32.mrb[0].mxu0
      %v2889 = vadd.f32 %v2712, %v2888
      %v2890 = vpop.f32.mrb[0].mxu0
      %2891 = vmatprep.mubr.bf16.mxu0 0
      %2892 = vmatmul.mubr.bf16.gmra.mrb[0].mxu0 %v2433
      %v2893 = vpop.f32.mrb[0].mxu0
      %v2894 = vadd.f32 %v2717, %v2893
      %v2895 = vpop.f32.mrb[0].mxu0
      %v2896 = vpop.f32.mrb[0].mxu0
      %v2897 = vadd.f32 %v2720, %v2896
      %v2898 = vpop.f32.mrb[0].mxu0
      %2899 = vmatprep.mubr.bf16.mxu0 0
      %2900 = vmatmul.mubr.bf16.gmra.mrb[0].mxu0 %v2436
      %v2901 = vpop.f32.mrb[0].mxu0
      %v2902 = vadd.f32 %v2725, %v2901
      %v2903 = vpop.f32.mrb[0].mxu0
      %v2904 = vpop.f32.mrb[0].mxu0
      %v2905 = vadd.f32 %v2728, %v2904
      %v2906 = vpop.f32.mrb[0].mxu0
      %2907 = vmatprep.mubr.bf16.mxu0 0
      %2908 = vmatmul.mubr.bf16.gmra.mrb[0].mxu0 %v2439
      %v2909 = vpop.f32.mrb[0].mxu0
      %v2910 = vadd.f32 %v2733, %v2909
      %v2911 = vpop.f32.mrb[0].mxu0
      %v2912 = vpop.f32.mrb[0].mxu0
      %v2913 = vadd.f32 %v2736, %v2912
      %v2914 = vpop.f32.mrb[0].mxu0
      %2915 = vmatprep.mubr.bf16.mxu0 0
      %2916 = vmatmul.mubr.bf16.gmra.mrb[0].mxu0 %v2442
      %v2917 = vpop.f32.mrb[0].mxu0
      %v2918 = vadd.f32 %v2741, %v2917
      %v2919 = vpop.f32.mrb[0].mxu0
      %v2920 = vpop.f32.mrb[0].mxu0
      %v2921 = vadd.f32 %v2744, %v2920
      %v2922 = vpop.f32.mrb[0].mxu0
      %2923 = vmatprep.mubr.bf16.mxu0 0
      %2924 = vmatmul.mubr.bf16.gmra.mrb[0].mxu0 %v2445
      %v2925 = vpop.f32.mrb[0].mxu0
      %v2926 = vadd.f32 %v2749, %v2925
      %v2927 = vpop.f32.mrb[0].mxu0
      %v2928 = vpop.f32.mrb[0].mxu0
      %v2929 = vadd.f32 %v2752, %v2928
      %v2930 = vpop.f32.mrb[0].mxu0
      %2931 = vmatprep.mubr.bf16.mxu0 0
      %2932 = vmatmul.mubr.bf16.gmra.mrb[0].mxu0 %v2448
      %v2933 = vpop.f32.mrb[0].mxu0
      %v2934 = vadd.f32 %v2757, %v2933
      %v2935 = vpop.f32.mrb[0].mxu0
      %v2936 = vpop.f32.mrb[0].mxu0
      %v2937 = vadd.f32 %v2760, %v2936
      %v2938 = vpop.f32.mrb[0].mxu0
      %2939 = vmatprep.mubr.bf16.mxu0 0
      %2940 = vmatmul.mubr.bf16.gmra.mrb[0].mxu0 %v2451
      %v2941 = vpop.f32.mrb[0].mxu0
      %v2942 = vadd.f32 %v2765, %v2941
      %v2943 = vpop.f32.mrb[0].mxu0
      %v2944 = vpop.f32.mrb[0].mxu0
      %v2945 = vadd.f32 %v2768, %v2944
      %v2946 = vpop.f32.mrb[0].mxu0
      %2947 = vmatprep.mubr.bf16.mxu0 0
      %2948 = vmatmul.mubr.bf16.gmra.mrb[0].mxu0 %v2454
      %v2949 = vpop.f32.mrb[0].mxu0
      %v2950 = vadd.f32 %v2773, %v2949
      %v2951 = vpop.f32.mrb[0].mxu0
      %v2952 = vpop.f32.mrb[0].mxu0
      %v2953 = vadd.f32 %v2776, %v2952
      %v2954 = vpop.f32.mrb[0].mxu0
      %2955 = vmatprep.mubr.bf16.mxu0 0
      %2956 = vmatmul.mubr.bf16.gmra.mrb[0].mxu0 %v2457
      %v2957 = vpop.f32.mrb[0].mxu0
      %v2958 = vadd.f32 %v2781, %v2957
      %v2959 = vpop.f32.mrb[0].mxu0
      %v2960 = vpop.f32.mrb[0].mxu0
      %v2961 = vadd.f32 %v2784, %v2960
      %v2962 = vpop.f32.mrb[0].mxu0
      %2963 = vmatprep.mubr.bf16.mxu0 0
      %2964 = vmatmul.mubr.bf16.gmra.mrb[0].mxu0 %v2460
      %v2965 = vpop.f32.mrb[0].mxu0
      %v2966 = vadd.f32 %v2789, %v2965
      %v2967 = vpop.f32.mrb[0].mxu0
      %v2968 = vpop.f32.mrb[0].mxu0
      %v2969 = vadd.f32 %v2792, %v2968
      %v2970 = vpop.f32.mrb[0].mxu0
      %2971 = vmatprep.mubr.bf16.mxu0 0
      %2972 = vmatmul.mubr.bf16.gmra.mrb[0].mxu0 %v2463
      %v2973 = vpop.f32.mrb[0].mxu0
      %v2974 = vadd.f32 %v2797, %v2973
      %v2975 = vpop.f32.mrb[0].mxu0
      %v2976 = vpop.f32.mrb[0].mxu0
      %v2977 = vadd.f32 %v2800, %v2976
      %v2978 = vpop.f32.mrb[0].mxu0
      %2979 = vmatprep.mubr.bf16.mxu0 0
      %2980 = vmatmul.mubr.bf16.gmra.mrb[0].mxu0 %v2466
      %v2981 = vpop.f32.mrb[0].mxu0
      %v2982 = vadd.f32 %v2805, %v2981
      %v2983 = vpop.f32.mrb[0].mxu0
      %v2984 = vpop.f32.mrb[0].mxu0
      %v2985 = vadd.f32 %v2808, %v2984
      %v2986 = vpop.f32.mrb[0].mxu0
      %2987 = vmatprep.mubr.bf16.mxu0 0
      %2988 = vmatmul.mubr.bf16.gmra.mrb[0].mxu0 %v2469
      %v2989 = vpop.f32.mrb[0].mxu0
      %v2990 = vadd.f32 %v2813, %v2989
      %v2991 = vpop.f32.mrb[0].mxu0
      %v2992 = vpop.f32.mrb[0].mxu0
      %v2993 = vadd.f32 %v2816, %v2992
      %v2994 = vpop.f32.mrb[0].mxu0
      %2995 = vmatprep.mubr.bf16.mxu0 0
      %2996 = vmatmul.mubr.bf16.gmra.mrb[0].mxu0 %v2472
      %v2997 = vpop.f32.mrb[0].mxu0
      %v2998 = vadd.f32 %v2821, %v2997
      %v2999 = vpop.f32.mrb[0].mxu0
      %v3000 = vpop.f32.mrb[0].mxu0
      %v3001 = vadd.f32 %v2824, %v3000
      %v3002 = vpop.f32.mrb[0].mxu0
      %3003 = vmatprep.mubr.bf16.mxu0 0
      %3004 = vmatmul.mubr.bf16.gmra.mrb[0].mxu0 %v2475
      %v3005 = vpop.f32.mrb[0].mxu0
      %v3006 = vadd.f32 %v2829, %v3005
      %v3007 = vpop.f32.mrb[0].mxu0
      %v3008 = vpop.f32.mrb[0].mxu0
      %v3009 = vadd.f32 %v2832, %v3008
      %v3010 = vpop.f32.mrb[0].mxu0
      %3011 = vmatprep.mubr.bf16.mxu0 0
      %3012 = vmatmul.mubr.bf16.gmra.mrb[0].mxu0 %v2478
      %v3013 = vpop.f32.mrb[0].mxu0
      %v3014 = vadd.f32 %v2837, %v3013
      %v3015 = vpop.f32.mrb[0].mxu0
      %v3016 = vpop.f32.mrb[0].mxu0
      %v3017 = vadd.f32 %v2840, %v3016
      %v3018 = vpop.f32.mrb[0].mxu0
      %3019 = vmatprep.mubr.bf16.mxu0 0
      %3020 = vmatmul.mubr.bf16.gmra.mrb[0].mxu0 %v2481
      %v3021 = vpop.f32.mrb[0].mxu0
      %v3022 = vadd.f32 %v2845, %v3021
      %v3023 = vpop.f32.mrb[0].mxu0
      %v3024 = vpop.f32.mrb[0].mxu0
      %v3025 = vadd.f32 %v2848, %v3024
      %v3026 = vpop.f32.mrb[0].mxu0
      %3027 = vdwg.mxu0
      %v3028 = vadd.f32 %v2392, %v2886
      %v3029 = vadd.f32 %v2393, %v2889
      %v3030 = vadd.f32 %v2394, %v2894
      %v3031 = vadd.f32 %v2395, %v2897
      %v3032 = vadd.f32 %v2396, %v2902
      %v3033 = vadd.f32 %v2397, %v2905
      %v3034 = vadd.f32 %v2398, %v2910
      %v3035 = vadd.f32 %v2399, %v2913
      %v3036 = vadd.f32 %v2400, %v2918
      %v3037 = vadd.f32 %v2401, %v2921
      %v3038 = vadd.f32 %v2402, %v2926
      %v3039 = vadd.f32 %v2403, %v2929
      %v3040 = vadd.f32 %v2404, %v2934
      %v3041 = vadd.f32 %v2405, %v2937
      %v3042 = vadd.f32 %v2406, %v2942
      %v3043 = vadd.f32 %v2407, %v2945
      %v3044 = vadd.f32 %v2408, %v2950
      %v3045 = vadd.f32 %v2409, %v2953
      %v3046 = vadd.f32 %v2410, %v2958
      %v3047 = vadd.f32 %v2411, %v2961
      %v3048 = vadd.f32 %v2412, %v2966
      %v3049 = vadd.f32 %v2413, %v2969
      %v3050 = vadd.f32 %v2414, %v2974
      %v3051 = vadd.f32 %v2415, %v2977
      %v3052 = vadd.f32 %v2416, %v2982
      %v3053 = vadd.f32 %v2417, %v2985
      %v3054 = vadd.f32 %v2418, %v2990
      %v3055 = vadd.f32 %v2419, %v2993
      %v3056 = vadd.f32 %v2420, %v2998
      %v3057 = vadd.f32 %v2421, %v3001
      %v3058 = vadd.f32 %v2422, %v3006
      %v3059 = vadd.f32 %v2423, %v3009
      %v3060 = vadd.f32 %v2424, %v3014
      %v3061 = vadd.f32 %v2425, %v3017
      %v3062 = vadd.f32 %v2426, %v3022
      %v3063 = vadd.f32 %v2427, %v3025
      %3064 = vst [vmem:[#allocation3] sm:$0xff] %v3028
      %3065 = vst [vmem:[#allocation3 + $0x8] sm:$0xff] %v3029
      %3066 = vst [vmem:[#allocation3 + $0x10] sm:$0xff] %v3030
      %3067 = vst [vmem:[#allocation3 + $0x18] sm:$0xff] %v3031
      %3068 = vst [vmem:[#allocation3 + $0x20] sm:$0xff] %v3032
      %3069 = vst [vmem:[#allocation3 + $0x28] sm:$0xff] %v3033
      %3070 = vst [vmem:[#allocation3 + $0x30] sm:$0xff] %v3034
      %3071 = vst [vmem:[#allocation3 + $0x38] sm:$0xff] %v3035
      %3072 = vst [vmem:[#allocation3 + $0x40] sm:$0xff] %v3036
      %3073 = vst [vmem:[#allocation3 + $0x48] sm:$0xff] %v3037
      %3074 = vst [vmem:[#allocation3 + $0x50] sm:$0xff] %v3038
      %3075 = vst [vmem:[#allocation3 + $0x58] sm:$0xff] %v3039
      %3076 = vst [vmem:[#allocation3 + $0x60] sm:$0xff] %v3040
      %3077 = vst [vmem:[#allocation3 + $0x68] sm:$0xff] %v3041
      %3078 = vst [vmem:[#allocation3 + $0x70] sm:$0xff] %v3042
      %3079 = vst [vmem:[#allocation3 + $0x78] sm:$0xff] %v3043
      %3080 = vst [vmem:[#allocation3 + $0x80] sm:$0xff] %v3044
      %3081 = vst [vmem:[#allocation3 + $0x88] sm:$0xff] %v3045
      %3082 = vst [vmem:[#allocation3 + $0x90] sm:$0xff] %v3046
      %3083 = vst [vmem:[#allocation3 + $0x98] sm:$0xff] %v3047
      %3084 = vst [vmem:[#allocation3 + $0xa0] sm:$0xff] %v3048
      %3085 = vst [vmem:[#allocation3 + $0xa8] sm:$0xff] %v3049
      %3086 = vst [vmem:[#allocation3 + $0xb0] sm:$0xff] %v3050
      %3087 = vst [vmem:[#allocation3 + $0xb8] sm:$0xff] %v3051
      %3088 = vst [vmem:[#allocation3 + $0xc0] sm:$0xff] %v3052
      %3089 = vst [vmem:[#allocation3 + $0xc8] sm:$0xff] %v3053
      %3090 = vst [vmem:[#allocation3 + $0xd0] sm:$0xff] %v3054
      %3091 = vst [vmem:[#allocation3 + $0xd8] sm:$0xff] %v3055
      %3092 = vst [vmem:[#allocation3 + $0xe0] sm:$0xff] %v3056
      %3093 = vst [vmem:[#allocation3 + $0xe8] sm:$0xff] %v3057
      %3094 = vst [vmem:[#allocation3 + $0xf0] sm:$0xff] %v3058
      %3095 = vst [vmem:[#allocation3 + $0xf8] sm:$0xff] %v3059
      %3096 = vst [vmem:[#allocation3 + $0x100] sm:$0xff] %v3060
      %3097 = vst [vmem:[#allocation3 + $0x108] sm:$0xff] %v3061
      %3098 = vst [vmem:[#allocation3 + $0x110] sm:$0xff] %v3062
      %3099 = vst [vmem:[#allocation3 + $0x118] sm:$0xff] %v3063
      %v3100 = vld [vmem:[%s206 + $0x10] sm:$0xc]
      %v3101 = vld [vmem:[%s206 + $0x14] sm:$0xf]
      %v3102 = vld [vmem:[%s206 + $0x18] sm:$0xf]
      %v3103 = vld [vmem:[%s206 + $0x1c] sm:$0xf]
      %v3104 = vld [vmem:[%s206 + $0x20] sm:$0xf]
      %v3105 = vld [vmem:[%s206 + $0x24] sm:$0xf]
      %v3106 = vld [vmem:[%s206 + $0x28] sm:$0xf]
      %v3107 = vld [vmem:[%s206 + $0x2c] sm:$0xf]
      %v3108 = vld [vmem:[%s206 + $0x30] sm:$0xf]
      %v3109 = vld [vmem:[%s206 + $0x34] sm:$0xf]
      %v3110 = vld [vmem:[%s206 + $0x38] sm:$0xf]
      %v3111 = vld [vmem:[%s206 + $0x3c] sm:$0xf]
      %v3112 = vld [vmem:[%s206 + $0x40] sm:$0xf]
      %v3113 = vld [vmem:[%s206 + $0x44] sm:$0xf]
      %v3114 = vld [vmem:[%s206 + $0x48] sm:$0xf]
      %v3115 = vld [vmem:[%s206 + $0x4c] sm:$0xf]
      %v3116 = vld [vmem:[%s206 + $0x50] sm:$0xf]
      %v3117 = vld [vmem:[%s206 + $0x54] sm:$0xf]
      %v3118 = vld [vmem:[%s206 + $0x58] sm:$0xf]
      %v3119 = vld [vmem:[%s206 + $0x5c] sm:$0xf]
      %v3120 = vld [vmem:[%s206 + $0x60] sm:$0xf]
      %v3121 = vld [vmem:[%s206 + $0x64] sm:$0xf]
      %v3122 = vld [vmem:[%s206 + $0x68] sm:$0xf]
      %v3123 = vld [vmem:[%s206 + $0x6c] sm:$0xf]
      %v3124 = vld [vmem:[%s206 + $0x70] sm:$0xf]
      %v3125 = vld [vmem:[%s206 + $0x74] sm:$0xf]
      %v3126 = vld [vmem:[%s206 + $0x78] sm:$0xf]
      %v3127 = vld [vmem:[%s206 + $0x7c] sm:$0xf]
      %v3128 = vld [vmem:[%s206 + $0x80] sm:$0xf]
      %v3129 = vld [vmem:[%s206 + $0x84] sm:$0xf]
      %v3130 = vld [vmem:[%s206 + $0x88] sm:$0xf]
      %v3131 = vld [vmem:[%s206 + $0x8c] sm:$0xf]
      %v3132 = vld [vmem:[%s206 + $0x90] sm:$0xf]
      %v3133 = vld [vmem:[%s206 + $0x94] sm:$0xf]
      %v3134 = vld [vmem:[%s206 + $0x98] sm:$0xf]
      %v3135 = vld [vmem:[%s206 + $0x9c] sm:$0xf]
      %v3136 = vld [vmem:[%s206 + $0xa0] sm:$0x3]
      %v3174 = vunpack.c.l.b16 %v3100
      %v3175 = vunpack.c.l.b16 %v3101
      %v3176 = vunpack.c.l.b16 %v3102
      %v3177 = vunpack.c.l.b16 %v3103
      %v3178 = vunpack.c.l.b16 %v3104
      %v3179 = vunpack.c.l.b16 %v3105
      %v3180 = vunpack.c.l.b16 %v3106
      %v3181 = vunpack.c.l.b16 %v3107
      %v3182 = vunpack.c.l.b16 %v3108
      %v3183 = vunpack.c.l.b16 %v3109
      %v3184 = vunpack.c.l.b16 %v3110
      %v3185 = vunpack.c.l.b16 %v3111
      %v3186 = vunpack.c.l.b16 %v3112
      %v3187 = vunpack.c.l.b16 %v3113
      %v3188 = vunpack.c.l.b16 %v3114
      %v3189 = vunpack.c.l.b16 %v3115
      %v3190 = vunpack.c.l.b16 %v3116
      %v3191 = vunpack.c.l.b16 %v3117
      %v3192 = vunpack.c.l.b16 %v3118
      %v3193 = vunpack.c.l.b16 %v3119
      %v3194 = vunpack.c.l.b16 %v3120
      %v3195 = vunpack.c.l.b16 %v3121
      %v3196 = vunpack.c.l.b16 %v3122
      %v3197 = vunpack.c.l.b16 %v3123
      %v3198 = vunpack.c.l.b16 %v3124
      %v3199 = vunpack.c.l.b16 %v3125
      %v3200 = vunpack.c.l.b16 %v3126
      %v3201 = vunpack.c.l.b16 %v3127
      %v3202 = vunpack.c.l.b16 %v3128
      %v3203 = vunpack.c.l.b16 %v3129
      %v3204 = vunpack.c.l.b16 %v3130
      %v3205 = vunpack.c.l.b16 %v3131
      %v3206 = vunpack.c.l.b16 %v3132
      %v3207 = vunpack.c.l.b16 %v3133
      %v3208 = vunpack.c.l.b16 %v3134
      %v3209 = vunpack.c.l.b16 %v3135
      %v3210 = vunpack.c.l.b16 %v3136
      %v3211 = vpack.c.b16 %v3175, %v3174
      %v3212 = vpack.c.b16 %v3177, %v3176
      %v3213 = vpack.c.b16 %v3179, %v3178
      %v3214 = vpack.c.b16 %v3181, %v3180
      %v3215 = vpack.c.b16 %v3183, %v3182
      %v3216 = vpack.c.b16 %v3185, %v3184
      %v3217 = vpack.c.b16 %v3187, %v3186
      %v3218 = vpack.c.b16 %v3189, %v3188
      %v3219 = vpack.c.b16 %v3191, %v3190
      %v3220 = vpack.c.b16 %v3193, %v3192
      %v3221 = vpack.c.b16 %v3195, %v3194
      %v3222 = vpack.c.b16 %v3197, %v3196
      %v3223 = vpack.c.b16 %v3199, %v3198
      %v3224 = vpack.c.b16 %v3201, %v3200
      %v3225 = vpack.c.b16 %v3203, %v3202
      %v3226 = vpack.c.b16 %v3205, %v3204
      %v3227 = vpack.c.b16 %v3207, %v3206
      %v3228 = vpack.c.b16 %v3209, %v3208
      %v3229 = vpack.c.b16 %v3210, %v3210
      %v3230 = vrot.slane %v3211, 2
      %v3231 = vrot.slane %v3212, 2
      %v3232 = vsel %vm2318, %v3230, %v3231
      %v3233 = vrot.slane %v3213, 2
      %v3234 = vsel %vm2318, %v3231, %v3233
      %v3235 = vrot.slane %v3214, 2
      %v3236 = vsel %vm2318, %v3233, %v3235
      %v3237 = vrot.slane %v3215, 2
      %v3238 = vsel %vm2318, %v3235, %v3237
      %v3239 = vrot.slane %v3216, 2
      %v3240 = vsel %vm2318, %v3237, %v3239
      %v3241 = vrot.slane %v3217, 2
      %v3242 = vsel %vm2318, %v3239, %v3241
      %v3243 = vrot.slane %v3218, 2
      %v3244 = vsel %vm2318, %v3241, %v3243
      %v3245 = vrot.slane %v3219, 2
      %v3246 = vsel %vm2318, %v3243, %v3245
      %v3247 = vrot.slane %v3220, 2
      %v3248 = vsel %vm2318, %v3245, %v3247
      %v3249 = vrot.slane %v3221, 2
      %v3250 = vsel %vm2318, %v3247, %v3249
      %v3251 = vrot.slane %v3222, 2
      %v3252 = vsel %vm2318, %v3249, %v3251
      %v3253 = vrot.slane %v3223, 2
      %v3254 = vsel %vm2318, %v3251, %v3253
      %v3255 = vrot.slane %v3224, 2
      %v3256 = vsel %vm2318, %v3253, %v3255
      %v3257 = vrot.slane %v3225, 2
      %v3258 = vsel %vm2318, %v3255, %v3257
      %v3259 = vrot.slane %v3226, 2
      %v3260 = vsel %vm2318, %v3257, %v3259
      %v3261 = vrot.slane %v3227, 2
      %v3262 = vsel %vm2318, %v3259, %v3261
      %v3263 = vrot.slane %v3228, 2
      %v3264 = vsel %vm2318, %v3261, %v3263
      %v3265 = vrot.slane %v3229, 2
      %v3266 = vsel %vm2318, %v3263, %v3265
      %3285 = vst [vmem:[#allocation2] sm:$0xff] %v3232
      %3286 = vst [vmem:[#allocation2 + $0x18] sm:$0xff] %v3234
      %3287 = vst [vmem:[#allocation2 + $0x30] sm:$0xff] %v3236
      %3288 = vst [vmem:[#allocation2 + $0x48] sm:$0xff] %v3238
      %3289 = vst [vmem:[#allocation2 + $0x60] sm:$0xff] %v3240
      %3290 = vst [vmem:[#allocation2 + $0x78] sm:$0xff] %v3242
      %3291 = vst [vmem:[#allocation2 + $0x90] sm:$0xff] %v3244
      %3292 = vst [vmem:[#allocation2 + $0xa8] sm:$0xff] %v3246
      %3293 = vst [vmem:[#allocation2 + $0xc0] sm:$0xff] %v3248
      %3294 = vst [vmem:[#allocation2 + $0xd8] sm:$0xff] %v3250
      %3295 = vst [vmem:[#allocation2 + $0xf0] sm:$0xff] %v3252
      %3296 = vst [vmem:[#allocation2 + $0x108] sm:$0xff] %v3254
      %3297 = vst [vmem:[#allocation2 + $0x120] sm:$0xff] %v3256
      %3298 = vst [vmem:[#allocation2 + $0x138] sm:$0xff] %v3258
      %3299 = vst [vmem:[#allocation2 + $0x150] sm:$0xff] %v3260
      %3300 = vst [vmem:[#allocation2 + $0x168] sm:$0xff] %v3262
      %3301 = vst [vmem:[#allocation2 + $0x180] sm:$0xff] %v3264
      %3302 = vst [vmem:[#allocation2 + $0x198] sm:$0xff] %v3266
      %v3303 = vld [vmem:[%s206 + $0x10] sm:$0xc]
      %v3304 = vld [vmem:[%s206 + $0x14] sm:$0xf]
      %v3305 = vld [vmem:[%s206 + $0x18] sm:$0xf]
      %v3306 = vld [vmem:[%s206 + $0x1c] sm:$0xf]
      %v3307 = vld [vmem:[%s206 + $0x20] sm:$0xf]
      %v3308 = vld [vmem:[%s206 + $0x24] sm:$0xf]
      %v3309 = vld [vmem:[%s206 + $0x28] sm:$0xf]
      %v3310 = vld [vmem:[%s206 + $0x2c] sm:$0xf]
      %v3311 = vld [vmem:[%s206 + $0x30] sm:$0xf]
      %v3312 = vld [vmem:[%s206 + $0x34] sm:$0xf]
      %v3313 = vld [vmem:[%s206 + $0x38] sm:$0xf]
      %v3314 = vld [vmem:[%s206 + $0x3c] sm:$0xf]
      %v3315 = vld [vmem:[%s206 + $0x40] sm:$0xf]
      %v3316 = vld [vmem:[%s206 + $0x44] sm:$0xf]
      %v3317 = vld [vmem:[%s206 + $0x48] sm:$0xf]
      %v3318 = vld [vmem:[%s206 + $0x4c] sm:$0xf]
      %v3319 = vld [vmem:[%s206 + $0x50] sm:$0xf]
      %v3320 = vld [vmem:[%s206 + $0x54] sm:$0xf]
      %v3321 = vld [vmem:[%s206 + $0x58] sm:$0xf]
      %v3322 = vld [vmem:[%s206 + $0x5c] sm:$0xf]
      %v3323 = vld [vmem:[%s206 + $0x60] sm:$0xf]
      %v3324 = vld [vmem:[%s206 + $0x64] sm:$0xf]
      %v3325 = vld [vmem:[%s206 + $0x68] sm:$0xf]
      %v3326 = vld [vmem:[%s206 + $0x6c] sm:$0xf]
      %v3327 = vld [vmem:[%s206 + $0x70] sm:$0xf]
      %v3328 = vld [vmem:[%s206 + $0x74] sm:$0xf]
      %v3329 = vld [vmem:[%s206 + $0x78] sm:$0xf]
      %v3330 = vld [vmem:[%s206 + $0x7c] sm:$0xf]
      %v3331 = vld [vmem:[%s206 + $0x80] sm:$0xf]
      %v3332 = vld [vmem:[%s206 + $0x84] sm:$0xf]
      %v3333 = vld [vmem:[%s206 + $0x88] sm:$0xf]
      %v3334 = vld [vmem:[%s206 + $0x8c] sm:$0xf]
      %v3335 = vld [vmem:[%s206 + $0x90] sm:$0xf]
      %v3336 = vld [vmem:[%s206 + $0x94] sm:$0xf]
      %v3337 = vld [vmem:[%s206 + $0x98] sm:$0xf]
      %v3338 = vld [vmem:[%s206 + $0x9c] sm:$0xf]
      %v3339 = vld [vmem:[%s206 + $0xa0] sm:$0x7]
      %v3377 = vunpack.c.l.b16 %v3303
      %v3378 = vunpack.c.l.b16 %v3304
      %v3379 = vunpack.c.l.b16 %v3305
      %v3380 = vunpack.c.l.b16 %v3306
      %v3381 = vunpack.c.l.b16 %v3307
      %v3382 = vunpack.c.l.b16 %v3308
      %v3383 = vunpack.c.l.b16 %v3309
      %v3384 = vunpack.c.l.b16 %v3310
      %v3385 = vunpack.c.l.b16 %v3311
      %v3386 = vunpack.c.l.b16 %v3312
      %v3387 = vunpack.c.l.b16 %v3313
      %v3388 = vunpack.c.l.b16 %v3314
      %v3389 = vunpack.c.l.b16 %v3315
      %v3390 = vunpack.c.l.b16 %v3316
      %v3391 = vunpack.c.l.b16 %v3317
      %v3392 = vunpack.c.l.b16 %v3318
      %v3393 = vunpack.c.l.b16 %v3319
      %v3394 = vunpack.c.l.b16 %v3320
      %v3395 = vunpack.c.l.b16 %v3321
      %v3396 = vunpack.c.l.b16 %v3322
      %v3397 = vunpack.c.l.b16 %v3323
      %v3398 = vunpack.c.l.b16 %v3324
      %v3399 = vunpack.c.l.b16 %v3325
      %v3400 = vunpack.c.l.b16 %v3326
      %v3401 = vunpack.c.l.b16 %v3327
      %v3402 = vunpack.c.l.b16 %v3328
      %v3403 = vunpack.c.l.b16 %v3329
      %v3404 = vunpack.c.l.b16 %v3330
      %v3405 = vunpack.c.l.b16 %v3331
      %v3406 = vunpack.c.l.b16 %v3332
      %v3407 = vunpack.c.l.b16 %v3333
      %v3408 = vunpack.c.l.b16 %v3334
      %v3409 = vunpack.c.l.b16 %v3335
      %v3410 = vunpack.c.l.b16 %v3336
      %v3411 = vunpack.c.l.b16 %v3337
      %v3412 = vunpack.c.l.b16 %v3338
      %v3413 = vunpack.c.l.b16 %v3339
      %v3414 = vpack.c.b16 %v3378, %v3377
      %v3415 = vpack.c.b16 %v3380, %v3379
      %v3416 = vpack.c.b16 %v3382, %v3381
      %v3417 = vpack.c.b16 %v3384, %v3383
      %v3418 = vpack.c.b16 %v3386, %v3385
      %v3419 = vpack.c.b16 %v3388, %v3387
      %v3420 = vpack.c.b16 %v3390, %v3389
      %v3421 = vpack.c.b16 %v3392, %v3391
      %v3422 = vpack.c.b16 %v3394, %v3393
      %v3423 = vpack.c.b16 %v3396, %v3395
      %v3424 = vpack.c.b16 %v3398, %v3397
      %v3425 = vpack.c.b16 %v3400, %v3399
      %v3426 = vpack.c.b16 %v3402, %v3401
      %v3427 = vpack.c.b16 %v3404, %v3403
      %v3428 = vpack.c.b16 %v3406, %v3405
      %v3429 = vpack.c.b16 %v3408, %v3407
      %v3430 = vpack.c.b16 %v3410, %v3409
      %v3431 = vpack.c.b16 %v3412, %v3411
      %v3432 = vpack.c.b16 %v3413, %v3413
      %vm3433 = vsmask.f32 5376
      %v3435 = vshrl.u32 %v3414, 16
      %v3437 = vrot.slane %v3435, 2
      %v3438 = vshll.u32 %v3414, 16
      %v3440 = vrot.slane %v3438, 3
      %v3441 = vor.u32 %v3437, %v3440
      %v3443 = vshrl.u32 %v3415, 16
      %v3445 = vrot.slane %v3443, 2
      %v3446 = vshll.u32 %v3415, 16
      %v3448 = vrot.slane %v3446, 3
      %v3449 = vor.u32 %v3445, %v3448
      %v3450 = vsel %vm3433, %v3441, %v3449
      %v3452 = vshrl.u32 %v3416, 16
      %v3454 = vrot.slane %v3452, 2
      %v3455 = vshll.u32 %v3416, 16
      %v3457 = vrot.slane %v3455, 3
      %v3458 = vor.u32 %v3454, %v3457
      %v3459 = vsel %vm3433, %v3449, %v3458
      %v3461 = vshrl.u32 %v3417, 16
      %v3463 = vrot.slane %v3461, 2
      %v3464 = vshll.u32 %v3417, 16
      %v3466 = vrot.slane %v3464, 3
      %v3467 = vor.u32 %v3463, %v3466
      %v3468 = vsel %vm3433, %v3458, %v3467
      %v3470 = vshrl.u32 %v3418, 16
      %v3472 = vrot.slane %v3470, 2
      %v3473 = vshll.u32 %v3418, 16
      %v3475 = vrot.slane %v3473, 3
      %v3476 = vor.u32 %v3472, %v3475
      %v3477 = vsel %vm3433, %v3467, %v3476
      %v3479 = vshrl.u32 %v3419, 16
      %v3481 = vrot.slane %v3479, 2
      %v3482 = vshll.u32 %v3419, 16
      %v3484 = vrot.slane %v3482, 3
      %v3485 = vor.u32 %v3481, %v3484
      %v3486 = vsel %vm3433, %v3476, %v3485
      %v3488 = vshrl.u32 %v3420, 16
      %v3490 = vrot.slane %v3488, 2
      %v3491 = vshll.u32 %v3420, 16
      %v3493 = vrot.slane %v3491, 3
      %v3494 = vor.u32 %v3490, %v3493
      %v3495 = vsel %vm3433, %v3485, %v3494
      %v3497 = vshrl.u32 %v3421, 16
      %v3499 = vrot.slane %v3497, 2
      %v3500 = vshll.u32 %v3421, 16
      %v3502 = vrot.slane %v3500, 3
      %v3503 = vor.u32 %v3499, %v3502
      %v3504 = vsel %vm3433, %v3494, %v3503
      %v3506 = vshrl.u32 %v3422, 16
      %v3508 = vrot.slane %v3506, 2
      %v3509 = vshll.u32 %v3422, 16
      %v3511 = vrot.slane %v3509, 3
      %v3512 = vor.u32 %v3508, %v3511
      %v3513 = vsel %vm3433, %v3503, %v3512
      %v3515 = vshrl.u32 %v3423, 16
      %v3517 = vrot.slane %v3515, 2
      %v3518 = vshll.u32 %v3423, 16
      %v3520 = vrot.slane %v3518, 3
      %v3521 = vor.u32 %v3517, %v3520
      %v3522 = vsel %vm3433, %v3512, %v3521
      %v3524 = vshrl.u32 %v3424, 16
      %v3526 = vrot.slane %v3524, 2
      %v3527 = vshll.u32 %v3424, 16
      %v3529 = vrot.slane %v3527, 3
      %v3530 = vor.u32 %v3526, %v3529
      %v3531 = vsel %vm3433, %v3521, %v3530
      %v3533 = vshrl.u32 %v3425, 16
      %v3535 = vrot.slane %v3533, 2
      %v3536 = vshll.u32 %v3425, 16
      %v3538 = vrot.slane %v3536, 3
      %v3539 = vor.u32 %v3535, %v3538
      %v3540 = vsel %vm3433, %v3530, %v3539
      %v3542 = vshrl.u32 %v3426, 16
      %v3544 = vrot.slane %v3542, 2
      %v3545 = vshll.u32 %v3426, 16
      %v3547 = vrot.slane %v3545, 3
      %v3548 = vor.u32 %v3544, %v3547
      %v3549 = vsel %vm3433, %v3539, %v3548
      %v3551 = vshrl.u32 %v3427, 16
      %v3553 = vrot.slane %v3551, 2
      %v3554 = vshll.u32 %v3427, 16
      %v3556 = vrot.slane %v3554, 3
      %v3557 = vor.u32 %v3553, %v3556
      %v3558 = vsel %vm3433, %v3548, %v3557
      %v3560 = vshrl.u32 %v3428, 16
      %v3562 = vrot.slane %v3560, 2
      %v3563 = vshll.u32 %v3428, 16
      %v3565 = vrot.slane %v3563, 3
      %v3566 = vor.u32 %v3562, %v3565
      %v3567 = vsel %vm3433, %v3557, %v3566
      %v3569 = vshrl.u32 %v3429, 16
      %v3571 = vrot.slane %v3569, 2
      %v3572 = vshll.u32 %v3429, 16
      %v3574 = vrot.slane %v3572, 3
      %v3575 = vor.u32 %v3571, %v3574
      %v3576 = vsel %vm3433, %v3566, %v3575
      %v3578 = vshrl.u32 %v3430, 16
      %v3580 = vrot.slane %v3578, 2
      %v3581 = vshll.u32 %v3430, 16
      %v3583 = vrot.slane %v3581, 3
      %v3584 = vor.u32 %v3580, %v3583
      %v3585 = vsel %vm3433, %v3575, %v3584
      %v3587 = vshrl.u32 %v3431, 16
      %v3589 = vrot.slane %v3587, 2
      %v3590 = vshll.u32 %v3431, 16
      %v3592 = vrot.slane %v3590, 3
      %v3593 = vor.u32 %v3589, %v3592
      %v3594 = vsel %vm3433, %v3584, %v3593
      %v3596 = vshrl.u32 %v3432, 16
      %v3598 = vrot.slane %v3596, 2
      %v3599 = vshll.u32 %v3432, 16
      %v3601 = vrot.slane %v3599, 3
      %v3602 = vor.u32 %v3598, %v3601
      %v3603 = vsel %vm3433, %v3593, %v3602
      %3622 = vst [vmem:[#allocation2 + $0x8] sm:$0xff] %v3450
      %3623 = vst [vmem:[#allocation2 + $0x20] sm:$0xff] %v3459
      %3624 = vst [vmem:[#allocation2 + $0x38] sm:$0xff] %v3468
      %3625 = vst [vmem:[#allocation2 + $0x50] sm:$0xff] %v3477
      %3626 = vst [vmem:[#allocation2 + $0x68] sm:$0xff] %v3486
      %3627 = vst [vmem:[#allocation2 + $0x80] sm:$0xff] %v3495
      %3628 = vst [vmem:[#allocation2 + $0x98] sm:$0xff] %v3504
      %3629 = vst [vmem:[#allocation2 + $0xb0] sm:$0xff] %v3513
      %3630 = vst [vmem:[#allocation2 + $0xc8] sm:$0xff] %v3522
      %3631 = vst [vmem:[#allocation2 + $0xe0] sm:$0xff] %v3531
      %3632 = vst [vmem:[#allocation2 + $0xf8] sm:$0xff] %v3540
      %3633 = vst [vmem:[#allocation2 + $0x110] sm:$0xff] %v3549
      %3634 = vst [vmem:[#allocation2 + $0x128] sm:$0xff] %v3558
      %3635 = vst [vmem:[#allocation2 + $0x140] sm:$0xff] %v3567
      %3636 = vst [vmem:[#allocation2 + $0x158] sm:$0xff] %v3576
      %3637 = vst [vmem:[#allocation2 + $0x170] sm:$0xff] %v3585
      %3638 = vst [vmem:[#allocation2 + $0x188] sm:$0xff] %v3594
      %3639 = vst [vmem:[#allocation2 + $0x1a0] sm:$0xff] %v3603
      %v3640 = vld [vmem:[%s206 + $0x10] sm:$0x8]
      %v3641 = vld [vmem:[%s206 + $0x14] sm:$0xf]
      %v3642 = vld [vmem:[%s206 + $0x18] sm:$0xf]
      %v3643 = vld [vmem:[%s206 + $0x1c] sm:$0xf]
      %v3644 = vld [vmem:[%s206 + $0x20] sm:$0xf]
      %v3645 = vld [vmem:[%s206 + $0x24] sm:$0xf]
      %v3646 = vld [vmem:[%s206 + $0x28] sm:$0xf]
      %v3647 = vld [vmem:[%s206 + $0x2c] sm:$0xf]
      %v3648 = vld [vmem:[%s206 + $0x30] sm:$0xf]
      %v3649 = vld [vmem:[%s206 + $0x34] sm:$0xf]
      %v3650 = vld [vmem:[%s206 + $0x38] sm:$0xf]
      %v3651 = vld [vmem:[%s206 + $0x3c] sm:$0xf]
      %v3652 = vld [vmem:[%s206 + $0x40] sm:$0xf]
      %v3653 = vld [vmem:[%s206 + $0x44] sm:$0xf]
      %v3654 = vld [vmem:[%s206 + $0x48] sm:$0xf]
      %v3655 = vld [vmem:[%s206 + $0x4c] sm:$0xf]
      %v3656 = vld [vmem:[%s206 + $0x50] sm:$0xf]
      %v3657 = vld [vmem:[%s206 + $0x54] sm:$0xf]
      %v3658 = vld [vmem:[%s206 + $0x58] sm:$0xf]
      %v3659 = vld [vmem:[%s206 + $0x5c] sm:$0xf]
      %v3660 = vld [vmem:[%s206 + $0x60] sm:$0xf]
      %v3661 = vld [vmem:[%s206 + $0x64] sm:$0xf]
      %v3662 = vld [vmem:[%s206 + $0x68] sm:$0xf]
      %v3663 = vld [vmem:[%s206 + $0x6c] sm:$0xf]
      %v3664 = vld [vmem:[%s206 + $0x70] sm:$0xf]
      %v3665 = vld [vmem:[%s206 + $0x74] sm:$0xf]
      %v3666 = vld [vmem:[%s206 + $0x78] sm:$0xf]
      %v3667 = vld [vmem:[%s206 + $0x7c] sm:$0xf]
      %v3668 = vld [vmem:[%s206 + $0x80] sm:$0xf]
      %v3669 = vld [vmem:[%s206 + $0x84] sm:$0xf]
      %v3670 = vld [vmem:[%s206 + $0x88] sm:$0xf]
      %v3671 = vld [vmem:[%s206 + $0x8c] sm:$0xf]
      %v3672 = vld [vmem:[%s206 + $0x90] sm:$0xf]
      %v3673 = vld [vmem:[%s206 + $0x94] sm:$0xf]
      %v3674 = vld [vmem:[%s206 + $0x98] sm:$0xf]
      %v3675 = vld [vmem:[%s206 + $0x9c] sm:$0xf]
      %v3676 = vld [vmem:[%s206 + $0xa0] sm:$0x7]
      %v3714 = vunpack.c.l.b16 %v3640
      %v3715 = vunpack.c.l.b16 %v3641
      %v3716 = vunpack.c.l.b16 %v3642
      %v3717 = vunpack.c.l.b16 %v3643
      %v3718 = vunpack.c.l.b16 %v3644
      %v3719 = vunpack.c.l.b16 %v3645
      %v3720 = vunpack.c.l.b16 %v3646
      %v3721 = vunpack.c.l.b16 %v3647
      %v3722 = vunpack.c.l.b16 %v3648
      %v3723 = vunpack.c.l.b16 %v3649
      %v3724 = vunpack.c.l.b16 %v3650
      %v3725 = vunpack.c.l.b16 %v3651
      %v3726 = vunpack.c.l.b16 %v3652
      %v3727 = vunpack.c.l.b16 %v3653
      %v3728 = vunpack.c.l.b16 %v3654
      %v3729 = vunpack.c.l.b16 %v3655
      %v3730 = vunpack.c.l.b16 %v3656
      %v3731 = vunpack.c.l.b16 %v3657
      %v3732 = vunpack.c.l.b16 %v3658
      %v3733 = vunpack.c.l.b16 %v3659
      %v3734 = vunpack.c.l.b16 %v3660
      %v3735 = vunpack.c.l.b16 %v3661
      %v3736 = vunpack.c.l.b16 %v3662
      %v3737 = vunpack.c.l.b16 %v3663
      %v3738 = vunpack.c.l.b16 %v3664
      %v3739 = vunpack.c.l.b16 %v3665
      %v3740 = vunpack.c.l.b16 %v3666
      %v3741 = vunpack.c.l.b16 %v3667
      %v3742 = vunpack.c.l.b16 %v3668
      %v3743 = vunpack.c.l.b16 %v3669
      %v3744 = vunpack.c.l.b16 %v3670
      %v3745 = vunpack.c.l.b16 %v3671
      %v3746 = vunpack.c.l.b16 %v3672
      %v3747 = vunpack.c.l.b16 %v3673
      %v3748 = vunpack.c.l.b16 %v3674
      %v3749 = vunpack.c.l.b16 %v3675
      %v3750 = vunpack.c.l.b16 %v3676
      %v3751 = vpack.c.b16 %v3715, %v3714
      %v3752 = vpack.c.b16 %v3717, %v3716
      %v3753 = vpack.c.b16 %v3719, %v3718
      %v3754 = vpack.c.b16 %v3721, %v3720
      %v3755 = vpack.c.b16 %v3723, %v3722
      %v3756 = vpack.c.b16 %v3725, %v3724
      %v3757 = vpack.c.b16 %v3727, %v3726
      %v3758 = vpack.c.b16 %v3729, %v3728
      %v3759 = vpack.c.b16 %v3731, %v3730
      %v3760 = vpack.c.b16 %v3733, %v3732
      %v3761 = vpack.c.b16 %v3735, %v3734
      %v3762 = vpack.c.b16 %v3737, %v3736
      %v3763 = vpack.c.b16 %v3739, %v3738
      %v3764 = vpack.c.b16 %v3741, %v3740
      %v3765 = vpack.c.b16 %v3743, %v3742
      %v3766 = vpack.c.b16 %v3745, %v3744
      %v3767 = vpack.c.b16 %v3747, %v3746
      %v3768 = vpack.c.b16 %v3749, %v3748
      %v3769 = vpack.c.b16 %v3750, %v3750
      %vm3770 = vcmask 1044480
      %v3771 = vrot.slane %v3751, 3
      %v3772 = vrot.slane %v3752, 3
      %v3773 = vsel %vm3770, %v3771, %v3772
      %v3774 = vrot.slane %v3753, 3
      %v3775 = vsel %vm3770, %v3772, %v3774
      %v3776 = vrot.slane %v3754, 3
      %v3777 = vsel %vm3770, %v3774, %v3776
      %v3778 = vrot.slane %v3755, 3
      %v3779 = vsel %vm3770, %v3776, %v3778
      %v3780 = vrot.slane %v3756, 3
      %v3781 = vsel %vm3770, %v3778, %v3780
      %v3782 = vrot.slane %v3757, 3
      %v3783 = vsel %vm3770, %v3780, %v3782
      %v3784 = vrot.slane %v3758, 3
      %v3785 = vsel %vm3770, %v3782, %v3784
      %v3786 = vrot.slane %v3759, 3
      %v3787 = vsel %vm3770, %v3784, %v3786
      %v3788 = vrot.slane %v3760, 3
      %v3789 = vsel %vm3770, %v3786, %v3788
      %v3790 = vrot.slane %v3761, 3
      %v3791 = vsel %vm3770, %v3788, %v3790
      %v3792 = vrot.slane %v3762, 3
      %v3793 = vsel %vm3770, %v3790, %v3792
      %v3794 = vrot.slane %v3763, 3
      %v3795 = vsel %vm3770, %v3792, %v3794
      %v3796 = vrot.slane %v3764, 3
      %v3797 = vsel %vm3770, %v3794, %v3796
      %v3798 = vrot.slane %v3765, 3
      %v3799 = vsel %vm3770, %v3796, %v3798
      %v3800 = vrot.slane %v3766, 3
      %v3801 = vsel %vm3770, %v3798, %v3800
      %v3802 = vrot.slane %v3767, 3
      %v3803 = vsel %vm3770, %v3800, %v3802
      %v3804 = vrot.slane %v3768, 3
      %v3805 = vsel %vm3770, %v3802, %v3804
      %v3806 = vrot.slane %v3769, 3
      %v3807 = vsel %vm3770, %v3804, %v3806
      %3826 = vst [vmem:[#allocation2 + $0x10] sm:$0xff] %v3773
      %3827 = vst [vmem:[#allocation2 + $0x28] sm:$0xff] %v3775
      %3828 = vst [vmem:[#allocation2 + $0x40] sm:$0xff] %v3777
      %3829 = vst [vmem:[#allocation2 + $0x58] sm:$0xff] %v3779
      %3830 = vst [vmem:[#allocation2 + $0x70] sm:$0xff] %v3781
      %3831 = vst [vmem:[#allocation2 + $0x88] sm:$0xff] %v3783
      %3832 = vst [vmem:[#allocation2 + $0xa0] sm:$0xff] %v3785
      %3833 = vst [vmem:[#allocation2 + $0xb8] sm:$0xff] %v3787
      %3834 = vst [vmem:[#allocation2 + $0xd0] sm:$0xff] %v3789
      %3835 = vst [vmem:[#allocation2 + $0xe8] sm:$0xff] %v3791
      %3836 = vst [vmem:[#allocation2 + $0x100] sm:$0xff] %v3793
      %3837 = vst [vmem:[#allocation2 + $0x118] sm:$0xff] %v3795
      %3838 = vst [vmem:[#allocation2 + $0x130] sm:$0xff] %v3797
      %3839 = vst [vmem:[#allocation2 + $0x148] sm:$0xff] %v3799
      %3840 = vst [vmem:[#allocation2 + $0x160] sm:$0xff] %v3801
      %3841 = vst [vmem:[#allocation2 + $0x178] sm:$0xff] %v3803
      %3842 = vst [vmem:[#allocation2 + $0x190] sm:$0xff] %v3805
      %3843 = vst [vmem:[#allocation2 + $0x1a8] sm:$0xff] %v3807
      %v3844 = vld [vmem:[#allocation3] sm:$0xff]
      %v3845 = vld [vmem:[#allocation3 + $0x8] sm:$0xff]
      %v3846 = vld [vmem:[#allocation3 + $0x10] sm:$0xff]
      %v3847 = vld [vmem:[#allocation3 + $0x18] sm:$0xff]
      %v3848 = vld [vmem:[#allocation3 + $0x20] sm:$0xff]
      %v3849 = vld [vmem:[#allocation3 + $0x28] sm:$0xff]
      %v3850 = vld [vmem:[#allocation3 + $0x30] sm:$0xff]
      %v3851 = vld [vmem:[#allocation3 + $0x38] sm:$0xff]
      %v3852 = vld [vmem:[#allocation3 + $0x40] sm:$0xff]
      %v3853 = vld [vmem:[#allocation3 + $0x48] sm:$0xff]
      %v3854 = vld [vmem:[#allocation3 + $0x50] sm:$0xff]
      %v3855 = vld [vmem:[#allocation3 + $0x58] sm:$0xff]
      %v3856 = vld [vmem:[#allocation3 + $0x60] sm:$0xff]
      %v3857 = vld [vmem:[#allocation3 + $0x68] sm:$0xff]
      %v3858 = vld [vmem:[#allocation3 + $0x70] sm:$0xff]
      %v3859 = vld [vmem:[#allocation3 + $0x78] sm:$0xff]
      %v3860 = vld [vmem:[#allocation3 + $0x80] sm:$0xff]
      %v3861 = vld [vmem:[#allocation3 + $0x88] sm:$0xff]
      %v3862 = vld [vmem:[#allocation3 + $0x90] sm:$0xff]
      %v3863 = vld [vmem:[#allocation3 + $0x98] sm:$0xff]
      %v3864 = vld [vmem:[#allocation3 + $0xa0] sm:$0xff]
      %v3865 = vld [vmem:[#allocation3 + $0xa8] sm:$0xff]
      %v3866 = vld [vmem:[#allocation3 + $0xb0] sm:$0xff]
      %v3867 = vld [vmem:[#allocation3 + $0xb8] sm:$0xff]
      %v3868 = vld [vmem:[#allocation3 + $0xc0] sm:$0xff]
      %v3869 = vld [vmem:[#allocation3 + $0xc8] sm:$0xff]
      %v3870 = vld [vmem:[#allocation3 + $0xd0] sm:$0xff]
      %v3871 = vld [vmem:[#allocation3 + $0xd8] sm:$0xff]
      %v3872 = vld [vmem:[#allocation3 + $0xe0] sm:$0xff]
      %v3873 = vld [vmem:[#allocation3 + $0xe8] sm:$0xff]
      %v3874 = vld [vmem:[#allocation3 + $0xf0] sm:$0xff]
      %v3875 = vld [vmem:[#allocation3 + $0xf8] sm:$0xff]
      %v3876 = vld [vmem:[#allocation3 + $0x100] sm:$0xff]
      %v3877 = vld [vmem:[#allocation3 + $0x108] sm:$0xff]
      %v3878 = vld [vmem:[#allocation3 + $0x110] sm:$0xff]
      %v3879 = vld [vmem:[#allocation3 + $0x118] sm:$0xff]
      %v3880 = vld [vmem:[#allocation2] sm:$0xff]
      %v3881 = vld [vmem:[#allocation2 + $0x8] sm:$0xff]
      %v3882 = vld [vmem:[#allocation2 + $0x10] sm:$0xff]
      %v3883 = vld [vmem:[#allocation2 + $0x18] sm:$0xff]
      %v3884 = vld [vmem:[#allocation2 + $0x20] sm:$0xff]
      %v3885 = vld [vmem:[#allocation2 + $0x28] sm:$0xff]
      %v3886 = vld [vmem:[#allocation2 + $0x30] sm:$0xff]
      %v3887 = vld [vmem:[#allocation2 + $0x38] sm:$0xff]
      %v3888 = vld [vmem:[#allocation2 + $0x40] sm:$0xff]
      %v3889 = vld [vmem:[#allocation2 + $0x48] sm:$0xff]
      %v3890 = vld [vmem:[#allocation2 + $0x50] sm:$0xff]
      %v3891 = vld [vmem:[#allocation2 + $0x58] sm:$0xff]
      %v3892 = vld [vmem:[#allocation2 + $0x60] sm:$0xff]
      %v3893 = vld [vmem:[#allocation2 + $0x68] sm:$0xff]
      %v3894 = vld [vmem:[#allocation2 + $0x70] sm:$0xff]
      %v3895 = vld [vmem:[#allocation2 + $0x78] sm:$0xff]
      %v3896 = vld [vmem:[#allocation2 + $0x80] sm:$0xff]
      %v3897 = vld [vmem:[#allocation2 + $0x88] sm:$0xff]
      %v3898 = vld [vmem:[#allocation2 + $0x90] sm:$0xff]
      %v3899 = vld [vmem:[#allocation2 + $0x98] sm:$0xff]
      %v3900 = vld [vmem:[#allocation2 + $0xa0] sm:$0xff]
      %v3901 = vld [vmem:[#allocation2 + $0xa8] sm:$0xff]
      %v3902 = vld [vmem:[#allocation2 + $0xb0] sm:$0xff]
      %v3903 = vld [vmem:[#allocation2 + $0xb8] sm:$0xff]
      %v3904 = vld [vmem:[#allocation2 + $0xc0] sm:$0xff]
      %v3905 = vld [vmem:[#allocation2 + $0xc8] sm:$0xff]
      %v3906 = vld [vmem:[#allocation2 + $0xd0] sm:$0xff]
      %v3907 = vld [vmem:[#allocation2 + $0xd8] sm:$0xff]
      %v3908 = vld [vmem:[#allocation2 + $0xe0] sm:$0xff]
      %v3909 = vld [vmem:[#allocation2 + $0xe8] sm:$0xff]
      %v3910 = vld [vmem:[#allocation2 + $0xf0] sm:$0xff]
      %v3911 = vld [vmem:[#allocation2 + $0xf8] sm:$0xff]
      %v3912 = vld [vmem:[#allocation2 + $0x100] sm:$0xff]
      %v3913 = vld [vmem:[#allocation2 + $0x108] sm:$0xff]
      %v3914 = vld [vmem:[#allocation2 + $0x110] sm:$0xff]
      %v3915 = vld [vmem:[#allocation2 + $0x118] sm:$0xff]
      %v3916 = vld [vmem:[#allocation2 + $0x120] sm:$0xff]
      %v3917 = vld [vmem:[#allocation2 + $0x128] sm:$0xff]
      %v3918 = vld [vmem:[#allocation2 + $0x130] sm:$0xff]
      %v3919 = vld [vmem:[#allocation2 + $0x138] sm:$0xff]
      %v3920 = vld [vmem:[#allocation2 + $0x140] sm:$0xff]
      %v3921 = vld [vmem:[#allocation2 + $0x148] sm:$0xff]
      %v3922 = vld [vmem:[#allocation2 + $0x150] sm:$0xff]
      %v3923 = vld [vmem:[#allocation2 + $0x158] sm:$0xff]
      %v3924 = vld [vmem:[#allocation2 + $0x160] sm:$0xff]
      %v3925 = vld [vmem:[#allocation2 + $0x168] sm:$0xff]
      %v3926 = vld [vmem:[#allocation2 + $0x170] sm:$0xff]
      %v3927 = vld [vmem:[#allocation2 + $0x178] sm:$0xff]
      %v3928 = vld [vmem:[#allocation2 + $0x180] sm:$0xff]
      %v3929 = vld [vmem:[#allocation2 + $0x188] sm:$0xff]
      %v3930 = vld [vmem:[#allocation2 + $0x190] sm:$0xff]
      %v3931 = vld [vmem:[#allocation2 + $0x198] sm:$0xff]
      %v3932 = vld [vmem:[#allocation2 + $0x1a0] sm:$0xff]
      %v3933 = vld [vmem:[#allocation2 + $0x1a8] sm:$0xff]
      %v3934 = vld [vmem:[%s1 + $0x180] sm:$0xf]
      %v3935 = vld [vmem:[%s1 + $0x184] sm:$0xf]
      %v3936 = vld [vmem:[%s1 + $0x188] sm:$0xf]
      %v3937 = vld [vmem:[%s1 + $0x18c] sm:$0xf]
      %v3938 = vld [vmem:[%s1 + $0x190] sm:$0xf]
      %v3939 = vld [vmem:[%s1 + $0x194] sm:$0xf]
      %v3940 = vld [vmem:[%s1 + $0x198] sm:$0xf]
      %v3941 = vld [vmem:[%s1 + $0x19c] sm:$0xf]
      %v3942 = vld [vmem:[%s1 + $0x1a0] sm:$0xf]
      %v3943 = vld [vmem:[%s1 + $0x1a4] sm:$0xf]
      %v3944 = vld [vmem:[%s1 + $0x1a8] sm:$0xf]
      %v3945 = vld [vmem:[%s1 + $0x1ac] sm:$0xf]
      %v3946 = vld [vmem:[%s1 + $0x1b0] sm:$0xf]
      %v3947 = vld [vmem:[%s1 + $0x1b4] sm:$0xf]
      %v3948 = vld [vmem:[%s1 + $0x1b8] sm:$0xf]
      %v3949 = vld [vmem:[%s1 + $0x1bc] sm:$0xf]
      %v3950 = vld [vmem:[%s1 + $0x1c0] sm:$0xf]
      %v3951 = vld [vmem:[%s1 + $0x1c4] sm:$0xf]
      %v3952 = vld [vmem:[%s1 + $0x1c8] sm:$0xf]
      %v3953 = vld [vmem:[%s1 + $0x1cc] sm:$0xf]
      %v3954 = vld [vmem:[%s1 + $0x1d0] sm:$0xf]
      %v3955 = vld [vmem:[%s1 + $0x1d4] sm:$0xf]
      %v3956 = vld [vmem:[%s1 + $0x1d8] sm:$0xf]
      %v3957 = vld [vmem:[%s1 + $0x1dc] sm:$0xf]
      %v3958 = vld [vmem:[%s1 + $0x1e0] sm:$0xf]
      %v3959 = vld [vmem:[%s1 + $0x1e4] sm:$0xf]
      %v3960 = vld [vmem:[%s1 + $0x1e8] sm:$0xf]
      %v3961 = vld [vmem:[%s1 + $0x1ec] sm:$0xf]
      %v3962 = vld [vmem:[%s1 + $0x1f0] sm:$0xf]
      %v3963 = vld [vmem:[%s1 + $0x1f4] sm:$0xf]
      %v3964 = vld [vmem:[%s1 + $0x1f8] sm:$0xf]
      %v3965 = vld [vmem:[%s1 + $0x1fc] sm:$0xf]
      %v3966 = vld [vmem:[%s1 + $0x200] sm:$0xf]
      %v3967 = vld [vmem:[%s1 + $0x204] sm:$0xf]
      %v3968 = vld [vmem:[%s1 + $0x208] sm:$0xf]
      %v3969 = vld [vmem:[%s1 + $0x20c] sm:$0xf]
      %v3970 = vld [vmem:[%s1 + $0x210] sm:$0xf]
      %v3971 = vld [vmem:[%s1 + $0x214] sm:$0xf]
      %v3972 = vld [vmem:[%s1 + $0x218] sm:$0xf]
      %v3973 = vld [vmem:[%s1 + $0x21c] sm:$0xf]
      %v3974 = vld [vmem:[%s1 + $0x220] sm:$0xf]
      %v3975 = vld [vmem:[%s1 + $0x224] sm:$0xf]
      %v3976 = vld [vmem:[%s1 + $0x228] sm:$0xf]
      %v3977 = vld [vmem:[%s1 + $0x22c] sm:$0xf]
      %v3978 = vld [vmem:[%s1 + $0x230] sm:$0xf]
      %v3979 = vld [vmem:[%s1 + $0x234] sm:$0xf]
      %v3980 = vld [vmem:[%s1 + $0x238] sm:$0xf]
      %v3981 = vld [vmem:[%s1 + $0x23c] sm:$0xf]
      %v4030 = vunpack.c.l.b16 %v3934
      %v4031 = vunpack.c.l.b16 %v3935
      %v4032 = vunpack.c.l.b16 %v3936
      %v4033 = vunpack.c.l.b16 %v3937
      %v4034 = vunpack.c.l.b16 %v3938
      %v4035 = vunpack.c.l.b16 %v3939
      %v4036 = vunpack.c.l.b16 %v3940
      %v4037 = vunpack.c.l.b16 %v3941
      %v4038 = vunpack.c.l.b16 %v3942
      %v4039 = vunpack.c.l.b16 %v3943
      %v4040 = vunpack.c.l.b16 %v3944
      %v4041 = vunpack.c.l.b16 %v3945
      %v4042 = vunpack.c.l.b16 %v3946
      %v4043 = vunpack.c.l.b16 %v3947
      %v4044 = vunpack.c.l.b16 %v3948
      %v4045 = vunpack.c.l.b16 %v3949
      %v4046 = vunpack.c.l.b16 %v3950
      %v4047 = vunpack.c.l.b16 %v3951
      %v4048 = vunpack.c.l.b16 %v3952
      %v4049 = vunpack.c.l.b16 %v3953
      %v4050 = vunpack.c.l.b16 %v3954
      %v4051 = vunpack.c.l.b16 %v3955
      %v4052 = vunpack.c.l.b16 %v3956
      %v4053 = vunpack.c.l.b16 %v3957
      %v4054 = vunpack.c.l.b16 %v3958
      %v4055 = vunpack.c.l.b16 %v3959
      %v4056 = vunpack.c.l.b16 %v3960
      %v4057 = vunpack.c.l.b16 %v3961
      %v4058 = vunpack.c.l.b16 %v3962
      %v4059 = vunpack.c.l.b16 %v3963
      %v4060 = vunpack.c.l.b16 %v3964
      %v4061 = vunpack.c.l.b16 %v3965
      %v4062 = vunpack.c.l.b16 %v3966
      %v4063 = vunpack.c.l.b16 %v3967
      %v4064 = vunpack.c.l.b16 %v3968
      %v4065 = vunpack.c.l.b16 %v3969
      %v4066 = vunpack.c.l.b16 %v3970
      %v4067 = vunpack.c.l.b16 %v3971
      %v4068 = vunpack.c.l.b16 %v3972
      %v4069 = vunpack.c.l.b16 %v3973
      %v4070 = vunpack.c.l.b16 %v3974
      %v4071 = vunpack.c.l.b16 %v3975
      %v4072 = vunpack.c.l.b16 %v3976
      %v4073 = vunpack.c.l.b16 %v3977
      %v4074 = vunpack.c.l.b16 %v3978
      %v4075 = vunpack.c.l.b16 %v3979
      %v4076 = vunpack.c.l.b16 %v3980
      %v4077 = vunpack.c.l.b16 %v3981
      %v4078 = vpack.c.b16 %v4031, %v4030
      %v4079 = vpack.c.b16 %v4033, %v4032
      %v4080 = vpack.c.b16 %v4035, %v4034
      %v4081 = vpack.c.b16 %v4037, %v4036
      %v4082 = vpack.c.b16 %v4039, %v4038
      %v4083 = vpack.c.b16 %v4041, %v4040
      %v4084 = vpack.c.b16 %v4043, %v4042
      %v4085 = vpack.c.b16 %v4045, %v4044
      %v4086 = vpack.c.b16 %v4047, %v4046
      %v4087 = vpack.c.b16 %v4049, %v4048
      %v4088 = vpack.c.b16 %v4051, %v4050
      %v4089 = vpack.c.b16 %v4053, %v4052
      %v4090 = vpack.c.b16 %v4055, %v4054
      %v4091 = vpack.c.b16 %v4057, %v4056
      %v4092 = vpack.c.b16 %v4059, %v4058
      %v4093 = vpack.c.b16 %v4061, %v4060
      %v4094 = vpack.c.b16 %v4063, %v4062
      %v4095 = vpack.c.b16 %v4065, %v4064
      %v4096 = vpack.c.b16 %v4067, %v4066
      %v4097 = vpack.c.b16 %v4069, %v4068
      %v4098 = vpack.c.b16 %v4071, %v4070
      %v4099 = vpack.c.b16 %v4073, %v4072
      %v4100 = vpack.c.b16 %v4075, %v4074
      %v4101 = vpack.c.b16 %v4077, %v4076
      %4126 = vmatprep.subr.bf16.mxu0 0
      %4127 = vmatpush1.bf16.msra.mxu0 %v4078
      %4128 = vmatprep.subr.bf16.mxu0 0
      %4129 = vmatpush1.bf16.msra.mxu0 %v4079
      %4130 = vmatprep.subr.bf16.mxu0 0
      %4131 = vmatpush1.bf16.msra.mxu0 %v4080
      %4132 = vmatprep.subr.bf16.mxu0 0
      %4133 = vmatpush1.bf16.msra.mxu0 %v4081
      %4134 = vmatprep.subr.bf16.mxu0 0
      %4135 = vmatpush1.bf16.msra.mxu0 %v4082
      %4136 = vmatprep.subr.bf16.mxu0 0
      %4137 = vmatpush1.bf16.msra.mxu0 %v4083
      %4138 = vmatprep.subr.bf16.mxu0 0
      %4139 = vmatpush1.bf16.msra.mxu0 %v4084
      %4140 = vmatprep.subr.bf16.mxu0 0
      %4141 = vmatpush1.bf16.msra.mxu0 %v4085
      %4142 = vmatprep.subr.bf16.mxu0 0
      %4143 = vmatpush1.bf16.msra.mxu0 %v4086
      %4144 = vmatprep.subr.bf16.mxu0 0
      %4145 = vmatpush1.bf16.msra.mxu0 %v4087
      %4146 = vmatprep.subr.bf16.mxu0 0
      %4147 = vmatpush1.bf16.msra.mxu0 %v4088
      %4148 = vmatprep.subr.bf16.mxu0 0
      %4149 = vmatpush1.bf16.msra.mxu0 %v4089
      %4150 = vmatprep.subr.bf16.mxu0 0
      %4151 = vmatpush1.bf16.msra.mxu0 %v4090
      %4152 = vmatprep.subr.bf16.mxu0 0
      %4153 = vmatpush1.bf16.msra.mxu0 %v4091
      %4154 = vmatprep.subr.bf16.mxu0 0
      %4155 = vmatpush1.bf16.msra.mxu0 %v4092
      %4156 = vmatprep.subr.bf16.mxu0 0
      %4157 = vmatpush1.bf16.msra.mxu0 %v4093
      %4158 = vmatprep.mubr.bf16.mxu0 %v3881
      %4159 = vmatmul.mubr.bf16.gmra.mrb[0].mxu0 %v3880
      %v4160 = vpop.f32.mrb[0].mxu0
      %v4161 = vadd.f32 0.0, %v4160
      %v4162 = vpop.f32.mrb[0].mxu0
      %v4163 = vpop.f32.mrb[0].mxu0
      %v4164 = vadd.f32 0.0, %v4163
      %v4165 = vpop.f32.mrb[0].mxu0
      %4166 = vmatprep.mubr.bf16.mxu0 %v3884
      %4167 = vmatmul.mubr.bf16.gmra.mrb[0].mxu0 %v3883
      %v4168 = vpop.f32.mrb[0].mxu0
      %v4169 = vadd.f32 0.0, %v4168
      %v4170 = vpop.f32.mrb[0].mxu0
      %v4171 = vpop.f32.mrb[0].mxu0
      %v4172 = vadd.f32 0.0, %v4171
      %v4173 = vpop.f32.mrb[0].mxu0
      %4174 = vmatprep.mubr.bf16.mxu0 %v3887
      %4175 = vmatmul.mubr.bf16.gmra.mrb[0].mxu0 %v3886
      %v4176 = vpop.f32.mrb[0].mxu0
      %v4177 = vadd.f32 0.0, %v4176
      %v4178 = vpop.f32.mrb[0].mxu0
      %v4179 = vpop.f32.mrb[0].mxu0
      %v4180 = vadd.f32 0.0, %v4179
      %v4181 = vpop.f32.mrb[0].mxu0
      %4182 = vmatprep.mubr.bf16.mxu0 %v3890
      %4183 = vmatmul.mubr.bf16.gmra.mrb[0].mxu0 %v3889
      %v4184 = vpop.f32.mrb[0].mxu0
      %v4185 = vadd.f32 0.0, %v4184
      %v4186 = vpop.f32.mrb[0].mxu0
      %v4187 = vpop.f32.mrb[0].mxu0
      %v4188 = vadd.f32 0.0, %v4187
      %v4189 = vpop.f32.mrb[0].mxu0
      %4190 = vmatprep.mubr.bf16.mxu0 %v3893
      %4191 = vmatmul.mubr.bf16.gmra.mrb[0].mxu0 %v3892
      %v4192 = vpop.f32.mrb[0].mxu0
      %v4193 = vadd.f32 0.0, %v4192
      %v4194 = vpop.f32.mrb[0].mxu0
      %v4195 = vpop.f32.mrb[0].mxu0
      %v4196 = vadd.f32 0.0, %v4195
      %v4197 = vpop.f32.mrb[0].mxu0
      %4198 = vmatprep.mubr.bf16.mxu0 %v3896
      %4199 = vmatmul.mubr.bf16.gmra.mrb[0].mxu0 %v3895
      %v4200 = vpop.f32.mrb[0].mxu0
      %v4201 = vadd.f32 0.0, %v4200
      %v4202 = vpop.f32.mrb[0].mxu0
      %v4203 = vpop.f32.mrb[0].mxu0
      %v4204 = vadd.f32 0.0, %v4203
      %v4205 = vpop.f32.mrb[0].mxu0
      %4206 = vmatprep.mubr.bf16.mxu0 %v3899
      %4207 = vmatmul.mubr.bf16.gmra.mrb[0].mxu0 %v3898
      %v4208 = vpop.f32.mrb[0].mxu0
      %v4209 = vadd.f32 0.0, %v4208
      %v4210 = vpop.f32.mrb[0].mxu0
      %v4211 = vpop.f32.mrb[0].mxu0
      %v4212 = vadd.f32 0.0, %v4211
      %v4213 = vpop.f32.mrb[0].mxu0
      %4214 = vmatprep.mubr.bf16.mxu0 %v3902
      %4215 = vmatmul.mubr.bf16.gmra.mrb[0].mxu0 %v3901
      %v4216 = vpop.f32.mrb[0].mxu0
      %v4217 = vadd.f32 0.0, %v4216
      %v4218 = vpop.f32.mrb[0].mxu0
      %v4219 = vpop.f32.mrb[0].mxu0
      %v4220 = vadd.f32 0.0, %v4219
      %v4221 = vpop.f32.mrb[0].mxu0
      %4222 = vmatprep.mubr.bf16.mxu0 %v3905
      %4223 = vmatmul.mubr.bf16.gmra.mrb[0].mxu0 %v3904
      %v4224 = vpop.f32.mrb[0].mxu0
      %v4225 = vadd.f32 0.0, %v4224
      %v4226 = vpop.f32.mrb[0].mxu0
      %v4227 = vpop.f32.mrb[0].mxu0
      %v4228 = vadd.f32 0.0, %v4227
      %v4229 = vpop.f32.mrb[0].mxu0
      %4230 = vmatprep.mubr.bf16.mxu0 %v3908
      %4231 = vmatmul.mubr.bf16.gmra.mrb[0].mxu0 %v3907
      %v4232 = vpop.f32.mrb[0].mxu0
      %v4233 = vadd.f32 0.0, %v4232
      %v4234 = vpop.f32.mrb[0].mxu0
      %v4235 = vpop.f32.mrb[0].mxu0
      %v4236 = vadd.f32 0.0, %v4235
      %v4237 = vpop.f32.mrb[0].mxu0
      %4238 = vmatprep.mubr.bf16.mxu0 %v3911
      %4239 = vmatmul.mubr.bf16.gmra.mrb[0].mxu0 %v3910
      %v4240 = vpop.f32.mrb[0].mxu0
      %v4241 = vadd.f32 0.0, %v4240
      %v4242 = vpop.f32.mrb[0].mxu0
      %v4243 = vpop.f32.mrb[0].mxu0
      %v4244 = vadd.f32 0.0, %v4243
      %v4245 = vpop.f32.mrb[0].mxu0
      %4246 = vmatprep.mubr.bf16.mxu0 %v3914
      %4247 = vmatmul.mubr.bf16.gmra.mrb[0].mxu0 %v3913
      %v4248 = vpop.f32.mrb[0].mxu0
      %v4249 = vadd.f32 0.0, %v4248
      %v4250 = vpop.f32.mrb[0].mxu0
      %v4251 = vpop.f32.mrb[0].mxu0
      %v4252 = vadd.f32 0.0, %v4251
      %v4253 = vpop.f32.mrb[0].mxu0
      %4254 = vmatprep.mubr.bf16.mxu0 %v3917
      %4255 = vmatmul.mubr.bf16.gmra.mrb[0].mxu0 %v3916
      %v4256 = vpop.f32.mrb[0].mxu0
      %v4257 = vadd.f32 0.0, %v4256
      %v4258 = vpop.f32.mrb[0].mxu0
      %v4259 = vpop.f32.mrb[0].mxu0
      %v4260 = vadd.f32 0.0, %v4259
      %v4261 = vpop.f32.mrb[0].mxu0
      %4262 = vmatprep.mubr.bf16.mxu0 %v3920
      %4263 = vmatmul.mubr.bf16.gmra.mrb[0].mxu0 %v3919
      %v4264 = vpop.f32.mrb[0].mxu0
      %v4265 = vadd.f32 0.0, %v4264
      %v4266 = vpop.f32.mrb[0].mxu0
      %v4267 = vpop.f32.mrb[0].mxu0
      %v4268 = vadd.f32 0.0, %v4267
      %v4269 = vpop.f32.mrb[0].mxu0
      %4270 = vmatprep.mubr.bf16.mxu0 %v3923
      %4271 = vmatmul.mubr.bf16.gmra.mrb[0].mxu0 %v3922
      %v4272 = vpop.f32.mrb[0].mxu0
      %v4273 = vadd.f32 0.0, %v4272
      %v4274 = vpop.f32.mrb[0].mxu0
      %v4275 = vpop.f32.mrb[0].mxu0
      %v4276 = vadd.f32 0.0, %v4275
      %v4277 = vpop.f32.mrb[0].mxu0
      %4278 = vmatprep.mubr.bf16.mxu0 %v3926
      %4279 = vmatmul.mubr.bf16.gmra.mrb[0].mxu0 %v3925
      %v4280 = vpop.f32.mrb[0].mxu0
      %v4281 = vadd.f32 0.0, %v4280
      %v4282 = vpop.f32.mrb[0].mxu0
      %v4283 = vpop.f32.mrb[0].mxu0
      %v4284 = vadd.f32 0.0, %v4283
      %v4285 = vpop.f32.mrb[0].mxu0
      %4286 = vmatprep.mubr.bf16.mxu0 %v3929
      %4287 = vmatmul.mubr.bf16.gmra.mrb[0].mxu0 %v3928
      %v4288 = vpop.f32.mrb[0].mxu0
      %v4289 = vadd.f32 0.0, %v4288
      %v4290 = vpop.f32.mrb[0].mxu0
      %v4291 = vpop.f32.mrb[0].mxu0
      %v4292 = vadd.f32 0.0, %v4291
      %v4293 = vpop.f32.mrb[0].mxu0
      %4294 = vmatprep.mubr.bf16.mxu0 %v3932
      %4295 = vmatmul.mubr.bf16.gmra.mrb[0].mxu0 %v3931
      %v4296 = vpop.f32.mrb[0].mxu0
      %v4297 = vadd.f32 0.0, %v4296
      %v4298 = vpop.f32.mrb[0].mxu0
      %v4299 = vpop.f32.mrb[0].mxu0
      %v4300 = vadd.f32 0.0, %v4299
      %v4301 = vpop.f32.mrb[0].mxu0
      %4302 = vdwg.mxu0
      %4303 = vmatprep.subr.bf16.mxu0 0
      %4304 = vmatpush1.bf16.msra.mxu0 %v4094
      %4305 = vmatprep.subr.bf16.mxu0 0
      %4306 = vmatpush1.bf16.msra.mxu0 %v4095
      %4307 = vmatprep.subr.bf16.mxu0 0
      %4308 = vmatpush1.bf16.msra.mxu0 %v4096
      %4309 = vmatprep.subr.bf16.mxu0 0
      %4310 = vmatpush1.bf16.msra.mxu0 %v4097
      %4311 = vmatprep.subr.bf16.mxu0 0
      %4312 = vmatpush1.bf16.msra.mxu0 %v4098
      %4313 = vmatprep.subr.bf16.mxu0 0
      %4314 = vmatpush1.bf16.msra.mxu0 %v4099
      %4315 = vmatprep.subr.bf16.mxu0 0
      %4316 = vmatpush1.bf16.msra.mxu0 %v4100
      %4317 = vmatprep.subr.bf16.mxu0 0
      %4318 = vmatpush1.bf16.msra.mxu0 %v4101
      %4319 = vmatprep.subr.bf16.mxu0 0
      %4320 = vmatpush1.bf16.msra.mxu0 0
      %4321 = vmatprep.subr.bf16.mxu0 0
      %4322 = vmatpush1.bf16.msra.mxu0 0
      %4323 = vmatprep.subr.bf16.mxu0 0
      %4324 = vmatpush1.bf16.msra.mxu0 0
      %4325 = vmatprep.subr.bf16.mxu0 0
      %4326 = vmatpush1.bf16.msra.mxu0 0
      %4327 = vmatprep.subr.bf16.mxu0 0
      %4328 = vmatpush1.bf16.msra.mxu0 0
      %4329 = vmatprep.subr.bf16.mxu0 0
      %4330 = vmatpush1.bf16.msra.mxu0 0
      %4331 = vmatprep.subr.bf16.mxu0 0
      %4332 = vmatpush1.bf16.msra.mxu0 0
      %4333 = vmatprep.subr.bf16.mxu0 0
      %4334 = vmatpush1.bf16.msra.mxu0 0
      %4335 = vmatprep.mubr.bf16.mxu0 0
      %4336 = vmatmul.mubr.bf16.gmra.mrb[0].mxu0 %v3882
      %v4337 = vpop.f32.mrb[0].mxu0
      %v4338 = vadd.f32 %v4161, %v4337
      %v4339 = vpop.f32.mrb[0].mxu0
      %v4340 = vpop.f32.mrb[0].mxu0
      %v4341 = vadd.f32 %v4164, %v4340
      %v4342 = vpop.f32.mrb[0].mxu0
      %4343 = vmatprep.mubr.bf16.mxu0 0
      %4344 = vmatmul.mubr.bf16.gmra.mrb[0].mxu0 %v3885
      %v4345 = vpop.f32.mrb[0].mxu0
      %v4346 = vadd.f32 %v4169, %v4345
      %v4347 = vpop.f32.mrb[0].mxu0
      %v4348 = vpop.f32.mrb[0].mxu0
      %v4349 = vadd.f32 %v4172, %v4348
      %v4350 = vpop.f32.mrb[0].mxu0
      %4351 = vmatprep.mubr.bf16.mxu0 0
      %4352 = vmatmul.mubr.bf16.gmra.mrb[0].mxu0 %v3888
      %v4353 = vpop.f32.mrb[0].mxu0
      %v4354 = vadd.f32 %v4177, %v4353
      %v4355 = vpop.f32.mrb[0].mxu0
      %v4356 = vpop.f32.mrb[0].mxu0
      %v4357 = vadd.f32 %v4180, %v4356
      %v4358 = vpop.f32.mrb[0].mxu0
      %4359 = vmatprep.mubr.bf16.mxu0 0
      %4360 = vmatmul.mubr.bf16.gmra.mrb[0].mxu0 %v3891
      %v4361 = vpop.f32.mrb[0].mxu0
      %v4362 = vadd.f32 %v4185, %v4361
      %v4363 = vpop.f32.mrb[0].mxu0
      %v4364 = vpop.f32.mrb[0].mxu0
      %v4365 = vadd.f32 %v4188, %v4364
      %v4366 = vpop.f32.mrb[0].mxu0
      %4367 = vmatprep.mubr.bf16.mxu0 0
      %4368 = vmatmul.mubr.bf16.gmra.mrb[0].mxu0 %v3894
      %v4369 = vpop.f32.mrb[0].mxu0
      %v4370 = vadd.f32 %v4193, %v4369
      %v4371 = vpop.f32.mrb[0].mxu0
      %v4372 = vpop.f32.mrb[0].mxu0
      %v4373 = vadd.f32 %v4196, %v4372
      %v4374 = vpop.f32.mrb[0].mxu0
      %4375 = vmatprep.mubr.bf16.mxu0 0
      %4376 = vmatmul.mubr.bf16.gmra.mrb[0].mxu0 %v3897
      %v4377 = vpop.f32.mrb[0].mxu0
      %v4378 = vadd.f32 %v4201, %v4377
      %v4379 = vpop.f32.mrb[0].mxu0
      %v4380 = vpop.f32.mrb[0].mxu0
      %v4381 = vadd.f32 %v4204, %v4380
      %v4382 = vpop.f32.mrb[0].mxu0
      %4383 = vmatprep.mubr.bf16.mxu0 0
      %4384 = vmatmul.mubr.bf16.gmra.mrb[0].mxu0 %v3900
      %v4385 = vpop.f32.mrb[0].mxu0
      %v4386 = vadd.f32 %v4209, %v4385
      %v4387 = vpop.f32.mrb[0].mxu0
      %v4388 = vpop.f32.mrb[0].mxu0
      %v4389 = vadd.f32 %v4212, %v4388
      %v4390 = vpop.f32.mrb[0].mxu0
      %4391 = vmatprep.mubr.bf16.mxu0 0
      %4392 = vmatmul.mubr.bf16.gmra.mrb[0].mxu0 %v3903
      %v4393 = vpop.f32.mrb[0].mxu0
      %v4394 = vadd.f32 %v4217, %v4393
      %v4395 = vpop.f32.mrb[0].mxu0
      %v4396 = vpop.f32.mrb[0].mxu0
      %v4397 = vadd.f32 %v4220, %v4396
      %v4398 = vpop.f32.mrb[0].mxu0
      %4399 = vmatprep.mubr.bf16.mxu0 0
      %4400 = vmatmul.mubr.bf16.gmra.mrb[0].mxu0 %v3906
      %v4401 = vpop.f32.mrb[0].mxu0
      %v4402 = vadd.f32 %v4225, %v4401
      %v4403 = vpop.f32.mrb[0].mxu0
      %v4404 = vpop.f32.mrb[0].mxu0
      %v4405 = vadd.f32 %v4228, %v4404
      %v4406 = vpop.f32.mrb[0].mxu0
      %4407 = vmatprep.mubr.bf16.mxu0 0
      %4408 = vmatmul.mubr.bf16.gmra.mrb[0].mxu0 %v3909
      %v4409 = vpop.f32.mrb[0].mxu0
      %v4410 = vadd.f32 %v4233, %v4409
      %v4411 = vpop.f32.mrb[0].mxu0
      %v4412 = vpop.f32.mrb[0].mxu0
      %v4413 = vadd.f32 %v4236, %v4412
      %v4414 = vpop.f32.mrb[0].mxu0
      %4415 = vmatprep.mubr.bf16.mxu0 0
      %4416 = vmatmul.mubr.bf16.gmra.mrb[0].mxu0 %v3912
      %v4417 = vpop.f32.mrb[0].mxu0
      %v4418 = vadd.f32 %v4241, %v4417
      %v4419 = vpop.f32.mrb[0].mxu0
      %v4420 = vpop.f32.mrb[0].mxu0
      %v4421 = vadd.f32 %v4244, %v4420
      %v4422 = vpop.f32.mrb[0].mxu0
      %4423 = vmatprep.mubr.bf16.mxu0 0
      %4424 = vmatmul.mubr.bf16.gmra.mrb[0].mxu0 %v3915
      %v4425 = vpop.f32.mrb[0].mxu0
      %v4426 = vadd.f32 %v4249, %v4425
      %v4427 = vpop.f32.mrb[0].mxu0
      %v4428 = vpop.f32.mrb[0].mxu0
      %v4429 = vadd.f32 %v4252, %v4428
      %v4430 = vpop.f32.mrb[0].mxu0
      %4431 = vmatprep.mubr.bf16.mxu0 0
      %4432 = vmatmul.mubr.bf16.gmra.mrb[0].mxu0 %v3918
      %v4433 = vpop.f32.mrb[0].mxu0
      %v4434 = vadd.f32 %v4257, %v4433
      %v4435 = vpop.f32.mrb[0].mxu0
      %v4436 = vpop.f32.mrb[0].mxu0
      %v4437 = vadd.f32 %v4260, %v4436
      %v4438 = vpop.f32.mrb[0].mxu0
      %4439 = vmatprep.mubr.bf16.mxu0 0
      %4440 = vmatmul.mubr.bf16.gmra.mrb[0].mxu0 %v3921
      %v4441 = vpop.f32.mrb[0].mxu0
      %v4442 = vadd.f32 %v4265, %v4441
      %v4443 = vpop.f32.mrb[0].mxu0
      %v4444 = vpop.f32.mrb[0].mxu0
      %v4445 = vadd.f32 %v4268, %v4444
      %v4446 = vpop.f32.mrb[0].mxu0
      %4447 = vmatprep.mubr.bf16.mxu0 0
      %4448 = vmatmul.mubr.bf16.gmra.mrb[0].mxu0 %v3924
      %v4449 = vpop.f32.mrb[0].mxu0
      %v4450 = vadd.f32 %v4273, %v4449
      %v4451 = vpop.f32.mrb[0].mxu0
      %v4452 = vpop.f32.mrb[0].mxu0
      %v4453 = vadd.f32 %v4276, %v4452
      %v4454 = vpop.f32.mrb[0].mxu0
      %4455 = vmatprep.mubr.bf16.mxu0 0
      %4456 = vmatmul.mubr.bf16.gmra.mrb[0].mxu0 %v3927
      %v4457 = vpop.f32.mrb[0].mxu0
      %v4458 = vadd.f32 %v4281, %v4457
      %v4459 = vpop.f32.mrb[0].mxu0
      %v4460 = vpop.f32.mrb[0].mxu0
      %v4461 = vadd.f32 %v4284, %v4460
      %v4462 = vpop.f32.mrb[0].mxu0
      %4463 = vmatprep.mubr.bf16.mxu0 0
      %4464 = vmatmul.mubr.bf16.gmra.mrb[0].mxu0 %v3930
      %v4465 = vpop.f32.mrb[0].mxu0
      %v4466 = vadd.f32 %v4289, %v4465
      %v4467 = vpop.f32.mrb[0].mxu0
      %v4468 = vpop.f32.mrb[0].mxu0
      %v4469 = vadd.f32 %v4292, %v4468
      %v4470 = vpop.f32.mrb[0].mxu0
      %4471 = vmatprep.mubr.bf16.mxu0 0
      %4472 = vmatmul.mubr.bf16.gmra.mrb[0].mxu0 %v3933
      %v4473 = vpop.f32.mrb[0].mxu0
      %v4474 = vadd.f32 %v4297, %v4473
      %v4475 = vpop.f32.mrb[0].mxu0
      %v4476 = vpop.f32.mrb[0].mxu0
      %v4477 = vadd.f32 %v4300, %v4476
      %v4478 = vpop.f32.mrb[0].mxu0
      %4479 = vdwg.mxu0
      %v4480 = vadd.f32 %v3844, %v4338
      %v4481 = vadd.f32 %v3845, %v4341
      %v4482 = vadd.f32 %v3846, %v4346
      %v4483 = vadd.f32 %v3847, %v4349
      %v4484 = vadd.f32 %v3848, %v4354
      %v4485 = vadd.f32 %v3849, %v4357
      %v4486 = vadd.f32 %v3850, %v4362
      %v4487 = vadd.f32 %v3851, %v4365
      %v4488 = vadd.f32 %v3852, %v4370
      %v4489 = vadd.f32 %v3853, %v4373
      %v4490 = vadd.f32 %v3854, %v4378
      %v4491 = vadd.f32 %v3855, %v4381
      %v4492 = vadd.f32 %v3856, %v4386
      %v4493 = vadd.f32 %v3857, %v4389
      %v4494 = vadd.f32 %v3858, %v4394
      %v4495 = vadd.f32 %v3859, %v4397
      %v4496 = vadd.f32 %v3860, %v4402
      %v4497 = vadd.f32 %v3861, %v4405
      %v4498 = vadd.f32 %v3862, %v4410
      %v4499 = vadd.f32 %v3863, %v4413
      %v4500 = vadd.f32 %v3864, %v4418
      %v4501 = vadd.f32 %v3865, %v4421
      %v4502 = vadd.f32 %v3866, %v4426
      %v4503 = vadd.f32 %v3867, %v4429
      %v4504 = vadd.f32 %v3868, %v4434
      %v4505 = vadd.f32 %v3869, %v4437
      %v4506 = vadd.f32 %v3870, %v4442
      %v4507 = vadd.f32 %v3871, %v4445
      %v4508 = vadd.f32 %v3872, %v4450
      %v4509 = vadd.f32 %v3873, %v4453
      %v4510 = vadd.f32 %v3874, %v4458
      %v4511 = vadd.f32 %v3875, %v4461
      %v4512 = vadd.f32 %v3876, %v4466
      %v4513 = vadd.f32 %v3877, %v4469
      %v4514 = vadd.f32 %v3878, %v4474
      %v4515 = vadd.f32 %v3879, %v4477
      %4516 = vst [vmem:[#allocation3] sm:$0xff] %v4480
      %4517 = vst [vmem:[#allocation3 + $0x8] sm:$0xff] %v4481
      %4518 = vst [vmem:[#allocation3 + $0x10] sm:$0xff] %v4482
      %4519 = vst [vmem:[#allocation3 + $0x18] sm:$0xff] %v4483
      %4520 = vst [vmem:[#allocation3 + $0x20] sm:$0xff] %v4484
      %4521 = vst [vmem:[#allocation3 + $0x28] sm:$0xff] %v4485
      %4522 = vst [vmem:[#allocation3 + $0x30] sm:$0xff] %v4486
      %4523 = vst [vmem:[#allocation3 + $0x38] sm:$0xff] %v4487
      %4524 = vst [vmem:[#allocation3 + $0x40] sm:$0xff] %v4488
      %4525 = vst [vmem:[#allocation3 + $0x48] sm:$0xff] %v4489
      %4526 = vst [vmem:[#allocation3 + $0x50] sm:$0xff] %v4490
      %4527 = vst [vmem:[#allocation3 + $0x58] sm:$0xff] %v4491
      %4528 = vst [vmem:[#allocation3 + $0x60] sm:$0xff] %v4492
      %4529 = vst [vmem:[#allocation3 + $0x68] sm:$0xff] %v4493
      %4530 = vst [vmem:[#allocation3 + $0x70] sm:$0xff] %v4494
      %4531 = vst [vmem:[#allocation3 + $0x78] sm:$0xff] %v4495
      %4532 = vst [vmem:[#allocation3 + $0x80] sm:$0xff] %v4496
      %4533 = vst [vmem:[#allocation3 + $0x88] sm:$0xff] %v4497
      %4534 = vst [vmem:[#allocation3 + $0x90] sm:$0xff] %v4498
      %4535 = vst [vmem:[#allocation3 + $0x98] sm:$0xff] %v4499
      %4536 = vst [vmem:[#allocation3 + $0xa0] sm:$0xff] %v4500
      %4537 = vst [vmem:[#allocation3 + $0xa8] sm:$0xff] %v4501
      %4538 = vst [vmem:[#allocation3 + $0xb0] sm:$0xff] %v4502
      %4539 = vst [vmem:[#allocation3 + $0xb8] sm:$0xff] %v4503
      %4540 = vst [vmem:[#allocation3 + $0xc0] sm:$0xff] %v4504
      %4541 = vst [vmem:[#allocation3 + $0xc8] sm:$0xff] %v4505
      %4542 = vst [vmem:[#allocation3 + $0xd0] sm:$0xff] %v4506
      %4543 = vst [vmem:[#allocation3 + $0xd8] sm:$0xff] %v4507
      %4544 = vst [vmem:[#allocation3 + $0xe0] sm:$0xff] %v4508
      %4545 = vst [vmem:[#allocation3 + $0xe8] sm:$0xff] %v4509
      %4546 = vst [vmem:[#allocation3 + $0xf0] sm:$0xff] %v4510
      %4547 = vst [vmem:[#allocation3 + $0xf8] sm:$0xff] %v4511
      %4548 = vst [vmem:[#allocation3 + $0x100] sm:$0xff] %v4512
      %4549 = vst [vmem:[#allocation3 + $0x108] sm:$0xff] %v4513
      %4550 = vst [vmem:[#allocation3 + $0x110] sm:$0xff] %v4514
      %4551 = vst [vmem:[#allocation3 + $0x118] sm:$0xff] %v4515
      %v4552 = vld [vmem:[#allocation3] sm:$0xff]
      %v4553 = vld [vmem:[#allocation3 + $0x8] sm:$0xff]
      %v4554 = vld [vmem:[#allocation3 + $0x10] sm:$0xff]
      %v4555 = vld [vmem:[#allocation3 + $0x18] sm:$0xff]
      %v4556 = vld [vmem:[#allocation3 + $0x20] sm:$0xff]
      %v4557 = vld [vmem:[#allocation3 + $0x28] sm:$0xff]
      %v4558 = vld [vmem:[#allocation3 + $0x30] sm:$0xff]
      %v4559 = vld [vmem:[#allocation3 + $0x38] sm:$0xff]
      %v4560 = vld [vmem:[#allocation3 + $0x40] sm:$0xff]
      %v4561 = vld [vmem:[#allocation3 + $0x48] sm:$0xff]
      %v4562 = vld [vmem:[#allocation3 + $0x50] sm:$0xff]
      %v4563 = vld [vmem:[#allocation3 + $0x58] sm:$0xff]
      %v4564 = vld [vmem:[#allocation3 + $0x60] sm:$0xff]
      %v4565 = vld [vmem:[#allocation3 + $0x68] sm:$0xff]
      %v4566 = vld [vmem:[#allocation3 + $0x70] sm:$0xff]
      %v4567 = vld [vmem:[#allocation3 + $0x78] sm:$0xff]
      %v4568 = vld [vmem:[#allocation3 + $0x80] sm:$0xff]
      %v4569 = vld [vmem:[#allocation3 + $0x88] sm:$0xff]
      %v4570 = vld [vmem:[#allocation3 + $0x90] sm:$0xff]
      %v4571 = vld [vmem:[#allocation3 + $0x98] sm:$0xff]
      %v4572 = vld [vmem:[#allocation3 + $0xa0] sm:$0xff]
      %v4573 = vld [vmem:[#allocation3 + $0xa8] sm:$0xff]
      %v4574 = vld [vmem:[#allocation3 + $0xb0] sm:$0xff]
      %v4575 = vld [vmem:[#allocation3 + $0xb8] sm:$0xff]
      %v4576 = vld [vmem:[#allocation3 + $0xc0] sm:$0xff]
      %v4577 = vld [vmem:[#allocation3 + $0xc8] sm:$0xff]
      %v4578 = vld [vmem:[#allocation3 + $0xd0] sm:$0xff]
      %v4579 = vld [vmem:[#allocation3 + $0xd8] sm:$0xff]
      %v4580 = vld [vmem:[#allocation3 + $0xe0] sm:$0xff]
      %v4581 = vld [vmem:[#allocation3 + $0xe8] sm:$0xff]
      %v4582 = vld [vmem:[#allocation3 + $0xf0] sm:$0xff]
      %v4583 = vld [vmem:[#allocation3 + $0xf8] sm:$0xff]
      %v4584 = vld [vmem:[#allocation3 + $0x100] sm:$0xff]
      %v4585 = vld [vmem:[#allocation3 + $0x108] sm:$0xff]
      %v4586 = vld [vmem:[#allocation3 + $0x110] sm:$0xff]
      %v4587 = vld [vmem:[#allocation3 + $0x118] sm:$0xff]
      %v4588 = vlaneseq
      %v4589 = vshrl.u32 %v4588, 7
      %v4590 = vadd.s32 %v4589, 8
      %v4591 = vadd.s32 %v4589, 16
      %v4592 = vadd.s32 %v4589, 24
      %v4593 = vadd.s32 %v4589, 32
      %v4594 = vadd.s32 %v4589, 40
      %v4595 = vadd.s32 %v4589, 48
      %v4596 = vadd.s32 %v4589, 56
      %v4597 = vadd.s32 %v4589, 64
      %v4598 = vadd.s32 %v4589, 72
      %v4599 = vadd.s32 %v4589, 80
      %v4600 = vadd.s32 %v4589, 88
      %v4601 = vadd.s32 %v4589, 96
      %v4602 = vadd.s32 %v4589, 104
      %v4603 = vadd.s32 %v4589, 112
      %v4604 = vadd.s32 %v4589, 120
      %v4605 = vadd.s32 %v4589, 128
      %v4606 = vadd.s32 %v4589, 136
      %v4607 = vadd.s32 %v4589, 144
      %v4608 = vadd.s32 %v4589, 152
      %v4609 = vadd.s32 %v4589, 160
      %v4610 = vadd.s32 %v4589, 168
      %v4611 = vadd.s32 %v4589, 176
      %v4612 = vadd.s32 %v4589, 184
      %v4613 = vadd.s32 %v4589, 192
      %v4614 = vadd.s32 %v4589, 200
      %v4615 = vadd.s32 %v4589, 208
      %v4616 = vadd.s32 %v4589, 216
      %v4617 = vadd.s32 %v4589, 224
      %v4618 = vadd.s32 %v4589, 232
      %v4619 = vadd.s32 %v4589, 240
      %v4620 = vadd.s32 %v4589, 248
      %v4621 = vadd.s32 %v4589, 256
      %v4622 = vadd.s32 %v4589, 264
      %v4623 = vadd.s32 %v4589, 272
      %v4624 = vadd.s32 %v4589, 280
      %vm4625 = vcmp.lt.s32.totalorder %v4589, 288
      %vm4626 = vcmp.lt.s32.totalorder %v4590, 288
      %vm4627 = vcmp.lt.s32.totalorder %v4591, 288
      %vm4628 = vcmp.lt.s32.totalorder %v4592, 288
      %vm4629 = vcmp.lt.s32.totalorder %v4593, 288
      %vm4630 = vcmp.lt.s32.totalorder %v4594, 288
      %vm4631 = vcmp.lt.s32.totalorder %v4595, 288
      %vm4632 = vcmp.lt.s32.totalorder %v4596, 288
      %vm4633 = vcmp.lt.s32.totalorder %v4597, 288
      %vm4634 = vcmp.lt.s32.totalorder %v4598, 288
      %vm4635 = vcmp.lt.s32.totalorder %v4599, 288
      %vm4636 = vcmp.lt.s32.totalorder %v4600, 288
      %vm4637 = vcmp.lt.s32.totalorder %v4601, 288
      %vm4638 = vcmp.lt.s32.totalorder %v4602, 288
      %vm4639 = vcmp.lt.s32.totalorder %v4603, 288
      %vm4640 = vcmp.lt.s32.totalorder %v4604, 288
      %vm4641 = vcmp.lt.s32.totalorder %v4605, 288
      %vm4642 = vcmp.lt.s32.totalorder %v4606, 288
      %vm4643 = vcmp.lt.s32.totalorder %v4607, 288
      %vm4644 = vcmp.lt.s32.totalorder %v4608, 288
      %vm4645 = vcmp.lt.s32.totalorder %v4609, 288
      %vm4646 = vcmp.lt.s32.totalorder %v4610, 288
      %vm4647 = vcmp.lt.s32.totalorder %v4611, 288
      %vm4648 = vcmp.lt.s32.totalorder %v4612, 288
      %vm4649 = vcmp.lt.s32.totalorder %v4613, 288
      %vm4650 = vcmp.lt.s32.totalorder %v4614, 288
      %vm4651 = vcmp.lt.s32.totalorder %v4615, 288
      %vm4652 = vcmp.lt.s32.totalorder %v4616, 288
      %vm4653 = vcmp.lt.s32.totalorder %v4617, 288
      %vm4654 = vcmp.lt.s32.totalorder %v4618, 288
      %vm4655 = vcmp.lt.s32.totalorder %v4619, 288
      %vm4656 = vcmp.lt.s32.totalorder %v4620, 288
      %vm4657 = vcmp.lt.s32.totalorder %v4621, 288
      %vm4658 = vcmp.lt.s32.totalorder %v4622, 288
      %vm4659 = vcmp.lt.s32.totalorder %v4623, 288
      %vm4660 = vcmp.lt.s32.totalorder %v4624, 288
      %vm4661 = vcmp.lt.s32.totalorder %v4589, 0
      %v4662 = vsub.s32 0, %v4589
      %v4663 = vsel %vm4661, %v4662, %v4589
      %v4664 = vmul.u32.u64.compose %v4663, 3817748708
      %v4665 = vextract.low.u32 %v4664
      %v4666 = vextract.high.u32 %v4664
      %v4667 = vshrl.u32 %v4666, 4
      %v4668 = vmul.u32 %v4667, 18
      %v4669 = vsub.s32 %v4663, %v4668
      %v4670 = vsub.s32 0, %v4669
      %v4671 = vsel %vm4661, %v4670, %v4669
      %vm4672 = vcmp.lt.s32.totalorder %v4590, 0
      %v4673 = vsub.s32 0, %v4590
      %v4674 = vsel %vm4672, %v4673, %v4590
      %v4675 = vmul.u32.u64.compose %v4674, 3817748708
      %v4676 = vextract.low.u32 %v4675
      %v4677 = vextract.high.u32 %v4675
      %v4678 = vshrl.u32 %v4677, 4
      %v4679 = vmul.u32 %v4678, 18
      %v4680 = vsub.s32 %v4674, %v4679
      %v4681 = vsub.s32 0, %v4680
      %v4682 = vsel %vm4672, %v4681, %v4680
      %vm4683 = vcmp.lt.s32.totalorder %v4591, 0
      %v4684 = vsub.s32 0, %v4591
      %v4685 = vsel %vm4683, %v4684, %v4591
      %v4686 = vmul.u32.u64.compose %v4685, 3817748708
      %v4687 = vextract.low.u32 %v4686
      %v4688 = vextract.high.u32 %v4686
      %v4689 = vshrl.u32 %v4688, 4
      %v4690 = vmul.u32 %v4689, 18
      %v4691 = vsub.s32 %v4685, %v4690
      %v4692 = vsub.s32 0, %v4691
      %v4693 = vsel %vm4683, %v4692, %v4691
      %vm4694 = vcmp.lt.s32.totalorder %v4592, 0
      %v4695 = vsub.s32 0, %v4592
      %v4696 = vsel %vm4694, %v4695, %v4592
      %v4697 = vmul.u32.u64.compose %v4696, 3817748708
      %v4698 = vextract.low.u32 %v4697
      %v4699 = vextract.high.u32 %v4697
      %v4700 = vshrl.u32 %v4699, 4
      %v4701 = vmul.u32 %v4700, 18
      %v4702 = vsub.s32 %v4696, %v4701
      %v4703 = vsub.s32 0, %v4702
      %v4704 = vsel %vm4694, %v4703, %v4702
      %vm4705 = vcmp.lt.s32.totalorder %v4593, 0
      %v4706 = vsub.s32 0, %v4593
      %v4707 = vsel %vm4705, %v4706, %v4593
      %v4708 = vmul.u32.u64.compose %v4707, 3817748708
      %v4709 = vextract.low.u32 %v4708
      %v4710 = vextract.high.u32 %v4708
      %v4711 = vshrl.u32 %v4710, 4
      %v4712 = vmul.u32 %v4711, 18
      %v4713 = vsub.s32 %v4707, %v4712
      %v4714 = vsub.s32 0, %v4713
      %v4715 = vsel %vm4705, %v4714, %v4713
      %vm4716 = vcmp.lt.s32.totalorder %v4594, 0
      %v4717 = vsub.s32 0, %v4594
      %v4718 = vsel %vm4716, %v4717, %v4594
      %v4719 = vmul.u32.u64.compose %v4718, 3817748708
      %v4720 = vextract.low.u32 %v4719
      %v4721 = vextract.high.u32 %v4719
      %v4722 = vshrl.u32 %v4721, 4
      %v4723 = vmul.u32 %v4722, 18
      %v4724 = vsub.s32 %v4718, %v4723
      %v4725 = vsub.s32 0, %v4724
      %v4726 = vsel %vm4716, %v4725, %v4724
      %vm4727 = vcmp.lt.s32.totalorder %v4595, 0
      %v4728 = vsub.s32 0, %v4595
      %v4729 = vsel %vm4727, %v4728, %v4595
      %v4730 = vmul.u32.u64.compose %v4729, 3817748708
      %v4731 = vextract.low.u32 %v4730
      %v4732 = vextract.high.u32 %v4730
      %v4733 = vshrl.u32 %v4732, 4
      %v4734 = vmul.u32 %v4733, 18
      %v4735 = vsub.s32 %v4729, %v4734
      %v4736 = vsub.s32 0, %v4735
      %v4737 = vsel %vm4727, %v4736, %v4735
      %vm4738 = vcmp.lt.s32.totalorder %v4596, 0
      %v4739 = vsub.s32 0, %v4596
      %v4740 = vsel %vm4738, %v4739, %v4596
      %v4741 = vmul.u32.u64.compose %v4740, 3817748708
      %v4742 = vextract.low.u32 %v4741
      %v4743 = vextract.high.u32 %v4741
      %v4744 = vshrl.u32 %v4743, 4
      %v4745 = vmul.u32 %v4744, 18
      %v4746 = vsub.s32 %v4740, %v4745
      %v4747 = vsub.s32 0, %v4746
      %v4748 = vsel %vm4738, %v4747, %v4746
      %vm4749 = vcmp.lt.s32.totalorder %v4597, 0
      %v4750 = vsub.s32 0, %v4597
      %v4751 = vsel %vm4749, %v4750, %v4597
      %v4752 = vmul.u32.u64.compose %v4751, 3817748708
      %v4753 = vextract.low.u32 %v4752
      %v4754 = vextract.high.u32 %v4752
      %v4755 = vshrl.u32 %v4754, 4
      %v4756 = vmul.u32 %v4755, 18
      %v4757 = vsub.s32 %v4751, %v4756
      %v4758 = vsub.s32 0, %v4757
      %v4759 = vsel %vm4749, %v4758, %v4757
      %vm4760 = vcmp.lt.s32.totalorder %v4598, 0
      %v4761 = vsub.s32 0, %v4598
      %v4762 = vsel %vm4760, %v4761, %v4598
      %v4763 = vmul.u32.u64.compose %v4762, 3817748708
      %v4764 = vextract.low.u32 %v4763
      %v4765 = vextract.high.u32 %v4763
      %v4766 = vshrl.u32 %v4765, 4
      %v4767 = vmul.u32 %v4766, 18
      %v4768 = vsub.s32 %v4762, %v4767
      %v4769 = vsub.s32 0, %v4768
      %v4770 = vsel %vm4760, %v4769, %v4768
      %vm4771 = vcmp.lt.s32.totalorder %v4599, 0
      %v4772 = vsub.s32 0, %v4599
      %v4773 = vsel %vm4771, %v4772, %v4599
      %v4774 = vmul.u32.u64.compose %v4773, 3817748708
      %v4775 = vextract.low.u32 %v4774
      %v4776 = vextract.high.u32 %v4774
      %v4777 = vshrl.u32 %v4776, 4
      %v4778 = vmul.u32 %v4777, 18
      %v4779 = vsub.s32 %v4773, %v4778
      %v4780 = vsub.s32 0, %v4779
      %v4781 = vsel %vm4771, %v4780, %v4779
      %vm4782 = vcmp.lt.s32.totalorder %v4600, 0
      %v4783 = vsub.s32 0, %v4600
      %v4784 = vsel %vm4782, %v4783, %v4600
      %v4785 = vmul.u32.u64.compose %v4784, 3817748708
      %v4786 = vextract.low.u32 %v4785
      %v4787 = vextract.high.u32 %v4785
      %v4788 = vshrl.u32 %v4787, 4
      %v4789 = vmul.u32 %v4788, 18
      %v4790 = vsub.s32 %v4784, %v4789
      %v4791 = vsub.s32 0, %v4790
      %v4792 = vsel %vm4782, %v4791, %v4790
      %vm4793 = vcmp.lt.s32.totalorder %v4601, 0
      %v4794 = vsub.s32 0, %v4601
      %v4795 = vsel %vm4793, %v4794, %v4601
      %v4796 = vmul.u32.u64.compose %v4795, 3817748708
      %v4797 = vextract.low.u32 %v4796
      %v4798 = vextract.high.u32 %v4796
      %v4799 = vshrl.u32 %v4798, 4
      %v4800 = vmul.u32 %v4799, 18
      %v4801 = vsub.s32 %v4795, %v4800
      %v4802 = vsub.s32 0, %v4801
      %v4803 = vsel %vm4793, %v4802, %v4801
      %vm4804 = vcmp.lt.s32.totalorder %v4602, 0
      %v4805 = vsub.s32 0, %v4602
      %v4806 = vsel %vm4804, %v4805, %v4602
      %v4807 = vmul.u32.u64.compose %v4806, 3817748708
      %v4808 = vextract.low.u32 %v4807
      %v4809 = vextract.high.u32 %v4807
      %v4810 = vshrl.u32 %v4809, 4
      %v4811 = vmul.u32 %v4810, 18
      %v4812 = vsub.s32 %v4806, %v4811
      %v4813 = vsub.s32 0, %v4812
      %v4814 = vsel %vm4804, %v4813, %v4812
      %vm4815 = vcmp.lt.s32.totalorder %v4603, 0
      %v4816 = vsub.s32 0, %v4603
      %v4817 = vsel %vm4815, %v4816, %v4603
      %v4818 = vmul.u32.u64.compose %v4817, 3817748708
      %v4819 = vextract.low.u32 %v4818
      %v4820 = vextract.high.u32 %v4818
      %v4821 = vshrl.u32 %v4820, 4
      %v4822 = vmul.u32 %v4821, 18
      %v4823 = vsub.s32 %v4817, %v4822
      %v4824 = vsub.s32 0, %v4823
      %v4825 = vsel %vm4815, %v4824, %v4823
      %vm4826 = vcmp.lt.s32.totalorder %v4604, 0
      %v4827 = vsub.s32 0, %v4604
      %v4828 = vsel %vm4826, %v4827, %v4604
      %v4829 = vmul.u32.u64.compose %v4828, 3817748708
      %v4830 = vextract.low.u32 %v4829
      %v4831 = vextract.high.u32 %v4829
      %v4832 = vshrl.u32 %v4831, 4
      %v4833 = vmul.u32 %v4832, 18
      %v4834 = vsub.s32 %v4828, %v4833
      %v4835 = vsub.s32 0, %v4834
      %v4836 = vsel %vm4826, %v4835, %v4834
      %vm4837 = vcmp.lt.s32.totalorder %v4605, 0
      %v4838 = vsub.s32 0, %v4605
      %v4839 = vsel %vm4837, %v4838, %v4605
      %v4840 = vmul.u32.u64.compose %v4839, 3817748708
      %v4841 = vextract.low.u32 %v4840
      %v4842 = vextract.high.u32 %v4840
      %v4843 = vshrl.u32 %v4842, 4
      %v4844 = vmul.u32 %v4843, 18
      %v4845 = vsub.s32 %v4839, %v4844
      %v4846 = vsub.s32 0, %v4845
      %v4847 = vsel %vm4837, %v4846, %v4845
      %vm4848 = vcmp.lt.s32.totalorder %v4606, 0
      %v4849 = vsub.s32 0, %v4606
      %v4850 = vsel %vm4848, %v4849, %v4606
      %v4851 = vmul.u32.u64.compose %v4850, 3817748708
      %v4852 = vextract.low.u32 %v4851
      %v4853 = vextract.high.u32 %v4851
      %v4854 = vshrl.u32 %v4853, 4
      %v4855 = vmul.u32 %v4854, 18
      %v4856 = vsub.s32 %v4850, %v4855
      %v4857 = vsub.s32 0, %v4856
      %v4858 = vsel %vm4848, %v4857, %v4856
      %vm4859 = vcmp.lt.s32.totalorder %v4607, 0
      %v4860 = vsub.s32 0, %v4607
      %v4861 = vsel %vm4859, %v4860, %v4607
      %v4862 = vmul.u32.u64.compose %v4861, 3817748708
      %v4863 = vextract.low.u32 %v4862
      %v4864 = vextract.high.u32 %v4862
      %v4865 = vshrl.u32 %v4864, 4
      %v4866 = vmul.u32 %v4865, 18
      %v4867 = vsub.s32 %v4861, %v4866
      %v4868 = vsub.s32 0, %v4867
      %v4869 = vsel %vm4859, %v4868, %v4867
      %vm4870 = vcmp.lt.s32.totalorder %v4608, 0
      %v4871 = vsub.s32 0, %v4608
      %v4872 = vsel %vm4870, %v4871, %v4608
      %v4873 = vmul.u32.u64.compose %v4872, 3817748708
      %v4874 = vextract.low.u32 %v4873
      %v4875 = vextract.high.u32 %v4873
      %v4876 = vshrl.u32 %v4875, 4
      %v4877 = vmul.u32 %v4876, 18
      %v4878 = vsub.s32 %v4872, %v4877
      %v4879 = vsub.s32 0, %v4878
      %v4880 = vsel %vm4870, %v4879, %v4878
      %vm4881 = vcmp.lt.s32.totalorder %v4609, 0
      %v4882 = vsub.s32 0, %v4609
      %v4883 = vsel %vm4881, %v4882, %v4609
      %v4884 = vmul.u32.u64.compose %v4883, 3817748708
      %v4885 = vextract.low.u32 %v4884
      %v4886 = vextract.high.u32 %v4884
      %v4887 = vshrl.u32 %v4886, 4
      %v4888 = vmul.u32 %v4887, 18
      %v4889 = vsub.s32 %v4883, %v4888
      %v4890 = vsub.s32 0, %v4889
      %v4891 = vsel %vm4881, %v4890, %v4889
      %vm4892 = vcmp.lt.s32.totalorder %v4610, 0
      %v4893 = vsub.s32 0, %v4610
      %v4894 = vsel %vm4892, %v4893, %v4610
      %v4895 = vmul.u32.u64.compose %v4894, 3817748708
      %v4896 = vextract.low.u32 %v4895
      %v4897 = vextract.high.u32 %v4895
      %v4898 = vshrl.u32 %v4897, 4
      %v4899 = vmul.u32 %v4898, 18
      %v4900 = vsub.s32 %v4894, %v4899
      %v4901 = vsub.s32 0, %v4900
      %v4902 = vsel %vm4892, %v4901, %v4900
      %vm4903 = vcmp.lt.s32.totalorder %v4611, 0
      %v4904 = vsub.s32 0, %v4611
      %v4905 = vsel %vm4903, %v4904, %v4611
      %v4906 = vmul.u32.u64.compose %v4905, 3817748708
      %v4907 = vextract.low.u32 %v4906
      %v4908 = vextract.high.u32 %v4906
      %v4909 = vshrl.u32 %v4908, 4
      %v4910 = vmul.u32 %v4909, 18
      %v4911 = vsub.s32 %v4905, %v4910
      %v4912 = vsub.s32 0, %v4911
      %v4913 = vsel %vm4903, %v4912, %v4911
      %vm4914 = vcmp.lt.s32.totalorder %v4612, 0
      %v4915 = vsub.s32 0, %v4612
      %v4916 = vsel %vm4914, %v4915, %v4612
      %v4917 = vmul.u32.u64.compose %v4916, 3817748708
      %v4918 = vextract.low.u32 %v4917
      %v4919 = vextract.high.u32 %v4917
      %v4920 = vshrl.u32 %v4919, 4
      %v4921 = vmul.u32 %v4920, 18
      %v4922 = vsub.s32 %v4916, %v4921
      %v4923 = vsub.s32 0, %v4922
      %v4924 = vsel %vm4914, %v4923, %v4922
      %vm4925 = vcmp.lt.s32.totalorder %v4613, 0
      %v4926 = vsub.s32 0, %v4613
      %v4927 = vsel %vm4925, %v4926, %v4613
      %v4928 = vmul.u32.u64.compose %v4927, 3817748708
      %v4929 = vextract.low.u32 %v4928
      %v4930 = vextract.high.u32 %v4928
      %v4931 = vshrl.u32 %v4930, 4
      %v4932 = vmul.u32 %v4931, 18
      %v4933 = vsub.s32 %v4927, %v4932
      %v4934 = vsub.s32 0, %v4933
      %v4935 = vsel %vm4925, %v4934, %v4933
      %vm4936 = vcmp.lt.s32.totalorder %v4614, 0
      %v4937 = vsub.s32 0, %v4614
      %v4938 = vsel %vm4936, %v4937, %v4614
      %v4939 = vmul.u32.u64.compose %v4938, 3817748708
      %v4940 = vextract.low.u32 %v4939
      %v4941 = vextract.high.u32 %v4939
      %v4942 = vshrl.u32 %v4941, 4
      %v4943 = vmul.u32 %v4942, 18
      %v4944 = vsub.s32 %v4938, %v4943
      %v4945 = vsub.s32 0, %v4944
      %v4946 = vsel %vm4936, %v4945, %v4944
      %vm4947 = vcmp.lt.s32.totalorder %v4615, 0
      %v4948 = vsub.s32 0, %v4615
      %v4949 = vsel %vm4947, %v4948, %v4615
      %v4950 = vmul.u32.u64.compose %v4949, 3817748708
      %v4951 = vextract.low.u32 %v4950
      %v4952 = vextract.high.u32 %v4950
      %v4953 = vshrl.u32 %v4952, 4
      %v4954 = vmul.u32 %v4953, 18
      %v4955 = vsub.s32 %v4949, %v4954
      %v4956 = vsub.s32 0, %v4955
      %v4957 = vsel %vm4947, %v4956, %v4955
      %vm4958 = vcmp.lt.s32.totalorder %v4616, 0
      %v4959 = vsub.s32 0, %v4616
      %v4960 = vsel %vm4958, %v4959, %v4616
      %v4961 = vmul.u32.u64.compose %v4960, 3817748708
      %v4962 = vextract.low.u32 %v4961
      %v4963 = vextract.high.u32 %v4961
      %v4964 = vshrl.u32 %v4963, 4
      %v4965 = vmul.u32 %v4964, 18
      %v4966 = vsub.s32 %v4960, %v4965
      %v4967 = vsub.s32 0, %v4966
      %v4968 = vsel %vm4958, %v4967, %v4966
      %vm4969 = vcmp.lt.s32.totalorder %v4617, 0
      %v4970 = vsub.s32 0, %v4617
      %v4971 = vsel %vm4969, %v4970, %v4617
      %v4972 = vmul.u32.u64.compose %v4971, 3817748708
      %v4973 = vextract.low.u32 %v4972
      %v4974 = vextract.high.u32 %v4972
      %v4975 = vshrl.u32 %v4974, 4
      %v4976 = vmul.u32 %v4975, 18
      %v4977 = vsub.s32 %v4971, %v4976
      %v4978 = vsub.s32 0, %v4977
      %v4979 = vsel %vm4969, %v4978, %v4977
      %vm4980 = vcmp.lt.s32.totalorder %v4618, 0
      %v4981 = vsub.s32 0, %v4618
      %v4982 = vsel %vm4980, %v4981, %v4618
      %v4983 = vmul.u32.u64.compose %v4982, 3817748708
      %v4984 = vextract.low.u32 %v4983
      %v4985 = vextract.high.u32 %v4983
      %v4986 = vshrl.u32 %v4985, 4
      %v4987 = vmul.u32 %v4986, 18
      %v4988 = vsub.s32 %v4982, %v4987
      %v4989 = vsub.s32 0, %v4988
      %v4990 = vsel %vm4980, %v4989, %v4988
      %vm4991 = vcmp.lt.s32.totalorder %v4619, 0
      %v4992 = vsub.s32 0, %v4619
      %v4993 = vsel %vm4991, %v4992, %v4619
      %v4994 = vmul.u32.u64.compose %v4993, 3817748708
      %v4995 = vextract.low.u32 %v4994
      %v4996 = vextract.high.u32 %v4994
      %v4997 = vshrl.u32 %v4996, 4
      %v4998 = vmul.u32 %v4997, 18
      %v4999 = vsub.s32 %v4993, %v4998
      %v5000 = vsub.s32 0, %v4999
      %v5001 = vsel %vm4991, %v5000, %v4999
      %vm5002 = vcmp.lt.s32.totalorder %v4620, 0
      %v5003 = vsub.s32 0, %v4620
      %v5004 = vsel %vm5002, %v5003, %v4620
      %v5005 = vmul.u32.u64.compose %v5004, 3817748708
      %v5006 = vextract.low.u32 %v5005
      %v5007 = vextract.high.u32 %v5005
      %v5008 = vshrl.u32 %v5007, 4
      %v5009 = vmul.u32 %v5008, 18
      %v5010 = vsub.s32 %v5004, %v5009
      %v5011 = vsub.s32 0, %v5010
      %v5012 = vsel %vm5002, %v5011, %v5010
      %vm5013 = vcmp.lt.s32.totalorder %v4621, 0
      %v5014 = vsub.s32 0, %v4621
      %v5015 = vsel %vm5013, %v5014, %v4621
      %v5016 = vmul.u32.u64.compose %v5015, 3817748708
      %v5017 = vextract.low.u32 %v5016
      %v5018 = vextract.high.u32 %v5016
      %v5019 = vshrl.u32 %v5018, 4
      %v5020 = vmul.u32 %v5019, 18
      %v5021 = vsub.s32 %v5015, %v5020
      %v5022 = vsub.s32 0, %v5021
      %v5023 = vsel %vm5013, %v5022, %v5021
      %vm5024 = vcmp.lt.s32.totalorder %v4622, 0
      %v5025 = vsub.s32 0, %v4622
      %v5026 = vsel %vm5024, %v5025, %v4622
      %v5027 = vmul.u32.u64.compose %v5026, 3817748708
      %v5028 = vextract.low.u32 %v5027
      %v5029 = vextract.high.u32 %v5027
      %v5030 = vshrl.u32 %v5029, 4
      %v5031 = vmul.u32 %v5030, 18
      %v5032 = vsub.s32 %v5026, %v5031
      %v5033 = vsub.s32 0, %v5032
      %v5034 = vsel %vm5024, %v5033, %v5032
      %vm5035 = vcmp.lt.s32.totalorder %v4623, 0
      %v5036 = vsub.s32 0, %v4623
      %v5037 = vsel %vm5035, %v5036, %v4623
      %v5038 = vmul.u32.u64.compose %v5037, 3817748708
      %v5039 = vextract.low.u32 %v5038
      %v5040 = vextract.high.u32 %v5038
      %v5041 = vshrl.u32 %v5040, 4
      %v5042 = vmul.u32 %v5041, 18
      %v5043 = vsub.s32 %v5037, %v5042
      %v5044 = vsub.s32 0, %v5043
      %v5045 = vsel %vm5035, %v5044, %v5043
      %vm5046 = vcmp.lt.s32.totalorder %v4624, 0
      %v5047 = vsub.s32 0, %v4624
      %v5048 = vsel %vm5046, %v5047, %v4624
      %v5049 = vmul.u32.u64.compose %v5048, 3817748708
      %v5050 = vextract.low.u32 %v5049
      %v5051 = vextract.high.u32 %v5049
      %v5052 = vshrl.u32 %v5051, 4
      %v5053 = vmul.u32 %v5052, 18
      %v5054 = vsub.s32 %v5048, %v5053
      %v5055 = vsub.s32 0, %v5054
      %v5056 = vsel %vm5046, %v5055, %v5054
      %vm5057 = vcmp.ne.s32.totalorder %v4671, 0
      %vm5058 = vcmp.ne.s32.totalorder %v4682, 0
      %vm5059 = vcmp.ne.s32.totalorder %v4693, 0
      %vm5060 = vcmp.ne.s32.totalorder %v4704, 0
      %vm5061 = vcmp.ne.s32.totalorder %v4715, 0
      %vm5062 = vcmp.ne.s32.totalorder %v4726, 0
      %vm5063 = vcmp.ne.s32.totalorder %v4737, 0
      %vm5064 = vcmp.ne.s32.totalorder %v4748, 0
      %vm5065 = vcmp.ne.s32.totalorder %v4759, 0
      %vm5066 = vcmp.ne.s32.totalorder %v4770, 0
      %vm5067 = vcmp.ne.s32.totalorder %v4781, 0
      %vm5068 = vcmp.ne.s32.totalorder %v4792, 0
      %vm5069 = vcmp.ne.s32.totalorder %v4803, 0
      %vm5070 = vcmp.ne.s32.totalorder %v4814, 0
      %vm5071 = vcmp.ne.s32.totalorder %v4825, 0
      %vm5072 = vcmp.ne.s32.totalorder %v4836, 0
      %vm5073 = vcmp.ne.s32.totalorder %v4847, 0
      %vm5074 = vcmp.ne.s32.totalorder %v4858, 0
      %vm5075 = vcmp.ne.s32.totalorder %v4869, 0
      %vm5076 = vcmp.ne.s32.totalorder %v4880, 0
      %vm5077 = vcmp.ne.s32.totalorder %v4891, 0
      %vm5078 = vcmp.ne.s32.totalorder %v4902, 0
      %vm5079 = vcmp.ne.s32.totalorder %v4913, 0
      %vm5080 = vcmp.ne.s32.totalorder %v4924, 0
      %vm5081 = vcmp.ne.s32.totalorder %v4935, 0
      %vm5082 = vcmp.ne.s32.totalorder %v4946, 0
      %vm5083 = vcmp.ne.s32.totalorder %v4957, 0
      %vm5084 = vcmp.ne.s32.totalorder %v4968, 0
      %vm5085 = vcmp.ne.s32.totalorder %v4979, 0
      %vm5086 = vcmp.ne.s32.totalorder %v4990, 0
      %vm5087 = vcmp.ne.s32.totalorder %v5001, 0
      %vm5088 = vcmp.ne.s32.totalorder %v5012, 0
      %vm5089 = vcmp.ne.s32.totalorder %v5023, 0
      %vm5090 = vcmp.ne.s32.totalorder %v5034, 0
      %vm5091 = vcmp.ne.s32.totalorder %v5045, 0
      %vm5092 = vcmp.ne.s32.totalorder %v5056, 0
      %vm5093 = vcmp.lt.s32.totalorder %v4671, 0
      %vm5094 = vcmp.lt.s32.totalorder %v4682, 0
      %vm5095 = vcmp.lt.s32.totalorder %v4693, 0
      %vm5096 = vcmp.lt.s32.totalorder %v4704, 0
      %vm5097 = vcmp.lt.s32.totalorder %v4715, 0
      %vm5098 = vcmp.lt.s32.totalorder %v4726, 0
      %vm5099 = vcmp.lt.s32.totalorder %v4737, 0
      %vm5100 = vcmp.lt.s32.totalorder %v4748, 0
      %vm5101 = vcmp.lt.s32.totalorder %v4759, 0
      %vm5102 = vcmp.lt.s32.totalorder %v4770, 0
      %vm5103 = vcmp.lt.s32.totalorder %v4781, 0
      %vm5104 = vcmp.lt.s32.totalorder %v4792, 0
      %vm5105 = vcmp.lt.s32.totalorder %v4803, 0
      %vm5106 = vcmp.lt.s32.totalorder %v4814, 0
      %vm5107 = vcmp.lt.s32.totalorder %v4825, 0
      %vm5108 = vcmp.lt.s32.totalorder %v4836, 0
      %vm5109 = vcmp.lt.s32.totalorder %v4847, 0
      %vm5110 = vcmp.lt.s32.totalorder %v4858, 0
      %vm5111 = vcmp.lt.s32.totalorder %v4869, 0
      %vm5112 = vcmp.lt.s32.totalorder %v4880, 0
      %vm5113 = vcmp.lt.s32.totalorder %v4891, 0
      %vm5114 = vcmp.lt.s32.totalorder %v4902, 0
      %vm5115 = vcmp.lt.s32.totalorder %v4913, 0
      %vm5116 = vcmp.lt.s32.totalorder %v4924, 0
      %vm5117 = vcmp.lt.s32.totalorder %v4935, 0
      %vm5118 = vcmp.lt.s32.totalorder %v4946, 0
      %vm5119 = vcmp.lt.s32.totalorder %v4957, 0
      %vm5120 = vcmp.lt.s32.totalorder %v4968, 0
      %vm5121 = vcmp.lt.s32.totalorder %v4979, 0
      %vm5122 = vcmp.lt.s32.totalorder %v4990, 0
      %vm5123 = vcmp.lt.s32.totalorder %v5001, 0
      %vm5124 = vcmp.lt.s32.totalorder %v5012, 0
      %vm5125 = vcmp.lt.s32.totalorder %v5023, 0
      %vm5126 = vcmp.lt.s32.totalorder %v5034, 0
      %vm5127 = vcmp.lt.s32.totalorder %v5045, 0
      %vm5128 = vcmp.lt.s32.totalorder %v5056, 0
      %vm5129 = vmand %vm5093, %vm5057
      %vm5130 = vmand %vm5094, %vm5058
      %vm5131 = vmand %vm5095, %vm5059
      %vm5132 = vmand %vm5096, %vm5060
      %vm5133 = vmand %vm5097, %vm5061
      %vm5134 = vmand %vm5098, %vm5062
      %vm5135 = vmand %vm5099, %vm5063
      %vm5136 = vmand %vm5100, %vm5064
      %vm5137 = vmand %vm5101, %vm5065
      %vm5138 = vmand %vm5102, %vm5066
      %vm5139 = vmand %vm5103, %vm5067
      %vm5140 = vmand %vm5104, %vm5068
      %vm5141 = vmand %vm5105, %vm5069
      %vm5142 = vmand %vm5106, %vm5070
      %vm5143 = vmand %vm5107, %vm5071
      %vm5144 = vmand %vm5108, %vm5072
      %vm5145 = vmand %vm5109, %vm5073
      %vm5146 = vmand %vm5110, %vm5074
      %vm5147 = vmand %vm5111, %vm5075
      %vm5148 = vmand %vm5112, %vm5076
      %vm5149 = vmand %vm5113, %vm5077
      %vm5150 = vmand %vm5114, %vm5078
      %vm5151 = vmand %vm5115, %vm5079
      %vm5152 = vmand %vm5116, %vm5080
      %vm5153 = vmand %vm5117, %vm5081
      %vm5154 = vmand %vm5118, %vm5082
      %vm5155 = vmand %vm5119, %vm5083
      %vm5156 = vmand %vm5120, %vm5084
      %vm5157 = vmand %vm5121, %vm5085
      %vm5158 = vmand %vm5122, %vm5086
      %vm5159 = vmand %vm5123, %vm5087
      %vm5160 = vmand %vm5124, %vm5088
      %vm5161 = vmand %vm5125, %vm5089
      %vm5162 = vmand %vm5126, %vm5090
      %vm5163 = vmand %vm5127, %vm5091
      %vm5164 = vmand %vm5128, %vm5092
      %v5165 = vadd.s32 %v4671, 18
      %v5166 = vadd.s32 %v4682, 18
      %v5167 = vadd.s32 %v4693, 18
      %v5168 = vadd.s32 %v4704, 18
      %v5169 = vadd.s32 %v4715, 18
      %v5170 = vadd.s32 %v4726, 18
      %v5171 = vadd.s32 %v4737, 18
      %v5172 = vadd.s32 %v4748, 18
      %v5173 = vadd.s32 %v4759, 18
      %v5174 = vadd.s32 %v4770, 18
      %v5175 = vadd.s32 %v4781, 18
      %v5176 = vadd.s32 %v4792, 18
      %v5177 = vadd.s32 %v4803, 18
      %v5178 = vadd.s32 %v4814, 18
      %v5179 = vadd.s32 %v4825, 18
      %v5180 = vadd.s32 %v4836, 18
      %v5181 = vadd.s32 %v4847, 18
      %v5182 = vadd.s32 %v4858, 18
      %v5183 = vadd.s32 %v4869, 18
      %v5184 = vadd.s32 %v4880, 18
      %v5185 = vadd.s32 %v4891, 18
      %v5186 = vadd.s32 %v4902, 18
      %v5187 = vadd.s32 %v4913, 18
      %v5188 = vadd.s32 %v4924, 18
      %v5189 = vadd.s32 %v4935, 18
      %v5190 = vadd.s32 %v4946, 18
      %v5191 = vadd.s32 %v4957, 18
      %v5192 = vadd.s32 %v4968, 18
      %v5193 = vadd.s32 %v4979, 18
      %v5194 = vadd.s32 %v4990, 18
      %v5195 = vadd.s32 %v5001, 18
      %v5196 = vadd.s32 %v5012, 18
      %v5197 = vadd.s32 %v5023, 18
      %v5198 = vadd.s32 %v5034, 18
      %v5199 = vadd.s32 %v5045, 18
      %v5200 = vadd.s32 %v5056, 18
      %v5201 = vsel %vm5129, %v5165, %v4671
      %v5202 = vsel %vm5130, %v5166, %v4682
      %v5203 = vsel %vm5131, %v5167, %v4693
      %v5204 = vsel %vm5132, %v5168, %v4704
      %v5205 = vsel %vm5133, %v5169, %v4715
      %v5206 = vsel %vm5134, %v5170, %v4726
      %v5207 = vsel %vm5135, %v5171, %v4737
      %v5208 = vsel %vm5136, %v5172, %v4748
      %v5209 = vsel %vm5137, %v5173, %v4759
      %v5210 = vsel %vm5138, %v5174, %v4770
      %v5211 = vsel %vm5139, %v5175, %v4781
      %v5212 = vsel %vm5140, %v5176, %v4792
      %v5213 = vsel %vm5141, %v5177, %v4803
      %v5214 = vsel %vm5142, %v5178, %v4814
      %v5215 = vsel %vm5143, %v5179, %v4825
      %v5216 = vsel %vm5144, %v5180, %v4836
      %v5217 = vsel %vm5145, %v5181, %v4847
      %v5218 = vsel %vm5146, %v5182, %v4858
      %v5219 = vsel %vm5147, %v5183, %v4869
      %v5220 = vsel %vm5148, %v5184, %v4880
      %v5221 = vsel %vm5149, %v5185, %v4891
      %v5222 = vsel %vm5150, %v5186, %v4902
      %v5223 = vsel %vm5151, %v5187, %v4913
      %v5224 = vsel %vm5152, %v5188, %v4924
      %v5225 = vsel %vm5153, %v5189, %v4935
      %v5226 = vsel %vm5154, %v5190, %v4946
      %v5227 = vsel %vm5155, %v5191, %v4957
      %v5228 = vsel %vm5156, %v5192, %v4968
      %v5229 = vsel %vm5157, %v5193, %v4979
      %v5230 = vsel %vm5158, %v5194, %v4990
      %v5231 = vsel %vm5159, %v5195, %v5001
      %v5232 = vsel %vm5160, %v5196, %v5012
      %v5233 = vsel %vm5161, %v5197, %v5023
      %v5234 = vsel %vm5162, %v5198, %v5034
      %v5235 = vsel %vm5163, %v5199, %v5045
      %v5236 = vsel %vm5164, %v5200, %v5056
      %vm5237 = vcmp.lt.s32.totalorder %v5201, 16
      %vm5238 = vcmp.lt.s32.totalorder %v5202, 16
      %vm5239 = vcmp.lt.s32.totalorder %v5203, 16
      %vm5240 = vcmp.lt.s32.totalorder %v5204, 16
      %vm5241 = vcmp.lt.s32.totalorder %v5205, 16
      %vm5242 = vcmp.lt.s32.totalorder %v5206, 16
      %vm5243 = vcmp.lt.s32.totalorder %v5207, 16
      %vm5244 = vcmp.lt.s32.totalorder %v5208, 16
      %vm5245 = vcmp.lt.s32.totalorder %v5209, 16
      %vm5246 = vcmp.lt.s32.totalorder %v5210, 16
      %vm5247 = vcmp.lt.s32.totalorder %v5211, 16
      %vm5248 = vcmp.lt.s32.totalorder %v5212, 16
      %vm5249 = vcmp.lt.s32.totalorder %v5213, 16
      %vm5250 = vcmp.lt.s32.totalorder %v5214, 16
      %vm5251 = vcmp.lt.s32.totalorder %v5215, 16
      %vm5252 = vcmp.lt.s32.totalorder %v5216, 16
      %vm5253 = vcmp.lt.s32.totalorder %v5217, 16
      %vm5254 = vcmp.lt.s32.totalorder %v5218, 16
      %vm5255 = vcmp.lt.s32.totalorder %v5219, 16
      %vm5256 = vcmp.lt.s32.totalorder %v5220, 16
      %vm5257 = vcmp.lt.s32.totalorder %v5221, 16
      %vm5258 = vcmp.lt.s32.totalorder %v5222, 16
      %vm5259 = vcmp.lt.s32.totalorder %v5223, 16
      %vm5260 = vcmp.lt.s32.totalorder %v5224, 16
      %vm5261 = vcmp.lt.s32.totalorder %v5225, 16
      %vm5262 = vcmp.lt.s32.totalorder %v5226, 16
      %vm5263 = vcmp.lt.s32.totalorder %v5227, 16
      %vm5264 = vcmp.lt.s32.totalorder %v5228, 16
      %vm5265 = vcmp.lt.s32.totalorder %v5229, 16
      %vm5266 = vcmp.lt.s32.totalorder %v5230, 16
      %vm5267 = vcmp.lt.s32.totalorder %v5231, 16
      %vm5268 = vcmp.lt.s32.totalorder %v5232, 16
      %vm5269 = vcmp.lt.s32.totalorder %v5233, 16
      %vm5270 = vcmp.lt.s32.totalorder %v5234, 16
      %vm5271 = vcmp.lt.s32.totalorder %v5235, 16
      %vm5272 = vcmp.lt.s32.totalorder %v5236, 16
      %vm5273 = vmand %vm4625, %vm5237
      %vm5274 = vmand %vm4626, %vm5238
      %vm5275 = vmand %vm4627, %vm5239
      %vm5276 = vmand %vm4628, %vm5240
      %vm5277 = vmand %vm4629, %vm5241
      %vm5278 = vmand %vm4630, %vm5242
      %vm5279 = vmand %vm4631, %vm5243
      %vm5280 = vmand %vm4632, %vm5244
      %vm5281 = vmand %vm4633, %vm5245
      %vm5282 = vmand %vm4634, %vm5246
      %vm5283 = vmand %vm4635, %vm5247
      %vm5284 = vmand %vm4636, %vm5248
      %vm5285 = vmand %vm4637, %vm5249
      %vm5286 = vmand %vm4638, %vm5250
      %vm5287 = vmand %vm4639, %vm5251
      %vm5288 = vmand %vm4640, %vm5252
      %vm5289 = vmand %vm4641, %vm5253
      %vm5290 = vmand %vm4642, %vm5254
      %vm5291 = vmand %vm4643, %vm5255
      %vm5292 = vmand %vm4644, %vm5256
      %vm5293 = vmand %vm4645, %vm5257
      %vm5294 = vmand %vm4646, %vm5258
      %vm5295 = vmand %vm4647, %vm5259
      %vm5296 = vmand %vm4648, %vm5260
      %vm5297 = vmand %vm4649, %vm5261
      %vm5298 = vmand %vm4650, %vm5262
      %vm5299 = vmand %vm4651, %vm5263
      %vm5300 = vmand %vm4652, %vm5264
      %vm5301 = vmand %vm4653, %vm5265
      %vm5302 = vmand %vm4654, %vm5266
      %vm5303 = vmand %vm4655, %vm5267
      %vm5304 = vmand %vm4656, %vm5268
      %vm5305 = vmand %vm4657, %vm5269
      %vm5306 = vmand %vm4658, %vm5270
      %vm5307 = vmand %vm4659, %vm5271
      %vm5308 = vmand %vm4660, %vm5272
      %v5309 = vsel %vm5273, 1, 0
      %v5310 = vsel %vm5274, 1, 0
      %v5311 = vsel %vm5275, 1, 0
      %v5312 = vsel %vm5276, 1, 0
      %v5313 = vsel %vm5277, 1, 0
      %v5314 = vsel %vm5278, 1, 0
      %v5315 = vsel %vm5279, 1, 0
      %v5316 = vsel %vm5280, 1, 0
      %v5317 = vsel %vm5281, 1, 0
      %v5318 = vsel %vm5282, 1, 0
      %v5319 = vsel %vm5283, 1, 0
      %v5320 = vsel %vm5284, 1, 0
      %v5321 = vsel %vm5285, 1, 0
      %v5322 = vsel %vm5286, 1, 0
      %v5323 = vsel %vm5287, 1, 0
      %v5324 = vsel %vm5288, 1, 0
      %v5325 = vsel %vm5289, 1, 0
      %v5326 = vsel %vm5290, 1, 0
      %v5327 = vsel %vm5291, 1, 0
      %v5328 = vsel %vm5292, 1, 0
      %v5329 = vsel %vm5293, 1, 0
      %v5330 = vsel %vm5294, 1, 0
      %v5331 = vsel %vm5295, 1, 0
      %v5332 = vsel %vm5296, 1, 0
      %v5333 = vsel %vm5297, 1, 0
      %v5334 = vsel %vm5298, 1, 0
      %v5335 = vsel %vm5299, 1, 0
      %v5336 = vsel %vm5300, 1, 0
      %v5337 = vsel %vm5301, 1, 0
      %v5338 = vsel %vm5302, 1, 0
      %v5339 = vsel %vm5303, 1, 0
      %v5340 = vsel %vm5304, 1, 0
      %v5341 = vsel %vm5305, 1, 0
      %v5342 = vsel %vm5306, 1, 0
      %v5343 = vsel %vm5307, 1, 0
      %v5344 = vsel %vm5308, 1, 0
      %vm5345 = vcmp.eq.s32.totalorder %v5309, 1
      %vm5346 = vcmp.eq.s32.totalorder %v5310, 1
      %vm5347 = vcmp.eq.s32.totalorder %v5311, 1
      %vm5348 = vcmp.eq.s32.totalorder %v5312, 1
      %vm5349 = vcmp.eq.s32.totalorder %v5313, 1
      %vm5350 = vcmp.eq.s32.totalorder %v5314, 1
      %vm5351 = vcmp.eq.s32.totalorder %v5315, 1
      %vm5352 = vcmp.eq.s32.totalorder %v5316, 1
      %vm5353 = vcmp.eq.s32.totalorder %v5317, 1
      %vm5354 = vcmp.eq.s32.totalorder %v5318, 1
      %vm5355 = vcmp.eq.s32.totalorder %v5319, 1
      %vm5356 = vcmp.eq.s32.totalorder %v5320, 1
      %vm5357 = vcmp.eq.s32.totalorder %v5321, 1
      %vm5358 = vcmp.eq.s32.totalorder %v5322, 1
      %vm5359 = vcmp.eq.s32.totalorder %v5323, 1
      %vm5360 = vcmp.eq.s32.totalorder %v5324, 1
      %vm5361 = vcmp.eq.s32.totalorder %v5325, 1
      %vm5362 = vcmp.eq.s32.totalorder %v5326, 1
      %vm5363 = vcmp.eq.s32.totalorder %v5327, 1
      %vm5364 = vcmp.eq.s32.totalorder %v5328, 1
      %vm5365 = vcmp.eq.s32.totalorder %v5329, 1
      %vm5366 = vcmp.eq.s32.totalorder %v5330, 1
      %vm5367 = vcmp.eq.s32.totalorder %v5331, 1
      %vm5368 = vcmp.eq.s32.totalorder %v5332, 1
      %vm5369 = vcmp.eq.s32.totalorder %v5333, 1
      %vm5370 = vcmp.eq.s32.totalorder %v5334, 1
      %vm5371 = vcmp.eq.s32.totalorder %v5335, 1
      %vm5372 = vcmp.eq.s32.totalorder %v5336, 1
      %vm5373 = vcmp.eq.s32.totalorder %v5337, 1
      %vm5374 = vcmp.eq.s32.totalorder %v5338, 1
      %vm5375 = vcmp.eq.s32.totalorder %v5339, 1
      %vm5376 = vcmp.eq.s32.totalorder %v5340, 1
      %vm5377 = vcmp.eq.s32.totalorder %v5341, 1
      %vm5378 = vcmp.eq.s32.totalorder %v5342, 1
      %vm5379 = vcmp.eq.s32.totalorder %v5343, 1
      %vm5380 = vcmp.eq.s32.totalorder %v5344, 1
      %v5381 = vsel %vm5345, %v4552, 0.0
      %v5382 = vsel %vm5346, %v4553, 0.0
      %v5383 = vsel %vm5347, %v4554, 0.0
      %v5384 = vsel %vm5348, %v4555, 0.0
      %v5385 = vsel %vm5349, %v4556, 0.0
      %v5386 = vsel %vm5350, %v4557, 0.0
      %v5387 = vsel %vm5351, %v4558, 0.0
      %v5388 = vsel %vm5352, %v4559, 0.0
      %v5389 = vsel %vm5353, %v4560, 0.0
      %v5390 = vsel %vm5354, %v4561, 0.0
      %v5391 = vsel %vm5355, %v4562, 0.0
      %v5392 = vsel %vm5356, %v4563, 0.0
      %v5393 = vsel %vm5357, %v4564, 0.0
      %v5394 = vsel %vm5358, %v4565, 0.0
      %v5395 = vsel %vm5359, %v4566, 0.0
      %v5396 = vsel %vm5360, %v4567, 0.0
      %v5397 = vsel %vm5361, %v4568, 0.0
      %v5398 = vsel %vm5362, %v4569, 0.0
      %v5399 = vsel %vm5363, %v4570, 0.0
      %v5400 = vsel %vm5364, %v4571, 0.0
      %v5401 = vsel %vm5365, %v4572, 0.0
      %v5402 = vsel %vm5366, %v4573, 0.0
      %v5403 = vsel %vm5367, %v4574, 0.0
      %v5404 = vsel %vm5368, %v4575, 0.0
      %v5405 = vsel %vm5369, %v4576, 0.0
      %v5406 = vsel %vm5370, %v4577, 0.0
      %v5407 = vsel %vm5371, %v4578, 0.0
      %v5408 = vsel %vm5372, %v4579, 0.0
      %v5409 = vsel %vm5373, %v4580, 0.0
      %v5410 = vsel %vm5374, %v4581, 0.0
      %v5411 = vsel %vm5375, %v4582, 0.0
      %v5412 = vsel %vm5376, %v4583, 0.0
      %v5413 = vsel %vm5377, %v4584, 0.0
      %v5414 = vsel %vm5378, %v4585, 0.0
      %v5415 = vsel %vm5379, %v4586, 0.0
      %v5416 = vsel %vm5380, %v4587, 0.0
      %v5417 = vadd.f32 %v5381, %v5382
      %v5418 = vadd.f32 %v5417, %v5383
      %v5419 = vadd.f32 %v5418, %v5384
      %v5420 = vadd.f32 %v5419, %v5385
      %v5421 = vadd.f32 %v5420, %v5386
      %v5422 = vadd.f32 %v5421, %v5387
      %v5423 = vadd.f32 %v5422, %v5388
      %v5424 = vadd.f32 %v5423, %v5389
      %v5425 = vadd.f32 %v5424, %v5390
      %v5426 = vadd.f32 %v5425, %v5391
      %v5427 = vadd.f32 %v5426, %v5392
      %v5428 = vadd.f32 %v5427, %v5393
      %v5429 = vadd.f32 %v5428, %v5394
      %v5430 = vadd.f32 %v5429, %v5395
      %v5431 = vadd.f32 %v5430, %v5396
      %v5432 = vadd.f32 %v5431, %v5397
      %v5433 = vadd.f32 %v5432, %v5398
      %v5434 = vadd.f32 %v5433, %v5399
      %v5435 = vadd.f32 %v5434, %v5400
      %v5436 = vadd.f32 %v5435, %v5401
      %v5437 = vadd.f32 %v5436, %v5402
      %v5438 = vadd.f32 %v5437, %v5403
      %v5439 = vadd.f32 %v5438, %v5404
      %v5440 = vadd.f32 %v5439, %v5405
      %v5441 = vadd.f32 %v5440, %v5406
      %v5442 = vadd.f32 %v5441, %v5407
      %v5443 = vadd.f32 %v5442, %v5408
      %v5444 = vadd.f32 %v5443, %v5409
      %v5445 = vadd.f32 %v5444, %v5410
      %v5446 = vadd.f32 %v5445, %v5411
      %v5447 = vadd.f32 %v5446, %v5412
      %v5448 = vadd.f32 %v5447, %v5413
      %v5449 = vadd.f32 %v5448, %v5414
      %v5450 = vadd.f32 %v5449, %v5415
      %v5451 = vadd.f32 %v5450, %v5416
      %v5452 = vrot.slane %v5451, 4
      %v5453 = vadd.f32 %v5451, %v5452
      %v5454 = vrot.slane %v5453, 2
      %v5455 = vadd.f32 %v5453, %v5454
      %v5456 = vrot.slane %v5455, 1
      %v5457 = vadd.f32 %v5455, %v5456
      %v5458 = vmul.f32 %v5381, %v5381
      %v5459 = vmul.f32 %v5382, %v5382
      %v5460 = vmul.f32 %v5383, %v5383
      %v5461 = vmul.f32 %v5384, %v5384
      %v5462 = vmul.f32 %v5385, %v5385
      %v5463 = vmul.f32 %v5386, %v5386
      %v5464 = vmul.f32 %v5387, %v5387
      %v5465 = vmul.f32 %v5388, %v5388
      %v5466 = vmul.f32 %v5389, %v5389
      %v5467 = vmul.f32 %v5390, %v5390
      %v5468 = vmul.f32 %v5391, %v5391
      %v5469 = vmul.f32 %v5392, %v5392
      %v5470 = vmul.f32 %v5393, %v5393
      %v5471 = vmul.f32 %v5394, %v5394
      %v5472 = vmul.f32 %v5395, %v5395
      %v5473 = vmul.f32 %v5396, %v5396
      %v5474 = vmul.f32 %v5397, %v5397
      %v5475 = vmul.f32 %v5398, %v5398
      %v5476 = vmul.f32 %v5399, %v5399
      %v5477 = vmul.f32 %v5400, %v5400
      %v5478 = vmul.f32 %v5401, %v5401
      %v5479 = vmul.f32 %v5402, %v5402
      %v5480 = vmul.f32 %v5403, %v5403
      %v5481 = vmul.f32 %v5404, %v5404
      %v5482 = vmul.f32 %v5405, %v5405
      %v5483 = vmul.f32 %v5406, %v5406
      %v5484 = vmul.f32 %v5407, %v5407
      %v5485 = vmul.f32 %v5408, %v5408
      %v5486 = vmul.f32 %v5409, %v5409
      %v5487 = vmul.f32 %v5410, %v5410
      %v5488 = vmul.f32 %v5411, %v5411
      %v5489 = vmul.f32 %v5412, %v5412
      %v5490 = vmul.f32 %v5413, %v5413
      %v5491 = vmul.f32 %v5414, %v5414
      %v5492 = vmul.f32 %v5415, %v5415
      %v5493 = vmul.f32 %v5416, %v5416
      %v5494 = vadd.f32 %v5458, %v5459
      %v5495 = vadd.f32 %v5494, %v5460
      %v5496 = vadd.f32 %v5495, %v5461
      %v5497 = vadd.f32 %v5496, %v5462
      %v5498 = vadd.f32 %v5497, %v5463
      %v5499 = vadd.f32 %v5498, %v5464
      %v5500 = vadd.f32 %v5499, %v5465
      %v5501 = vadd.f32 %v5500, %v5466
      %v5502 = vadd.f32 %v5501, %v5467
      %v5503 = vadd.f32 %v5502, %v5468
      %v5504 = vadd.f32 %v5503, %v5469
      %v5505 = vadd.f32 %v5504, %v5470
      %v5506 = vadd.f32 %v5505, %v5471
      %v5507 = vadd.f32 %v5506, %v5472
      %v5508 = vadd.f32 %v5507, %v5473
      %v5509 = vadd.f32 %v5508, %v5474
      %v5510 = vadd.f32 %v5509, %v5475
      %v5511 = vadd.f32 %v5510, %v5476
      %v5512 = vadd.f32 %v5511, %v5477
      %v5513 = vadd.f32 %v5512, %v5478
      %v5514 = vadd.f32 %v5513, %v5479
      %v5515 = vadd.f32 %v5514, %v5480
      %v5516 = vadd.f32 %v5515, %v5481
      %v5517 = vadd.f32 %v5516, %v5482
      %v5518 = vadd.f32 %v5517, %v5483
      %v5519 = vadd.f32 %v5518, %v5484
      %v5520 = vadd.f32 %v5519, %v5485
      %v5521 = vadd.f32 %v5520, %v5486
      %v5522 = vadd.f32 %v5521, %v5487
      %v5523 = vadd.f32 %v5522, %v5488
      %v5524 = vadd.f32 %v5523, %v5489
      %v5525 = vadd.f32 %v5524, %v5490
      %v5526 = vadd.f32 %v5525, %v5491
      %v5527 = vadd.f32 %v5526, %v5492
      %v5528 = vadd.f32 %v5527, %v5493
      %v5529 = vrot.slane %v5528, 4
      %v5530 = vadd.f32 %v5528, %v5529
      %v5531 = vrot.slane %v5530, 2
      %v5532 = vadd.f32 %v5530, %v5531
      %v5533 = vrot.slane %v5532, 1
      %v5534 = vadd.f32 %v5532, %v5533
      %vm5535 = vcmp.eq.s32.totalorder %v4589, 0
      %v5536 = vsel %vm5535, %v5457, 0.0
      %5537 = vst [vmem:[%s217] sm:$0xff] %v5536
      %v5538 = vsel %vm5535, %v5534, 0.0
      %5539 = vst [vmem:[%s221] sm:$0xff] %v5538
      %v5540 = vpack.c.bf16 %v4553, %v4552
      %v5541 = vpack.c.bf16 %v4555, %v4554
      %v5542 = vpack.c.bf16 %v4557, %v4556
      %v5543 = vpack.c.bf16 %v4559, %v4558
      %v5544 = vpack.c.bf16 %v4561, %v4560
      %v5545 = vpack.c.bf16 %v4563, %v4562
      %v5546 = vpack.c.bf16 %v4565, %v4564
      %v5547 = vpack.c.bf16 %v4567, %v4566
      %v5548 = vpack.c.bf16 %v4569, %v4568
      %v5549 = vpack.c.bf16 %v4571, %v4570
      %v5550 = vpack.c.bf16 %v4573, %v4572
      %v5551 = vpack.c.bf16 %v4575, %v4574
      %v5552 = vpack.c.bf16 %v4577, %v4576
      %v5553 = vpack.c.bf16 %v4579, %v4578
      %v5554 = vpack.c.bf16 %v4581, %v4580
      %v5555 = vpack.c.bf16 %v4583, %v4582
      %v5556 = vpack.c.bf16 %v4585, %v4584
      %v5557 = vpack.c.bf16 %v4587, %v4586
      %v5576 = vunpack.c.l.b16 %v5540
      %v5577 = vunpack.c.h.b16 %v5540
      %v5578 = vunpack.c.l.b16 %v5541
      %v5579 = vunpack.c.h.b16 %v5541
      %v5580 = vunpack.c.l.b16 %v5542
      %v5581 = vunpack.c.h.b16 %v5542
      %v5582 = vunpack.c.l.b16 %v5543
      %v5583 = vunpack.c.h.b16 %v5543
      %v5584 = vunpack.c.l.b16 %v5544
      %v5585 = vunpack.c.h.b16 %v5544
      %v5586 = vunpack.c.l.b16 %v5545
      %v5587 = vunpack.c.h.b16 %v5545
      %v5588 = vunpack.c.l.b16 %v5546
      %v5589 = vunpack.c.h.b16 %v5546
      %v5590 = vunpack.c.l.b16 %v5547
      %v5591 = vunpack.c.h.b16 %v5547
      %v5592 = vunpack.c.l.b16 %v5548
      %v5593 = vunpack.c.h.b16 %v5548
      %v5594 = vunpack.c.l.b16 %v5549
      %v5595 = vunpack.c.h.b16 %v5549
      %v5596 = vunpack.c.l.b16 %v5550
      %v5597 = vunpack.c.h.b16 %v5550
      %v5598 = vunpack.c.l.b16 %v5551
      %v5599 = vunpack.c.h.b16 %v5551
      %v5600 = vunpack.c.l.b16 %v5552
      %v5601 = vunpack.c.h.b16 %v5552
      %v5602 = vunpack.c.l.b16 %v5553
      %v5603 = vunpack.c.h.b16 %v5553
      %v5604 = vunpack.c.l.b16 %v5554
      %v5605 = vunpack.c.h.b16 %v5554
      %v5606 = vunpack.c.l.b16 %v5555
      %v5607 = vunpack.c.h.b16 %v5555
      %v5608 = vunpack.c.l.b16 %v5556
      %v5609 = vunpack.c.h.b16 %v5556
      %v5610 = vunpack.c.l.b16 %v5557
      %v5611 = vunpack.c.h.b16 %v5557
      %v5612 = vpack.c.b16 %v5576, %v5576
      %v5613 = vpack.c.b16 %v5577, %v5577
      %v5614 = vpack.c.b16 %v5578, %v5578
      %v5615 = vpack.c.b16 %v5579, %v5579
      %v5616 = vpack.c.b16 %v5580, %v5580
      %v5617 = vpack.c.b16 %v5581, %v5581
      %v5618 = vpack.c.b16 %v5582, %v5582
      %v5619 = vpack.c.b16 %v5583, %v5583
      %v5620 = vpack.c.b16 %v5584, %v5584
      %v5621 = vpack.c.b16 %v5585, %v5585
      %v5622 = vpack.c.b16 %v5586, %v5586
      %v5623 = vpack.c.b16 %v5587, %v5587
      %v5624 = vpack.c.b16 %v5588, %v5588
      %v5625 = vpack.c.b16 %v5589, %v5589
      %v5626 = vpack.c.b16 %v5590, %v5590
      %v5627 = vpack.c.b16 %v5591, %v5591
      %v5628 = vpack.c.b16 %v5592, %v5592
      %v5629 = vpack.c.b16 %v5593, %v5593
      %v5630 = vpack.c.b16 %v5594, %v5594
      %v5631 = vpack.c.b16 %v5595, %v5595
      %v5632 = vpack.c.b16 %v5596, %v5596
      %v5633 = vpack.c.b16 %v5597, %v5597
      %v5634 = vpack.c.b16 %v5598, %v5598
      %v5635 = vpack.c.b16 %v5599, %v5599
      %v5636 = vpack.c.b16 %v5600, %v5600
      %v5637 = vpack.c.b16 %v5601, %v5601
      %v5638 = vpack.c.b16 %v5602, %v5602
      %v5639 = vpack.c.b16 %v5603, %v5603
      %v5640 = vpack.c.b16 %v5604, %v5604
      %v5641 = vpack.c.b16 %v5605, %v5605
      %v5642 = vpack.c.b16 %v5606, %v5606
      %v5643 = vpack.c.b16 %v5607, %v5607
      %v5644 = vpack.c.b16 %v5608, %v5608
      %v5645 = vpack.c.b16 %v5609, %v5609
      %v5646 = vpack.c.b16 %v5610, %v5610
      %v5647 = vpack.c.b16 %v5611, %v5611
      %5684 = vst [vmem:[%s212] sm:$0xf] %v5612
      %5685 = vst [vmem:[%s212 + $0x4] sm:$0xf] %v5613
      %5686 = vst [vmem:[%s212 + $0x8] sm:$0xf] %v5614
      %5687 = vst [vmem:[%s212 + $0xc] sm:$0xf] %v5615
      %5688 = vst [vmem:[%s212 + $0x10] sm:$0xf] %v5616
      %5689 = vst [vmem:[%s212 + $0x14] sm:$0xf] %v5617
      %5690 = vst [vmem:[%s212 + $0x18] sm:$0xf] %v5618
      %5691 = vst [vmem:[%s212 + $0x1c] sm:$0xf] %v5619
      %5692 = vst [vmem:[%s212 + $0x20] sm:$0xf] %v5620
      %5693 = vst [vmem:[%s212 + $0x24] sm:$0xf] %v5621
      %5694 = vst [vmem:[%s212 + $0x28] sm:$0xf] %v5622
      %5695 = vst [vmem:[%s212 + $0x2c] sm:$0xf] %v5623
      %5696 = vst [vmem:[%s212 + $0x30] sm:$0xf] %v5624
      %5697 = vst [vmem:[%s212 + $0x34] sm:$0xf] %v5625
      %5698 = vst [vmem:[%s212 + $0x38] sm:$0xf] %v5626
      %5699 = vst [vmem:[%s212 + $0x3c] sm:$0xf] %v5627
      %5700 = vst [vmem:[%s212 + $0x40] sm:$0xf] %v5628
      %5701 = vst [vmem:[%s212 + $0x44] sm:$0xf] %v5629
      %5702 = vst [vmem:[%s212 + $0x48] sm:$0xf] %v5630
      %5703 = vst [vmem:[%s212 + $0x4c] sm:$0xf] %v5631
      %5704 = vst [vmem:[%s212 + $0x50] sm:$0xf] %v5632
      %5705 = vst [vmem:[%s212 + $0x54] sm:$0xf] %v5633
      %5706 = vst [vmem:[%s212 + $0x58] sm:$0xf] %v5634
      %5707 = vst [vmem:[%s212 + $0x5c] sm:$0xf] %v5635
      %5708 = vst [vmem:[%s212 + $0x60] sm:$0xf] %v5636
      %5709 = vst [vmem:[%s212 + $0x64] sm:$0xf] %v5637
      %5710 = vst [vmem:[%s212 + $0x68] sm:$0xf] %v5638
      %5711 = vst [vmem:[%s212 + $0x6c] sm:$0xf] %v5639
      %5712 = vst [vmem:[%s212 + $0x70] sm:$0xf] %v5640
      %5713 = vst [vmem:[%s212 + $0x74] sm:$0xf] %v5641
      %5714 = vst [vmem:[%s212 + $0x78] sm:$0xf] %v5642
      %5715 = vst [vmem:[%s212 + $0x7c] sm:$0xf] %v5643
      %5716 = vst [vmem:[%s212 + $0x80] sm:$0xf] %v5644
      %5717 = vst [vmem:[%s212 + $0x84] sm:$0xf] %v5645
      %5718 = vst [vmem:[%s212 + $0x88] sm:$0xf] %v5646
      %5719 = vst [vmem:[%s212 + $0x8c] sm:$0xf] %v5647
      %s5720 = smul.u32 36, %s16
      %p5721 = scmp.lt.s32.totalorder %s5720, 71
      %s5722 = scalar_select %p5721, %s5720, 71
      %s5723 = smul.addr %s5722, 4
      %s5724 = scalar_lea.vmem %s2, %s5723
      %p5725 = scmp.lt.s32.totalorder %s16, 1
      %s5726 = scalar_select %p5725, %s16, 1
      %s5727 = smul.addr %s5726, 8
      %s5728 = scalar_lea.vmem %s3, %s5727
      %p5729 = scmp.lt.s32.totalorder %s16, 1
      %s5730 = scalar_select %p5729, %s16, 1
      %s5731 = smul.addr %s5730, 8
      %s5732 = scalar_lea.vmem %s4, %s5731
      // Predicated region
      $region29: #{double_conv.3} parent=27 // pred_check
        %p5733 = pneg %p81
      $region30: #{double_conv.3} parent=27 // pred_check_branch
        %5735 = sbr.rel (%p5733) target = $region32
      $region31: #{double_conv.3} parent=27 // pred_region
        %s5736 = smul.u32 36, %s16
      $region32: #{double_conv.3} parent=27 // pred_fallthru
        _
      // Predicated region
      $region33: #{double_conv.3} parent=27 // pred_check
        %p5737 = pneg %p107
      $region34: #{double_conv.3} parent=27 // pred_check_branch
        %5739 = sbr.rel (%p5737) target = $region36
      $region35: #{double_conv.3} parent=27 // pred_region
        _
      $region36: #{double_conv.3} parent=27 // pred_fallthru
        _
      // Predicated region
      $region37: #{double_conv.3} parent=27 // pred_check
        %p5740 = pneg %p133
      $region38: #{double_conv.3} parent=27 // pred_check_branch
        %5742 = sbr.rel (%p5740) target = $region40
      $region39: #{double_conv.3} parent=27 // pred_region
        _
      $region40: #{double_conv.3} parent=27 // pred_fallthru
        _
    $region28: #{double_conv.3} parent=5 // pred_fallthru
      _
    %p5743 = scmp.le.s32.totalorder 2, %s11
    // Predicated region
    $region41: #{double_conv.3} parent=5 // pred_check
      %p5744 = pneg %p5743
    $region42: #{double_conv.3} parent=5 // pred_check_branch
      %5746 = sbr.rel (%p5744) target = $region44
    $region43: #{double_conv.3} parent=5 // pred_region
      %s5747 = ssub.s32 %s11, 2
      // Predicated region
      $region45: #{double_conv.3} parent=43 // pred_check
        %p5748 = pneg %p87
      $region46: #{double_conv.3} parent=43 // pred_check_branch
        %5750 = sbr.rel (%p5748) target = $region48
      $region47: #{double_conv.3} parent=43 // pred_region
        %s5751 = smul.u32 36, %s17
        %p5752 = scmp.lt.s32.totalorder %s5751, 71
        %s5753 = scalar_select %p5752, %s5751, 71
        %s5754 = smul.addr %s5753, 4
        %s5755 = scalar_lea.vmem %s2, %s5754
      $region48: #{double_conv.3} parent=43 // pred_fallthru
        _
      // Predicated region
      $region49: #{double_conv.3} parent=43 // pred_check
        %p5756 = pneg %p113
      $region50: #{double_conv.3} parent=43 // pred_check_branch
        %5758 = sbr.rel (%p5756) target = $region52
      $region51: #{double_conv.3} parent=43 // pred_region
        %p5759 = scmp.lt.s32.totalorder %s17, 1
        %s5760 = scalar_select %p5759, %s17, 1
        %s5761 = smul.addr %s5760, 8
        %s5762 = scalar_lea.vmem %s3, %s5761
      $region52: #{double_conv.3} parent=43 // pred_fallthru
        _
      // Predicated region
      $region53: #{double_conv.3} parent=43 // pred_check
        %p5763 = pneg %p139
      $region54: #{double_conv.3} parent=43 // pred_check_branch
        %5765 = sbr.rel (%p5763) target = $region56
      $region55: #{double_conv.3} parent=43 // pred_region
        %p5766 = scmp.lt.s32.totalorder %s17, 1
        %s5767 = scalar_select %p5766, %s17, 1
        %s5768 = smul.addr %s5767, 8
        %s5769 = scalar_lea.vmem %s4, %s5768
      $region56: #{double_conv.3} parent=43 // pred_fallthru
        _
    $region44: #{double_conv.3} parent=5 // pred_fallthru
      _
  $region6: #{double_conv.3} parent=0 // loop_footer
    %s15 = sadd.s32 1, %s11
  $region7: #{double_conv.3} parent=0 // loop_footer_branch
    %10 = sbr.rel target = $region3
  $region8: #{double_conv.3} parent=0 // loop_exit
    _

</llo_original>
